<compile_context>
chip_gen: v6e
topology: v6e:2x2x1
jax: 0.10.0
libtpu: 0.0.40
codegen_flags: <defaults>
</compile_context>

<pallas_src>
import functools

import jax
import jax.numpy as jnp
import numpy as np
from jax.experimental import pallas as pl
from jax.experimental.pallas import tpu as pltpu

STD_EPS = 1e-5          # PNA std aggregator epsilon: std = sqrt(relu(var) + eps)
_BIG = 1e30             # "infinity" for masked max / min (select stays in f32, never overflows)
FP = 128                # lane-padded feature width (all hidden dims zero-padded to this)
N_CONV_PARAMS = 7       # per layer: w_pre_cat, w_ep, b_msg, w_xid, w_amp, w_att, b_post


def _round_up(v, m):
    return ((v + m - 1) // m) * m


# ---------------------------------------------------------------------------
# Fused kernel: 3 x PNAConv + global_add_pool + MLP head, all VMEM resident.
# ---------------------------------------------------------------------------
def pnanet_kernel(ec, ald_ref, x_ref, ea_ref, src_ref, dstc_ref, dstr_ref, dst3_ref,
                  bat_ref, deg_ref, *rest):
    conv_refs = rest[:3 * N_CONV_PARAMS]
    wl1_ref, bl1_ref, wl2_ref, bl2_ref = rest[3 * N_CONV_PARAMS:3 * N_CONV_PARAMS + 4]
    out_ref = rest[3 * N_CONV_PARAMS + 4]
    msg_scratch = rest[3 * N_CONV_PARAMS + 5]          # (E_pad, FP) f32 scratch (reused per layer)

    f32 = jnp.float32
    bf16 = jnp.bfloat16
    n_nodes = x_ref.shape[0]
    n_edges = ea_ref.shape[0]
    n_graphs = out_ref.shape[0]
    fp = x_ref.shape[1]
    n_chunks = n_edges // ec

    ald = ald_ref[0, 0]                                # avg_log_deg scalar (SMEM)
    x0_b = x_ref[...].astype(bf16)                     # (N, FP) lane-dense, zero-padded
    ea_b = ea_ref[...].astype(bf16)                    # (E, De) bf16 MXU operand
    src_c = src_ref[...]                               # (E, 1) int32  edge_index[0]
    dst_c = dstc_ref[...]                              # (E, 1) int32  edge_index[1]
    dst_r = dstr_ref[...]                              # (1, E) int32
    bat_r = bat_ref[...]                               # (1, N) int32
    deg = deg_ref[...]                                 # (N, 1) f32 in-degree (from wrapper)

    # One-hot gather / scatter / pool operators, built directly in bf16 (exact 0/1 values).
    iota_en = jax.lax.broadcasted_iota(jnp.int32, (n_edges, n_nodes), 1)
    g_src = (iota_en == src_c).astype(bf16)            # (E, N) row e selects node src[e]
    g_dst = (iota_en == dst_c).astype(bf16)            # (E, N) row e selects node dst[e]
    iota_ne = jax.lax.broadcasted_iota(jnp.int32, (n_nodes, n_edges), 0)
    s_dst = (iota_ne == dst_r).astype(bf16)            # (N, E) scatter onto destination nodes
    iota_bn = jax.lax.broadcasted_iota(jnp.int32, (n_graphs, n_nodes), 0)
    pool = (iota_bn == bat_r).astype(bf16)             # (B, N) global_add_pool operator

    # PNA degree scalers (shared by all three layers).
    deg_c = jnp.maximum(deg, 1.0)
    log_deg = jnp.log(deg_c + 1.0)
    amp = log_deg / ald                                # amplification scaler
    att = ald / log_deg                                # attenuation scaler
    has_in = deg > 0.0

    def pna_layer(h_b, w_pre_ref, w_ep_ref, b_msg_ref, w_xid_ref, w_amp_ref, w_att_ref,
                  b_post_ref):
        # gather endpoint features with one-hot matmuls (exact), then one wide-K pre_nn dot
        x_i = jnp.dot(g_dst, h_b, preferred_element_type=f32)           # (E, FP) target feats
        x_j = jnp.dot(g_src, h_b, preferred_element_type=f32)           # (E, FP) source feats
        xij = jnp.concatenate([x_i, x_j], axis=-1).astype(bf16)         # (E, 2FP), K = 256
        msg = (jnp.dot(xij, w_pre_ref[...], preferred_element_type=f32)
               + jnp.dot(ea_b, w_ep_ref[...], preferred_element_type=f32)
               + b_msg_ref[...])                                         # (E, FP) f32
        msg_scratch[...] = msg

        # mean / std via ONE scatter matmul over [msg | msg*msg]
        # TODO(synk): second moment uses bf16 MXU operands (E[m^2]-E[m]^2); keep f32 if tighter
        # tolerance than 5e-2 is ever required.
        msq = jnp.concatenate([msg, msg * msg], axis=-1).astype(bf16)    # (E, 2FP)
        s = jnp.dot(s_dst, msq, preferred_element_type=f32)              # (N, 2FP)
        s_sum = s[:, :fp]
        s_sq = s[:, fp:]
        mean = s_sum / deg_c
        var = s_sq / deg_c - mean * mean
        std = jnp.sqrt(jnp.maximum(var, 0.0) + STD_EPS)

        # chunked masked min / max: running (N, FP) accumulators, only an (N, EC, FP) slab live.
        def chunk_body(c, carry):
            mx_a, mn_a = carry
            start = pl.multiple_of(c * ec, ec)
            m_chunk = msg_scratch[pl.ds(start, ec), :]                   # (EC, FP) f32
            d_chunk = dst3_ref[:, pl.ds(start, ec), :]                   # (1, EC, 1) int32
            sel = jax.lax.broadcasted_iota(jnp.int32, (n_nodes, ec, 1), 0) == d_chunk
            m3 = m_chunk[None, :, :]                                     # (1, EC, FP) f32
            mx_a = jnp.maximum(mx_a, jnp.max(jnp.where(sel, m3, -_BIG), axis=1))
            mn_a = jnp.minimum(mn_a, jnp.min(jnp.where(sel, m3, _BIG), axis=1))
            return mx_a, mn_a

        mx0 = jnp.full((n_nodes, fp), -_BIG, f32)
        mn0 = jnp.full((n_nodes, fp), _BIG, f32)
        mx, mn = jax.lax.fori_loop(0, n_chunks, chunk_body, (mx0, mn0))
        mx = jnp.where(has_in, mx, 0.0)
        mn = jnp.where(has_in, mn, 0.0)

        # post_nn + conv.lin (folded): [x | aggs] one wide-K dot, plus scaled agg dots; the
        # per-row degree scalers commute with the matmul so no scaled copies are materialized.
        aggs_b = jnp.concatenate([mean, mn, mx, std], axis=-1).astype(bf16)   # (N, 4FP)
        xa = jnp.concatenate([h_b, aggs_b], axis=-1)                          # (N, 5FP)
        out = jnp.dot(xa, w_xid_ref[...], preferred_element_type=f32)
        out = out + amp * jnp.dot(aggs_b, w_amp_ref[...], preferred_element_type=f32)
        out = out + att * jnp.dot(aggs_b, w_att_ref[...], preferred_element_type=f32)
        return out + b_post_ref[...]                                          # (N, FP) f32

    h1 = pna_layer(x0_b, *conv_refs[0:N_CONV_PARAMS])
    h1_b = h1.astype(bf16)
    h2 = pna_layer(h1_b, *conv_refs[N_CONV_PARAMS:2 * N_CONV_PARAMS])
    h2_b = h2.astype(bf16)
    h3 = pna_layer(h2_b, *conv_refs[2 * N_CONV_PARAMS:3 * N_CONV_PARAMS])
    h3_b = h3.astype(bf16)

    # global_add_pool + head: ONE pool matmul over [h1|h2|h3] and ONE wide-K lin1 matmul.
    hcat = jnp.concatenate([h1_b, h2_b, h3_b], axis=-1)                  # (N, 3FP)
    pooled = jnp.dot(pool, hcat, preferred_element_type=f32)             # (B, 3FP)
    z = jnp.dot(pooled.astype(bf16), wl1_ref[...], preferred_element_type=f32) + bl1_ref[...]
    z = jnp.maximum(z, 0.0)
    # TODO(synk): F.dropout(p=0.5) is identity here (eval mode / training=False).
    out_ref[...] = (jnp.dot(z.astype(bf16), wl2_ref[...], preferred_element_type=f32)
                    + bl2_ref[...])                                      # (B, 128) lane-dense


# ---------------------------------------------------------------------------
# Parameter prep: eval-time algebraic folds + 128-lane padding + per-block splits.
# Matmul weights are shipped in bf16; biases stay f32.
# ---------------------------------------------------------------------------
def _pad2(a, rows, cols, dtype=jnp.float32):
    a = jnp.asarray(a, jnp.float32)
    if a.ndim == 1:
        a = a.reshape(1, -1)
    out = jnp.zeros((rows, cols), jnp.float32).at[:a.shape[0], :a.shape[1]].set(a)
    return out.astype(dtype)


def _prep_conv(p):
    f_in = p["wpre"].shape[1]                 # message width (= in_channels)
    f_out = p["wlin"].shape[1]                # layer output width
    assert f_in <= FP and f_out <= FP
    w_xi = p["wpre"][:f_in]
    w_xj = p["wpre"][f_in:2 * f_in]
    w_e = p["wpre"][2 * f_in:]
    w_ep = p["we"] @ w_e                      # edge_encoder folded into pre_nn
    b_msg = p["be"] @ w_e + p["bpre"]

    w_pre_cat = jnp.zeros((2 * FP, FP), jnp.float32)
    w_pre_cat = w_pre_cat.at[:f_in, :f_in].set(w_xi)
    w_pre_cat = w_pre_cat.at[FP:FP + f_in, :f_in].set(w_xj)

    w_post = p["wpost"] @ p["wlin"]           # conv.lin folded into post_nn
    b_post = p["bpost"] @ p["wlin"] + p["blin"]

    def agg_block(row0):
        blk = jnp.zeros((4 * FP, FP), jnp.float32)
        for a in range(4):
            blk = blk.at[a * FP:a * FP + f_in, :f_out].set(
                w_post[row0 + a * f_in: row0 + (a + 1) * f_in])
        return blk

    w_x = _pad2(w_post[:f_in], FP, FP)
    w_xid = jnp.concatenate([w_x, agg_block(f_in)], axis=0)         # (5FP, FP)
    w_amp = agg_block(5 * f_in)                                     # (4FP, FP)
    w_att = agg_block(9 * f_in)                                     # (4FP, FP)
    return [w_pre_cat.astype(jnp.bfloat16),
            _pad2(w_ep, w_ep.shape[0], FP, jnp.bfloat16),
            _pad2(b_msg, 1, FP),
            w_xid.astype(jnp.bfloat16),
            w_amp.astype(jnp.bfloat16),
            w_att.astype(jnp.bfloat16),
            _pad2(b_post, 1, FP)]


def _prep_head(hp, dim_h):
    d3 = 3 * dim_h
    assert d3 <= FP
    wl1 = jnp.zeros((3 * FP, FP), jnp.float32)
    for layer in range(3):
        wl1 = wl1.at[layer * FP:layer * FP + dim_h, :d3].set(
            hp["wl1"][layer * dim_h:(layer + 1) * dim_h])
    bl1 = _pad2(hp["bl1"], 1, FP)
    wl2 = jnp.zeros((FP, FP), jnp.float32).at[:d3, :1].set(hp["wl2"])
    bl2 = jnp.zeros((1, FP), jnp.float32).at[:, :1].set(jnp.asarray(hp["bl2"]).reshape(1, 1))
    return [wl1.astype(jnp.bfloat16), bl1, wl2.astype(jnp.bfloat16), bl2]


def prepare_params(params):
    flat = []
    for name in ("conv1", "conv2", "conv3"):
        flat += _prep_conv(params[name])
    dim_h = params["conv1"]["wlin"].shape[1]
    flat += _prep_head(params["head"], dim_h)
    return flat


# ---------------------------------------------------------------------------
# Wrapper: layout plumbing (lane padding, edge padding, index reshapes) + pallas_call.
# ---------------------------------------------------------------------------
def pnanet_forward(x, edge_index, edge_attr, batch, num_graphs, flat_params,
                   avg_log_deg, edge_chunk=256):
    n, f0 = x.shape
    e = edge_attr.shape[0]
    assert f0 <= FP
    src = edge_index[0].astype(jnp.int32)
    dst = edge_index[1].astype(jnp.int32)

    # in-degree computed once here (tiny (N,1) input, no in-kernel (N,E) reduce)
    deg = jax.ops.segment_sum(jnp.ones((e,), jnp.float32), dst, num_segments=n).reshape(n, 1)

    # pad edges to a multiple of the min/max chunk; padded dst = -1 never matches any node
    ec = _round_up(min(edge_chunk, _round_up(e, 8)), 8)
    e_pad = _round_up(e, ec)
    pad = e_pad - e
    if pad:
        src = jnp.concatenate([src, jnp.zeros((pad,), jnp.int32)])
        dst = jnp.concatenate([dst, jnp.full((pad,), -1, jnp.int32)])
        edge_attr = jnp.concatenate(
            [edge_attr, jnp.zeros((pad, edge_attr.shape[1]), edge_attr.dtype)])

    x_pad = jnp.zeros((n, FP), jnp.float32).at[:, :f0].set(x)

    args = ([jnp.full((1, 1), avg_log_deg, jnp.float32),          # SMEM scalar (no recompile)
             x_pad, edge_attr.astype(jnp.float32),
             src.reshape(e_pad, 1), dst.reshape(e_pad, 1),
             dst.reshape(1, e_pad), dst.reshape(1, e_pad, 1),
             batch.astype(jnp.int32).reshape(1, n), deg]
            + list(flat_params))
    in_specs = ([pl.BlockSpec(memory_space=pltpu.MemorySpace.SMEM)]
                + [pl.BlockSpec(memory_space=pltpu.MemorySpace.VMEM)] * (len(args) - 1))

    out = pl.pallas_call(
        functools.partial(pnanet_kernel, ec),
        out_shape=jax.ShapeDtypeStruct((num_graphs, FP), jnp.float32),
        in_specs=in_specs,
        out_specs=pl.BlockSpec(memory_space=pltpu.MemorySpace.VMEM),
        scratch_shapes=[pltpu.VMEM((e_pad, FP), jnp.float32)],
        compiler_params=pltpu.CompilerParams(vmem_limit_bytes=48 * 1024 * 1024),
        # TODO(synk): for large graphs, add a grid (edge-chunk reduction axis plus a "parallel"
        # node/graph axis for v7x's second TensorCore) and replace the O(E*N) one-hot gathers
        # with scalar-prefetched row gathers (PrefetchScalarGridSpec + pl.Element).
    )(*args)
    return out[:, :1]


# ---------------------------------------------------------------------------
# Parameter init (deterministic, synthetic) and pure-f32 JAX reference.
# ---------------------------------------------------------------------------
def init_conv_params(key, f_in, f_out, edge_dim):
    ks = jax.random.split(key, 8)
    s = 0.1
    rnd = lambda k, shp: s * jax.random.normal(k, shp, jnp.float32)
    return {
        "we": rnd(ks[0], (edge_dim, f_in)), "be": rnd(ks[1], (f_in,)),
        "wpre": rnd(ks[2], (3 * f_in, f_in)), "bpre": rnd(ks[3], (f_in,)),
        "wpost": rnd(ks[4], (13 * f_in, f_out)), "bpost": rnd(ks[5], (f_out,)),
        "wlin": rnd(ks[6], (f_out, f_out)), "blin": rnd(ks[7], (f_out,)),
    }


def init_head_params(key, dim_h):
    ks = jax.random.split(key, 4)
    s = 0.1
    d = 3 * dim_h
    return {
        "wl1": s * jax.random.normal(ks[0], (d, d), jnp.float32),
        "bl1": s * jax.random.normal(ks[1], (d,), jnp.float32),
        "wl2": s * jax.random.normal(ks[2], (d, 1), jnp.float32),
        "bl2": s * jax.random.normal(ks[3], (1,), jnp.float32),
    }


def reference_forward(x, edge_index, edge_attr, batch, num_graphs, params, avg_log_deg):
    src, dst = edge_index[0], edge_index[1]
    n = x.shape[0]
    scat = (jnp.arange(n)[:, None] == dst[None, :]).astype(jnp.float32)     # (N, E)
    deg = scat.sum(axis=1, keepdims=True)
    deg_c = jnp.maximum(deg, 1.0)
    amp = jnp.log(deg_c + 1.0) / avg_log_deg
    att = avg_log_deg / jnp.log(deg_c + 1.0)
    mask3 = scat[:, :, None] > 0

    def conv(h, p):
        e_enc = edge_attr @ p["we"] + p["be"]
        m = jnp.concatenate([h[dst], h[src], e_enc], axis=1) @ p["wpre"] + p["bpre"]
        mean = (scat @ m) / deg_c
        var = (scat @ (m * m)) / deg_c - mean * mean
        std = jnp.sqrt(jnp.maximum(var, 0.0) + STD_EPS)
        mx = jnp.where(deg > 0, jnp.max(jnp.where(mask3, m[None], -_BIG), axis=1), 0.0)
        mn = jnp.where(deg > 0, jnp.min(jnp.where(mask3, m[None], _BIG), axis=1), 0.0)
        agg = jnp.concatenate([mean, mn, mx, std], axis=1)
        out = jnp.concatenate([h, agg, agg * amp, agg * att], axis=1)
        out = out @ p["wpost"] + p["bpost"]
        return out @ p["wlin"] + p["blin"]

    h1 = conv(x, params["conv1"])
    h2 = conv(h1, params["conv2"])
    h3 = conv(h2, params["conv3"])
    pool = (jnp.arange(num_graphs)[:, None] == batch[None, :]).astype(jnp.float32)
    hcat = jnp.concatenate([pool @ h1, pool @ h2, pool @ h3], axis=1)
    hp = params["head"]
    z = jnp.maximum(hcat @ hp["wl1"] + hp["bl1"], 0.0)
    return z @ hp["wl2"] + hp["bl2"]


if __name__ == "__main__":
    # small synthetic graph batch
    N_NODES, N_EDGES, N_GRAPHS = 16, 48, 2
    NUM_NODE_FEATURES, DIM_H, EDGE_DIM = 8, 32, 4

    key = jax.random.PRNGKey(0)
    k_x, k_ea, k_ei, k_p1, k_p2, k_p3, k_ph = jax.random.split(key, 7)

    x = jax.random.normal(k_x, (N_NODES, NUM_NODE_FEATURES), jnp.float32)
    edge_attr = jax.random.normal(k_ea, (N_EDGES, EDGE_DIM), jnp.float32)
    edge_index = jax.random.randint(k_ei, (2, N_EDGES), 0, N_NODES, jnp.int32)
    batch = jnp.concatenate([jnp.zeros(N_NODES // 2, jnp.int32),
                             jnp.ones(N_NODES - N_NODES // 2, jnp.int32)])

    # PNAConv 'deg' constructor arg = in-degree histogram; only its log-average enters the
    # forward pass (amplification / attenuation scalers), supplied as an SMEM scalar.
    in_deg = np.bincount(np.asarray(edge_index[1]), minlength=N_NODES)
    deg_hist = np.bincount(in_deg)
    avg_log_deg = float((np.log(np.arange(len(deg_hist)) + 1.0) * deg_hist).sum()
                        / deg_hist.sum())

    params = {
        "conv1": init_conv_params(k_p1, NUM_NODE_FEATURES, DIM_H, EDGE_DIM),
        "conv2": init_conv_params(k_p2, DIM_H, DIM_H, EDGE_DIM),
        "conv3": init_conv_params(k_p3, DIM_H, DIM_H, EDGE_DIM),
        "head": init_head_params(k_ph, DIM_H),
    }
    flat = prepare_params(params)

    # edge_chunk=16 -> 3 chunks at E=48, exercising the chunked min/max reduction path
    out = pnanet_forward(x, edge_index, edge_attr, batch, N_GRAPHS, flat, avg_log_deg,
                         edge_chunk=16)
    out = jax.block_until_ready(out)

    ref = reference_forward(x, edge_index, edge_attr, batch, N_GRAPHS, params, avg_log_deg)
    # tolerance accounts for bf16 MXU operands (f32 accumulate) vs the pure-f32 reference
    np.testing.assert_allclose(np.asarray(out), np.asarray(ref), rtol=5e-2, atol=5e-2)

    assert out.shape == (N_GRAPHS, 1)
    print("KERNEL_OK")
</pallas_src>

<mosaic_0001>
module attributes {stable_mosaic.version = 11 : i64} {
  func.func @pnanet_kernel(%arg0: memref<1x1xf32, #tpu.memory_space<smem>>, %arg1: memref<16x128xf32, #tpu.memory_space<vmem>>, %arg2: memref<48x4xf32, #tpu.memory_space<vmem>>, %arg3: memref<48x1xi32, #tpu.memory_space<vmem>>, %arg4: memref<48x1xi32, #tpu.memory_space<vmem>>, %arg5: memref<1x48xi32, #tpu.memory_space<vmem>>, %arg6: memref<1x48x1xi32, #tpu.memory_space<vmem>>, %arg7: memref<1x16xi32, #tpu.memory_space<vmem>>, %arg8: memref<16x1xf32, #tpu.memory_space<vmem>>, %arg9: memref<256x128xbf16, #tpu.memory_space<vmem>>, %arg10: memref<4x128xbf16, #tpu.memory_space<vmem>>, %arg11: memref<1x128xf32, #tpu.memory_space<vmem>>, %arg12: memref<640x128xbf16, #tpu.memory_space<vmem>>, %arg13: memref<512x128xbf16, #tpu.memory_space<vmem>>, %arg14: memref<512x128xbf16, #tpu.memory_space<vmem>>, %arg15: memref<1x128xf32, #tpu.memory_space<vmem>>, %arg16: memref<256x128xbf16, #tpu.memory_space<vmem>>, %arg17: memref<4x128xbf16, #tpu.memory_space<vmem>>, %arg18: memref<1x128xf32, #tpu.memory_space<vmem>>, %arg19: memref<640x128xbf16, #tpu.memory_space<vmem>>, %arg20: memref<512x128xbf16, #tpu.memory_space<vmem>>, %arg21: memref<512x128xbf16, #tpu.memory_space<vmem>>, %arg22: memref<1x128xf32, #tpu.memory_space<vmem>>, %arg23: memref<256x128xbf16, #tpu.memory_space<vmem>>, %arg24: memref<4x128xbf16, #tpu.memory_space<vmem>>, %arg25: memref<1x128xf32, #tpu.memory_space<vmem>>, %arg26: memref<640x128xbf16, #tpu.memory_space<vmem>>, %arg27: memref<512x128xbf16, #tpu.memory_space<vmem>>, %arg28: memref<512x128xbf16, #tpu.memory_space<vmem>>, %arg29: memref<1x128xf32, #tpu.memory_space<vmem>>, %arg30: memref<384x128xbf16, #tpu.memory_space<vmem>>, %arg31: memref<1x128xf32, #tpu.memory_space<vmem>>, %arg32: memref<128x128xbf16, #tpu.memory_space<vmem>>, %arg33: memref<1x128xf32, #tpu.memory_space<vmem>>, %arg34: memref<2x128xf32, #tpu.memory_space<vmem>>, %arg35: memref<48x128xf32, #tpu.memory_space<vmem>>) attributes {dimension_semantics = [], scalar_prefetch = 0 : i64, scratch_operands = 1 : i64, tpu.core_type = #tpu.core_type<tc>} {
    %c0 = arith.constant 0 : index
    %c0_0 = arith.constant 0 : index
    %0 = memref.load %arg0[%c0, %c0_0] : memref<1x1xf32, #tpu.memory_space<smem>>
    %c0_1 = arith.constant 0 : index
    %c0_2 = arith.constant 0 : index
    %1 = vector.load %arg1[%c0_1, %c0_2] : memref<16x128xf32, #tpu.memory_space<vmem>>, vector<16x128xf32>
    %2 = arith.truncf %1 : vector<16x128xf32> to vector<16x128xbf16>
    %c0_3 = arith.constant 0 : index
    %c0_4 = arith.constant 0 : index
    %3 = vector.load %arg2[%c0_3, %c0_4] : memref<48x4xf32, #tpu.memory_space<vmem>>, vector<48x4xf32>
    %4 = arith.truncf %3 : vector<48x4xf32> to vector<48x4xbf16>
    %c0_5 = arith.constant 0 : index
    %c0_6 = arith.constant 0 : index
    %5 = vector.load %arg3[%c0_5, %c0_6] : memref<48x1xi32, #tpu.memory_space<vmem>>, vector<48x1xi32>
    %c0_7 = arith.constant 0 : index
    %c0_8 = arith.constant 0 : index
    %6 = vector.load %arg4[%c0_7, %c0_8] : memref<48x1xi32, #tpu.memory_space<vmem>>, vector<48x1xi32>
    %c0_9 = arith.constant 0 : index
    %c0_10 = arith.constant 0 : index
    %7 = vector.load %arg5[%c0_9, %c0_10] : memref<1x48xi32, #tpu.memory_space<vmem>>, vector<1x48xi32>
    %c0_11 = arith.constant 0 : index
    %c0_12 = arith.constant 0 : index
    %8 = vector.load %arg7[%c0_11, %c0_12] : memref<1x16xi32, #tpu.memory_space<vmem>>, vector<1x16xi32>
    %c0_13 = arith.constant 0 : index
    %c0_14 = arith.constant 0 : index
    %9 = vector.load %arg8[%c0_13, %c0_14] : memref<16x1xf32, #tpu.memory_space<vmem>>, vector<16x1xf32>
    %10 = tpu.iota {dimensions = array<i32: 1>} : vector<48x16xi32>
    %11 = vector.broadcast %5 : vector<48x1xi32> to vector<48x16xi32>
    %12 = arith.cmpi eq, %10, %11 : vector<48x16xi32>
    %13 = arith.extui %12 : vector<48x16xi1> to vector<48x16xi32>
    %14 = arith.sitofp %13 : vector<48x16xi32> to vector<48x16xf32>
    %15 = arith.truncf %14 : vector<48x16xf32> to vector<48x16xbf16>
    %16 = vector.broadcast %6 : vector<48x1xi32> to vector<48x16xi32>
    %17 = arith.cmpi eq, %10, %16 : vector<48x16xi32>
    %18 = arith.extui %17 : vector<48x16xi1> to vector<48x16xi32>
    %19 = arith.sitofp %18 : vector<48x16xi32> to vector<48x16xf32>
    %20 = arith.truncf %19 : vector<48x16xf32> to vector<48x16xbf16>
    %21 = tpu.iota {dimensions = array<i32: 0>} : vector<16x48xi32>
    %22 = vector.broadcast %7 : vector<1x48xi32> to vector<16x48xi32>
    %23 = arith.cmpi eq, %21, %22 : vector<16x48xi32>
    %24 = arith.extui %23 : vector<16x48xi1> to vector<16x48xi32>
    %25 = arith.sitofp %24 : vector<16x48xi32> to vector<16x48xf32>
    %26 = arith.truncf %25 : vector<16x48xf32> to vector<16x48xbf16>
    %27 = tpu.iota {dimensions = array<i32: 0>} : vector<2x16xi32>
    %28 = vector.broadcast %8 : vector<1x16xi32> to vector<2x16xi32>
    %29 = arith.cmpi eq, %27, %28 : vector<2x16xi32>
    %30 = arith.extui %29 : vector<2x16xi1> to vector<2x16xi32>
    %31 = arith.sitofp %30 : vector<2x16xi32> to vector<2x16xf32>
    %32 = arith.truncf %31 : vector<2x16xf32> to vector<2x16xbf16>
    %cst = arith.constant 1.000000e+00 : f32
    %33 = vector.broadcast %cst : f32 to vector<16x1xf32>
    %34 = arith.maximumf %9, %33 : vector<16x1xf32>
    %cst_15 = arith.constant 1.000000e+00 : f32
    %35 = vector.broadcast %cst_15 : f32 to vector<16x1xf32>
    %36 = arith.addf %34, %35 : vector<16x1xf32>
    %37 = math.log %36 : vector<16x1xf32>
    %38 = vector.broadcast %0 : f32 to vector<16x1xf32>
    %39 = arith.divf %37, %38 : vector<16x1xf32>
    %40 = vector.broadcast %0 : f32 to vector<16x1xf32>
    %41 = arith.divf %40, %37 : vector<16x1xf32>
    %cst_16 = arith.constant 0.000000e+00 : f32
    %42 = vector.broadcast %cst_16 : f32 to vector<16x1xf32>
    %43 = arith.cmpf ogt, %9, %42 : vector<16x1xf32>
    %cst_17 = arith.constant dense<0.000000e+00> : vector<48x128xf32>
    %44 = tpu.matmul %20, %2, %cst_17 {dimension_numbers = #tpu.dot_dimension_numbers<[1], [0], [0], [1], [0, 0, 1, 1], [], []>} : vector<48x16xbf16>, vector<16x128xbf16>, vector<48x128xf32> -> vector<48x128xf32>
    %cst_18 = arith.constant dense<0.000000e+00> : vector<48x128xf32>
    %45 = tpu.matmul %15, %2, %cst_18 {dimension_numbers = #tpu.dot_dimension_numbers<[1], [0], [0], [1], [0, 0, 1, 1], [], []>} : vector<48x16xbf16>, vector<16x128xbf16>, vector<48x128xf32> -> vector<48x128xf32>
    %46 = tpu.concatenate %44, %45 in 1 : vector<48x128xf32>, vector<48x128xf32> -> vector<48x256xf32>
    %47 = arith.truncf %46 : vector<48x256xf32> to vector<48x256xbf16>
    %c0_19 = arith.constant 0 : index
    %c0_20 = arith.constant 0 : index
    %48 = vector.load %arg9[%c0_19, %c0_20] : memref<256x128xbf16, #tpu.memory_space<vmem>>, vector<256x128xbf16>
    %cst_21 = arith.constant dense<0.000000e+00> : vector<48x128xf32>
    %49 = tpu.matmul %47, %48, %cst_21 {dimension_numbers = #tpu.dot_dimension_numbers<[1], [0], [0], [1], [0, 0, 1, 1], [], []>} : vector<48x256xbf16>, vector<256x128xbf16>, vector<48x128xf32> -> vector<48x128xf32>
    %c0_22 = arith.constant 0 : index
    %c0_23 = arith.constant 0 : index
    %50 = vector.load %arg10[%c0_22, %c0_23] : memref<4x128xbf16, #tpu.memory_space<vmem>>, vector<4x128xbf16>
    %cst_24 = arith.constant dense<0.000000e+00> : vector<48x128xf32>
    %51 = tpu.matmul %4, %50, %cst_24 {dimension_numbers = #tpu.dot_dimension_numbers<[1], [0], [0], [1], [0, 0, 1, 1], [], []>} : vector<48x4xbf16>, vector<4x128xbf16>, vector<48x128xf32> -> vector<48x128xf32>
    %52 = arith.addf %49, %51 : vector<48x128xf32>
    %c0_25 = arith.constant 0 : index
    %c0_26 = arith.constant 0 : index
    %53 = vector.load %arg11[%c0_25, %c0_26] : memref<1x128xf32, #tpu.memory_space<vmem>>, vector<1x128xf32>
    %54 = vector.broadcast %53 : vector<1x128xf32> to vector<48x128xf32>
    %55 = arith.addf %52, %54 : vector<48x128xf32>
    %c0_27 = arith.constant 0 : index
    %c0_28 = arith.constant 0 : index
    %56 = vector.load %arg35[%c0_27, %c0_28] : memref<48x128xf32, #tpu.memory_space<vmem>>, vector<48x128xf32>
    tpu.vector_store %arg35[%c0_27, %c0_28], %55 {strides = array<i32>} : memref<48x128xf32, #tpu.memory_space<vmem>>, vector<48x128xf32>,
    %57 = arith.mulf %55, %55 : vector<48x128xf32>
    %58 = tpu.concatenate %55, %57 in 1 : vector<48x128xf32>, vector<48x128xf32> -> vector<48x256xf32>
    %59 = arith.truncf %58 : vector<48x256xf32> to vector<48x256xbf16>
    %cst_29 = arith.constant dense<0.000000e+00> : vector<16x256xf32>
    %60 = tpu.matmul %26, %59, %cst_29 {dimension_numbers = #tpu.dot_dimension_numbers<[1], [0], [0], [1], [0, 0, 1, 1], [], []>} : vector<16x48xbf16>, vector<48x256xbf16>, vector<16x256xf32> -> vector<16x256xf32>
    %61 = vector.extract_strided_slice %60 {offsets = [0, 0], sizes = [16, 128], strides = [1, 1]} : vector<16x256xf32> to vector<16x128xf32>
    %62 = vector.extract_strided_slice %60 {offsets = [0, 128], sizes = [16, 128], strides = [1, 1]} : vector<16x256xf32> to vector<16x128xf32>
    %63 = vector.broadcast %34 : vector<16x1xf32> to vector<16x128xf32>
    %64 = arith.divf %61, %63 : vector<16x128xf32>
    %65 = vector.broadcast %34 : vector<16x1xf32> to vector<16x128xf32>
    %66 = arith.divf %62, %65 : vector<16x128xf32>
    %67 = arith.mulf %64, %64 : vector<16x128xf32>
    %68 = arith.subf %66, %67 : vector<16x128xf32>
    %cst_30 = arith.constant 0.000000e+00 : f32
    %69 = vector.broadcast %cst_30 : f32 to vector<16x128xf32>
    %70 = arith.maximumf %68, %69 : vector<16x128xf32>
    %cst_31 = arith.constant 9.99999974E-6 : f32
    %71 = vector.broadcast %cst_31 : f32 to vector<16x128xf32>
    %72 = arith.addf %70, %71 : vector<16x128xf32>
    %73 = math.sqrt %72 : vector<16x128xf32>
    %cst_32 = arith.constant -1.000000e+30 : f32
    %74 = vector.broadcast %cst_32 : f32 to vector<16x128xf32>
    %cst_33 = arith.constant 1.000000e+30 : f32
    %75 = vector.broadcast %cst_33 : f32 to vector<16x128xf32>
    %c0_i32 = arith.constant 0 : i32
    %c3_i32 = arith.constant 3 : i32
    %76 = arith.addi %c0_i32, %c3_i32 : i32
    %c1_i32 = arith.constant 1 : i32
    %77:2 = scf.for %arg36 = %c0_i32 to %76 step %c1_i32 iter_args(%arg37 = %74, %arg38 = %75) -> (vector<16x128xf32>, vector<16x128xf32>)  : i32 {
      %c16_i32 = arith.constant 16 : i32
      %244 = arith.muli %arg36, %c16_i32 : i32
      %245 = tpu.assume_multiple %244, 16 : i32
      %246 = arith.index_cast %245 : i32 to index
      %c0_130 = arith.constant 0 : index
      %247 = vector.load %arg35[%246, %c0_130] : memref<48x128xf32, #tpu.memory_space<vmem>>, vector<16x128xf32>
      %c0_131 = arith.constant 0 : index
      %248 = arith.index_cast %245 : i32 to index
      %c0_132 = arith.constant 0 : index
      %249 = vector.load %arg6[%c0_131, %248, %c0_132] : memref<1x48x1xi32, #tpu.memory_space<vmem>>, vector<1x16x1xi32>
      %250 = tpu.iota {dimensions = array<i32: 0>} : vector<16x16x1xi32>
      %251 = vector.broadcast %249 : vector<1x16x1xi32> to vector<16x16x1xi32>
      %252 = arith.cmpi eq, %250, %251 : vector<16x16x1xi32>
      %253 = vector.shape_cast %247 : vector<16x128xf32> to vector<1x16x128xf32>
      %cst_133 = arith.constant -1.000000e+30 : f32
      %254 = vector.shape_cast %252 : vector<16x16x1xi1> to vector<16x16x1xi1>
      %255 = vector.broadcast %254 : vector<16x16x1xi1> to vector<16x16x128xi1>
      %256 = vector.shape_cast %253 : vector<1x16x128xf32> to vector<1x16x128xf32>
      %257 = vector.broadcast %256 : vector<1x16x128xf32> to vector<16x16x128xf32>
      %258 = vector.broadcast %cst_133 : f32 to vector<16x16x128xf32>
      %259 = arith.select %255, %257, %258 : vector<16x16x128xi1>, vector<16x16x128xf32>
      %cst_134 = arith.constant dense<0xFF800000> : vector<16x128xf32>
      %260 = vector.multi_reduction <maximumf>, %259, %cst_134 [1] : vector<16x16x128xf32> to vector<16x128xf32>
      %261 = arith.maximumf %arg37, %260 : vector<16x128xf32>
      %cst_135 = arith.constant 1.000000e+30 : f32
      %262 = vector.shape_cast %252 : vector<16x16x1xi1> to vector<16x16x1xi1>
      %263 = vector.broadcast %262 : vector<16x16x1xi1> to vector<16x16x128xi1>
      %264 = vector.shape_cast %253 : vector<1x16x128xf32> to vector<1x16x128xf32>
      %265 = vector.broadcast %264 : vector<1x16x128xf32> to vector<16x16x128xf32>
      %266 = vector.broadcast %cst_135 : f32 to vector<16x16x128xf32>
      %267 = arith.select %263, %265, %266 : vector<16x16x128xi1>, vector<16x16x128xf32>
      %cst_136 = arith.constant dense<0x7F800000> : vector<16x128xf32>
      %268 = vector.multi_reduction <minimumf>, %267, %cst_136 [1] : vector<16x16x128xf32> to vector<16x128xf32>
      %269 = arith.minimumf %arg38, %268 : vector<16x128xf32>
      scf.yield %261, %269 : vector<16x128xf32>, vector<16x128xf32>
    }
    %c3_i32_34 = arith.constant 3 : i32
    %cst_35 = arith.constant 0.000000e+00 : f32
    %78 = vector.shape_cast %43 : vector<16x1xi1> to vector<16x1xi1>
    %79 = vector.broadcast %78 : vector<16x1xi1> to vector<16x128xi1>
    %80 = vector.broadcast %cst_35 : f32 to vector<16x128xf32>
    %81 = arith.select %79, %77#0, %80 : vector<16x128xi1>, vector<16x128xf32>
    %cst_36 = arith.constant 0.000000e+00 : f32
    %82 = vector.shape_cast %43 : vector<16x1xi1> to vector<16x1xi1>
    %83 = vector.broadcast %82 : vector<16x1xi1> to vector<16x128xi1>
    %84 = vector.broadcast %cst_36 : f32 to vector<16x128xf32>
    %85 = arith.select %83, %77#1, %84 : vector<16x128xi1>, vector<16x128xf32>
    %86 = tpu.concatenate %64, %85, %81, %73 in 1 : vector<16x128xf32>, vector<16x128xf32>, vector<16x128xf32>, vector<16x128xf32> -> vector<16x512xf32>
    %87 = arith.truncf %86 : vector<16x512xf32> to vector<16x512xbf16>
    %88 = tpu.concatenate %2, %87 in 1 : vector<16x128xbf16>, vector<16x512xbf16> -> vector<16x640xbf16>
    %c0_37 = arith.constant 0 : index
    %c0_38 = arith.constant 0 : index
    %89 = vector.load %arg12[%c0_37, %c0_38] : memref<640x128xbf16, #tpu.memory_space<vmem>>, vector<640x128xbf16>
    %cst_39 = arith.constant dense<0.000000e+00> : vector<16x128xf32>
    %90 = tpu.matmul %88, %89, %cst_39 {dimension_numbers = #tpu.dot_dimension_numbers<[1], [0], [0], [1], [0, 0, 1, 1], [], []>} : vector<16x640xbf16>, vector<640x128xbf16>, vector<16x128xf32> -> vector<16x128xf32>
    %c0_40 = arith.constant 0 : index
    %c0_41 = arith.constant 0 : index
    %91 = vector.load %arg13[%c0_40, %c0_41] : memref<512x128xbf16, #tpu.memory_space<vmem>>, vector<512x128xbf16>
    %cst_42 = arith.constant dense<0.000000e+00> : vector<16x128xf32>
    %92 = tpu.matmul %87, %91, %cst_42 {dimension_numbers = #tpu.dot_dimension_numbers<[1], [0], [0], [1], [0, 0, 1, 1], [], []>} : vector<16x512xbf16>, vector<512x128xbf16>, vector<16x128xf32> -> vector<16x128xf32>
    %93 = vector.broadcast %39 : vector<16x1xf32> to vector<16x128xf32>
    %94 = arith.mulf %93, %92 : vector<16x128xf32>
    %95 = arith.addf %90, %94 : vector<16x128xf32>
    %c0_43 = arith.constant 0 : index
    %c0_44 = arith.constant 0 : index
    %96 = vector.load %arg14[%c0_43, %c0_44] : memref<512x128xbf16, #tpu.memory_space<vmem>>, vector<512x128xbf16>
    %cst_45 = arith.constant dense<0.000000e+00> : vector<16x128xf32>
    %97 = tpu.matmul %87, %96, %cst_45 {dimension_numbers = #tpu.dot_dimension_numbers<[1], [0], [0], [1], [0, 0, 1, 1], [], []>} : vector<16x512xbf16>, vector<512x128xbf16>, vector<16x128xf32> -> vector<16x128xf32>
    %98 = vector.broadcast %41 : vector<16x1xf32> to vector<16x128xf32>
    %99 = arith.mulf %98, %97 : vector<16x128xf32>
    %100 = arith.addf %95, %99 : vector<16x128xf32>
    %c0_46 = arith.constant 0 : index
    %c0_47 = arith.constant 0 : index
    %101 = vector.load %arg15[%c0_46, %c0_47] : memref<1x128xf32, #tpu.memory_space<vmem>>, vector<1x128xf32>
    %102 = vector.broadcast %101 : vector<1x128xf32> to vector<16x128xf32>
    %103 = arith.addf %100, %102 : vector<16x128xf32>
    %104 = arith.truncf %103 : vector<16x128xf32> to vector<16x128xbf16>
    %cst_48 = arith.constant dense<0.000000e+00> : vector<48x128xf32>
    %105 = tpu.matmul %20, %104, %cst_48 {dimension_numbers = #tpu.dot_dimension_numbers<[1], [0], [0], [1], [0, 0, 1, 1], [], []>} : vector<48x16xbf16>, vector<16x128xbf16>, vector<48x128xf32> -> vector<48x128xf32>
    %cst_49 = arith.constant dense<0.000000e+00> : vector<48x128xf32>
    %106 = tpu.matmul %15, %104, %cst_49 {dimension_numbers = #tpu.dot_dimension_numbers<[1], [0], [0], [1], [0, 0, 1, 1], [], []>} : vector<48x16xbf16>, vector<16x128xbf16>, vector<48x128xf32> -> vector<48x128xf32>
    %107 = tpu.concatenate %105, %106 in 1 : vector<48x128xf32>, vector<48x128xf32> -> vector<48x256xf32>
    %108 = arith.truncf %107 : vector<48x256xf32> to vector<48x256xbf16>
    %c0_50 = arith.constant 0 : index
    %c0_51 = arith.constant 0 : index
    %109 = vector.load %arg16[%c0_50, %c0_51] : memref<256x128xbf16, #tpu.memory_space<vmem>>, vector<256x128xbf16>
    %cst_52 = arith.constant dense<0.000000e+00> : vector<48x128xf32>
    %110 = tpu.matmul %108, %109, %cst_52 {dimension_numbers = #tpu.dot_dimension_numbers<[1], [0], [0], [1], [0, 0, 1, 1], [], []>} : vector<48x256xbf16>, vector<256x128xbf16>, vector<48x128xf32> -> vector<48x128xf32>
    %c0_53 = arith.constant 0 : index
    %c0_54 = arith.constant 0 : index
    %111 = vector.load %arg17[%c0_53, %c0_54] : memref<4x128xbf16, #tpu.memory_space<vmem>>, vector<4x128xbf16>
    %cst_55 = arith.constant dense<0.000000e+00> : vector<48x128xf32>
    %112 = tpu.matmul %4, %111, %cst_55 {dimension_numbers = #tpu.dot_dimension_numbers<[1], [0], [0], [1], [0, 0, 1, 1], [], []>} : vector<48x4xbf16>, vector<4x128xbf16>, vector<48x128xf32> -> vector<48x128xf32>
    %113 = arith.addf %110, %112 : vector<48x128xf32>
    %c0_56 = arith.constant 0 : index
    %c0_57 = arith.constant 0 : index
    %114 = vector.load %arg18[%c0_56, %c0_57] : memref<1x128xf32, #tpu.memory_space<vmem>>, vector<1x128xf32>
    %115 = vector.broadcast %114 : vector<1x128xf32> to vector<48x128xf32>
    %116 = arith.addf %113, %115 : vector<48x128xf32>
    %c0_58 = arith.constant 0 : index
    %c0_59 = arith.constant 0 : index
    %117 = vector.load %arg35[%c0_58, %c0_59] : memref<48x128xf32, #tpu.memory_space<vmem>>, vector<48x128xf32>
    tpu.vector_store %arg35[%c0_58, %c0_59], %116 {strides = array<i32>} : memref<48x128xf32, #tpu.memory_space<vmem>>, vector<48x128xf32>,
    %118 = arith.mulf %116, %116 : vector<48x128xf32>
    %119 = tpu.concatenate %116, %118 in 1 : vector<48x128xf32>, vector<48x128xf32> -> vector<48x256xf32>
    %120 = arith.truncf %119 : vector<48x256xf32> to vector<48x256xbf16>
    %cst_60 = arith.constant dense<0.000000e+00> : vector<16x256xf32>
    %121 = tpu.matmul %26, %120, %cst_60 {dimension_numbers = #tpu.dot_dimension_numbers<[1], [0], [0], [1], [0, 0, 1, 1], [], []>} : vector<16x48xbf16>, vector<48x256xbf16>, vector<16x256xf32> -> vector<16x256xf32>
    %122 = vector.extract_strided_slice %121 {offsets = [0, 0], sizes = [16, 128], strides = [1, 1]} : vector<16x256xf32> to vector<16x128xf32>
    %123 = vector.extract_strided_slice %121 {offsets = [0, 128], sizes = [16, 128], strides = [1, 1]} : vector<16x256xf32> to vector<16x128xf32>
    %124 = vector.broadcast %34 : vector<16x1xf32> to vector<16x128xf32>
    %125 = arith.divf %122, %124 : vector<16x128xf32>
    %126 = vector.broadcast %34 : vector<16x1xf32> to vector<16x128xf32>
    %127 = arith.divf %123, %126 : vector<16x128xf32>
    %128 = arith.mulf %125, %125 : vector<16x128xf32>
    %129 = arith.subf %127, %128 : vector<16x128xf32>
    %cst_61 = arith.constant 0.000000e+00 : f32
    %130 = vector.broadcast %cst_61 : f32 to vector<16x128xf32>
    %131 = arith.maximumf %129, %130 : vector<16x128xf32>
    %cst_62 = arith.constant 9.99999974E-6 : f32
    %132 = vector.broadcast %cst_62 : f32 to vector<16x128xf32>
    %133 = arith.addf %131, %132 : vector<16x128xf32>
    %134 = math.sqrt %133 : vector<16x128xf32>
    %cst_63 = arith.constant -1.000000e+30 : f32
    %135 = vector.broadcast %cst_63 : f32 to vector<16x128xf32>
    %cst_64 = arith.constant 1.000000e+30 : f32
    %136 = vector.broadcast %cst_64 : f32 to vector<16x128xf32>
    %c0_i32_65 = arith.constant 0 : i32
    %c3_i32_66 = arith.constant 3 : i32
    %137 = arith.addi %c0_i32_65, %c3_i32_66 : i32
    %c1_i32_67 = arith.constant 1 : i32
    %138:2 = scf.for %arg36 = %c0_i32_65 to %137 step %c1_i32_67 iter_args(%arg37 = %135, %arg38 = %136) -> (vector<16x128xf32>, vector<16x128xf32>)  : i32 {
      %c16_i32 = arith.constant 16 : i32
      %244 = arith.muli %arg36, %c16_i32 : i32
      %245 = tpu.assume_multiple %244, 16 : i32
      %246 = arith.index_cast %245 : i32 to index
      %c0_130 = arith.constant 0 : index
      %247 = vector.load %arg35[%246, %c0_130] : memref<48x128xf32, #tpu.memory_space<vmem>>, vector<16x128xf32>
      %c0_131 = arith.constant 0 : index
      %248 = arith.index_cast %245 : i32 to index
      %c0_132 = arith.constant 0 : index
      %249 = vector.load %arg6[%c0_131, %248, %c0_132] : memref<1x48x1xi32, #tpu.memory_space<vmem>>, vector<1x16x1xi32>
      %250 = tpu.iota {dimensions = array<i32: 0>} : vector<16x16x1xi32>
      %251 = vector.broadcast %249 : vector<1x16x1xi32> to vector<16x16x1xi32>
      %252 = arith.cmpi eq, %250, %251 : vector<16x16x1xi32>
      %253 = vector.shape_cast %247 : vector<16x128xf32> to vector<1x16x128xf32>
      %cst_133 = arith.constant -1.000000e+30 : f32
      %254 = vector.shape_cast %252 : vector<16x16x1xi1> to vector<16x16x1xi1>
      %255 = vector.broadcast %254 : vector<16x16x1xi1> to vector<16x16x128xi1>
      %256 = vector.shape_cast %253 : vector<1x16x128xf32> to vector<1x16x128xf32>
      %257 = vector.broadcast %256 : vector<1x16x128xf32> to vector<16x16x128xf32>
      %258 = vector.broadcast %cst_133 : f32 to vector<16x16x128xf32>
      %259 = arith.select %255, %257, %258 : vector<16x16x128xi1>, vector<16x16x128xf32>
      %cst_134 = arith.constant dense<0xFF800000> : vector<16x128xf32>
      %260 = vector.multi_reduction <maximumf>, %259, %cst_134 [1] : vector<16x16x128xf32> to vector<16x128xf32>
      %261 = arith.maximumf %arg37, %260 : vector<16x128xf32>
      %cst_135 = arith.constant 1.000000e+30 : f32
      %262 = vector.shape_cast %252 : vector<16x16x1xi1> to vector<16x16x1xi1>
      %263 = vector.broadcast %262 : vector<16x16x1xi1> to vector<16x16x128xi1>
      %264 = vector.shape_cast %253 : vector<1x16x128xf32> to vector<1x16x128xf32>
      %265 = vector.broadcast %264 : vector<1x16x128xf32> to vector<16x16x128xf32>
      %266 = vector.broadcast %cst_135 : f32 to vector<16x16x128xf32>
      %267 = arith.select %263, %265, %266 : vector<16x16x128xi1>, vector<16x16x128xf32>
      %cst_136 = arith.constant dense<0x7F800000> : vector<16x128xf32>
      %268 = vector.multi_reduction <minimumf>, %267, %cst_136 [1] : vector<16x16x128xf32> to vector<16x128xf32>
      %269 = arith.minimumf %arg38, %268 : vector<16x128xf32>
      scf.yield %261, %269 : vector<16x128xf32>, vector<16x128xf32>
    }
    %c3_i32_68 = arith.constant 3 : i32
    %cst_69 = arith.constant 0.000000e+00 : f32
    %139 = vector.shape_cast %43 : vector<16x1xi1> to vector<16x1xi1>
    %140 = vector.broadcast %139 : vector<16x1xi1> to vector<16x128xi1>
    %141 = vector.broadcast %cst_69 : f32 to vector<16x128xf32>
    %142 = arith.select %140, %138#0, %141 : vector<16x128xi1>, vector<16x128xf32>
    %cst_70 = arith.constant 0.000000e+00 : f32
    %143 = vector.shape_cast %43 : vector<16x1xi1> to vector<16x1xi1>
    %144 = vector.broadcast %143 : vector<16x1xi1> to vector<16x128xi1>
    %145 = vector.broadcast %cst_70 : f32 to vector<16x128xf32>
    %146 = arith.select %144, %138#1, %145 : vector<16x128xi1>, vector<16x128xf32>
    %147 = tpu.concatenate %125, %146, %142, %134 in 1 : vector<16x128xf32>, vector<16x128xf32>, vector<16x128xf32>, vector<16x128xf32> -> vector<16x512xf32>
    %148 = arith.truncf %147 : vector<16x512xf32> to vector<16x512xbf16>
    %149 = tpu.concatenate %104, %148 in 1 : vector<16x128xbf16>, vector<16x512xbf16> -> vector<16x640xbf16>
    %c0_71 = arith.constant 0 : index
    %c0_72 = arith.constant 0 : index
    %150 = vector.load %arg19[%c0_71, %c0_72] : memref<640x128xbf16, #tpu.memory_space<vmem>>, vector<640x128xbf16>
    %cst_73 = arith.constant dense<0.000000e+00> : vector<16x128xf32>
    %151 = tpu.matmul %149, %150, %cst_73 {dimension_numbers = #tpu.dot_dimension_numbers<[1], [0], [0], [1], [0, 0, 1, 1], [], []>} : vector<16x640xbf16>, vector<640x128xbf16>, vector<16x128xf32> -> vector<16x128xf32>
    %c0_74 = arith.constant 0 : index
    %c0_75 = arith.constant 0 : index
    %152 = vector.load %arg20[%c0_74, %c0_75] : memref<512x128xbf16, #tpu.memory_space<vmem>>, vector<512x128xbf16>
    %cst_76 = arith.constant dense<0.000000e+00> : vector<16x128xf32>
    %153 = tpu.matmul %148, %152, %cst_76 {dimension_numbers = #tpu.dot_dimension_numbers<[1], [0], [0], [1], [0, 0, 1, 1], [], []>} : vector<16x512xbf16>, vector<512x128xbf16>, vector<16x128xf32> -> vector<16x128xf32>
    %154 = vector.broadcast %39 : vector<16x1xf32> to vector<16x128xf32>
    %155 = arith.mulf %154, %153 : vector<16x128xf32>
    %156 = arith.addf %151, %155 : vector<16x128xf32>
    %c0_77 = arith.constant 0 : index
    %c0_78 = arith.constant 0 : index
    %157 = vector.load %arg21[%c0_77, %c0_78] : memref<512x128xbf16, #tpu.memory_space<vmem>>, vector<512x128xbf16>
    %cst_79 = arith.constant dense<0.000000e+00> : vector<16x128xf32>
    %158 = tpu.matmul %148, %157, %cst_79 {dimension_numbers = #tpu.dot_dimension_numbers<[1], [0], [0], [1], [0, 0, 1, 1], [], []>} : vector<16x512xbf16>, vector<512x128xbf16>, vector<16x128xf32> -> vector<16x128xf32>
    %159 = vector.broadcast %41 : vector<16x1xf32> to vector<16x128xf32>
    %160 = arith.mulf %159, %158 : vector<16x128xf32>
    %161 = arith.addf %156, %160 : vector<16x128xf32>
    %c0_80 = arith.constant 0 : index
    %c0_81 = arith.constant 0 : index
    %162 = vector.load %arg22[%c0_80, %c0_81] : memref<1x128xf32, #tpu.memory_space<vmem>>, vector<1x128xf32>
    %163 = vector.broadcast %162 : vector<1x128xf32> to vector<16x128xf32>
    %164 = arith.addf %161, %163 : vector<16x128xf32>
    %165 = arith.truncf %164 : vector<16x128xf32> to vector<16x128xbf16>
    %cst_82 = arith.constant dense<0.000000e+00> : vector<48x128xf32>
    %166 = tpu.matmul %20, %165, %cst_82 {dimension_numbers = #tpu.dot_dimension_numbers<[1], [0], [0], [1], [0, 0, 1, 1], [], []>} : vector<48x16xbf16>, vector<16x128xbf16>, vector<48x128xf32> -> vector<48x128xf32>
    %cst_83 = arith.constant dense<0.000000e+00> : vector<48x128xf32>
    %167 = tpu.matmul %15, %165, %cst_83 {dimension_numbers = #tpu.dot_dimension_numbers<[1], [0], [0], [1], [0, 0, 1, 1], [], []>} : vector<48x16xbf16>, vector<16x128xbf16>, vector<48x128xf32> -> vector<48x128xf32>
    %168 = tpu.concatenate %166, %167 in 1 : vector<48x128xf32>, vector<48x128xf32> -> vector<48x256xf32>
    %169 = arith.truncf %168 : vector<48x256xf32> to vector<48x256xbf16>
    %c0_84 = arith.constant 0 : index
    %c0_85 = arith.constant 0 : index
    %170 = vector.load %arg23[%c0_84, %c0_85] : memref<256x128xbf16, #tpu.memory_space<vmem>>, vector<256x128xbf16>
    %cst_86 = arith.constant dense<0.000000e+00> : vector<48x128xf32>
    %171 = tpu.matmul %169, %170, %cst_86 {dimension_numbers = #tpu.dot_dimension_numbers<[1], [0], [0], [1], [0, 0, 1, 1], [], []>} : vector<48x256xbf16>, vector<256x128xbf16>, vector<48x128xf32> -> vector<48x128xf32>
    %c0_87 = arith.constant 0 : index
    %c0_88 = arith.constant 0 : index
    %172 = vector.load %arg24[%c0_87, %c0_88] : memref<4x128xbf16, #tpu.memory_space<vmem>>, vector<4x128xbf16>
    %cst_89 = arith.constant dense<0.000000e+00> : vector<48x128xf32>
    %173 = tpu.matmul %4, %172, %cst_89 {dimension_numbers = #tpu.dot_dimension_numbers<[1], [0], [0], [1], [0, 0, 1, 1], [], []>} : vector<48x4xbf16>, vector<4x128xbf16>, vector<48x128xf32> -> vector<48x128xf32>
    %174 = arith.addf %171, %173 : vector<48x128xf32>
    %c0_90 = arith.constant 0 : index
    %c0_91 = arith.constant 0 : index
    %175 = vector.load %arg25[%c0_90, %c0_91] : memref<1x128xf32, #tpu.memory_space<vmem>>, vector<1x128xf32>
    %176 = vector.broadcast %175 : vector<1x128xf32> to vector<48x128xf32>
    %177 = arith.addf %174, %176 : vector<48x128xf32>
    %c0_92 = arith.constant 0 : index
    %c0_93 = arith.constant 0 : index
    %178 = vector.load %arg35[%c0_92, %c0_93] : memref<48x128xf32, #tpu.memory_space<vmem>>, vector<48x128xf32>
    tpu.vector_store %arg35[%c0_92, %c0_93], %177 {strides = array<i32>} : memref<48x128xf32, #tpu.memory_space<vmem>>, vector<48x128xf32>,
    %179 = arith.mulf %177, %177 : vector<48x128xf32>
    %180 = tpu.concatenate %177, %179 in 1 : vector<48x128xf32>, vector<48x128xf32> -> vector<48x256xf32>
    %181 = arith.truncf %180 : vector<48x256xf32> to vector<48x256xbf16>
    %cst_94 = arith.constant dense<0.000000e+00> : vector<16x256xf32>
    %182 = tpu.matmul %26, %181, %cst_94 {dimension_numbers = #tpu.dot_dimension_numbers<[1], [0], [0], [1], [0, 0, 1, 1], [], []>} : vector<16x48xbf16>, vector<48x256xbf16>, vector<16x256xf32> -> vector<16x256xf32>
    %183 = vector.extract_strided_slice %182 {offsets = [0, 0], sizes = [16, 128], strides = [1, 1]} : vector<16x256xf32> to vector<16x128xf32>
    %184 = vector.extract_strided_slice %182 {offsets = [0, 128], sizes = [16, 128], strides = [1, 1]} : vector<16x256xf32> to vector<16x128xf32>
    %185 = vector.broadcast %34 : vector<16x1xf32> to vector<16x128xf32>
    %186 = arith.divf %183, %185 : vector<16x128xf32>
    %187 = vector.broadcast %34 : vector<16x1xf32> to vector<16x128xf32>
    %188 = arith.divf %184, %187 : vector<16x128xf32>
    %189 = arith.mulf %186, %186 : vector<16x128xf32>
    %190 = arith.subf %188, %189 : vector<16x128xf32>
    %cst_95 = arith.constant 0.000000e+00 : f32
    %191 = vector.broadcast %cst_95 : f32 to vector<16x128xf32>
    %192 = arith.maximumf %190, %191 : vector<16x128xf32>
    %cst_96 = arith.constant 9.99999974E-6 : f32
    %193 = vector.broadcast %cst_96 : f32 to vector<16x128xf32>
    %194 = arith.addf %192, %193 : vector<16x128xf32>
    %195 = math.sqrt %194 : vector<16x128xf32>
    %cst_97 = arith.constant -1.000000e+30 : f32
    %196 = vector.broadcast %cst_97 : f32 to vector<16x128xf32>
    %cst_98 = arith.constant 1.000000e+30 : f32
    %197 = vector.broadcast %cst_98 : f32 to vector<16x128xf32>
    %c0_i32_99 = arith.constant 0 : i32
    %c3_i32_100 = arith.constant 3 : i32
    %198 = arith.addi %c0_i32_99, %c3_i32_100 : i32
    %c1_i32_101 = arith.constant 1 : i32
    %199:2 = scf.for %arg36 = %c0_i32_99 to %198 step %c1_i32_101 iter_args(%arg37 = %196, %arg38 = %197) -> (vector<16x128xf32>, vector<16x128xf32>)  : i32 {
      %c16_i32 = arith.constant 16 : i32
      %244 = arith.muli %arg36, %c16_i32 : i32
      %245 = tpu.assume_multiple %244, 16 : i32
      %246 = arith.index_cast %245 : i32 to index
      %c0_130 = arith.constant 0 : index
      %247 = vector.load %arg35[%246, %c0_130] : memref<48x128xf32, #tpu.memory_space<vmem>>, vector<16x128xf32>
      %c0_131 = arith.constant 0 : index
      %248 = arith.index_cast %245 : i32 to index
      %c0_132 = arith.constant 0 : index
      %249 = vector.load %arg6[%c0_131, %248, %c0_132] : memref<1x48x1xi32, #tpu.memory_space<vmem>>, vector<1x16x1xi32>
      %250 = tpu.iota {dimensions = array<i32: 0>} : vector<16x16x1xi32>
      %251 = vector.broadcast %249 : vector<1x16x1xi32> to vector<16x16x1xi32>
      %252 = arith.cmpi eq, %250, %251 : vector<16x16x1xi32>
      %253 = vector.shape_cast %247 : vector<16x128xf32> to vector<1x16x128xf32>
      %cst_133 = arith.constant -1.000000e+30 : f32
      %254 = vector.shape_cast %252 : vector<16x16x1xi1> to vector<16x16x1xi1>
      %255 = vector.broadcast %254 : vector<16x16x1xi1> to vector<16x16x128xi1>
      %256 = vector.shape_cast %253 : vector<1x16x128xf32> to vector<1x16x128xf32>
      %257 = vector.broadcast %256 : vector<1x16x128xf32> to vector<16x16x128xf32>
      %258 = vector.broadcast %cst_133 : f32 to vector<16x16x128xf32>
      %259 = arith.select %255, %257, %258 : vector<16x16x128xi1>, vector<16x16x128xf32>
      %cst_134 = arith.constant dense<0xFF800000> : vector<16x128xf32>
      %260 = vector.multi_reduction <maximumf>, %259, %cst_134 [1] : vector<16x16x128xf32> to vector<16x128xf32>
      %261 = arith.maximumf %arg37, %260 : vector<16x128xf32>
      %cst_135 = arith.constant 1.000000e+30 : f32
      %262 = vector.shape_cast %252 : vector<16x16x1xi1> to vector<16x16x1xi1>
      %263 = vector.broadcast %262 : vector<16x16x1xi1> to vector<16x16x128xi1>
      %264 = vector.shape_cast %253 : vector<1x16x128xf32> to vector<1x16x128xf32>
      %265 = vector.broadcast %264 : vector<1x16x128xf32> to vector<16x16x128xf32>
      %266 = vector.broadcast %cst_135 : f32 to vector<16x16x128xf32>
      %267 = arith.select %263, %265, %266 : vector<16x16x128xi1>, vector<16x16x128xf32>
      %cst_136 = arith.constant dense<0x7F800000> : vector<16x128xf32>
      %268 = vector.multi_reduction <minimumf>, %267, %cst_136 [1] : vector<16x16x128xf32> to vector<16x128xf32>
      %269 = arith.minimumf %arg38, %268 : vector<16x128xf32>
      scf.yield %261, %269 : vector<16x128xf32>, vector<16x128xf32>
    }
    %c3_i32_102 = arith.constant 3 : i32
    %cst_103 = arith.constant 0.000000e+00 : f32
    %200 = vector.shape_cast %43 : vector<16x1xi1> to vector<16x1xi1>
    %201 = vector.broadcast %200 : vector<16x1xi1> to vector<16x128xi1>
    %202 = vector.broadcast %cst_103 : f32 to vector<16x128xf32>
    %203 = arith.select %201, %199#0, %202 : vector<16x128xi1>, vector<16x128xf32>
    %cst_104 = arith.constant 0.000000e+00 : f32
    %204 = vector.shape_cast %43 : vector<16x1xi1> to vector<16x1xi1>
    %205 = vector.broadcast %204 : vector<16x1xi1> to vector<16x128xi1>
    %206 = vector.broadcast %cst_104 : f32 to vector<16x128xf32>
    %207 = arith.select %205, %199#1, %206 : vector<16x128xi1>, vector<16x128xf32>
    %208 = tpu.concatenate %186, %207, %203, %195 in 1 : vector<16x128xf32>, vector<16x128xf32>, vector<16x128xf32>, vector<16x128xf32> -> vector<16x512xf32>
    %209 = arith.truncf %208 : vector<16x512xf32> to vector<16x512xbf16>
    %210 = tpu.concatenate %165, %209 in 1 : vector<16x128xbf16>, vector<16x512xbf16> -> vector<16x640xbf16>
    %c0_105 = arith.constant 0 : index
    %c0_106 = arith.constant 0 : index
    %211 = vector.load %arg26[%c0_105, %c0_106] : memref<640x128xbf16, #tpu.memory_space<vmem>>, vector<640x128xbf16>
    %cst_107 = arith.constant dense<0.000000e+00> : vector<16x128xf32>
    %212 = tpu.matmul %210, %211, %cst_107 {dimension_numbers = #tpu.dot_dimension_numbers<[1], [0], [0], [1], [0, 0, 1, 1], [], []>} : vector<16x640xbf16>, vector<640x128xbf16>, vector<16x128xf32> -> vector<16x128xf32>
    %c0_108 = arith.constant 0 : index
    %c0_109 = arith.constant 0 : index
    %213 = vector.load %arg27[%c0_108, %c0_109] : memref<512x128xbf16, #tpu.memory_space<vmem>>, vector<512x128xbf16>
    %cst_110 = arith.constant dense<0.000000e+00> : vector<16x128xf32>
    %214 = tpu.matmul %209, %213, %cst_110 {dimension_numbers = #tpu.dot_dimension_numbers<[1], [0], [0], [1], [0, 0, 1, 1], [], []>} : vector<16x512xbf16>, vector<512x128xbf16>, vector<16x128xf32> -> vector<16x128xf32>
    %215 = vector.broadcast %39 : vector<16x1xf32> to vector<16x128xf32>
    %216 = arith.mulf %215, %214 : vector<16x128xf32>
    %217 = arith.addf %212, %216 : vector<16x128xf32>
    %c0_111 = arith.constant 0 : index
    %c0_112 = arith.constant 0 : index
    %218 = vector.load %arg28[%c0_111, %c0_112] : memref<512x128xbf16, #tpu.memory_space<vmem>>, vector<512x128xbf16>
    %cst_113 = arith.constant dense<0.000000e+00> : vector<16x128xf32>
    %219 = tpu.matmul %209, %218, %cst_113 {dimension_numbers = #tpu.dot_dimension_numbers<[1], [0], [0], [1], [0, 0, 1, 1], [], []>} : vector<16x512xbf16>, vector<512x128xbf16>, vector<16x128xf32> -> vector<16x128xf32>
    %220 = vector.broadcast %41 : vector<16x1xf32> to vector<16x128xf32>
    %221 = arith.mulf %220, %219 : vector<16x128xf32>
    %222 = arith.addf %217, %221 : vector<16x128xf32>
    %c0_114 = arith.constant 0 : index
    %c0_115 = arith.constant 0 : index
    %223 = vector.load %arg29[%c0_114, %c0_115] : memref<1x128xf32, #tpu.memory_space<vmem>>, vector<1x128xf32>
    %224 = vector.broadcast %223 : vector<1x128xf32> to vector<16x128xf32>
    %225 = arith.addf %222, %224 : vector<16x128xf32>
    %226 = arith.truncf %225 : vector<16x128xf32> to vector<16x128xbf16>
    %227 = tpu.concatenate %104, %165, %226 in 1 : vector<16x128xbf16>, vector<16x128xbf16>, vector<16x128xbf16> -> vector<16x384xbf16>
    %cst_116 = arith.constant dense<0.000000e+00> : vector<2x384xf32>
    %228 = tpu.matmul %32, %227, %cst_116 {dimension_numbers = #tpu.dot_dimension_numbers<[1], [0], [0], [1], [0, 0, 1, 1], [], []>} : vector<2x16xbf16>, vector<16x384xbf16>, vector<2x384xf32> -> vector<2x384xf32>
    %229 = arith.truncf %228 : vector<2x384xf32> to vector<2x384xbf16>
    %c0_117 = arith.constant 0 : index
    %c0_118 = arith.constant 0 : index
    %230 = vector.load %arg30[%c0_117, %c0_118] : memref<384x128xbf16, #tpu.memory_space<vmem>>, vector<384x128xbf16>
    %cst_119 = arith.constant dense<0.000000e+00> : vector<2x128xf32>
    %231 = tpu.matmul %229, %230, %cst_119 {dimension_numbers = #tpu.dot_dimension_numbers<[1], [0], [0], [1], [0, 0, 1, 1], [], []>} : vector<2x384xbf16>, vector<384x128xbf16>, vector<2x128xf32> -> vector<2x128xf32>
    %c0_120 = arith.constant 0 : index
    %c0_121 = arith.constant 0 : index
    %232 = vector.load %arg31[%c0_120, %c0_121] : memref<1x128xf32, #tpu.memory_space<vmem>>, vector<1x128xf32>
    %233 = vector.broadcast %232 : vector<1x128xf32> to vector<2x128xf32>
    %234 = arith.addf %231, %233 : vector<2x128xf32>
    %cst_122 = arith.constant 0.000000e+00 : f32
    %235 = vector.broadcast %cst_122 : f32 to vector<2x128xf32>
    %236 = arith.maximumf %234, %235 : vector<2x128xf32>
    %237 = arith.truncf %236 : vector<2x128xf32> to vector<2x128xbf16>
    %c0_123 = arith.constant 0 : index
    %c0_124 = arith.constant 0 : index
    %238 = vector.load %arg32[%c0_123, %c0_124] : memref<128x128xbf16, #tpu.memory_space<vmem>>, vector<128x128xbf16>
    %cst_125 = arith.constant dense<0.000000e+00> : vector<2x128xf32>
    %239 = tpu.matmul %237, %238, %cst_125 {dimension_numbers = #tpu.dot_dimension_numbers<[1], [0], [0], [1], [0, 0, 1, 1], [], []>} : vector<2x128xbf16>, vector<128x128xbf16>, vector<2x128xf32> -> vector<2x128xf32>
    %c0_126 = arith.constant 0 : index
    %c0_127 = arith.constant 0 : index
    %240 = vector.load %arg33[%c0_126, %c0_127] : memref<1x128xf32, #tpu.memory_space<vmem>>, vector<1x128xf32>
    %241 = vector.broadcast %240 : vector<1x128xf32> to vector<2x128xf32>
    %242 = arith.addf %239, %241 : vector<2x128xf32>
    %c0_128 = arith.constant 0 : index
    %c0_129 = arith.constant 0 : index
    %243 = vector.load %arg34[%c0_128, %c0_129] : memref<2x128xf32, #tpu.memory_space<vmem>>, vector<2x128xf32>
    tpu.vector_store %arg34[%c0_128, %c0_129], %242 {strides = array<i32>} : memref<2x128xf32, #tpu.memory_space<vmem>>, vector<2x128xf32>,
    return
  }
}

</mosaic_0001>

<llo_original>
// kernel: tpu_custom_call.1
$region0: #{tpu_custom_call.1}
  #allocation0 [shape = 'u32[]', space=smem, size = 0x4, offset = 0x4, fixed_abs, tag = 'smem constant byte address 0x4 - core index']
  #allocation1 [shape = 'u32[144,128]{1,0:T(1,128)}', space=vmem, size = 0x12000, scoped, tag = 'internal scratch']
  #allocation2 [shape = 'f32[48,128]{1,0:T(8,128)}', space=vmem, size = 0x6000, scoped, tag = 'scratch operand']
  #allocation3 [shape = 'f32[1,1]{1,0:T(1,128)S(6)}', space=smem, size = 0x200, scoped, tag = 'scoped memory for tpu_custom_call.1']
  %s0 = inlined_call_operand.smem [shape: u32[35], index: -1, kind: input, shape index: {}]
  %s1 = sld [smem:[%s0]]
  %s2 = scalar_lea.smem %s0, 1
  %s3 = sld [smem:[%s2]]
  %s4 = scalar_lea.smem %s0, 2
  %s5 = sld [smem:[%s4]]
  %s6 = scalar_lea.smem %s0, 3
  %s7 = sld [smem:[%s6]]
  %s8 = scalar_lea.smem %s0, 4
  %s9 = sld [smem:[%s8]]
  %s10 = scalar_lea.smem %s0, 5
  %s11 = sld [smem:[%s10]]
  %s12 = scalar_lea.smem %s0, 6
  %s13 = sld [smem:[%s12]]
  %s14 = scalar_lea.smem %s0, 7
  %s15 = sld [smem:[%s14]]
  %s16 = scalar_lea.smem %s0, 8
  %s17 = sld [smem:[%s16]]
  %s18 = scalar_lea.smem %s0, 9
  %s19 = sld [smem:[%s18]]
  %s20 = scalar_lea.smem %s0, 10
  %s21 = sld [smem:[%s20]]
  %s22 = scalar_lea.smem %s0, 11
  %s23 = sld [smem:[%s22]]
  %s24 = scalar_lea.smem %s0, 12
  %s25 = sld [smem:[%s24]]
  %s26 = scalar_lea.smem %s0, 13
  %s27 = sld [smem:[%s26]]
  %s28 = scalar_lea.smem %s0, 14
  %s29 = sld [smem:[%s28]]
  %s30 = scalar_lea.smem %s0, 15
  %s31 = sld [smem:[%s30]]
  %s32 = scalar_lea.smem %s0, 16
  %s33 = sld [smem:[%s32]]
  %s34 = scalar_lea.smem %s0, 17
  %s35 = sld [smem:[%s34]]
  %s36 = scalar_lea.smem %s0, 18
  %s37 = sld [smem:[%s36]]
  %s38 = scalar_lea.smem %s0, 19
  %s39 = sld [smem:[%s38]]
  %s40 = scalar_lea.smem %s0, 20
  %s41 = sld [smem:[%s40]]
  %s42 = scalar_lea.smem %s0, 21
  %s43 = sld [smem:[%s42]]
  %s44 = scalar_lea.smem %s0, 22
  %s45 = sld [smem:[%s44]]
  %s46 = scalar_lea.smem %s0, 23
  %s47 = sld [smem:[%s46]]
  %s48 = scalar_lea.smem %s0, 24
  %s49 = sld [smem:[%s48]]
  %s50 = scalar_lea.smem %s0, 25
  %s51 = sld [smem:[%s50]]
  %s52 = scalar_lea.smem %s0, 26
  %s53 = sld [smem:[%s52]]
  %s54 = scalar_lea.smem %s0, 27
  %s55 = sld [smem:[%s54]]
  %s56 = scalar_lea.smem %s0, 28
  %s57 = sld [smem:[%s56]]
  %s58 = scalar_lea.smem %s0, 29
  %s59 = sld [smem:[%s58]]
  %s60 = scalar_lea.smem %s0, 30
  %s61 = sld [smem:[%s60]]
  %s62 = scalar_lea.smem %s0, 31
  %s63 = sld [smem:[%s62]]
  %s64 = scalar_lea.smem %s0, 32
  %s65 = sld [smem:[%s64]]
  %s66 = scalar_lea.smem %s0, 33
  %s67 = sld [smem:[%s66]]
  %s68 = scalar_lea.smem %s0, 34
  %s69 = sld [smem:[%s68]]
  %s70 = sld [smem:[#allocation0]]
  $region239: #{tpu_custom_call.1} parent=0
    _
  %s72 = ssub.s32 1, %s70
  %s73 = scalar_select 0, %s72, %s70
  %74 = sst [smem:[#allocation3]] %s1
  $region1: #{tpu_custom_call.1} parent=0
    #allocation4 [shape = 'u8[8192]{0}', space=vmem, size = 0x2000, scoped, tag = 'input window, operand 1, single buffered']
    #allocation5 [shape = 's32[1]{0}', space=sflag, size = 0x4, scoped, tag = 'scoped memory for tpu_custom_call.1']
    #allocation6 [shape = 's32[1]{0}', space=sflag, size = 0x4, scoped, tag = 'scoped memory for tpu_custom_call.1']
    #allocation7 [shape = 'u8[65536]{0}', space=vmem, size = 0x10000, scoped, tag = 'input window, operand 9, single buffered']
    #allocation8 [shape = 's32[1]{0}', space=sflag, size = 0x4, scoped, tag = 'scoped memory for tpu_custom_call.1']
    #allocation9 [shape = 'u8[163840]{0}', space=vmem, size = 0x28000, scoped, tag = 'input window, operand 12, single buffered']
    #allocation10 [shape = 'u8[131072]{0}', space=vmem, size = 0x20000, scoped, tag = 'input window, operand 13, single buffered']
    #allocation11 [shape = 's32[1]{0}', space=sflag, size = 0x4, scoped, tag = 'scoped memory for tpu_custom_call.1']
    #allocation12 [shape = 'u8[131072]{0}', space=vmem, size = 0x20000, scoped, tag = 'input window, operand 14, single buffered']
    #allocation13 [shape = 'u8[512]{0}', space=vmem, size = 0x400, scoped, tag = 'input window, operand 15, single buffered']
    #allocation14 [shape = 's32[1]{0}', space=sflag, size = 0x4, scoped, tag = 'scoped memory for tpu_custom_call.1']
    #allocation15 [shape = 'u8[65536]{0}', space=vmem, size = 0x10000, scoped, tag = 'input window, operand 16, single buffered']
    #allocation16 [shape = 'u8[512]{0}', space=vmem, size = 0x400, scoped, tag = 'input window, operand 18, single buffered']
    #allocation17 [shape = 's32[1]{0}', space=sflag, size = 0x4, scoped, tag = 'scoped memory for tpu_custom_call.1']
    #allocation18 [shape = 'u8[163840]{0}', space=vmem, size = 0x28000, scoped, tag = 'input window, operand 19, single buffered']
    #allocation19 [shape = 'u8[131072]{0}', space=vmem, size = 0x20000, scoped, tag = 'input window, operand 20, single buffered']
    #allocation20 [shape = 's32[1]{0}', space=sflag, size = 0x4, scoped, tag = 'scoped memory for tpu_custom_call.1']
    #allocation21 [shape = 'u8[131072]{0}', space=vmem, size = 0x20000, scoped, tag = 'input window, operand 21, single buffered']
    #allocation22 [shape = 'u8[512]{0}', space=vmem, size = 0x400, scoped, tag = 'input window, operand 22, single buffered']
    #allocation23 [shape = 's32[1]{0}', space=sflag, size = 0x4, scoped, tag = 'scoped memory for tpu_custom_call.1']
    #allocation24 [shape = 'u8[65536]{0}', space=vmem, size = 0x10000, scoped, tag = 'input window, operand 23, single buffered']
    #allocation25 [shape = 'u8[512]{0}', space=vmem, size = 0x400, scoped, tag = 'input window, operand 25, single buffered']
    #allocation26 [shape = 's32[1]{0}', space=sflag, size = 0x4, scoped, tag = 'scoped memory for tpu_custom_call.1']
    #allocation27 [shape = 'u8[163840]{0}', space=vmem, size = 0x28000, scoped, tag = 'input window, operand 26, single buffered']
    #allocation28 [shape = 'u8[131072]{0}', space=vmem, size = 0x20000, scoped, tag = 'input window, operand 28, single buffered']
    #allocation29 [shape = 's32[1]{0}', space=sflag, size = 0x4, scoped, tag = 'scoped memory for tpu_custom_call.1']
    #allocation30 [shape = 'u8[98304]{0}', space=vmem, size = 0x18000, scoped, tag = 'input window, operand 30, single buffered']
    #allocation31 [shape = 'u8[32768]{0}', space=vmem, size = 0x8000, scoped, tag = 'input window, operand 32, single buffered']
    #allocation32 [shape = 's32[1]{0}', space=sflag, size = 0x4, scoped, tag = 'scoped memory for tpu_custom_call.1']
    #allocation33 [shape = 'u8[1024]{0}', space=vmem, size = 0x400, scoped, tag = 'output window, operand 0, single buffered']
    %75 = vsyncpa [#allocation5], 0
    %76 = vsyncpa [#allocation8], 0
    %77 = vsyncpa [#allocation11], 0
    %78 = vsyncpa [#allocation14], 0
    %79 = vsyncpa [#allocation17], 0
    %80 = vsyncpa [#allocation20], 0
    %81 = vsyncpa [#allocation23], 0
    %82 = vsyncpa [#allocation26], 0
    %83 = vsyncpa [#allocation29], 0
    %84 = vsyncpa [#allocation32], 0
    %85 = vsyncpa [#allocation6], 0
    // Predicated region
    $region2: #{tpu_custom_call.1} parent=1 // pred_check
      _
    $region3: #{tpu_custom_call.1} parent=1 // pred_check_branch
      %87 = sbr.rel (0) target = $region5
    $region4: #{tpu_custom_call.1} parent=1 // pred_region
      _
    $region5: #{tpu_custom_call.1} parent=1 // pred_fallthru
      _
    // Predicated region
    $region6: #{tpu_custom_call.1} parent=1 // pred_check
      _
    $region7: #{tpu_custom_call.1} parent=1 // pred_check_branch
      %89 = sbr.rel (0) target = $region9
    $region8: #{tpu_custom_call.1} parent=1 // pred_region
      %s91 = ssub.s32 256, 256
      %92 = vsyncadd [#allocation5], %s91
      %s93 = sshll.u32 [#allocation4], 4
      %s94 = int_to_ptr.vmem [resolvable:$true] %s93
      %99 = dma.hbm_to_vmem [thread:$0]  %s3, 256, %s94, [#allocation5], 128, 128, 8
    $region9: #{tpu_custom_call.1} parent=1 // pred_fallthru
      _
    // Predicated region
    $region10: #{tpu_custom_call.1} parent=1 // pred_check
      _
    $region11: #{tpu_custom_call.1} parent=1 // pred_check_branch
      %101 = sbr.rel (0) target = $region13
    $region12: #{tpu_custom_call.1} parent=1 // pred_region
      _
    $region13: #{tpu_custom_call.1} parent=1 // pred_fallthru
      _
    // Predicated region
    $region14: #{tpu_custom_call.1} parent=1 // pred_check
      _
    $region15: #{tpu_custom_call.1} parent=1 // pred_check_branch
      %103 = sbr.rel (0) target = $region17
    $region16: #{tpu_custom_call.1} parent=1 // pred_region
      _
    $region17: #{tpu_custom_call.1} parent=1 // pred_fallthru
      _
    // Predicated region
    $region18: #{tpu_custom_call.1} parent=1 // pred_check
      _
    $region19: #{tpu_custom_call.1} parent=1 // pred_check_branch
      %105 = sbr.rel (0) target = $region21
    $region20: #{tpu_custom_call.1} parent=1 // pred_region
      _
    $region21: #{tpu_custom_call.1} parent=1 // pred_fallthru
      _
    // Predicated region
    $region22: #{tpu_custom_call.1} parent=1 // pred_check
      _
    $region23: #{tpu_custom_call.1} parent=1 // pred_check_branch
      %107 = sbr.rel (0) target = $region25
    $region24: #{tpu_custom_call.1} parent=1 // pred_region
      _
    $region25: #{tpu_custom_call.1} parent=1 // pred_fallthru
      _
    // Predicated region
    $region26: #{tpu_custom_call.1} parent=1 // pred_check
      _
    $region27: #{tpu_custom_call.1} parent=1 // pred_check_branch
      %109 = sbr.rel (0) target = $region29
    $region28: #{tpu_custom_call.1} parent=1 // pred_region
      _
    $region29: #{tpu_custom_call.1} parent=1 // pred_fallthru
      _
    // Predicated region
    $region30: #{tpu_custom_call.1} parent=1 // pred_check
      _
    $region31: #{tpu_custom_call.1} parent=1 // pred_check_branch
      %111 = sbr.rel (0) target = $region33
    $region32: #{tpu_custom_call.1} parent=1 // pred_region
      _
    $region33: #{tpu_custom_call.1} parent=1 // pred_fallthru
      _
    // Predicated region
    $region34: #{tpu_custom_call.1} parent=1 // pred_check
      _
    $region35: #{tpu_custom_call.1} parent=1 // pred_check_branch
      %113 = sbr.rel (0) target = $region37
    $region36: #{tpu_custom_call.1} parent=1 // pred_region
      _
    $region37: #{tpu_custom_call.1} parent=1 // pred_fallthru
      _
    // Predicated region
    $region38: #{tpu_custom_call.1} parent=1 // pred_check
      _
    $region39: #{tpu_custom_call.1} parent=1 // pred_check_branch
      %115 = sbr.rel (0) target = $region41
    $region40: #{tpu_custom_call.1} parent=1 // pred_region
      %s117 = ssub.s32 2048, 2048
      %118 = vsyncadd [#allocation8], %s117
      %s119 = sshll.u32 [#allocation7], 4
      %s120 = int_to_ptr.vmem [resolvable:$true] %s119
      %125 = dma.hbm_to_vmem [thread:$0]  %s19, 2048, %s120, [#allocation8], 64, 64, 4
    $region41: #{tpu_custom_call.1} parent=1 // pred_fallthru
      _
    // Predicated region
    $region42: #{tpu_custom_call.1} parent=1 // pred_check
      _
    $region43: #{tpu_custom_call.1} parent=1 // pred_check_branch
      %127 = sbr.rel (0) target = $region45
    $region44: #{tpu_custom_call.1} parent=1 // pred_region
      _
    $region45: #{tpu_custom_call.1} parent=1 // pred_fallthru
      _
    // Predicated region
    $region46: #{tpu_custom_call.1} parent=1 // pred_check
      _
    $region47: #{tpu_custom_call.1} parent=1 // pred_check_branch
      %129 = sbr.rel (0) target = $region49
    $region48: #{tpu_custom_call.1} parent=1 // pred_region
      _
    $region49: #{tpu_custom_call.1} parent=1 // pred_fallthru
      _
    // Predicated region
    $region50: #{tpu_custom_call.1} parent=1 // pred_check
      _
    $region51: #{tpu_custom_call.1} parent=1 // pred_check_branch
      %131 = sbr.rel (0) target = $region53
    $region52: #{tpu_custom_call.1} parent=1 // pred_region
      %s133 = ssub.s32 5120, 5120
      %134 = vsyncadd [#allocation8], %s133
      %s135 = sshll.u32 [#allocation9], 4
      %s136 = int_to_ptr.vmem [resolvable:$true] %s135
      %141 = dma.hbm_to_vmem [thread:$0]  %s25, 5120, %s136, [#allocation8], 64, 64, 4
    $region53: #{tpu_custom_call.1} parent=1 // pred_fallthru
      _
    // Predicated region
    $region54: #{tpu_custom_call.1} parent=1 // pred_check
      _
    $region55: #{tpu_custom_call.1} parent=1 // pred_check_branch
      %143 = sbr.rel (0) target = $region57
    $region56: #{tpu_custom_call.1} parent=1 // pred_region
      %s145 = ssub.s32 4096, 4096
      %146 = vsyncadd [#allocation11], %s145
      %s147 = sshll.u32 [#allocation10], 4
      %s148 = int_to_ptr.vmem [resolvable:$true] %s147
      %153 = dma.hbm_to_vmem [thread:$0]  %s27, 4096, %s148, [#allocation11], 64, 64, 4
    $region57: #{tpu_custom_call.1} parent=1 // pred_fallthru
      _
    // Predicated region
    $region58: #{tpu_custom_call.1} parent=1 // pred_check
      _
    $region59: #{tpu_custom_call.1} parent=1 // pred_check_branch
      %155 = sbr.rel (0) target = $region61
    $region60: #{tpu_custom_call.1} parent=1 // pred_region
      %s157 = ssub.s32 4096, 4096
      %158 = vsyncadd [#allocation11], %s157
      %s159 = sshll.u32 [#allocation12], 4
      %s160 = int_to_ptr.vmem [resolvable:$true] %s159
      %165 = dma.hbm_to_vmem [thread:$0]  %s29, 4096, %s160, [#allocation11], 64, 64, 4
    $region61: #{tpu_custom_call.1} parent=1 // pred_fallthru
      _
    // Predicated region
    $region62: #{tpu_custom_call.1} parent=1 // pred_check
      _
    $region63: #{tpu_custom_call.1} parent=1 // pred_check_branch
      %167 = sbr.rel (0) target = $region65
    $region64: #{tpu_custom_call.1} parent=1 // pred_region
      %s169 = ssub.s32 16, 16
      %170 = vsyncadd [#allocation14], %s169
      %s172 = sshll.u32 [#allocation13], 4
      %s173 = int_to_ptr.vmem [resolvable:$true] %s172
      %175 = dma.hbm_to_vmem [thread:$0]  %s31, 16, %s173, [#allocation14]
    $region65: #{tpu_custom_call.1} parent=1 // pred_fallthru
      _
    // Predicated region
    $region66: #{tpu_custom_call.1} parent=1 // pred_check
      _
    $region67: #{tpu_custom_call.1} parent=1 // pred_check_branch
      %177 = sbr.rel (0) target = $region69
    $region68: #{tpu_custom_call.1} parent=1 // pred_region
      %s179 = ssub.s32 2048, 2048
      %180 = vsyncadd [#allocation14], %s179
      %s181 = sshll.u32 [#allocation15], 4
      %s182 = int_to_ptr.vmem [resolvable:$true] %s181
      %187 = dma.hbm_to_vmem [thread:$0]  %s33, 2048, %s182, [#allocation14], 64, 64, 4
    $region69: #{tpu_custom_call.1} parent=1 // pred_fallthru
      _
    // Predicated region
    $region70: #{tpu_custom_call.1} parent=1 // pred_check
      _
    $region71: #{tpu_custom_call.1} parent=1 // pred_check_branch
      %189 = sbr.rel (0) target = $region73
    $region72: #{tpu_custom_call.1} parent=1 // pred_region
      _
    $region73: #{tpu_custom_call.1} parent=1 // pred_fallthru
      _
    // Predicated region
    $region74: #{tpu_custom_call.1} parent=1 // pred_check
      _
    $region75: #{tpu_custom_call.1} parent=1 // pred_check_branch
      %191 = sbr.rel (0) target = $region77
    $region76: #{tpu_custom_call.1} parent=1 // pred_region
      %s193 = ssub.s32 16, 16
      %194 = vsyncadd [#allocation17], %s193
      %s196 = sshll.u32 [#allocation16], 4
      %s197 = int_to_ptr.vmem [resolvable:$true] %s196
      %199 = dma.hbm_to_vmem [thread:$0]  %s37, 16, %s197, [#allocation17]
    $region77: #{tpu_custom_call.1} parent=1 // pred_fallthru
      _
    // Predicated region
    $region78: #{tpu_custom_call.1} parent=1 // pred_check
      _
    $region79: #{tpu_custom_call.1} parent=1 // pred_check_branch
      %201 = sbr.rel (0) target = $region81
    $region80: #{tpu_custom_call.1} parent=1 // pred_region
      %s203 = ssub.s32 5120, 5120
      %204 = vsyncadd [#allocation17], %s203
      %s205 = sshll.u32 [#allocation18], 4
      %s206 = int_to_ptr.vmem [resolvable:$true] %s205
      %211 = dma.hbm_to_vmem [thread:$0]  %s39, 5120, %s206, [#allocation17], 64, 64, 4
    $region81: #{tpu_custom_call.1} parent=1 // pred_fallthru
      _
    // Predicated region
    $region82: #{tpu_custom_call.1} parent=1 // pred_check
      _
    $region83: #{tpu_custom_call.1} parent=1 // pred_check_branch
      %213 = sbr.rel (0) target = $region85
    $region84: #{tpu_custom_call.1} parent=1 // pred_region
      %s215 = ssub.s32 4096, 4096
      %216 = vsyncadd [#allocation20], %s215
      %s217 = sshll.u32 [#allocation19], 4
      %s218 = int_to_ptr.vmem [resolvable:$true] %s217
      %223 = dma.hbm_to_vmem [thread:$0]  %s41, 4096, %s218, [#allocation20], 64, 64, 4
    $region85: #{tpu_custom_call.1} parent=1 // pred_fallthru
      _
    // Predicated region
    $region86: #{tpu_custom_call.1} parent=1 // pred_check
      _
    $region87: #{tpu_custom_call.1} parent=1 // pred_check_branch
      %225 = sbr.rel (0) target = $region89
    $region88: #{tpu_custom_call.1} parent=1 // pred_region
      %s227 = ssub.s32 4096, 4096
      %228 = vsyncadd [#allocation20], %s227
      %s229 = sshll.u32 [#allocation21], 4
      %s230 = int_to_ptr.vmem [resolvable:$true] %s229
      %235 = dma.hbm_to_vmem [thread:$0]  %s43, 4096, %s230, [#allocation20], 64, 64, 4
    $region89: #{tpu_custom_call.1} parent=1 // pred_fallthru
      _
    // Predicated region
    $region90: #{tpu_custom_call.1} parent=1 // pred_check
      _
    $region91: #{tpu_custom_call.1} parent=1 // pred_check_branch
      %237 = sbr.rel (0) target = $region93
    $region92: #{tpu_custom_call.1} parent=1 // pred_region
      %s239 = ssub.s32 16, 16
      %240 = vsyncadd [#allocation23], %s239
      %s242 = sshll.u32 [#allocation22], 4
      %s243 = int_to_ptr.vmem [resolvable:$true] %s242
      %245 = dma.hbm_to_vmem [thread:$0]  %s45, 16, %s243, [#allocation23]
    $region93: #{tpu_custom_call.1} parent=1 // pred_fallthru
      _
    // Predicated region
    $region94: #{tpu_custom_call.1} parent=1 // pred_check
      _
    $region95: #{tpu_custom_call.1} parent=1 // pred_check_branch
      %247 = sbr.rel (0) target = $region97
    $region96: #{tpu_custom_call.1} parent=1 // pred_region
      %s249 = ssub.s32 2048, 2048
      %250 = vsyncadd [#allocation23], %s249
      %s251 = sshll.u32 [#allocation24], 4
      %s252 = int_to_ptr.vmem [resolvable:$true] %s251
      %257 = dma.hbm_to_vmem [thread:$0]  %s47, 2048, %s252, [#allocation23], 64, 64, 4
    $region97: #{tpu_custom_call.1} parent=1 // pred_fallthru
      _
    // Predicated region
    $region98: #{tpu_custom_call.1} parent=1 // pred_check
      _
    $region99: #{tpu_custom_call.1} parent=1 // pred_check_branch
      %259 = sbr.rel (0) target = $region101
    $region100: #{tpu_custom_call.1} parent=1 // pred_region
      _
    $region101: #{tpu_custom_call.1} parent=1 // pred_fallthru
      _
    // Predicated region
    $region102: #{tpu_custom_call.1} parent=1 // pred_check
      _
    $region103: #{tpu_custom_call.1} parent=1 // pred_check_branch
      %261 = sbr.rel (0) target = $region105
    $region104: #{tpu_custom_call.1} parent=1 // pred_region
      %s263 = ssub.s32 16, 16
      %264 = vsyncadd [#allocation26], %s263
      %s266 = sshll.u32 [#allocation25], 4
      %s267 = int_to_ptr.vmem [resolvable:$true] %s266
      %269 = dma.hbm_to_vmem [thread:$0]  %s51, 16, %s267, [#allocation26]
    $region105: #{tpu_custom_call.1} parent=1 // pred_fallthru
      _
    // Predicated region
    $region106: #{tpu_custom_call.1} parent=1 // pred_check
      _
    $region107: #{tpu_custom_call.1} parent=1 // pred_check_branch
      %271 = sbr.rel (0) target = $region109
    $region108: #{tpu_custom_call.1} parent=1 // pred_region
      %s273 = ssub.s32 5120, 5120
      %274 = vsyncadd [#allocation26], %s273
      %s275 = sshll.u32 [#allocation27], 4
      %s276 = int_to_ptr.vmem [resolvable:$true] %s275
      %281 = dma.hbm_to_vmem [thread:$0]  %s53, 5120, %s276, [#allocation26], 64, 64, 4
    $region109: #{tpu_custom_call.1} parent=1 // pred_fallthru
      _
    // Predicated region
    $region110: #{tpu_custom_call.1} parent=1 // pred_check
      _
    $region111: #{tpu_custom_call.1} parent=1 // pred_check_branch
      %283 = sbr.rel (0) target = $region113
    $region112: #{tpu_custom_call.1} parent=1 // pred_region
      _
    $region113: #{tpu_custom_call.1} parent=1 // pred_fallthru
      _
    // Predicated region
    $region114: #{tpu_custom_call.1} parent=1 // pred_check
      _
    $region115: #{tpu_custom_call.1} parent=1 // pred_check_branch
      %285 = sbr.rel (0) target = $region117
    $region116: #{tpu_custom_call.1} parent=1 // pred_region
      %s287 = ssub.s32 4096, 4096
      %288 = vsyncadd [#allocation29], %s287
      %s289 = sshll.u32 [#allocation28], 4
      %s290 = int_to_ptr.vmem [resolvable:$true] %s289
      %295 = dma.hbm_to_vmem [thread:$0]  %s57, 4096, %s290, [#allocation29], 64, 64, 4
    $region117: #{tpu_custom_call.1} parent=1 // pred_fallthru
      _
    // Predicated region
    $region118: #{tpu_custom_call.1} parent=1 // pred_check
      _
    $region119: #{tpu_custom_call.1} parent=1 // pred_check_branch
      %297 = sbr.rel (0) target = $region121
    $region120: #{tpu_custom_call.1} parent=1 // pred_region
      _
    $region121: #{tpu_custom_call.1} parent=1 // pred_fallthru
      _
    // Predicated region
    $region122: #{tpu_custom_call.1} parent=1 // pred_check
      _
    $region123: #{tpu_custom_call.1} parent=1 // pred_check_branch
      %299 = sbr.rel (0) target = $region125
    $region124: #{tpu_custom_call.1} parent=1 // pred_region
      %s301 = ssub.s32 3072, 3072
      %302 = vsyncadd [#allocation29], %s301
      %s303 = sshll.u32 [#allocation30], 4
      %s304 = int_to_ptr.vmem [resolvable:$true] %s303
      %309 = dma.hbm_to_vmem [thread:$0]  %s61, 3072, %s304, [#allocation29], 64, 64, 4
    $region125: #{tpu_custom_call.1} parent=1 // pred_fallthru
      _
    // Predicated region
    $region126: #{tpu_custom_call.1} parent=1 // pred_check
      _
    $region127: #{tpu_custom_call.1} parent=1 // pred_check_branch
      %311 = sbr.rel (0) target = $region129
    $region128: #{tpu_custom_call.1} parent=1 // pred_region
      _
    $region129: #{tpu_custom_call.1} parent=1 // pred_fallthru
      _
    // Predicated region
    $region130: #{tpu_custom_call.1} parent=1 // pred_check
      _
    $region131: #{tpu_custom_call.1} parent=1 // pred_check_branch
      %313 = sbr.rel (0) target = $region133
    $region132: #{tpu_custom_call.1} parent=1 // pred_region
      %s315 = ssub.s32 1024, 1024
      %316 = vsyncadd [#allocation32], %s315
      %s317 = sshll.u32 [#allocation31], 4
      %s318 = int_to_ptr.vmem [resolvable:$true] %s317
      %323 = dma.hbm_to_vmem [thread:$0]  %s65, 1024, %s318, [#allocation32], 64, 64, 4
    $region133: #{tpu_custom_call.1} parent=1 // pred_fallthru
      _
    // Predicated region
    $region134: #{tpu_custom_call.1} parent=1 // pred_check
      _
    $region135: #{tpu_custom_call.1} parent=1 // pred_check_branch
      %325 = sbr.rel (0) target = $region137
    $region136: #{tpu_custom_call.1} parent=1 // pred_region
      _
    $region137: #{tpu_custom_call.1} parent=1 // pred_fallthru
      _
    // Predicated region
    $region138: #{tpu_custom_call.1} parent=1 // pred_check
      _
    $region139: #{tpu_custom_call.1} parent=1 // pred_check_branch
      %327 = sbr.rel (0) target = $region141
    $region140: #{tpu_custom_call.1} parent=1 // pred_region
      %328 = dma.done [#allocation5], 256
    $region141: #{tpu_custom_call.1} parent=1 // pred_fallthru
      _
    // Predicated region
    $region142: #{tpu_custom_call.1} parent=1 // pred_check
      _
    $region143: #{tpu_custom_call.1} parent=1 // pred_check_branch
      %330 = sbr.rel (0) target = $region145
    $region144: #{tpu_custom_call.1} parent=1 // pred_region
      %331 = dma.done [#allocation8], 2048
    $region145: #{tpu_custom_call.1} parent=1 // pred_fallthru
      _
    // Predicated region
    $region146: #{tpu_custom_call.1} parent=1 // pred_check
      _
    $region147: #{tpu_custom_call.1} parent=1 // pred_check_branch
      %333 = sbr.rel (0) target = $region149
    $region148: #{tpu_custom_call.1} parent=1 // pred_region
      %334 = dma.done [#allocation8], 5120
    $region149: #{tpu_custom_call.1} parent=1 // pred_fallthru
      _
    // Predicated region
    $region150: #{tpu_custom_call.1} parent=1 // pred_check
      _
    $region151: #{tpu_custom_call.1} parent=1 // pred_check_branch
      %336 = sbr.rel (0) target = $region153
    $region152: #{tpu_custom_call.1} parent=1 // pred_region
      %337 = dma.done [#allocation11], 4096
    $region153: #{tpu_custom_call.1} parent=1 // pred_fallthru
      _
    // Predicated region
    $region154: #{tpu_custom_call.1} parent=1 // pred_check
      _
    $region155: #{tpu_custom_call.1} parent=1 // pred_check_branch
      %339 = sbr.rel (0) target = $region157
    $region156: #{tpu_custom_call.1} parent=1 // pred_region
      %340 = dma.done [#allocation11], 4096
    $region157: #{tpu_custom_call.1} parent=1 // pred_fallthru
      _
    // Predicated region
    $region158: #{tpu_custom_call.1} parent=1 // pred_check
      _
    $region159: #{tpu_custom_call.1} parent=1 // pred_check_branch
      %342 = sbr.rel (0) target = $region161
    $region160: #{tpu_custom_call.1} parent=1 // pred_region
      %343 = dma.done [#allocation14], 16
    $region161: #{tpu_custom_call.1} parent=1 // pred_fallthru
      _
    // Predicated region
    $region162: #{tpu_custom_call.1} parent=1 // pred_check
      _
    $region163: #{tpu_custom_call.1} parent=1 // pred_check_branch
      %345 = sbr.rel (0) target = $region165
    $region164: #{tpu_custom_call.1} parent=1 // pred_region
      %346 = dma.done [#allocation14], 2048
    $region165: #{tpu_custom_call.1} parent=1 // pred_fallthru
      _
    // Predicated region
    $region166: #{tpu_custom_call.1} parent=1 // pred_check
      _
    $region167: #{tpu_custom_call.1} parent=1 // pred_check_branch
      %348 = sbr.rel (0) target = $region169
    $region168: #{tpu_custom_call.1} parent=1 // pred_region
      %349 = dma.done [#allocation17], 16
    $region169: #{tpu_custom_call.1} parent=1 // pred_fallthru
      _
    // Predicated region
    $region170: #{tpu_custom_call.1} parent=1 // pred_check
      _
    $region171: #{tpu_custom_call.1} parent=1 // pred_check_branch
      %351 = sbr.rel (0) target = $region173
    $region172: #{tpu_custom_call.1} parent=1 // pred_region
      %352 = dma.done [#allocation17], 5120
    $region173: #{tpu_custom_call.1} parent=1 // pred_fallthru
      _
    // Predicated region
    $region174: #{tpu_custom_call.1} parent=1 // pred_check
      _
    $region175: #{tpu_custom_call.1} parent=1 // pred_check_branch
      %354 = sbr.rel (0) target = $region177
    $region176: #{tpu_custom_call.1} parent=1 // pred_region
      %355 = dma.done [#allocation20], 4096
    $region177: #{tpu_custom_call.1} parent=1 // pred_fallthru
      _
    // Predicated region
    $region178: #{tpu_custom_call.1} parent=1 // pred_check
      _
    $region179: #{tpu_custom_call.1} parent=1 // pred_check_branch
      %357 = sbr.rel (0) target = $region181
    $region180: #{tpu_custom_call.1} parent=1 // pred_region
      %358 = dma.done [#allocation20], 4096
    $region181: #{tpu_custom_call.1} parent=1 // pred_fallthru
      _
    // Predicated region
    $region182: #{tpu_custom_call.1} parent=1 // pred_check
      _
    $region183: #{tpu_custom_call.1} parent=1 // pred_check_branch
      %360 = sbr.rel (0) target = $region185
    $region184: #{tpu_custom_call.1} parent=1 // pred_region
      %361 = dma.done [#allocation23], 16
    $region185: #{tpu_custom_call.1} parent=1 // pred_fallthru
      _
    // Predicated region
    $region186: #{tpu_custom_call.1} parent=1 // pred_check
      _
    $region187: #{tpu_custom_call.1} parent=1 // pred_check_branch
      %363 = sbr.rel (0) target = $region189
    $region188: #{tpu_custom_call.1} parent=1 // pred_region
      %364 = dma.done [#allocation23], 2048
    $region189: #{tpu_custom_call.1} parent=1 // pred_fallthru
      _
    // Predicated region
    $region190: #{tpu_custom_call.1} parent=1 // pred_check
      _
    $region191: #{tpu_custom_call.1} parent=1 // pred_check_branch
      %366 = sbr.rel (0) target = $region193
    $region192: #{tpu_custom_call.1} parent=1 // pred_region
      %367 = dma.done [#allocation26], 16
    $region193: #{tpu_custom_call.1} parent=1 // pred_fallthru
      _
    // Predicated region
    $region194: #{tpu_custom_call.1} parent=1 // pred_check
      _
    $region195: #{tpu_custom_call.1} parent=1 // pred_check_branch
      %369 = sbr.rel (0) target = $region197
    $region196: #{tpu_custom_call.1} parent=1 // pred_region
      %370 = dma.done [#allocation26], 5120
    $region197: #{tpu_custom_call.1} parent=1 // pred_fallthru
      _
    // Predicated region
    $region198: #{tpu_custom_call.1} parent=1 // pred_check
      _
    $region199: #{tpu_custom_call.1} parent=1 // pred_check_branch
      %372 = sbr.rel (0) target = $region201
    $region200: #{tpu_custom_call.1} parent=1 // pred_region
      %373 = dma.done [#allocation29], 4096
    $region201: #{tpu_custom_call.1} parent=1 // pred_fallthru
      _
    // Predicated region
    $region202: #{tpu_custom_call.1} parent=1 // pred_check
      _
    $region203: #{tpu_custom_call.1} parent=1 // pred_check_branch
      %375 = sbr.rel (0) target = $region205
    $region204: #{tpu_custom_call.1} parent=1 // pred_region
      %376 = dma.done [#allocation29], 3072
    $region205: #{tpu_custom_call.1} parent=1 // pred_fallthru
      _
    // Predicated region
    $region206: #{tpu_custom_call.1} parent=1 // pred_check
      _
    $region207: #{tpu_custom_call.1} parent=1 // pred_check_branch
      %378 = sbr.rel (0) target = $region209
    $region208: #{tpu_custom_call.1} parent=1 // pred_region
      %379 = dma.done [#allocation32], 1024
    $region209: #{tpu_custom_call.1} parent=1 // pred_fallthru
      _
    %s381 = sld [smem:[#allocation3]]
    %v382 = vld [vmem:[#allocation4] sm:$0xff]
    %v383 = vld [vmem:[#allocation4 + $0x8] sm:$0xff]
    %v384 = vpack.c.bf16 %v383, %v382
    %v385 = vld [vmem:[%s5] sm:$0xff]
    %v386 = vld [vmem:[%s5 + $0x8] sm:$0xff]
    %v387 = vld [vmem:[%s5 + $0x10] sm:$0xff]
    %v388 = vld [vmem:[%s5 + $0x18] sm:$0xff]
    %v389 = vld [vmem:[%s5 + $0x20] sm:$0xff]
    %v390 = vld [vmem:[%s5 + $0x28] sm:$0xff]
    %v391 = vpack.c.bf16 %v386, %v385
    %v392 = vpack.c.bf16 %v388, %v387
    %v393 = vpack.c.bf16 %v390, %v389
    %v394 = vld [vmem:[%s7] sm:$0xff]
    %v395 = vld [vmem:[%s7 + $0x8] sm:$0xff]
    %v396 = vld [vmem:[%s7 + $0x10] sm:$0xff]
    %v397 = vld [vmem:[%s7 + $0x18] sm:$0xff]
    %v398 = vld [vmem:[%s7 + $0x20] sm:$0xff]
    %v399 = vld [vmem:[%s7 + $0x28] sm:$0xff]
    %v400 = vld [vmem:[%s9] sm:$0xff]
    %v401 = vld [vmem:[%s9 + $0x8] sm:$0xff]
    %v402 = vld [vmem:[%s9 + $0x10] sm:$0xff]
    %v403 = vld [vmem:[%s9 + $0x18] sm:$0xff]
    %v404 = vld [vmem:[%s9 + $0x20] sm:$0xff]
    %v405 = vld [vmem:[%s9 + $0x28] sm:$0xff]
    %v406 = vld [vmem:[%s11] sm:$0x1]
    %v407 = vld [vmem:[%s15] sm:$0x1]
    %v408 = vld [vmem:[%s17] sm:$0xff]
    %v409 = vld [vmem:[%s17 + $0x8] sm:$0xff]
    %v410 = vlaneseq
    %v411 = vand.u32 %v410, 127
    %412 = vset.pattern.permute.xlu0 0
    %413 = vperm.xlu0 %412, %v394
    %v414 = vpop.permute.xlu0 %413
    %415 = vset.pattern.permute.xlu0 0
    %416 = vperm.xlu0 %415, %v395
    %v417 = vpop.permute.xlu0 %416
    %418 = vset.pattern.permute.xlu0 0
    %419 = vperm.xlu0 %418, %v396
    %v420 = vpop.permute.xlu0 %419
    %421 = vset.pattern.permute.xlu0 0
    %422 = vperm.xlu0 %421, %v397
    %v423 = vpop.permute.xlu0 %422
    %424 = vset.pattern.permute.xlu0 0
    %425 = vperm.xlu0 %424, %v398
    %v426 = vpop.permute.xlu0 %425
    %427 = vset.pattern.permute.xlu0 0
    %428 = vperm.xlu0 %427, %v399
    %v429 = vpop.permute.xlu0 %428
    %vm430 = vcmp.eq.s32.totalorder %v411, %v414
    %vm431 = vcmp.eq.s32.totalorder %v411, %v417
    %vm432 = vcmp.eq.s32.totalorder %v411, %v420
    %vm433 = vcmp.eq.s32.totalorder %v411, %v423
    %vm434 = vcmp.eq.s32.totalorder %v411, %v426
    %vm435 = vcmp.eq.s32.totalorder %v411, %v429
    %v436 = vsel %vm430, 1, 0
    %v437 = vsel %vm431, 1, 0
    %v438 = vsel %vm432, 1, 0
    %v439 = vsel %vm433, 1, 0
    %v440 = vsel %vm434, 1, 0
    %v441 = vsel %vm435, 1, 0
    %v442 = vcvt.s32.f32 %v436
    %v443 = vcvt.s32.f32 %v437
    %v444 = vcvt.s32.f32 %v438
    %v445 = vcvt.s32.f32 %v439
    %v446 = vcvt.s32.f32 %v440
    %v447 = vcvt.s32.f32 %v441
    %v448 = vpack.c.bf16 %v443, %v442
    %v449 = vpack.c.bf16 %v445, %v444
    %v450 = vpack.c.bf16 %v447, %v446
    %451 = vset.pattern.permute.xlu0 0
    %452 = vperm.xlu0 %451, %v400
    %v453 = vpop.permute.xlu0 %452
    %454 = vset.pattern.permute.xlu0 0
    %455 = vperm.xlu0 %454, %v401
    %v456 = vpop.permute.xlu0 %455
    %457 = vset.pattern.permute.xlu0 0
    %458 = vperm.xlu0 %457, %v402
    %v459 = vpop.permute.xlu0 %458
    %460 = vset.pattern.permute.xlu0 0
    %461 = vperm.xlu0 %460, %v403
    %v462 = vpop.permute.xlu0 %461
    %463 = vset.pattern.permute.xlu0 0
    %464 = vperm.xlu0 %463, %v404
    %v465 = vpop.permute.xlu0 %464
    %466 = vset.pattern.permute.xlu0 0
    %467 = vperm.xlu0 %466, %v405
    %v468 = vpop.permute.xlu0 %467
    %vm469 = vcmp.eq.s32.totalorder %v411, %v453
    %vm470 = vcmp.eq.s32.totalorder %v411, %v456
    %vm471 = vcmp.eq.s32.totalorder %v411, %v459
    %vm472 = vcmp.eq.s32.totalorder %v411, %v462
    %vm473 = vcmp.eq.s32.totalorder %v411, %v465
    %vm474 = vcmp.eq.s32.totalorder %v411, %v468
    %v475 = vsel %vm469, 1, 0
    %v476 = vsel %vm470, 1, 0
    %v477 = vsel %vm471, 1, 0
    %v478 = vsel %vm472, 1, 0
    %v479 = vsel %vm473, 1, 0
    %v480 = vsel %vm474, 1, 0
    %v481 = vcvt.s32.f32 %v475
    %v482 = vcvt.s32.f32 %v476
    %v483 = vcvt.s32.f32 %v477
    %v484 = vcvt.s32.f32 %v478
    %v485 = vcvt.s32.f32 %v479
    %v486 = vcvt.s32.f32 %v480
    %v487 = vpack.c.bf16 %v482, %v481
    %v488 = vpack.c.bf16 %v484, %v483
    %v489 = vpack.c.bf16 %v486, %v485
    %v490 = vlaneseq
    %v491 = vshrl.u32 %v490, 7
    %v492 = vadd.s32 %v491, 8
    %v493 = vlaneseq
    %v494 = vshrl.u32 %v493, 7
    %v495 = vsub.s32 0, %v494
    %v496 = vrot.slane %v406, %v495
    %vm497 = vcmp.eq.s32.totalorder %v491, %v496
    %vm498 = vcmp.eq.s32.totalorder %v492, %v496
    %v499 = vsel %vm497, 1, 0
    %v500 = vsel %vm498, 1, 0
    %v501 = vcvt.s32.f32 %v499
    %v502 = vcvt.s32.f32 %v500
    %v503 = vpack.c.bf16 %v502, %v501
    %v504 = vlaneseq
    %v505 = vshrl.u32 %v504, 7
    %v506 = vsub.s32 0, %v505
    %v507 = vrot.slane %v407, %v506
    %vm508 = vcmp.eq.s32.totalorder %v491, %v507
    %v509 = vsel %vm508, 1, 0
    %v510 = vcvt.s32.f32 %v509
    %v511 = vpack.c.bf16 %v510, %v510
    %v512 = vmax.f32 %v408, 1.0
    %v513 = vmax.f32 %v409, 1.0
    %v514 = vadd.f32 %v512, 1.0
    %v515 = vadd.f32 %v513, 1.0
    %v516 = vlog2.pop %v514
    %v517 = vmul.f32 %v516, 0.6931472
    %v518 = vlog2.pop %v515
    %v519 = vmul.f32 %v518, 0.6931472
    %v520 = vstv %s381
    %v521 = vrcp.pop %v520
    %v522 = vmul.f32 %v517, %v521
    %v523 = vmul.f32 %v519, %v521
    %v524 = vrcp.pop %v517
    %v525 = vmul.f32 %v520, %v524
    %v526 = vrcp.pop %v519
    %v527 = vmul.f32 %v520, %v526
    %vm528 = vcmp.gt.f32.partialorder %v408, 0.0
    %vm529 = vcmp.gt.f32.partialorder %v409, 0.0
    %vm530 = vcmask 130048
    %v532 = vsel %vm530, %v487, 0
    %v535 = vsel %vm530, %v488, 0
    %v538 = vsel %vm530, %v489, 0
    %540 = vmatprep.subr.bf16.mxu0 0
    %541 = vmatpush1.bf16.msra.mxu0 0
    %542 = vmatprep.subr.bf16.mxu0 0
    %543 = vmatpush1.bf16.msra.mxu0 0
    %544 = vmatprep.subr.bf16.mxu0 0
    %545 = vmatpush1.bf16.msra.mxu0 0
    %546 = vmatprep.subr.bf16.mxu0 0
    %547 = vmatpush1.bf16.msra.mxu0 0
    %548 = vmatprep.subr.bf16.mxu0 0
    %549 = vmatpush1.bf16.msra.mxu0 0
    %550 = vmatprep.subr.bf16.mxu0 0
    %551 = vmatpush1.bf16.msra.mxu0 0
    %552 = vmatprep.subr.bf16.mxu0 0
    %553 = vmatpush1.bf16.msra.mxu0 0
    %554 = vmatprep.subr.bf16.mxu0 0
    %555 = vmatpush1.bf16.msra.mxu0 %v384
    %556 = vmatprep.subr.bf16.mxu0 0
    %557 = vmatpush2.bf16.msra.mxu0 0
    %558 = vmatprep.subr.bf16.mxu0 0
    %559 = vmatpush2.bf16.msra.mxu0 0
    %560 = vmatprep.subr.bf16.mxu0 0
    %561 = vmatpush2.bf16.msra.mxu0 0
    %562 = vmatprep.subr.bf16.mxu0 0
    %563 = vmatpush2.bf16.msra.mxu0 0
    %564 = vmatprep.subr.bf16.mxu0 0
    %565 = vmatpush2.bf16.msra.mxu0 0
    %566 = vmatprep.subr.bf16.mxu0 0
    %567 = vmatpush2.bf16.msra.mxu0 0
    %568 = vmatprep.subr.bf16.mxu0 0
    %569 = vmatpush2.bf16.msra.mxu0 0
    %570 = vmatprep.subr.bf16.mxu0 0
    %571 = vmatpush2.bf16.msra.mxu0 0
    %572 = vmatprep.mubr.bf16.mxu0 0
    %573 = vmatmul.mubr.bf16.gmra.mxu0 %v532
    %v574 = vpop.f32.mrf.mxu0
    %v575 = vadd.f32 0.0, %v574
    %v576 = vpop.f32.mrf.mxu0
    %v577 = vpop.f32.mrf.mxu0
    %v578 = vadd.f32 0.0, %v577
    %v579 = vpop.f32.mrf.mxu0
    %580 = vmatprep.mubr.bf16.mxu0 0
    %581 = vmatmul.mubr.bf16.gmra.mxu0 %v535
    %v582 = vpop.f32.mrf.mxu0
    %v583 = vadd.f32 0.0, %v582
    %v584 = vpop.f32.mrf.mxu0
    %v585 = vpop.f32.mrf.mxu0
    %v586 = vadd.f32 0.0, %v585
    %v587 = vpop.f32.mrf.mxu0
    %588 = vmatprep.mubr.bf16.mxu0 0
    %589 = vmatmul.mubr.bf16.gmra.mxu0 %v538
    %v590 = vpop.f32.mrf.mxu0
    %v591 = vadd.f32 0.0, %v590
    %v592 = vpop.f32.mrf.mxu0
    %v593 = vpop.f32.mrf.mxu0
    %v594 = vadd.f32 0.0, %v593
    %v595 = vpop.f32.mrf.mxu0
    %596 = vdwg.mxu0
    %v598 = vsel %vm530, %v448, 0
    %v601 = vsel %vm530, %v449, 0
    %v604 = vsel %vm530, %v450, 0
    %606 = vmatprep.subr.bf16.mxu0 0
    %607 = vmatpush1.bf16.msra.mxu0 0
    %608 = vmatprep.subr.bf16.mxu0 0
    %609 = vmatpush1.bf16.msra.mxu0 0
    %610 = vmatprep.subr.bf16.mxu0 0
    %611 = vmatpush1.bf16.msra.mxu0 0
    %612 = vmatprep.subr.bf16.mxu0 0
    %613 = vmatpush1.bf16.msra.mxu0 0
    %614 = vmatprep.subr.bf16.mxu0 0
    %615 = vmatpush1.bf16.msra.mxu0 0
    %616 = vmatprep.subr.bf16.mxu0 0
    %617 = vmatpush1.bf16.msra.mxu0 0
    %618 = vmatprep.subr.bf16.mxu0 0
    %619 = vmatpush1.bf16.msra.mxu0 0
    %620 = vmatprep.subr.bf16.mxu0 0
    %621 = vmatpush1.bf16.msra.mxu0 %v384
    %622 = vmatprep.subr.bf16.mxu0 0
    %623 = vmatpush2.bf16.msra.mxu0 0
    %624 = vmatprep.subr.bf16.mxu0 0
    %625 = vmatpush2.bf16.msra.mxu0 0
    %626 = vmatprep.subr.bf16.mxu0 0
    %627 = vmatpush2.bf16.msra.mxu0 0
    %628 = vmatprep.subr.bf16.mxu0 0
    %629 = vmatpush2.bf16.msra.mxu0 0
    %630 = vmatprep.subr.bf16.mxu0 0
    %631 = vmatpush2.bf16.msra.mxu0 0
    %632 = vmatprep.subr.bf16.mxu0 0
    %633 = vmatpush2.bf16.msra.mxu0 0
    %634 = vmatprep.subr.bf16.mxu0 0
    %635 = vmatpush2.bf16.msra.mxu0 0
    %636 = vmatprep.subr.bf16.mxu0 0
    %637 = vmatpush2.bf16.msra.mxu0 0
    %638 = vmatprep.mubr.bf16.mxu0 0
    %639 = vmatmul.mubr.bf16.gmra.mxu0 %v598
    %v640 = vpop.f32.mrf.mxu0
    %v641 = vadd.f32 0.0, %v640
    %v642 = vpop.f32.mrf.mxu0
    %v643 = vpop.f32.mrf.mxu0
    %v644 = vadd.f32 0.0, %v643
    %v645 = vpop.f32.mrf.mxu0
    %646 = vmatprep.mubr.bf16.mxu0 0
    %647 = vmatmul.mubr.bf16.gmra.mxu0 %v601
    %v648 = vpop.f32.mrf.mxu0
    %v649 = vadd.f32 0.0, %v648
    %v650 = vpop.f32.mrf.mxu0
    %v651 = vpop.f32.mrf.mxu0
    %v652 = vadd.f32 0.0, %v651
    %v653 = vpop.f32.mrf.mxu0
    %654 = vmatprep.mubr.bf16.mxu0 0
    %655 = vmatmul.mubr.bf16.gmra.mxu0 %v604
    %v656 = vpop.f32.mrf.mxu0
    %v657 = vadd.f32 0.0, %v656
    %v658 = vpop.f32.mrf.mxu0
    %v659 = vpop.f32.mrf.mxu0
    %v660 = vadd.f32 0.0, %v659
    %v661 = vpop.f32.mrf.mxu0
    %662 = vdwg.mxu0
    %v663 = vpack.c.bf16 %v578, %v575
    %v664 = vpack.c.bf16 %v644, %v641
    %v665 = vpack.c.bf16 %v586, %v583
    %v666 = vpack.c.bf16 %v652, %v649
    %v667 = vpack.c.bf16 %v594, %v591
    %v668 = vpack.c.bf16 %v660, %v657
    %v669 = vld [vmem:[#allocation7] sm:$0xf]
    %v670 = vld [vmem:[#allocation7 + $0x4] sm:$0xf]
    %v671 = vld [vmem:[#allocation7 + $0x8] sm:$0xf]
    %v672 = vld [vmem:[#allocation7 + $0xc] sm:$0xf]
    %v673 = vld [vmem:[#allocation7 + $0x10] sm:$0xf]
    %v674 = vld [vmem:[#allocation7 + $0x14] sm:$0xf]
    %v675 = vld [vmem:[#allocation7 + $0x18] sm:$0xf]
    %v676 = vld [vmem:[#allocation7 + $0x1c] sm:$0xf]
    %v677 = vld [vmem:[#allocation7 + $0x20] sm:$0xf]
    %v678 = vld [vmem:[#allocation7 + $0x24] sm:$0xf]
    %v679 = vld [vmem:[#allocation7 + $0x28] sm:$0xf]
    %v680 = vld [vmem:[#allocation7 + $0x2c] sm:$0xf]
    %v681 = vld [vmem:[#allocation7 + $0x30] sm:$0xf]
    %v682 = vld [vmem:[#allocation7 + $0x34] sm:$0xf]
    %v683 = vld [vmem:[#allocation7 + $0x38] sm:$0xf]
    %v684 = vld [vmem:[#allocation7 + $0x3c] sm:$0xf]
    %v685 = vld [vmem:[#allocation7 + $0x40] sm:$0xf]
    %v686 = vld [vmem:[#allocation7 + $0x44] sm:$0xf]
    %v687 = vld [vmem:[#allocation7 + $0x48] sm:$0xf]
    %v688 = vld [vmem:[#allocation7 + $0x4c] sm:$0xf]
    %v689 = vld [vmem:[#allocation7 + $0x50] sm:$0xf]
    %v690 = vld [vmem:[#allocation7 + $0x54] sm:$0xf]
    %v691 = vld [vmem:[#allocation7 + $0x58] sm:$0xf]
    %v692 = vld [vmem:[#allocation7 + $0x5c] sm:$0xf]
    %v693 = vld [vmem:[#allocation7 + $0x60] sm:$0xf]
    %v694 = vld [vmem:[#allocation7 + $0x64] sm:$0xf]
    %v695 = vld [vmem:[#allocation7 + $0x68] sm:$0xf]
    %v696 = vld [vmem:[#allocation7 + $0x6c] sm:$0xf]
    %v697 = vld [vmem:[#allocation7 + $0x70] sm:$0xf]
    %v698 = vld [vmem:[#allocation7 + $0x74] sm:$0xf]
    %v699 = vld [vmem:[#allocation7 + $0x78] sm:$0xf]
    %v700 = vld [vmem:[#allocation7 + $0x7c] sm:$0xf]
    %v701 = vld [vmem:[%s21] sm:$0x3]
    %vm702 = vcmask 31744
    %v704 = vsel %vm702, %v391, 0
    %v707 = vsel %vm702, %v392, 0
    %v710 = vsel %vm702, %v393, 0
    %vm712 = vcmask 1041408
    %v714 = vsel %vm712, %v701, 0
    %716 = vmatprep.subr.bf16.mxu0 0
    %717 = vmatpush1.bf16.msra.mxu0 0
    %718 = vmatprep.subr.bf16.mxu0 0
    %719 = vmatpush1.bf16.msra.mxu0 0
    %720 = vmatprep.subr.bf16.mxu0 0
    %721 = vmatpush1.bf16.msra.mxu0 0
    %722 = vmatprep.subr.bf16.mxu0 0
    %723 = vmatpush1.bf16.msra.mxu0 0
    %724 = vmatprep.subr.bf16.mxu0 0
    %725 = vmatpush1.bf16.msra.mxu0 0
    %726 = vmatprep.subr.bf16.mxu0 0
    %727 = vmatpush1.bf16.msra.mxu0 0
    %728 = vmatprep.subr.bf16.mxu0 0
    %729 = vmatpush1.bf16.msra.mxu0 0
    %730 = vmatprep.subr.bf16.mxu0 0
    %731 = vmatpush1.bf16.msra.mxu0 %v714
    %732 = vmatprep.subr.bf16.mxu0 0
    %733 = vmatpush2.bf16.msra.mxu0 0
    %734 = vmatprep.subr.bf16.mxu0 0
    %735 = vmatpush2.bf16.msra.mxu0 0
    %736 = vmatprep.subr.bf16.mxu0 0
    %737 = vmatpush2.bf16.msra.mxu0 0
    %738 = vmatprep.subr.bf16.mxu0 0
    %739 = vmatpush2.bf16.msra.mxu0 0
    %740 = vmatprep.subr.bf16.mxu0 0
    %741 = vmatpush2.bf16.msra.mxu0 0
    %742 = vmatprep.subr.bf16.mxu0 0
    %743 = vmatpush2.bf16.msra.mxu0 0
    %744 = vmatprep.subr.bf16.mxu0 0
    %745 = vmatpush2.bf16.msra.mxu0 0
    %746 = vmatprep.subr.bf16.mxu0 0
    %747 = vmatpush2.bf16.msra.mxu0 0
    %748 = vmatprep.mubr.bf16.mxu0 0
    %749 = vmatmul.mubr.bf16.gmra.mxu0 %v704
    %v750 = vpop.f32.mrf.mxu0
    %v751 = vadd.f32 0.0, %v750
    %v752 = vpop.f32.mrf.mxu0
    %v753 = vpop.f32.mrf.mxu0
    %v754 = vadd.f32 0.0, %v753
    %v755 = vpop.f32.mrf.mxu0
    %756 = vmatprep.mubr.bf16.mxu0 0
    %757 = vmatmul.mubr.bf16.gmra.mxu0 %v707
    %v758 = vpop.f32.mrf.mxu0
    %v759 = vadd.f32 0.0, %v758
    %v760 = vpop.f32.mrf.mxu0
    %v761 = vpop.f32.mrf.mxu0
    %v762 = vadd.f32 0.0, %v761
    %v763 = vpop.f32.mrf.mxu0
    %764 = vmatprep.mubr.bf16.mxu0 0
    %765 = vmatmul.mubr.bf16.gmra.mxu0 %v710
    %v766 = vpop.f32.mrf.mxu0
    %v767 = vadd.f32 0.0, %v766
    %v768 = vpop.f32.mrf.mxu0
    %v769 = vpop.f32.mrf.mxu0
    %v770 = vadd.f32 0.0, %v769
    %v771 = vpop.f32.mrf.mxu0
    %772 = vdwg.mxu0
    %v805 = vunpack.c.l.b16 %v669
    %v806 = vunpack.c.l.b16 %v670
    %v807 = vunpack.c.l.b16 %v671
    %v808 = vunpack.c.l.b16 %v672
    %v809 = vunpack.c.l.b16 %v673
    %v810 = vunpack.c.l.b16 %v674
    %v811 = vunpack.c.l.b16 %v675
    %v812 = vunpack.c.l.b16 %v676
    %v813 = vunpack.c.l.b16 %v677
    %v814 = vunpack.c.l.b16 %v678
    %v815 = vunpack.c.l.b16 %v679
    %v816 = vunpack.c.l.b16 %v680
    %v817 = vunpack.c.l.b16 %v681
    %v818 = vunpack.c.l.b16 %v682
    %v819 = vunpack.c.l.b16 %v683
    %v820 = vunpack.c.l.b16 %v684
    %v821 = vunpack.c.l.b16 %v685
    %v822 = vunpack.c.l.b16 %v686
    %v823 = vunpack.c.l.b16 %v687
    %v824 = vunpack.c.l.b16 %v688
    %v825 = vunpack.c.l.b16 %v689
    %v826 = vunpack.c.l.b16 %v690
    %v827 = vunpack.c.l.b16 %v691
    %v828 = vunpack.c.l.b16 %v692
    %v829 = vunpack.c.l.b16 %v693
    %v830 = vunpack.c.l.b16 %v694
    %v831 = vunpack.c.l.b16 %v695
    %v832 = vunpack.c.l.b16 %v696
    %v833 = vunpack.c.l.b16 %v697
    %v834 = vunpack.c.l.b16 %v698
    %v835 = vunpack.c.l.b16 %v699
    %v836 = vunpack.c.l.b16 %v700
    %v837 = vpack.c.b16 %v806, %v805
    %v838 = vpack.c.b16 %v808, %v807
    %v839 = vpack.c.b16 %v810, %v809
    %v840 = vpack.c.b16 %v812, %v811
    %v841 = vpack.c.b16 %v814, %v813
    %v842 = vpack.c.b16 %v816, %v815
    %v843 = vpack.c.b16 %v818, %v817
    %v844 = vpack.c.b16 %v820, %v819
    %v845 = vpack.c.b16 %v822, %v821
    %v846 = vpack.c.b16 %v824, %v823
    %v847 = vpack.c.b16 %v826, %v825
    %v848 = vpack.c.b16 %v828, %v827
    %v849 = vpack.c.b16 %v830, %v829
    %v850 = vpack.c.b16 %v832, %v831
    %v851 = vpack.c.b16 %v834, %v833
    %v852 = vpack.c.b16 %v836, %v835
    %869 = vmatprep.subr.bf16.mxu0 0
    %870 = vmatpush1.bf16.msra.mxu0 %v844
    %871 = vmatprep.subr.bf16.mxu0 0
    %872 = vmatpush1.bf16.msra.mxu0 %v843
    %873 = vmatprep.subr.bf16.mxu0 0
    %874 = vmatpush1.bf16.msra.mxu0 %v842
    %875 = vmatprep.subr.bf16.mxu0 0
    %876 = vmatpush1.bf16.msra.mxu0 %v841
    %877 = vmatprep.subr.bf16.mxu0 0
    %878 = vmatpush1.bf16.msra.mxu0 %v840
    %879 = vmatprep.subr.bf16.mxu0 0
    %880 = vmatpush1.bf16.msra.mxu0 %v839
    %881 = vmatprep.subr.bf16.mxu0 0
    %882 = vmatpush1.bf16.msra.mxu0 %v838
    %883 = vmatprep.subr.bf16.mxu0 0
    %884 = vmatpush1.bf16.msra.mxu0 %v837
    %885 = vmatprep.subr.bf16.mxu0 0
    %886 = vmatpush2.bf16.msra.mxu0 %v852
    %887 = vmatprep.subr.bf16.mxu0 0
    %888 = vmatpush2.bf16.msra.mxu0 %v851
    %889 = vmatprep.subr.bf16.mxu0 0
    %890 = vmatpush2.bf16.msra.mxu0 %v850
    %891 = vmatprep.subr.bf16.mxu0 0
    %892 = vmatpush2.bf16.msra.mxu0 %v849
    %893 = vmatprep.subr.bf16.mxu0 0
    %894 = vmatpush2.bf16.msra.mxu0 %v848
    %895 = vmatprep.subr.bf16.mxu0 0
    %896 = vmatpush2.bf16.msra.mxu0 %v847
    %897 = vmatprep.subr.bf16.mxu0 0
    %898 = vmatpush2.bf16.msra.mxu0 %v846
    %899 = vmatprep.subr.bf16.mxu0 0
    %900 = vmatpush2.bf16.msra.mxu0 %v845
    %901 = vmatprep.mubr.bf16.mxu0 %v664
    %902 = vmatmul.mubr.bf16.gmra.mxu0 %v663
    %v903 = vpop.f32.mrf.mxu0
    %v904 = vadd.f32 %v751, %v903
    %v905 = vpop.f32.mrf.mxu0
    %v906 = vpop.f32.mrf.mxu0
    %v907 = vadd.f32 %v754, %v906
    %v908 = vpop.f32.mrf.mxu0
    %909 = vmatprep.mubr.bf16.mxu0 %v666
    %910 = vmatmul.mubr.bf16.gmra.mxu0 %v665
    %v911 = vpop.f32.mrf.mxu0
    %v912 = vadd.f32 %v759, %v911
    %v913 = vpop.f32.mrf.mxu0
    %v914 = vpop.f32.mrf.mxu0
    %v915 = vadd.f32 %v762, %v914
    %v916 = vpop.f32.mrf.mxu0
    %917 = vmatprep.mubr.bf16.mxu0 %v668
    %918 = vmatmul.mubr.bf16.gmra.mxu0 %v667
    %v919 = vpop.f32.mrf.mxu0
    %v920 = vadd.f32 %v767, %v919
    %v921 = vpop.f32.mrf.mxu0
    %v922 = vpop.f32.mrf.mxu0
    %v923 = vadd.f32 %v770, %v922
    %v924 = vpop.f32.mrf.mxu0
    %925 = vdwg.mxu0
    %v926 = vld [vmem:[%s23] sm:$0x1]
    %v928 = vlaneseq
    %v929 = vshrl.u32 %v928, 7
    %v930 = vsub.s32 0, %v929
    %v931 = vrot.slane %v926, %v930
    %v933 = vadd.f32 %v904, %v931
    %v934 = vadd.f32 %v907, %v931
    %v935 = vadd.f32 %v912, %v931
    %v936 = vadd.f32 %v915, %v931
    %v937 = vadd.f32 %v920, %v931
    %v938 = vadd.f32 %v923, %v931
    %939 = vst [vmem:[#allocation2] sm:$0xff] %v933
    %940 = vst [vmem:[#allocation2 + $0x8] sm:$0xff] %v934
    %941 = vst [vmem:[#allocation2 + $0x10] sm:$0xff] %v935
    %942 = vst [vmem:[#allocation2 + $0x18] sm:$0xff] %v936
    %943 = vst [vmem:[#allocation2 + $0x20] sm:$0xff] %v937
    %944 = vst [vmem:[#allocation2 + $0x28] sm:$0xff] %v938
    %v945 = vmul.f32 %v933, %v933
    %v946 = vmul.f32 %v934, %v934
    %v947 = vmul.f32 %v935, %v935
    %v948 = vmul.f32 %v936, %v936
    %v949 = vmul.f32 %v937, %v937
    %v950 = vmul.f32 %v938, %v938
    %v951 = vpack.c.bf16 %v934, %v933
    %v952 = vpack.c.bf16 %v946, %v945
    %v953 = vpack.c.bf16 %v936, %v935
    %v954 = vpack.c.bf16 %v948, %v947
    %v955 = vpack.c.bf16 %v938, %v937
    %v956 = vpack.c.bf16 %v950, %v949
    %vm957 = vcmask 392192
    %v959 = vsel %vm957, %v503, 0
    %961 = vmatprep.subr.bf16.mxu0 0
    %962 = vmatpush1.bf16.msra.mxu0 0
    %963 = vmatprep.subr.bf16.mxu0 0
    %964 = vmatpush1.bf16.msra.mxu0 0
    %965 = vmatprep.subr.bf16.mxu0 0
    %966 = vmatpush1.bf16.msra.mxu0 0
    %967 = vmatprep.subr.bf16.mxu0 0
    %968 = vmatpush1.bf16.msra.mxu0 0
    %969 = vmatprep.subr.bf16.mxu0 0
    %970 = vmatpush1.bf16.msra.mxu0 0
    %971 = vmatprep.subr.bf16.mxu0 %v956
    %972 = vmatpush1.bf16.msra.mxu0 %v955
    %973 = vmatprep.subr.bf16.mxu0 %v954
    %974 = vmatpush1.bf16.msra.mxu0 %v953
    %975 = vmatprep.subr.bf16.mxu0 %v952
    %976 = vmatpush1.bf16.msra.mxu0 %v951
    %977 = vmatprep.subr.bf16.mxu0 0
    %978 = vmatpush2.bf16.msra.mxu0 0
    %979 = vmatprep.subr.bf16.mxu0 0
    %980 = vmatpush2.bf16.msra.mxu0 0
    %981 = vmatprep.subr.bf16.mxu0 0
    %982 = vmatpush2.bf16.msra.mxu0 0
    %983 = vmatprep.subr.bf16.mxu0 0
    %984 = vmatpush2.bf16.msra.mxu0 0
    %985 = vmatprep.subr.bf16.mxu0 0
    %986 = vmatpush2.bf16.msra.mxu0 0
    %987 = vmatprep.subr.bf16.mxu0 0
    %988 = vmatpush2.bf16.msra.mxu0 0
    %989 = vmatprep.subr.bf16.mxu0 0
    %990 = vmatpush2.bf16.msra.mxu0 0
    %991 = vmatprep.subr.bf16.mxu0 0
    %992 = vmatpush2.bf16.msra.mxu0 0
    %993 = vmatprep.mubr.bf16.mxu0 0
    %994 = vmatmul.mubr.bf16.gmra.mxu0 %v959
    %v995 = vpop.f32.mrf.mxu0
    %v996 = vadd.f32 0.0, %v995
    %v997 = vpop.f32.mrf.mxu0
    %v998 = vadd.f32 0.0, %v997
    %v999 = vpop.f32.mrf.mxu0
    %v1000 = vadd.f32 0.0, %v999
    %v1001 = vpop.f32.mrf.mxu0
    %v1002 = vadd.f32 0.0, %v1001
    %1003 = vdwg.mxu0
    %1005 = vset.pattern.permute.xlu0 0
    %1006 = vperm.xlu0 %1005, %v512
    %v1007 = vpop.permute.xlu0 %1006
    %1010 = vset.pattern.permute.xlu0 0
    %1011 = vperm.xlu0 %1010, %v513
    %v1012 = vpop.permute.xlu0 %1011
    %v1014 = vrcp.pop %v1007
    %v1015 = vmul.f32 %v996, %v1014
    %v1016 = vrcp.pop %v1012
    %v1017 = vmul.f32 %v1000, %v1016
    %v1018 = vmul.f32 %v998, %v1014
    %v1019 = vmul.f32 %v1002, %v1016
    %v1020 = vmul.f32 %v1015, %v1015
    %v1021 = vmul.f32 %v1017, %v1017
    %v1022 = vsub.f32 %v1018, %v1020
    %v1023 = vsub.f32 %v1019, %v1021
    %v1024 = vmax.f32 %v1022, 0.0
    %v1025 = vmax.f32 %v1023, 0.0
    %v1026 = vadd.f32 %v1024, 1e-05
    %v1027 = vadd.f32 %v1025, 1e-05
    %v1028 = vrsqrt.pop %v1026
    %v1029 = vmul.f32 %v1026, %v1028
    %vm1030 = vcmp.eq.f32.partialorder %v1026, inf
    %v1031 = vsel %vm1030, %v1026, %v1029
    %vm1032 = vcmp.eq.f32.partialorder %v1026, 0.0
    %v1033 = vand.u32 %v1026, 2147483648
    %v1034 = vsel %vm1032, %v1033, %v1031
    %v1035 = vrsqrt.pop %v1027
    %v1036 = vmul.f32 %v1027, %v1035
    %vm1037 = vcmp.eq.f32.partialorder %v1027, inf
    %v1038 = vsel %vm1037, %v1027, %v1036
    %vm1039 = vcmp.eq.f32.partialorder %v1027, 0.0
    %v1040 = vand.u32 %v1027, 2147483648
    %v1041 = vsel %vm1039, %v1040, %v1038
    loop: start=0, step=1, limit=3
    $region210: #{tpu_custom_call.1} parent=1 // loop_pre_header
      _
    $region211: #{tpu_custom_call.1} parent=1 // loop_header
      %s1043 = sphi 0, %s1047
      %p1044 = scmp.ge.s32.totalorder %s1043, 3
      %v1048 = vphi -1e+30, %v1423
      %v1049 = vphi -1e+30, %v1424
      %v1050 = vphi -1e+30, %v1425
      %v1051 = vphi -1e+30, %v1426
      %v1052 = vphi -1e+30, %v1427
      %v1053 = vphi -1e+30, %v1428
      %v1054 = vphi -1e+30, %v1429
      %v1055 = vphi -1e+30, %v1430
      %v1056 = vphi -1e+30, %v1431
      %v1057 = vphi -1e+30, %v1432
      %v1058 = vphi -1e+30, %v1433
      %v1059 = vphi -1e+30, %v1434
      %v1060 = vphi -1e+30, %v1435
      %v1061 = vphi -1e+30, %v1436
      %v1062 = vphi -1e+30, %v1437
      %v1063 = vphi -1e+30, %v1438
      %v1064 = vphi 1e+30, %v1583
      %v1065 = vphi 1e+30, %v1584
      %v1066 = vphi 1e+30, %v1585
      %v1067 = vphi 1e+30, %v1586
      %v1068 = vphi 1e+30, %v1587
      %v1069 = vphi 1e+30, %v1588
      %v1070 = vphi 1e+30, %v1589
      %v1071 = vphi 1e+30, %v1590
      %v1072 = vphi 1e+30, %v1591
      %v1073 = vphi 1e+30, %v1592
      %v1074 = vphi 1e+30, %v1593
      %v1075 = vphi 1e+30, %v1594
      %v1076 = vphi 1e+30, %v1595
      %v1077 = vphi 1e+30, %v1596
      %v1078 = vphi 1e+30, %v1597
      %v1079 = vphi 1e+30, %v1598
    $region212: #{tpu_custom_call.1} parent=1 // loop_header_branch
      %1046 = sbr.rel (%p1044) target = $region216
    $region213: #{tpu_custom_call.1} parent=1 // loop_body
      %s1080 = smul.u32 %s1043, 16
      %s1081 = scalar_lea.vmem [#allocation2], %s1080
      %v1082 = vld [vmem:[%s1081] sm:$0xff]
      %v1083 = vld [vmem:[%s1081 + $0x8] sm:$0xff]
      %s1084 = scalar_lea.vmem %s13, %s1080
      %v1085 = vld [vmem:[%s1084] sm:$0xff]
      %v1086 = vld [vmem:[%s1084 + $0x8] sm:$0xff]
      %vm1087 = vcmp.eq.s32.totalorder %v1085, 0
      %vm1088 = vcmp.eq.s32.totalorder %v1086, 0
      %vm1089 = vcmp.eq.s32.totalorder %v1085, 1
      %vm1090 = vcmp.eq.s32.totalorder %v1086, 1
      %vm1091 = vcmp.eq.s32.totalorder %v1085, 2
      %vm1092 = vcmp.eq.s32.totalorder %v1086, 2
      %vm1093 = vcmp.eq.s32.totalorder %v1085, 3
      %vm1094 = vcmp.eq.s32.totalorder %v1086, 3
      %vm1095 = vcmp.eq.s32.totalorder %v1085, 4
      %vm1096 = vcmp.eq.s32.totalorder %v1086, 4
      %vm1097 = vcmp.eq.s32.totalorder %v1085, 5
      %vm1098 = vcmp.eq.s32.totalorder %v1086, 5
      %vm1099 = vcmp.eq.s32.totalorder %v1085, 6
      %vm1100 = vcmp.eq.s32.totalorder %v1086, 6
      %vm1101 = vcmp.eq.s32.totalorder %v1085, 7
      %vm1102 = vcmp.eq.s32.totalorder %v1086, 7
      %vm1103 = vcmp.eq.s32.totalorder %v1085, 8
      %vm1104 = vcmp.eq.s32.totalorder %v1086, 8
      %vm1105 = vcmp.eq.s32.totalorder %v1085, 9
      %vm1106 = vcmp.eq.s32.totalorder %v1086, 9
      %vm1107 = vcmp.eq.s32.totalorder %v1085, 10
      %vm1108 = vcmp.eq.s32.totalorder %v1086, 10
      %vm1109 = vcmp.eq.s32.totalorder %v1085, 11
      %vm1110 = vcmp.eq.s32.totalorder %v1086, 11
      %vm1111 = vcmp.eq.s32.totalorder %v1085, 12
      %vm1112 = vcmp.eq.s32.totalorder %v1086, 12
      %vm1113 = vcmp.eq.s32.totalorder %v1085, 13
      %vm1114 = vcmp.eq.s32.totalorder %v1086, 13
      %vm1115 = vcmp.eq.s32.totalorder %v1085, 14
      %vm1116 = vcmp.eq.s32.totalorder %v1086, 14
      %vm1117 = vcmp.eq.s32.totalorder %v1085, 15
      %vm1118 = vcmp.eq.s32.totalorder %v1086, 15
      %v1119 = vsel %vm1087, 1, 0
      %v1120 = vsel %vm1088, 1, 0
      %v1121 = vsel %vm1089, 1, 0
      %v1122 = vsel %vm1090, 1, 0
      %v1123 = vsel %vm1091, 1, 0
      %v1124 = vsel %vm1092, 1, 0
      %v1125 = vsel %vm1093, 1, 0
      %v1126 = vsel %vm1094, 1, 0
      %v1127 = vsel %vm1095, 1, 0
      %v1128 = vsel %vm1096, 1, 0
      %v1129 = vsel %vm1097, 1, 0
      %v1130 = vsel %vm1098, 1, 0
      %v1131 = vsel %vm1099, 1, 0
      %v1132 = vsel %vm1100, 1, 0
      %v1133 = vsel %vm1101, 1, 0
      %v1134 = vsel %vm1102, 1, 0
      %v1135 = vsel %vm1103, 1, 0
      %v1136 = vsel %vm1104, 1, 0
      %v1137 = vsel %vm1105, 1, 0
      %v1138 = vsel %vm1106, 1, 0
      %v1139 = vsel %vm1107, 1, 0
      %v1140 = vsel %vm1108, 1, 0
      %v1141 = vsel %vm1109, 1, 0
      %v1142 = vsel %vm1110, 1, 0
      %v1143 = vsel %vm1111, 1, 0
      %v1144 = vsel %vm1112, 1, 0
      %v1145 = vsel %vm1113, 1, 0
      %v1146 = vsel %vm1114, 1, 0
      %v1147 = vsel %vm1115, 1, 0
      %v1148 = vsel %vm1116, 1, 0
      %v1149 = vsel %vm1117, 1, 0
      %v1150 = vsel %vm1118, 1, 0
      %1151 = vset.pattern.permute.xlu0 0
      %1152 = vperm.xlu0 %1151, %v1119
      %v1153 = vpop.permute.xlu0 %1152
      %1154 = vset.pattern.permute.xlu0 0
      %1155 = vperm.xlu0 %1154, %v1120
      %v1156 = vpop.permute.xlu0 %1155
      %1157 = vset.pattern.permute.xlu0 0
      %1158 = vperm.xlu0 %1157, %v1121
      %v1159 = vpop.permute.xlu0 %1158
      %1160 = vset.pattern.permute.xlu0 0
      %1161 = vperm.xlu0 %1160, %v1122
      %v1162 = vpop.permute.xlu0 %1161
      %1163 = vset.pattern.permute.xlu0 0
      %1164 = vperm.xlu0 %1163, %v1123
      %v1165 = vpop.permute.xlu0 %1164
      %1166 = vset.pattern.permute.xlu0 0
      %1167 = vperm.xlu0 %1166, %v1124
      %v1168 = vpop.permute.xlu0 %1167
      %1169 = vset.pattern.permute.xlu0 0
      %1170 = vperm.xlu0 %1169, %v1125
      %v1171 = vpop.permute.xlu0 %1170
      %1172 = vset.pattern.permute.xlu0 0
      %1173 = vperm.xlu0 %1172, %v1126
      %v1174 = vpop.permute.xlu0 %1173
      %1175 = vset.pattern.permute.xlu0 0
      %1176 = vperm.xlu0 %1175, %v1127
      %v1177 = vpop.permute.xlu0 %1176
      %1178 = vset.pattern.permute.xlu0 0
      %1179 = vperm.xlu0 %1178, %v1128
      %v1180 = vpop.permute.xlu0 %1179
      %1181 = vset.pattern.permute.xlu0 0
      %1182 = vperm.xlu0 %1181, %v1129
      %v1183 = vpop.permute.xlu0 %1182
      %1184 = vset.pattern.permute.xlu0 0
      %1185 = vperm.xlu0 %1184, %v1130
      %v1186 = vpop.permute.xlu0 %1185
      %1187 = vset.pattern.permute.xlu0 0
      %1188 = vperm.xlu0 %1187, %v1131
      %v1189 = vpop.permute.xlu0 %1188
      %1190 = vset.pattern.permute.xlu0 0
      %1191 = vperm.xlu0 %1190, %v1132
      %v1192 = vpop.permute.xlu0 %1191
      %1193 = vset.pattern.permute.xlu0 0
      %1194 = vperm.xlu0 %1193, %v1133
      %v1195 = vpop.permute.xlu0 %1194
      %1196 = vset.pattern.permute.xlu0 0
      %1197 = vperm.xlu0 %1196, %v1134
      %v1198 = vpop.permute.xlu0 %1197
      %1199 = vset.pattern.permute.xlu0 0
      %1200 = vperm.xlu0 %1199, %v1135
      %v1201 = vpop.permute.xlu0 %1200
      %1202 = vset.pattern.permute.xlu0 0
      %1203 = vperm.xlu0 %1202, %v1136
      %v1204 = vpop.permute.xlu0 %1203
      %1205 = vset.pattern.permute.xlu0 0
      %1206 = vperm.xlu0 %1205, %v1137
      %v1207 = vpop.permute.xlu0 %1206
      %1208 = vset.pattern.permute.xlu0 0
      %1209 = vperm.xlu0 %1208, %v1138
      %v1210 = vpop.permute.xlu0 %1209
      %1211 = vset.pattern.permute.xlu0 0
      %1212 = vperm.xlu0 %1211, %v1139
      %v1213 = vpop.permute.xlu0 %1212
      %1214 = vset.pattern.permute.xlu0 0
      %1215 = vperm.xlu0 %1214, %v1140
      %v1216 = vpop.permute.xlu0 %1215
      %1217 = vset.pattern.permute.xlu0 0
      %1218 = vperm.xlu0 %1217, %v1141
      %v1219 = vpop.permute.xlu0 %1218
      %1220 = vset.pattern.permute.xlu0 0
      %1221 = vperm.xlu0 %1220, %v1142
      %v1222 = vpop.permute.xlu0 %1221
      %1223 = vset.pattern.permute.xlu0 0
      %1224 = vperm.xlu0 %1223, %v1143
      %v1225 = vpop.permute.xlu0 %1224
      %1226 = vset.pattern.permute.xlu0 0
      %1227 = vperm.xlu0 %1226, %v1144
      %v1228 = vpop.permute.xlu0 %1227
      %1229 = vset.pattern.permute.xlu0 0
      %1230 = vperm.xlu0 %1229, %v1145
      %v1231 = vpop.permute.xlu0 %1230
      %1232 = vset.pattern.permute.xlu0 0
      %1233 = vperm.xlu0 %1232, %v1146
      %v1234 = vpop.permute.xlu0 %1233
      %1235 = vset.pattern.permute.xlu0 0
      %1236 = vperm.xlu0 %1235, %v1147
      %v1237 = vpop.permute.xlu0 %1236
      %1238 = vset.pattern.permute.xlu0 0
      %1239 = vperm.xlu0 %1238, %v1148
      %v1240 = vpop.permute.xlu0 %1239
      %1241 = vset.pattern.permute.xlu0 0
      %1242 = vperm.xlu0 %1241, %v1149
      %v1243 = vpop.permute.xlu0 %1242
      %1244 = vset.pattern.permute.xlu0 0
      %1245 = vperm.xlu0 %1244, %v1150
      %v1246 = vpop.permute.xlu0 %1245
      %vm1247 = vcmp.eq.s32.totalorder %v1153, 1
      %vm1248 = vcmp.eq.s32.totalorder %v1156, 1
      %vm1249 = vcmp.eq.s32.totalorder %v1159, 1
      %vm1250 = vcmp.eq.s32.totalorder %v1162, 1
      %vm1251 = vcmp.eq.s32.totalorder %v1165, 1
      %vm1252 = vcmp.eq.s32.totalorder %v1168, 1
      %vm1253 = vcmp.eq.s32.totalorder %v1171, 1
      %vm1254 = vcmp.eq.s32.totalorder %v1174, 1
      %vm1255 = vcmp.eq.s32.totalorder %v1177, 1
      %vm1256 = vcmp.eq.s32.totalorder %v1180, 1
      %vm1257 = vcmp.eq.s32.totalorder %v1183, 1
      %vm1258 = vcmp.eq.s32.totalorder %v1186, 1
      %vm1259 = vcmp.eq.s32.totalorder %v1189, 1
      %vm1260 = vcmp.eq.s32.totalorder %v1192, 1
      %vm1261 = vcmp.eq.s32.totalorder %v1195, 1
      %vm1262 = vcmp.eq.s32.totalorder %v1198, 1
      %vm1263 = vcmp.eq.s32.totalorder %v1201, 1
      %vm1264 = vcmp.eq.s32.totalorder %v1204, 1
      %vm1265 = vcmp.eq.s32.totalorder %v1207, 1
      %vm1266 = vcmp.eq.s32.totalorder %v1210, 1
      %vm1267 = vcmp.eq.s32.totalorder %v1213, 1
      %vm1268 = vcmp.eq.s32.totalorder %v1216, 1
      %vm1269 = vcmp.eq.s32.totalorder %v1219, 1
      %vm1270 = vcmp.eq.s32.totalorder %v1222, 1
      %vm1271 = vcmp.eq.s32.totalorder %v1225, 1
      %vm1272 = vcmp.eq.s32.totalorder %v1228, 1
      %vm1273 = vcmp.eq.s32.totalorder %v1231, 1
      %vm1274 = vcmp.eq.s32.totalorder %v1234, 1
      %vm1275 = vcmp.eq.s32.totalorder %v1237, 1
      %vm1276 = vcmp.eq.s32.totalorder %v1240, 1
      %vm1277 = vcmp.eq.s32.totalorder %v1243, 1
      %vm1278 = vcmp.eq.s32.totalorder %v1246, 1
      %v1279 = vsel %vm1247, %v1082, -1e+30
      %v1280 = vsel %vm1248, %v1083, -1e+30
      %v1281 = vsel %vm1249, %v1082, -1e+30
      %v1282 = vsel %vm1250, %v1083, -1e+30
      %v1283 = vsel %vm1251, %v1082, -1e+30
      %v1284 = vsel %vm1252, %v1083, -1e+30
      %v1285 = vsel %vm1253, %v1082, -1e+30
      %v1286 = vsel %vm1254, %v1083, -1e+30
      %v1287 = vsel %vm1255, %v1082, -1e+30
      %v1288 = vsel %vm1256, %v1083, -1e+30
      %v1289 = vsel %vm1257, %v1082, -1e+30
      %v1290 = vsel %vm1258, %v1083, -1e+30
      %v1291 = vsel %vm1259, %v1082, -1e+30
      %v1292 = vsel %vm1260, %v1083, -1e+30
      %v1293 = vsel %vm1261, %v1082, -1e+30
      %v1294 = vsel %vm1262, %v1083, -1e+30
      %v1295 = vsel %vm1263, %v1082, -1e+30
      %v1296 = vsel %vm1264, %v1083, -1e+30
      %v1297 = vsel %vm1265, %v1082, -1e+30
      %v1298 = vsel %vm1266, %v1083, -1e+30
      %v1299 = vsel %vm1267, %v1082, -1e+30
      %v1300 = vsel %vm1268, %v1083, -1e+30
      %v1301 = vsel %vm1269, %v1082, -1e+30
      %v1302 = vsel %vm1270, %v1083, -1e+30
      %v1303 = vsel %vm1271, %v1082, -1e+30
      %v1304 = vsel %vm1272, %v1083, -1e+30
      %v1305 = vsel %vm1273, %v1082, -1e+30
      %v1306 = vsel %vm1274, %v1083, -1e+30
      %v1307 = vsel %vm1275, %v1082, -1e+30
      %v1308 = vsel %vm1276, %v1083, -1e+30
      %v1309 = vsel %vm1277, %v1082, -1e+30
      %v1310 = vsel %vm1278, %v1083, -1e+30
      %v1311 = vmax.f32 %v1279, %v1280
      %v1312 = vrot.slane %v1311, 4
      %v1313 = vmax.f32 %v1311, %v1312
      %v1314 = vrot.slane %v1313, 2
      %v1315 = vmax.f32 %v1313, %v1314
      %v1316 = vrot.slane %v1315, 1
      %v1317 = vmax.f32 %v1315, %v1316
      %v1318 = vmax.f32 %v1281, %v1282
      %v1319 = vrot.slane %v1318, 4
      %v1320 = vmax.f32 %v1318, %v1319
      %v1321 = vrot.slane %v1320, 2
      %v1322 = vmax.f32 %v1320, %v1321
      %v1323 = vrot.slane %v1322, 1
      %v1324 = vmax.f32 %v1322, %v1323
      %v1325 = vmax.f32 %v1283, %v1284
      %v1326 = vrot.slane %v1325, 4
      %v1327 = vmax.f32 %v1325, %v1326
      %v1328 = vrot.slane %v1327, 2
      %v1329 = vmax.f32 %v1327, %v1328
      %v1330 = vrot.slane %v1329, 1
      %v1331 = vmax.f32 %v1329, %v1330
      %v1332 = vmax.f32 %v1285, %v1286
      %v1333 = vrot.slane %v1332, 4
      %v1334 = vmax.f32 %v1332, %v1333
      %v1335 = vrot.slane %v1334, 2
      %v1336 = vmax.f32 %v1334, %v1335
      %v1337 = vrot.slane %v1336, 1
      %v1338 = vmax.f32 %v1336, %v1337
      %v1339 = vmax.f32 %v1287, %v1288
      %v1340 = vrot.slane %v1339, 4
      %v1341 = vmax.f32 %v1339, %v1340
      %v1342 = vrot.slane %v1341, 2
      %v1343 = vmax.f32 %v1341, %v1342
      %v1344 = vrot.slane %v1343, 1
      %v1345 = vmax.f32 %v1343, %v1344
      %v1346 = vmax.f32 %v1289, %v1290
      %v1347 = vrot.slane %v1346, 4
      %v1348 = vmax.f32 %v1346, %v1347
      %v1349 = vrot.slane %v1348, 2
      %v1350 = vmax.f32 %v1348, %v1349
      %v1351 = vrot.slane %v1350, 1
      %v1352 = vmax.f32 %v1350, %v1351
      %v1353 = vmax.f32 %v1291, %v1292
      %v1354 = vrot.slane %v1353, 4
      %v1355 = vmax.f32 %v1353, %v1354
      %v1356 = vrot.slane %v1355, 2
      %v1357 = vmax.f32 %v1355, %v1356
      %v1358 = vrot.slane %v1357, 1
      %v1359 = vmax.f32 %v1357, %v1358
      %v1360 = vmax.f32 %v1293, %v1294
      %v1361 = vrot.slane %v1360, 4
      %v1362 = vmax.f32 %v1360, %v1361
      %v1363 = vrot.slane %v1362, 2
      %v1364 = vmax.f32 %v1362, %v1363
      %v1365 = vrot.slane %v1364, 1
      %v1366 = vmax.f32 %v1364, %v1365
      %v1367 = vmax.f32 %v1295, %v1296
      %v1368 = vrot.slane %v1367, 4
      %v1369 = vmax.f32 %v1367, %v1368
      %v1370 = vrot.slane %v1369, 2
      %v1371 = vmax.f32 %v1369, %v1370
      %v1372 = vrot.slane %v1371, 1
      %v1373 = vmax.f32 %v1371, %v1372
      %v1374 = vmax.f32 %v1297, %v1298
      %v1375 = vrot.slane %v1374, 4
      %v1376 = vmax.f32 %v1374, %v1375
      %v1377 = vrot.slane %v1376, 2
      %v1378 = vmax.f32 %v1376, %v1377
      %v1379 = vrot.slane %v1378, 1
      %v1380 = vmax.f32 %v1378, %v1379
      %v1381 = vmax.f32 %v1299, %v1300
      %v1382 = vrot.slane %v1381, 4
      %v1383 = vmax.f32 %v1381, %v1382
      %v1384 = vrot.slane %v1383, 2
      %v1385 = vmax.f32 %v1383, %v1384
      %v1386 = vrot.slane %v1385, 1
      %v1387 = vmax.f32 %v1385, %v1386
      %v1388 = vmax.f32 %v1301, %v1302
      %v1389 = vrot.slane %v1388, 4
      %v1390 = vmax.f32 %v1388, %v1389
      %v1391 = vrot.slane %v1390, 2
      %v1392 = vmax.f32 %v1390, %v1391
      %v1393 = vrot.slane %v1392, 1
      %v1394 = vmax.f32 %v1392, %v1393
      %v1395 = vmax.f32 %v1303, %v1304
      %v1396 = vrot.slane %v1395, 4
      %v1397 = vmax.f32 %v1395, %v1396
      %v1398 = vrot.slane %v1397, 2
      %v1399 = vmax.f32 %v1397, %v1398
      %v1400 = vrot.slane %v1399, 1
      %v1401 = vmax.f32 %v1399, %v1400
      %v1402 = vmax.f32 %v1305, %v1306
      %v1403 = vrot.slane %v1402, 4
      %v1404 = vmax.f32 %v1402, %v1403
      %v1405 = vrot.slane %v1404, 2
      %v1406 = vmax.f32 %v1404, %v1405
      %v1407 = vrot.slane %v1406, 1
      %v1408 = vmax.f32 %v1406, %v1407
      %v1409 = vmax.f32 %v1307, %v1308
      %v1410 = vrot.slane %v1409, 4
      %v1411 = vmax.f32 %v1409, %v1410
      %v1412 = vrot.slane %v1411, 2
      %v1413 = vmax.f32 %v1411, %v1412
      %v1414 = vrot.slane %v1413, 1
      %v1415 = vmax.f32 %v1413, %v1414
      %v1416 = vmax.f32 %v1309, %v1310
      %v1417 = vrot.slane %v1416, 4
      %v1418 = vmax.f32 %v1416, %v1417
      %v1419 = vrot.slane %v1418, 2
      %v1420 = vmax.f32 %v1418, %v1419
      %v1421 = vrot.slane %v1420, 1
      %v1422 = vmax.f32 %v1420, %v1421
      %v1423 = vmax.f32 %v1048, %v1317
      %v1424 = vmax.f32 %v1049, %v1324
      %v1425 = vmax.f32 %v1050, %v1331
      %v1426 = vmax.f32 %v1051, %v1338
      %v1427 = vmax.f32 %v1052, %v1345
      %v1428 = vmax.f32 %v1053, %v1352
      %v1429 = vmax.f32 %v1054, %v1359
      %v1430 = vmax.f32 %v1055, %v1366
      %v1431 = vmax.f32 %v1056, %v1373
      %v1432 = vmax.f32 %v1057, %v1380
      %v1433 = vmax.f32 %v1058, %v1387
      %v1434 = vmax.f32 %v1059, %v1394
      %v1435 = vmax.f32 %v1060, %v1401
      %v1436 = vmax.f32 %v1061, %v1408
      %v1437 = vmax.f32 %v1062, %v1415
      %v1438 = vmax.f32 %v1063, %v1422
      %v1439 = vsel %vm1247, %v1082, 1e+30
      %v1440 = vsel %vm1248, %v1083, 1e+30
      %v1441 = vsel %vm1249, %v1082, 1e+30
      %v1442 = vsel %vm1250, %v1083, 1e+30
      %v1443 = vsel %vm1251, %v1082, 1e+30
      %v1444 = vsel %vm1252, %v1083, 1e+30
      %v1445 = vsel %vm1253, %v1082, 1e+30
      %v1446 = vsel %vm1254, %v1083, 1e+30
      %v1447 = vsel %vm1255, %v1082, 1e+30
      %v1448 = vsel %vm1256, %v1083, 1e+30
      %v1449 = vsel %vm1257, %v1082, 1e+30
      %v1450 = vsel %vm1258, %v1083, 1e+30
      %v1451 = vsel %vm1259, %v1082, 1e+30
      %v1452 = vsel %vm1260, %v1083, 1e+30
      %v1453 = vsel %vm1261, %v1082, 1e+30
      %v1454 = vsel %vm1262, %v1083, 1e+30
      %v1455 = vsel %vm1263, %v1082, 1e+30
      %v1456 = vsel %vm1264, %v1083, 1e+30
      %v1457 = vsel %vm1265, %v1082, 1e+30
      %v1458 = vsel %vm1266, %v1083, 1e+30
      %v1459 = vsel %vm1267, %v1082, 1e+30
      %v1460 = vsel %vm1268, %v1083, 1e+30
      %v1461 = vsel %vm1269, %v1082, 1e+30
      %v1462 = vsel %vm1270, %v1083, 1e+30
      %v1463 = vsel %vm1271, %v1082, 1e+30
      %v1464 = vsel %vm1272, %v1083, 1e+30
      %v1465 = vsel %vm1273, %v1082, 1e+30
      %v1466 = vsel %vm1274, %v1083, 1e+30
      %v1467 = vsel %vm1275, %v1082, 1e+30
      %v1468 = vsel %vm1276, %v1083, 1e+30
      %v1469 = vsel %vm1277, %v1082, 1e+30
      %v1470 = vsel %vm1278, %v1083, 1e+30
      %v1471 = vmin.f32 %v1439, %v1440
      %v1472 = vrot.slane %v1471, 4
      %v1473 = vmin.f32 %v1471, %v1472
      %v1474 = vrot.slane %v1473, 2
      %v1475 = vmin.f32 %v1473, %v1474
      %v1476 = vrot.slane %v1475, 1
      %v1477 = vmin.f32 %v1475, %v1476
      %v1478 = vmin.f32 %v1441, %v1442
      %v1479 = vrot.slane %v1478, 4
      %v1480 = vmin.f32 %v1478, %v1479
      %v1481 = vrot.slane %v1480, 2
      %v1482 = vmin.f32 %v1480, %v1481
      %v1483 = vrot.slane %v1482, 1
      %v1484 = vmin.f32 %v1482, %v1483
      %v1485 = vmin.f32 %v1443, %v1444
      %v1486 = vrot.slane %v1485, 4
      %v1487 = vmin.f32 %v1485, %v1486
      %v1488 = vrot.slane %v1487, 2
      %v1489 = vmin.f32 %v1487, %v1488
      %v1490 = vrot.slane %v1489, 1
      %v1491 = vmin.f32 %v1489, %v1490
      %v1492 = vmin.f32 %v1445, %v1446
      %v1493 = vrot.slane %v1492, 4
      %v1494 = vmin.f32 %v1492, %v1493
      %v1495 = vrot.slane %v1494, 2
      %v1496 = vmin.f32 %v1494, %v1495
      %v1497 = vrot.slane %v1496, 1
      %v1498 = vmin.f32 %v1496, %v1497
      %v1499 = vmin.f32 %v1447, %v1448
      %v1500 = vrot.slane %v1499, 4
      %v1501 = vmin.f32 %v1499, %v1500
      %v1502 = vrot.slane %v1501, 2
      %v1503 = vmin.f32 %v1501, %v1502
      %v1504 = vrot.slane %v1503, 1
      %v1505 = vmin.f32 %v1503, %v1504
      %v1506 = vmin.f32 %v1449, %v1450
      %v1507 = vrot.slane %v1506, 4
      %v1508 = vmin.f32 %v1506, %v1507
      %v1509 = vrot.slane %v1508, 2
      %v1510 = vmin.f32 %v1508, %v1509
      %v1511 = vrot.slane %v1510, 1
      %v1512 = vmin.f32 %v1510, %v1511
      %v1513 = vmin.f32 %v1451, %v1452
      %v1514 = vrot.slane %v1513, 4
      %v1515 = vmin.f32 %v1513, %v1514
      %v1516 = vrot.slane %v1515, 2
      %v1517 = vmin.f32 %v1515, %v1516
      %v1518 = vrot.slane %v1517, 1
      %v1519 = vmin.f32 %v1517, %v1518
      %v1520 = vmin.f32 %v1453, %v1454
      %v1521 = vrot.slane %v1520, 4
      %v1522 = vmin.f32 %v1520, %v1521
      %v1523 = vrot.slane %v1522, 2
      %v1524 = vmin.f32 %v1522, %v1523
      %v1525 = vrot.slane %v1524, 1
      %v1526 = vmin.f32 %v1524, %v1525
      %v1527 = vmin.f32 %v1455, %v1456
      %v1528 = vrot.slane %v1527, 4
      %v1529 = vmin.f32 %v1527, %v1528
      %v1530 = vrot.slane %v1529, 2
      %v1531 = vmin.f32 %v1529, %v1530
      %v1532 = vrot.slane %v1531, 1
      %v1533 = vmin.f32 %v1531, %v1532
      %v1534 = vmin.f32 %v1457, %v1458
      %v1535 = vrot.slane %v1534, 4
      %v1536 = vmin.f32 %v1534, %v1535
      %v1537 = vrot.slane %v1536, 2
      %v1538 = vmin.f32 %v1536, %v1537
      %v1539 = vrot.slane %v1538, 1
      %v1540 = vmin.f32 %v1538, %v1539
      %v1541 = vmin.f32 %v1459, %v1460
      %v1542 = vrot.slane %v1541, 4
      %v1543 = vmin.f32 %v1541, %v1542
      %v1544 = vrot.slane %v1543, 2
      %v1545 = vmin.f32 %v1543, %v1544
      %v1546 = vrot.slane %v1545, 1
      %v1547 = vmin.f32 %v1545, %v1546
      %v1548 = vmin.f32 %v1461, %v1462
      %v1549 = vrot.slane %v1548, 4
      %v1550 = vmin.f32 %v1548, %v1549
      %v1551 = vrot.slane %v1550, 2
      %v1552 = vmin.f32 %v1550, %v1551
      %v1553 = vrot.slane %v1552, 1
      %v1554 = vmin.f32 %v1552, %v1553
      %v1555 = vmin.f32 %v1463, %v1464
      %v1556 = vrot.slane %v1555, 4
      %v1557 = vmin.f32 %v1555, %v1556
      %v1558 = vrot.slane %v1557, 2
      %v1559 = vmin.f32 %v1557, %v1558
      %v1560 = vrot.slane %v1559, 1
      %v1561 = vmin.f32 %v1559, %v1560
      %v1562 = vmin.f32 %v1465, %v1466
      %v1563 = vrot.slane %v1562, 4
      %v1564 = vmin.f32 %v1562, %v1563
      %v1565 = vrot.slane %v1564, 2
      %v1566 = vmin.f32 %v1564, %v1565
      %v1567 = vrot.slane %v1566, 1
      %v1568 = vmin.f32 %v1566, %v1567
      %v1569 = vmin.f32 %v1467, %v1468
      %v1570 = vrot.slane %v1569, 4
      %v1571 = vmin.f32 %v1569, %v1570
      %v1572 = vrot.slane %v1571, 2
      %v1573 = vmin.f32 %v1571, %v1572
      %v1574 = vrot.slane %v1573, 1
      %v1575 = vmin.f32 %v1573, %v1574
      %v1576 = vmin.f32 %v1469, %v1470
      %v1577 = vrot.slane %v1576, 4
      %v1578 = vmin.f32 %v1576, %v1577
      %v1579 = vrot.slane %v1578, 2
      %v1580 = vmin.f32 %v1578, %v1579
      %v1581 = vrot.slane %v1580, 1
      %v1582 = vmin.f32 %v1580, %v1581
      %v1583 = vmin.f32 %v1064, %v1477
      %v1584 = vmin.f32 %v1065, %v1484
      %v1585 = vmin.f32 %v1066, %v1491
      %v1586 = vmin.f32 %v1067, %v1498
      %v1587 = vmin.f32 %v1068, %v1505
      %v1588 = vmin.f32 %v1069, %v1512
      %v1589 = vmin.f32 %v1070, %v1519
      %v1590 = vmin.f32 %v1071, %v1526
      %v1591 = vmin.f32 %v1072, %v1533
      %v1592 = vmin.f32 %v1073, %v1540
      %v1593 = vmin.f32 %v1074, %v1547
      %v1594 = vmin.f32 %v1075, %v1554
      %v1595 = vmin.f32 %v1076, %v1561
      %v1596 = vmin.f32 %v1077, %v1568
      %v1597 = vmin.f32 %v1078, %v1575
      %v1598 = vmin.f32 %v1079, %v1582
    $region214: #{tpu_custom_call.1} parent=1 // loop_footer
      %s1047 = sadd.s32 1, %s1043
    $region215: #{tpu_custom_call.1} parent=1 // loop_footer_branch
      %1042 = sbr.rel target = $region211
    $region216: #{tpu_custom_call.1} parent=1 // loop_exit
      _
    %v1599 = vsel %vm528, 1, 0
    %v1600 = vsel %vm529, 1, 0
    %1601 = vset.pattern.permute.xlu0 0
    %1602 = vperm.xlu0 %1601, %v1599
    %v1603 = vpop.permute.xlu0 %1602
    %1604 = vset.pattern.permute.xlu0 0
    %1605 = vperm.xlu0 %1604, %v1600
    %v1606 = vpop.permute.xlu0 %1605
    %vm1607 = vcmp.eq.s32.totalorder %v1603, 1
    %vm1608 = vcmp.eq.s32.totalorder %v1606, 1
    %vm1625 = vcmask 1041409
    %v1626 = vsel %vm1625, %v1049, %v1048
    %vm1627 = vcmask 1042434
    %v1628 = vsel %vm1627, %v1050, %v1626
    %vm1629 = vcmask 1043459
    %v1630 = vsel %vm1629, %v1051, %v1628
    %vm1631 = vcmask 1044484
    %v1632 = vsel %vm1631, %v1052, %v1630
    %vm1633 = vcmask 1045509
    %v1634 = vsel %vm1633, %v1053, %v1632
    %vm1635 = vcmask 1046534
    %v1636 = vsel %vm1635, %v1054, %v1634
    %vm1637 = vcmask 1047559
    %v1638 = vsel %vm1637, %v1055, %v1636
    %v1639 = vsel %vm1625, %v1057, %v1056
    %v1640 = vsel %vm1627, %v1058, %v1639
    %v1641 = vsel %vm1629, %v1059, %v1640
    %v1642 = vsel %vm1631, %v1060, %v1641
    %v1643 = vsel %vm1633, %v1061, %v1642
    %v1644 = vsel %vm1635, %v1062, %v1643
    %v1645 = vsel %vm1637, %v1063, %v1644
    %v1648 = vsel %vm1607, %v1638, 0.0
    %v1649 = vsel %vm1608, %v1645, 0.0
    %v1666 = vsel %vm1625, %v1065, %v1064
    %v1667 = vsel %vm1627, %v1066, %v1666
    %v1668 = vsel %vm1629, %v1067, %v1667
    %v1669 = vsel %vm1631, %v1068, %v1668
    %v1670 = vsel %vm1633, %v1069, %v1669
    %v1671 = vsel %vm1635, %v1070, %v1670
    %v1672 = vsel %vm1637, %v1071, %v1671
    %v1673 = vsel %vm1625, %v1073, %v1072
    %v1674 = vsel %vm1627, %v1074, %v1673
    %v1675 = vsel %vm1629, %v1075, %v1674
    %v1676 = vsel %vm1631, %v1076, %v1675
    %v1677 = vsel %vm1633, %v1077, %v1676
    %v1678 = vsel %vm1635, %v1078, %v1677
    %v1679 = vsel %vm1637, %v1079, %v1678
    %v1682 = vsel %vm1607, %v1672, 0.0
    %v1683 = vsel %vm1608, %v1679, 0.0
    %v1684 = vpack.c.bf16 %v1017, %v1015
    %v1685 = vpack.c.bf16 %v1683, %v1682
    %v1686 = vpack.c.bf16 %v1649, %v1648
    %v1687 = vpack.c.bf16 %v1041, %v1034
    %v1688 = vld [vmem:[#allocation9] sm:$0xf]
    %v1689 = vld [vmem:[#allocation9 + $0x4] sm:$0xf]
    %v1690 = vld [vmem:[#allocation9 + $0x8] sm:$0xf]
    %v1691 = vld [vmem:[#allocation9 + $0xc] sm:$0xf]
    %v1692 = vld [vmem:[#allocation9 + $0x10] sm:$0xf]
    %v1693 = vld [vmem:[#allocation9 + $0x14] sm:$0xf]
    %v1694 = vld [vmem:[#allocation9 + $0x18] sm:$0xf]
    %v1695 = vld [vmem:[#allocation9 + $0x1c] sm:$0xf]
    %v1696 = vld [vmem:[#allocation9 + $0x20] sm:$0xf]
    %v1697 = vld [vmem:[#allocation9 + $0x24] sm:$0xf]
    %v1698 = vld [vmem:[#allocation9 + $0x28] sm:$0xf]
    %v1699 = vld [vmem:[#allocation9 + $0x2c] sm:$0xf]
    %v1700 = vld [vmem:[#allocation9 + $0x30] sm:$0xf]
    %v1701 = vld [vmem:[#allocation9 + $0x34] sm:$0xf]
    %v1702 = vld [vmem:[#allocation9 + $0x38] sm:$0xf]
    %v1703 = vld [vmem:[#allocation9 + $0x3c] sm:$0xf]
    %v1704 = vld [vmem:[#allocation9 + $0x40] sm:$0xf]
    %v1705 = vld [vmem:[#allocation9 + $0x44] sm:$0xf]
    %v1706 = vld [vmem:[#allocation9 + $0x48] sm:$0xf]
    %v1707 = vld [vmem:[#allocation9 + $0x4c] sm:$0xf]
    %v1708 = vld [vmem:[#allocation9 + $0x50] sm:$0xf]
    %v1709 = vld [vmem:[#allocation9 + $0x54] sm:$0xf]
    %v1710 = vld [vmem:[#allocation9 + $0x58] sm:$0xf]
    %v1711 = vld [vmem:[#allocation9 + $0x5c] sm:$0xf]
    %v1712 = vld [vmem:[#allocation9 + $0x60] sm:$0xf]
    %v1713 = vld [vmem:[#allocation9 + $0x64] sm:$0xf]
    %v1714 = vld [vmem:[#allocation9 + $0x68] sm:$0xf]
    %v1715 = vld [vmem:[#allocation9 + $0x6c] sm:$0xf]
    %v1716 = vld [vmem:[#allocation9 + $0x70] sm:$0xf]
    %v1717 = vld [vmem:[#allocation9 + $0x74] sm:$0xf]
    %v1718 = vld [vmem:[#allocation9 + $0x78] sm:$0xf]
    %v1719 = vld [vmem:[#allocation9 + $0x7c] sm:$0xf]
    %v1720 = vld [vmem:[#allocation9 + $0x80] sm:$0xf]
    %v1721 = vld [vmem:[#allocation9 + $0x84] sm:$0xf]
    %v1722 = vld [vmem:[#allocation9 + $0x88] sm:$0xf]
    %v1723 = vld [vmem:[#allocation9 + $0x8c] sm:$0xf]
    %v1724 = vld [vmem:[#allocation9 + $0x90] sm:$0xf]
    %v1725 = vld [vmem:[#allocation9 + $0x94] sm:$0xf]
    %v1726 = vld [vmem:[#allocation9 + $0x98] sm:$0xf]
    %v1727 = vld [vmem:[#allocation9 + $0x9c] sm:$0xf]
    %v1728 = vld [vmem:[#allocation9 + $0xa0] sm:$0xf]
    %v1729 = vld [vmem:[#allocation9 + $0xa4] sm:$0xf]
    %v1730 = vld [vmem:[#allocation9 + $0xa8] sm:$0xf]
    %v1731 = vld [vmem:[#allocation9 + $0xac] sm:$0xf]
    %v1732 = vld [vmem:[#allocation9 + $0xb0] sm:$0xf]
    %v1733 = vld [vmem:[#allocation9 + $0xb4] sm:$0xf]
    %v1734 = vld [vmem:[#allocation9 + $0xb8] sm:$0xf]
    %v1735 = vld [vmem:[#allocation9 + $0xbc] sm:$0xf]
    %v1736 = vld [vmem:[#allocation9 + $0xc0] sm:$0xf]
    %v1737 = vld [vmem:[#allocation9 + $0xc4] sm:$0xf]
    %v1738 = vld [vmem:[#allocation9 + $0xc8] sm:$0xf]
    %v1739 = vld [vmem:[#allocation9 + $0xcc] sm:$0xf]
    %v1740 = vld [vmem:[#allocation9 + $0xd0] sm:$0xf]
    %v1741 = vld [vmem:[#allocation9 + $0xd4] sm:$0xf]
    %v1742 = vld [vmem:[#allocation9 + $0xd8] sm:$0xf]
    %v1743 = vld [vmem:[#allocation9 + $0xdc] sm:$0xf]
    %v1744 = vld [vmem:[#allocation9 + $0xe0] sm:$0xf]
    %v1745 = vld [vmem:[#allocation9 + $0xe4] sm:$0xf]
    %v1746 = vld [vmem:[#allocation9 + $0xe8] sm:$0xf]
    %v1747 = vld [vmem:[#allocation9 + $0xec] sm:$0xf]
    %v1748 = vld [vmem:[#allocation9 + $0xf0] sm:$0xf]
    %v1749 = vld [vmem:[#allocation9 + $0xf4] sm:$0xf]
    %v1750 = vld [vmem:[#allocation9 + $0xf8] sm:$0xf]
    %v1751 = vld [vmem:[#allocation9 + $0xfc] sm:$0xf]
    %v1752 = vld [vmem:[#allocation9 + $0x100] sm:$0xf]
    %v1753 = vld [vmem:[#allocation9 + $0x104] sm:$0xf]
    %v1754 = vld [vmem:[#allocation9 + $0x108] sm:$0xf]
    %v1755 = vld [vmem:[#allocation9 + $0x10c] sm:$0xf]
    %v1756 = vld [vmem:[#allocation9 + $0x110] sm:$0xf]
    %v1757 = vld [vmem:[#allocation9 + $0x114] sm:$0xf]
    %v1758 = vld [vmem:[#allocation9 + $0x118] sm:$0xf]
    %v1759 = vld [vmem:[#allocation9 + $0x11c] sm:$0xf]
    %v1760 = vld [vmem:[#allocation9 + $0x120] sm:$0xf]
    %v1761 = vld [vmem:[#allocation9 + $0x124] sm:$0xf]
    %v1762 = vld [vmem:[#allocation9 + $0x128] sm:$0xf]
    %v1763 = vld [vmem:[#allocation9 + $0x12c] sm:$0xf]
    %v1764 = vld [vmem:[#allocation9 + $0x130] sm:$0xf]
    %v1765 = vld [vmem:[#allocation9 + $0x134] sm:$0xf]
    %v1766 = vld [vmem:[#allocation9 + $0x138] sm:$0xf]
    %v1767 = vld [vmem:[#allocation9 + $0x13c] sm:$0xf]
    %v1768 = vld [vmem:[#allocation10] sm:$0xf]
    %v1769 = vld [vmem:[#allocation10 + $0x4] sm:$0xf]
    %v1770 = vld [vmem:[#allocation10 + $0x8] sm:$0xf]
    %v1771 = vld [vmem:[#allocation10 + $0xc] sm:$0xf]
    %v1772 = vld [vmem:[#allocation10 + $0x10] sm:$0xf]
    %v1773 = vld [vmem:[#allocation10 + $0x14] sm:$0xf]
    %v1774 = vld [vmem:[#allocation10 + $0x18] sm:$0xf]
    %v1775 = vld [vmem:[#allocation10 + $0x1c] sm:$0xf]
    %v1776 = vld [vmem:[#allocation10 + $0x20] sm:$0xf]
    %v1777 = vld [vmem:[#allocation10 + $0x24] sm:$0xf]
    %v1778 = vld [vmem:[#allocation10 + $0x28] sm:$0xf]
    %v1779 = vld [vmem:[#allocation10 + $0x2c] sm:$0xf]
    %v1780 = vld [vmem:[#allocation10 + $0x30] sm:$0xf]
    %v1781 = vld [vmem:[#allocation10 + $0x34] sm:$0xf]
    %v1782 = vld [vmem:[#allocation10 + $0x38] sm:$0xf]
    %v1783 = vld [vmem:[#allocation10 + $0x3c] sm:$0xf]
    %v1784 = vld [vmem:[#allocation10 + $0x40] sm:$0xf]
    %v1785 = vld [vmem:[#allocation10 + $0x44] sm:$0xf]
    %v1786 = vld [vmem:[#allocation10 + $0x48] sm:$0xf]
    %v1787 = vld [vmem:[#allocation10 + $0x4c] sm:$0xf]
    %v1788 = vld [vmem:[#allocation10 + $0x50] sm:$0xf]
    %v1789 = vld [vmem:[#allocation10 + $0x54] sm:$0xf]
    %v1790 = vld [vmem:[#allocation10 + $0x58] sm:$0xf]
    %v1791 = vld [vmem:[#allocation10 + $0x5c] sm:$0xf]
    %v1792 = vld [vmem:[#allocation10 + $0x60] sm:$0xf]
    %v1793 = vld [vmem:[#allocation10 + $0x64] sm:$0xf]
    %v1794 = vld [vmem:[#allocation10 + $0x68] sm:$0xf]
    %v1795 = vld [vmem:[#allocation10 + $0x6c] sm:$0xf]
    %v1796 = vld [vmem:[#allocation10 + $0x70] sm:$0xf]
    %v1797 = vld [vmem:[#allocation10 + $0x74] sm:$0xf]
    %v1798 = vld [vmem:[#allocation10 + $0x78] sm:$0xf]
    %v1799 = vld [vmem:[#allocation10 + $0x7c] sm:$0xf]
    %v1800 = vld [vmem:[#allocation10 + $0x80] sm:$0xf]
    %v1801 = vld [vmem:[#allocation10 + $0x84] sm:$0xf]
    %v1802 = vld [vmem:[#allocation10 + $0x88] sm:$0xf]
    %v1803 = vld [vmem:[#allocation10 + $0x8c] sm:$0xf]
    %v1804 = vld [vmem:[#allocation10 + $0x90] sm:$0xf]
    %v1805 = vld [vmem:[#allocation10 + $0x94] sm:$0xf]
    %v1806 = vld [vmem:[#allocation10 + $0x98] sm:$0xf]
    %v1807 = vld [vmem:[#allocation10 + $0x9c] sm:$0xf]
    %v1808 = vld [vmem:[#allocation10 + $0xa0] sm:$0xf]
    %v1809 = vld [vmem:[#allocation10 + $0xa4] sm:$0xf]
    %v1810 = vld [vmem:[#allocation10 + $0xa8] sm:$0xf]
    %v1811 = vld [vmem:[#allocation10 + $0xac] sm:$0xf]
    %v1812 = vld [vmem:[#allocation10 + $0xb0] sm:$0xf]
    %v1813 = vld [vmem:[#allocation10 + $0xb4] sm:$0xf]
    %v1814 = vld [vmem:[#allocation10 + $0xb8] sm:$0xf]
    %v1815 = vld [vmem:[#allocation10 + $0xbc] sm:$0xf]
    %v1816 = vld [vmem:[#allocation10 + $0xc0] sm:$0xf]
    %v1817 = vld [vmem:[#allocation10 + $0xc4] sm:$0xf]
    %v1818 = vld [vmem:[#allocation10 + $0xc8] sm:$0xf]
    %v1819 = vld [vmem:[#allocation10 + $0xcc] sm:$0xf]
    %v1820 = vld [vmem:[#allocation10 + $0xd0] sm:$0xf]
    %v1821 = vld [vmem:[#allocation10 + $0xd4] sm:$0xf]
    %v1822 = vld [vmem:[#allocation10 + $0xd8] sm:$0xf]
    %v1823 = vld [vmem:[#allocation10 + $0xdc] sm:$0xf]
    %v1824 = vld [vmem:[#allocation10 + $0xe0] sm:$0xf]
    %v1825 = vld [vmem:[#allocation10 + $0xe4] sm:$0xf]
    %v1826 = vld [vmem:[#allocation10 + $0xe8] sm:$0xf]
    %v1827 = vld [vmem:[#allocation10 + $0xec] sm:$0xf]
    %v1828 = vld [vmem:[#allocation10 + $0xf0] sm:$0xf]
    %v1829 = vld [vmem:[#allocation10 + $0xf4] sm:$0xf]
    %v1830 = vld [vmem:[#allocation10 + $0xf8] sm:$0xf]
    %v1831 = vld [vmem:[#allocation10 + $0xfc] sm:$0xf]
    %v1896 = vunpack.c.l.b16 %v1768
    %v1897 = vunpack.c.l.b16 %v1769
    %v1898 = vunpack.c.l.b16 %v1770
    %v1899 = vunpack.c.l.b16 %v1771
    %v1900 = vunpack.c.l.b16 %v1772
    %v1901 = vunpack.c.l.b16 %v1773
    %v1902 = vunpack.c.l.b16 %v1774
    %v1903 = vunpack.c.l.b16 %v1775
    %v1904 = vunpack.c.l.b16 %v1776
    %v1905 = vunpack.c.l.b16 %v1777
    %v1906 = vunpack.c.l.b16 %v1778
    %v1907 = vunpack.c.l.b16 %v1779
    %v1908 = vunpack.c.l.b16 %v1780
    %v1909 = vunpack.c.l.b16 %v1781
    %v1910 = vunpack.c.l.b16 %v1782
    %v1911 = vunpack.c.l.b16 %v1783
    %v1912 = vunpack.c.l.b16 %v1784
    %v1913 = vunpack.c.l.b16 %v1785
    %v1914 = vunpack.c.l.b16 %v1786
    %v1915 = vunpack.c.l.b16 %v1787
    %v1916 = vunpack.c.l.b16 %v1788
    %v1917 = vunpack.c.l.b16 %v1789
    %v1918 = vunpack.c.l.b16 %v1790
    %v1919 = vunpack.c.l.b16 %v1791
    %v1920 = vunpack.c.l.b16 %v1792
    %v1921 = vunpack.c.l.b16 %v1793
    %v1922 = vunpack.c.l.b16 %v1794
    %v1923 = vunpack.c.l.b16 %v1795
    %v1924 = vunpack.c.l.b16 %v1796
    %v1925 = vunpack.c.l.b16 %v1797
    %v1926 = vunpack.c.l.b16 %v1798
    %v1927 = vunpack.c.l.b16 %v1799
    %v1928 = vunpack.c.l.b16 %v1800
    %v1929 = vunpack.c.l.b16 %v1801
    %v1930 = vunpack.c.l.b16 %v1802
    %v1931 = vunpack.c.l.b16 %v1803
    %v1932 = vunpack.c.l.b16 %v1804
    %v1933 = vunpack.c.l.b16 %v1805
    %v1934 = vunpack.c.l.b16 %v1806
    %v1935 = vunpack.c.l.b16 %v1807
    %v1936 = vunpack.c.l.b16 %v1808
    %v1937 = vunpack.c.l.b16 %v1809
    %v1938 = vunpack.c.l.b16 %v1810
    %v1939 = vunpack.c.l.b16 %v1811
    %v1940 = vunpack.c.l.b16 %v1812
    %v1941 = vunpack.c.l.b16 %v1813
    %v1942 = vunpack.c.l.b16 %v1814
    %v1943 = vunpack.c.l.b16 %v1815
    %v1944 = vunpack.c.l.b16 %v1816
    %v1945 = vunpack.c.l.b16 %v1817
    %v1946 = vunpack.c.l.b16 %v1818
    %v1947 = vunpack.c.l.b16 %v1819
    %v1948 = vunpack.c.l.b16 %v1820
    %v1949 = vunpack.c.l.b16 %v1821
    %v1950 = vunpack.c.l.b16 %v1822
    %v1951 = vunpack.c.l.b16 %v1823
    %v1952 = vunpack.c.l.b16 %v1824
    %v1953 = vunpack.c.l.b16 %v1825
    %v1954 = vunpack.c.l.b16 %v1826
    %v1955 = vunpack.c.l.b16 %v1827
    %v1956 = vunpack.c.l.b16 %v1828
    %v1957 = vunpack.c.l.b16 %v1829
    %v1958 = vunpack.c.l.b16 %v1830
    %v1959 = vunpack.c.l.b16 %v1831
    %v1960 = vpack.c.b16 %v1897, %v1896
    %v1961 = vpack.c.b16 %v1899, %v1898
    %v1962 = vpack.c.b16 %v1901, %v1900
    %v1963 = vpack.c.b16 %v1903, %v1902
    %v1964 = vpack.c.b16 %v1905, %v1904
    %v1965 = vpack.c.b16 %v1907, %v1906
    %v1966 = vpack.c.b16 %v1909, %v1908
    %v1967 = vpack.c.b16 %v1911, %v1910
    %v1968 = vpack.c.b16 %v1913, %v1912
    %v1969 = vpack.c.b16 %v1915, %v1914
    %v1970 = vpack.c.b16 %v1917, %v1916
    %v1971 = vpack.c.b16 %v1919, %v1918
    %v1972 = vpack.c.b16 %v1921, %v1920
    %v1973 = vpack.c.b16 %v1923, %v1922
    %v1974 = vpack.c.b16 %v1925, %v1924
    %v1975 = vpack.c.b16 %v1927, %v1926
    %v1976 = vpack.c.b16 %v1929, %v1928
    %v1977 = vpack.c.b16 %v1931, %v1930
    %v1978 = vpack.c.b16 %v1933, %v1932
    %v1979 = vpack.c.b16 %v1935, %v1934
    %v1980 = vpack.c.b16 %v1937, %v1936
    %v1981 = vpack.c.b16 %v1939, %v1938
    %v1982 = vpack.c.b16 %v1941, %v1940
    %v1983 = vpack.c.b16 %v1943, %v1942
    %v1984 = vpack.c.b16 %v1945, %v1944
    %v1985 = vpack.c.b16 %v1947, %v1946
    %v1986 = vpack.c.b16 %v1949, %v1948
    %v1987 = vpack.c.b16 %v1951, %v1950
    %v1988 = vpack.c.b16 %v1953, %v1952
    %v1989 = vpack.c.b16 %v1955, %v1954
    %v1990 = vpack.c.b16 %v1957, %v1956
    %v1991 = vpack.c.b16 %v1959, %v1958
    %2024 = vmatprep.subr.bf16.mxu0 0
    %2025 = vmatpush1.bf16.msra.mxu0 %v1967
    %2026 = vmatprep.subr.bf16.mxu0 0
    %2027 = vmatpush1.bf16.msra.mxu0 %v1966
    %2028 = vmatprep.subr.bf16.mxu0 0
    %2029 = vmatpush1.bf16.msra.mxu0 %v1965
    %2030 = vmatprep.subr.bf16.mxu0 0
    %2031 = vmatpush1.bf16.msra.mxu0 %v1964
    %2032 = vmatprep.subr.bf16.mxu0 0
    %2033 = vmatpush1.bf16.msra.mxu0 %v1963
    %2034 = vmatprep.subr.bf16.mxu0 0
    %2035 = vmatpush1.bf16.msra.mxu0 %v1962
    %2036 = vmatprep.subr.bf16.mxu0 0
    %2037 = vmatpush1.bf16.msra.mxu0 %v1961
    %2038 = vmatprep.subr.bf16.mxu0 0
    %2039 = vmatpush1.bf16.msra.mxu0 %v1960
    %2040 = vmatprep.subr.bf16.mxu0 0
    %2041 = vmatpush2.bf16.msra.mxu0 %v1975
    %2042 = vmatprep.subr.bf16.mxu0 0
    %2043 = vmatpush2.bf16.msra.mxu0 %v1974
    %2044 = vmatprep.subr.bf16.mxu0 0
    %2045 = vmatpush2.bf16.msra.mxu0 %v1973
    %2046 = vmatprep.subr.bf16.mxu0 0
    %2047 = vmatpush2.bf16.msra.mxu0 %v1972
    %2048 = vmatprep.subr.bf16.mxu0 0
    %2049 = vmatpush2.bf16.msra.mxu0 %v1971
    %2050 = vmatprep.subr.bf16.mxu0 0
    %2051 = vmatpush2.bf16.msra.mxu0 %v1970
    %2052 = vmatprep.subr.bf16.mxu0 0
    %2053 = vmatpush2.bf16.msra.mxu0 %v1969
    %2054 = vmatprep.subr.bf16.mxu0 0
    %2055 = vmatpush2.bf16.msra.mxu0 %v1968
    %2056 = vmatprep.mubr.bf16.mxu0 %v1685
    %2057 = vmatmul.mubr.bf16.gmra.mxu0 %v1684
    %v2058 = vpop.f32.mrf.mxu0
    %v2059 = vadd.f32 0.0, %v2058
    %v2060 = vpop.f32.mrf.mxu0
    %v2061 = vpop.f32.mrf.mxu0
    %v2062 = vadd.f32 0.0, %v2061
    %v2063 = vpop.f32.mrf.mxu0
    %2064 = vdwg.mxu0
    %2065 = vmatprep.subr.bf16.mxu0 0
    %2066 = vmatpush1.bf16.msra.mxu0 %v1983
    %2067 = vmatprep.subr.bf16.mxu0 0
    %2068 = vmatpush1.bf16.msra.mxu0 %v1982
    %2069 = vmatprep.subr.bf16.mxu0 0
    %2070 = vmatpush1.bf16.msra.mxu0 %v1981
    %2071 = vmatprep.subr.bf16.mxu0 0
    %2072 = vmatpush1.bf16.msra.mxu0 %v1980
    %2073 = vmatprep.subr.bf16.mxu0 0
    %2074 = vmatpush1.bf16.msra.mxu0 %v1979
    %2075 = vmatprep.subr.bf16.mxu0 0
    %2076 = vmatpush1.bf16.msra.mxu0 %v1978
    %2077 = vmatprep.subr.bf16.mxu0 0
    %2078 = vmatpush1.bf16.msra.mxu0 %v1977
    %2079 = vmatprep.subr.bf16.mxu0 0
    %2080 = vmatpush1.bf16.msra.mxu0 %v1976
    %2081 = vmatprep.subr.bf16.mxu0 0
    %2082 = vmatpush2.bf16.msra.mxu0 %v1991
    %2083 = vmatprep.subr.bf16.mxu0 0
    %2084 = vmatpush2.bf16.msra.mxu0 %v1990
    %2085 = vmatprep.subr.bf16.mxu0 0
    %2086 = vmatpush2.bf16.msra.mxu0 %v1989
    %2087 = vmatprep.subr.bf16.mxu0 0
    %2088 = vmatpush2.bf16.msra.mxu0 %v1988
    %2089 = vmatprep.subr.bf16.mxu0 0
    %2090 = vmatpush2.bf16.msra.mxu0 %v1987
    %2091 = vmatprep.subr.bf16.mxu0 0
    %2092 = vmatpush2.bf16.msra.mxu0 %v1986
    %2093 = vmatprep.subr.bf16.mxu0 0
    %2094 = vmatpush2.bf16.msra.mxu0 %v1985
    %2095 = vmatprep.subr.bf16.mxu0 0
    %2096 = vmatpush2.bf16.msra.mxu0 %v1984
    %2097 = vmatprep.mubr.bf16.mxu0 %v1687
    %2098 = vmatmul.mubr.bf16.gmra.mxu0 %v1686
    %v2099 = vpop.f32.mrf.mxu0
    %v2100 = vadd.f32 %v2059, %v2099
    %v2101 = vpop.f32.mrf.mxu0
    %v2102 = vpop.f32.mrf.mxu0
    %v2103 = vadd.f32 %v2062, %v2102
    %v2104 = vpop.f32.mrf.mxu0
    %2105 = vdwg.mxu0
    %2107 = vset.pattern.permute.xlu0 0
    %2108 = vperm.xlu0 %2107, %v522
    %v2109 = vpop.permute.xlu0 %2108
    %2112 = vset.pattern.permute.xlu0 0
    %2113 = vperm.xlu0 %2112, %v523
    %v2114 = vpop.permute.xlu0 %2113
    %v2116 = vmul.f32 %v2109, %v2100
    %v2117 = vmul.f32 %v2114, %v2103
    %v2198 = vunpack.c.l.b16 %v1688
    %v2199 = vunpack.c.l.b16 %v1689
    %v2200 = vunpack.c.l.b16 %v1690
    %v2201 = vunpack.c.l.b16 %v1691
    %v2202 = vunpack.c.l.b16 %v1692
    %v2203 = vunpack.c.l.b16 %v1693
    %v2204 = vunpack.c.l.b16 %v1694
    %v2205 = vunpack.c.l.b16 %v1695
    %v2206 = vunpack.c.l.b16 %v1696
    %v2207 = vunpack.c.l.b16 %v1697
    %v2208 = vunpack.c.l.b16 %v1698
    %v2209 = vunpack.c.l.b16 %v1699
    %v2210 = vunpack.c.l.b16 %v1700
    %v2211 = vunpack.c.l.b16 %v1701
    %v2212 = vunpack.c.l.b16 %v1702
    %v2213 = vunpack.c.l.b16 %v1703
    %v2214 = vunpack.c.l.b16 %v1704
    %v2215 = vunpack.c.l.b16 %v1705
    %v2216 = vunpack.c.l.b16 %v1706
    %v2217 = vunpack.c.l.b16 %v1707
    %v2218 = vunpack.c.l.b16 %v1708
    %v2219 = vunpack.c.l.b16 %v1709
    %v2220 = vunpack.c.l.b16 %v1710
    %v2221 = vunpack.c.l.b16 %v1711
    %v2222 = vunpack.c.l.b16 %v1712
    %v2223 = vunpack.c.l.b16 %v1713
    %v2224 = vunpack.c.l.b16 %v1714
    %v2225 = vunpack.c.l.b16 %v1715
    %v2226 = vunpack.c.l.b16 %v1716
    %v2227 = vunpack.c.l.b16 %v1717
    %v2228 = vunpack.c.l.b16 %v1718
    %v2229 = vunpack.c.l.b16 %v1719
    %v2230 = vunpack.c.l.b16 %v1720
    %v2231 = vunpack.c.l.b16 %v1721
    %v2232 = vunpack.c.l.b16 %v1722
    %v2233 = vunpack.c.l.b16 %v1723
    %v2234 = vunpack.c.l.b16 %v1724
    %v2235 = vunpack.c.l.b16 %v1725
    %v2236 = vunpack.c.l.b16 %v1726
    %v2237 = vunpack.c.l.b16 %v1727
    %v2238 = vunpack.c.l.b16 %v1728
    %v2239 = vunpack.c.l.b16 %v1729
    %v2240 = vunpack.c.l.b16 %v1730
    %v2241 = vunpack.c.l.b16 %v1731
    %v2242 = vunpack.c.l.b16 %v1732
    %v2243 = vunpack.c.l.b16 %v1733
    %v2244 = vunpack.c.l.b16 %v1734
    %v2245 = vunpack.c.l.b16 %v1735
    %v2246 = vunpack.c.l.b16 %v1736
    %v2247 = vunpack.c.l.b16 %v1737
    %v2248 = vunpack.c.l.b16 %v1738
    %v2249 = vunpack.c.l.b16 %v1739
    %v2250 = vunpack.c.l.b16 %v1740
    %v2251 = vunpack.c.l.b16 %v1741
    %v2252 = vunpack.c.l.b16 %v1742
    %v2253 = vunpack.c.l.b16 %v1743
    %v2254 = vunpack.c.l.b16 %v1744
    %v2255 = vunpack.c.l.b16 %v1745
    %v2256 = vunpack.c.l.b16 %v1746
    %v2257 = vunpack.c.l.b16 %v1747
    %v2258 = vunpack.c.l.b16 %v1748
    %v2259 = vunpack.c.l.b16 %v1749
    %v2260 = vunpack.c.l.b16 %v1750
    %v2261 = vunpack.c.l.b16 %v1751
    %v2262 = vunpack.c.l.b16 %v1752
    %v2263 = vunpack.c.l.b16 %v1753
    %v2264 = vunpack.c.l.b16 %v1754
    %v2265 = vunpack.c.l.b16 %v1755
    %v2266 = vunpack.c.l.b16 %v1756
    %v2267 = vunpack.c.l.b16 %v1757
    %v2268 = vunpack.c.l.b16 %v1758
    %v2269 = vunpack.c.l.b16 %v1759
    %v2270 = vunpack.c.l.b16 %v1760
    %v2271 = vunpack.c.l.b16 %v1761
    %v2272 = vunpack.c.l.b16 %v1762
    %v2273 = vunpack.c.l.b16 %v1763
    %v2274 = vunpack.c.l.b16 %v1764
    %v2275 = vunpack.c.l.b16 %v1765
    %v2276 = vunpack.c.l.b16 %v1766
    %v2277 = vunpack.c.l.b16 %v1767
    %v2278 = vpack.c.b16 %v2199, %v2198
    %v2279 = vpack.c.b16 %v2201, %v2200
    %v2280 = vpack.c.b16 %v2203, %v2202
    %v2281 = vpack.c.b16 %v2205, %v2204
    %v2282 = vpack.c.b16 %v2207, %v2206
    %v2283 = vpack.c.b16 %v2209, %v2208
    %v2284 = vpack.c.b16 %v2211, %v2210
    %v2285 = vpack.c.b16 %v2213, %v2212
    %v2286 = vpack.c.b16 %v2215, %v2214
    %v2287 = vpack.c.b16 %v2217, %v2216
    %v2288 = vpack.c.b16 %v2219, %v2218
    %v2289 = vpack.c.b16 %v2221, %v2220
    %v2290 = vpack.c.b16 %v2223, %v2222
    %v2291 = vpack.c.b16 %v2225, %v2224
    %v2292 = vpack.c.b16 %v2227, %v2226
    %v2293 = vpack.c.b16 %v2229, %v2228
    %v2294 = vpack.c.b16 %v2231, %v2230
    %v2295 = vpack.c.b16 %v2233, %v2232
    %v2296 = vpack.c.b16 %v2235, %v2234
    %v2297 = vpack.c.b16 %v2237, %v2236
    %v2298 = vpack.c.b16 %v2239, %v2238
    %v2299 = vpack.c.b16 %v2241, %v2240
    %v2300 = vpack.c.b16 %v2243, %v2242
    %v2301 = vpack.c.b16 %v2245, %v2244
    %v2302 = vpack.c.b16 %v2247, %v2246
    %v2303 = vpack.c.b16 %v2249, %v2248
    %v2304 = vpack.c.b16 %v2251, %v2250
    %v2305 = vpack.c.b16 %v2253, %v2252
    %v2306 = vpack.c.b16 %v2255, %v2254
    %v2307 = vpack.c.b16 %v2257, %v2256
    %v2308 = vpack.c.b16 %v2259, %v2258
    %v2309 = vpack.c.b16 %v2261, %v2260
    %v2310 = vpack.c.b16 %v2263, %v2262
    %v2311 = vpack.c.b16 %v2265, %v2264
    %v2312 = vpack.c.b16 %v2267, %v2266
    %v2313 = vpack.c.b16 %v2269, %v2268
    %v2314 = vpack.c.b16 %v2271, %v2270
    %v2315 = vpack.c.b16 %v2273, %v2272
    %v2316 = vpack.c.b16 %v2275, %v2274
    %v2317 = vpack.c.b16 %v2277, %v2276
    %2358 = vmatprep.subr.bf16.mxu0 0
    %2359 = vmatpush1.bf16.msra.mxu0 %v2285
    %2360 = vmatprep.subr.bf16.mxu0 0
    %2361 = vmatpush1.bf16.msra.mxu0 %v2284
    %2362 = vmatprep.subr.bf16.mxu0 0
    %2363 = vmatpush1.bf16.msra.mxu0 %v2283
    %2364 = vmatprep.subr.bf16.mxu0 0
    %2365 = vmatpush1.bf16.msra.mxu0 %v2282
    %2366 = vmatprep.subr.bf16.mxu0 0
    %2367 = vmatpush1.bf16.msra.mxu0 %v2281
    %2368 = vmatprep.subr.bf16.mxu0 0
    %2369 = vmatpush1.bf16.msra.mxu0 %v2280
    %2370 = vmatprep.subr.bf16.mxu0 0
    %2371 = vmatpush1.bf16.msra.mxu0 %v2279
    %2372 = vmatprep.subr.bf16.mxu0 0
    %2373 = vmatpush1.bf16.msra.mxu0 %v2278
    %2374 = vmatprep.subr.bf16.mxu0 0
    %2375 = vmatpush2.bf16.msra.mxu0 %v2293
    %2376 = vmatprep.subr.bf16.mxu0 0
    %2377 = vmatpush2.bf16.msra.mxu0 %v2292
    %2378 = vmatprep.subr.bf16.mxu0 0
    %2379 = vmatpush2.bf16.msra.mxu0 %v2291
    %2380 = vmatprep.subr.bf16.mxu0 0
    %2381 = vmatpush2.bf16.msra.mxu0 %v2290
    %2382 = vmatprep.subr.bf16.mxu0 0
    %2383 = vmatpush2.bf16.msra.mxu0 %v2289
    %2384 = vmatprep.subr.bf16.mxu0 0
    %2385 = vmatpush2.bf16.msra.mxu0 %v2288
    %2386 = vmatprep.subr.bf16.mxu0 0
    %2387 = vmatpush2.bf16.msra.mxu0 %v2287
    %2388 = vmatprep.subr.bf16.mxu0 0
    %2389 = vmatpush2.bf16.msra.mxu0 %v2286
    %2390 = vmatprep.mubr.bf16.mxu0 %v1684
    %2391 = vmatmul.mubr.bf16.gmra.mxu0 %v384
    %v2392 = vpop.f32.mrf.mxu0
    %v2393 = vadd.f32 %v2116, %v2392
    %v2394 = vpop.f32.mrf.mxu0
    %v2395 = vpop.f32.mrf.mxu0
    %v2396 = vadd.f32 %v2117, %v2395
    %v2397 = vpop.f32.mrf.mxu0
    %2398 = vdwg.mxu0
    %2399 = vmatprep.subr.bf16.mxu0 0
    %2400 = vmatpush1.bf16.msra.mxu0 %v2301
    %2401 = vmatprep.subr.bf16.mxu0 0
    %2402 = vmatpush1.bf16.msra.mxu0 %v2300
    %2403 = vmatprep.subr.bf16.mxu0 0
    %2404 = vmatpush1.bf16.msra.mxu0 %v2299
    %2405 = vmatprep.subr.bf16.mxu0 0
    %2406 = vmatpush1.bf16.msra.mxu0 %v2298
    %2407 = vmatprep.subr.bf16.mxu0 0
    %2408 = vmatpush1.bf16.msra.mxu0 %v2297
    %2409 = vmatprep.subr.bf16.mxu0 0
    %2410 = vmatpush1.bf16.msra.mxu0 %v2296
    %2411 = vmatprep.subr.bf16.mxu0 0
    %2412 = vmatpush1.bf16.msra.mxu0 %v2295
    %2413 = vmatprep.subr.bf16.mxu0 0
    %2414 = vmatpush1.bf16.msra.mxu0 %v2294
    %2415 = vmatprep.subr.bf16.mxu0 0
    %2416 = vmatpush2.bf16.msra.mxu0 %v2309
    %2417 = vmatprep.subr.bf16.mxu0 0
    %2418 = vmatpush2.bf16.msra.mxu0 %v2308
    %2419 = vmatprep.subr.bf16.mxu0 0
    %2420 = vmatpush2.bf16.msra.mxu0 %v2307
    %2421 = vmatprep.subr.bf16.mxu0 0
    %2422 = vmatpush2.bf16.msra.mxu0 %v2306
    %2423 = vmatprep.subr.bf16.mxu0 0
    %2424 = vmatpush2.bf16.msra.mxu0 %v2305
    %2425 = vmatprep.subr.bf16.mxu0 0
    %2426 = vmatpush2.bf16.msra.mxu0 %v2304
    %2427 = vmatprep.subr.bf16.mxu0 0
    %2428 = vmatpush2.bf16.msra.mxu0 %v2303
    %2429 = vmatprep.subr.bf16.mxu0 0
    %2430 = vmatpush2.bf16.msra.mxu0 %v2302
    %2431 = vmatprep.mubr.bf16.mxu0 %v1686
    %2432 = vmatmul.mubr.bf16.gmra.mxu0 %v1685
    %v2433 = vpop.f32.mrf.mxu0
    %v2434 = vadd.f32 %v2393, %v2433
    %v2435 = vpop.f32.mrf.mxu0
    %v2436 = vpop.f32.mrf.mxu0
    %v2437 = vadd.f32 %v2396, %v2436
    %v2438 = vpop.f32.mrf.mxu0
    %2439 = vdwg.mxu0
    %2440 = vmatprep.subr.bf16.mxu0 0
    %2441 = vmatpush1.bf16.msra.mxu0 %v2317
    %2442 = vmatprep.subr.bf16.mxu0 0
    %2443 = vmatpush1.bf16.msra.mxu0 %v2316
    %2444 = vmatprep.subr.bf16.mxu0 0
    %2445 = vmatpush1.bf16.msra.mxu0 %v2315
    %2446 = vmatprep.subr.bf16.mxu0 0
    %2447 = vmatpush1.bf16.msra.mxu0 %v2314
    %2448 = vmatprep.subr.bf16.mxu0 0
    %2449 = vmatpush1.bf16.msra.mxu0 %v2313
    %2450 = vmatprep.subr.bf16.mxu0 0
    %2451 = vmatpush1.bf16.msra.mxu0 %v2312
    %2452 = vmatprep.subr.bf16.mxu0 0
    %2453 = vmatpush1.bf16.msra.mxu0 %v2311
    %2454 = vmatprep.subr.bf16.mxu0 0
    %2455 = vmatpush1.bf16.msra.mxu0 %v2310
    %2456 = vmatprep.subr.bf16.mxu0 0
    %2457 = vmatpush2.bf16.msra.mxu0 0
    %2458 = vmatprep.subr.bf16.mxu0 0
    %2459 = vmatpush2.bf16.msra.mxu0 0
    %2460 = vmatprep.subr.bf16.mxu0 0
    %2461 = vmatpush2.bf16.msra.mxu0 0
    %2462 = vmatprep.subr.bf16.mxu0 0
    %2463 = vmatpush2.bf16.msra.mxu0 0
    %2464 = vmatprep.subr.bf16.mxu0 0
    %2465 = vmatpush2.bf16.msra.mxu0 0
    %2466 = vmatprep.subr.bf16.mxu0 0
    %2467 = vmatpush2.bf16.msra.mxu0 0
    %2468 = vmatprep.subr.bf16.mxu0 0
    %2469 = vmatpush2.bf16.msra.mxu0 0
    %2470 = vmatprep.subr.bf16.mxu0 0
    %2471 = vmatpush2.bf16.msra.mxu0 0
    %2472 = vmatprep.mubr.bf16.mxu0 0
    %2473 = vmatmul.mubr.bf16.gmra.mxu0 %v1687
    %v2474 = vpop.f32.mrf.mxu0
    %v2475 = vadd.f32 %v2434, %v2474
    %v2476 = vpop.f32.mrf.mxu0
    %v2477 = vpop.f32.mrf.mxu0
    %v2478 = vadd.f32 %v2437, %v2477
    %v2479 = vpop.f32.mrf.mxu0
    %2480 = vdwg.mxu0
    %v2481 = vld [vmem:[#allocation12] sm:$0xf]
    %v2482 = vld [vmem:[#allocation12 + $0x4] sm:$0xf]
    %v2483 = vld [vmem:[#allocation12 + $0x8] sm:$0xf]
    %v2484 = vld [vmem:[#allocation12 + $0xc] sm:$0xf]
    %v2485 = vld [vmem:[#allocation12 + $0x10] sm:$0xf]
    %v2486 = vld [vmem:[#allocation12 + $0x14] sm:$0xf]
    %v2487 = vld [vmem:[#allocation12 + $0x18] sm:$0xf]
    %v2488 = vld [vmem:[#allocation12 + $0x1c] sm:$0xf]
    %v2489 = vld [vmem:[#allocation12 + $0x20] sm:$0xf]
    %v2490 = vld [vmem:[#allocation12 + $0x24] sm:$0xf]
    %v2491 = vld [vmem:[#allocation12 + $0x28] sm:$0xf]
    %v2492 = vld [vmem:[#allocation12 + $0x2c] sm:$0xf]
    %v2493 = vld [vmem:[#allocation12 + $0x30] sm:$0xf]
    %v2494 = vld [vmem:[#allocation12 + $0x34] sm:$0xf]
    %v2495 = vld [vmem:[#allocation12 + $0x38] sm:$0xf]
    %v2496 = vld [vmem:[#allocation12 + $0x3c] sm:$0xf]
    %v2497 = vld [vmem:[#allocation12 + $0x40] sm:$0xf]
    %v2498 = vld [vmem:[#allocation12 + $0x44] sm:$0xf]
    %v2499 = vld [vmem:[#allocation12 + $0x48] sm:$0xf]
    %v2500 = vld [vmem:[#allocation12 + $0x4c] sm:$0xf]
    %v2501 = vld [vmem:[#allocation12 + $0x50] sm:$0xf]
    %v2502 = vld [vmem:[#allocation12 + $0x54] sm:$0xf]
    %v2503 = vld [vmem:[#allocation12 + $0x58] sm:$0xf]
    %v2504 = vld [vmem:[#allocation12 + $0x5c] sm:$0xf]
    %v2505 = vld [vmem:[#allocation12 + $0x60] sm:$0xf]
    %v2506 = vld [vmem:[#allocation12 + $0x64] sm:$0xf]
    %v2507 = vld [vmem:[#allocation12 + $0x68] sm:$0xf]
    %v2508 = vld [vmem:[#allocation12 + $0x6c] sm:$0xf]
    %v2509 = vld [vmem:[#allocation12 + $0x70] sm:$0xf]
    %v2510 = vld [vmem:[#allocation12 + $0x74] sm:$0xf]
    %v2511 = vld [vmem:[#allocation12 + $0x78] sm:$0xf]
    %v2512 = vld [vmem:[#allocation12 + $0x7c] sm:$0xf]
    %v2513 = vld [vmem:[#allocation12 + $0x80] sm:$0xf]
    %v2514 = vld [vmem:[#allocation12 + $0x84] sm:$0xf]
    %v2515 = vld [vmem:[#allocation12 + $0x88] sm:$0xf]
    %v2516 = vld [vmem:[#allocation12 + $0x8c] sm:$0xf]
    %v2517 = vld [vmem:[#allocation12 + $0x90] sm:$0xf]
    %v2518 = vld [vmem:[#allocation12 + $0x94] sm:$0xf]
    %v2519 = vld [vmem:[#allocation12 + $0x98] sm:$0xf]
    %v2520 = vld [vmem:[#allocation12 + $0x9c] sm:$0xf]
    %v2521 = vld [vmem:[#allocation12 + $0xa0] sm:$0xf]
    %v2522 = vld [vmem:[#allocation12 + $0xa4] sm:$0xf]
    %v2523 = vld [vmem:[#allocation12 + $0xa8] sm:$0xf]
    %v2524 = vld [vmem:[#allocation12 + $0xac] sm:$0xf]
    %v2525 = vld [vmem:[#allocation12 + $0xb0] sm:$0xf]
    %v2526 = vld [vmem:[#allocation12 + $0xb4] sm:$0xf]
    %v2527 = vld [vmem:[#allocation12 + $0xb8] sm:$0xf]
    %v2528 = vld [vmem:[#allocation12 + $0xbc] sm:$0xf]
    %v2529 = vld [vmem:[#allocation12 + $0xc0] sm:$0xf]
    %v2530 = vld [vmem:[#allocation12 + $0xc4] sm:$0xf]
    %v2531 = vld [vmem:[#allocation12 + $0xc8] sm:$0xf]
    %v2532 = vld [vmem:[#allocation12 + $0xcc] sm:$0xf]
    %v2533 = vld [vmem:[#allocation12 + $0xd0] sm:$0xf]
    %v2534 = vld [vmem:[#allocation12 + $0xd4] sm:$0xf]
    %v2535 = vld [vmem:[#allocation12 + $0xd8] sm:$0xf]
    %v2536 = vld [vmem:[#allocation12 + $0xdc] sm:$0xf]
    %v2537 = vld [vmem:[#allocation12 + $0xe0] sm:$0xf]
    %v2538 = vld [vmem:[#allocation12 + $0xe4] sm:$0xf]
    %v2539 = vld [vmem:[#allocation12 + $0xe8] sm:$0xf]
    %v2540 = vld [vmem:[#allocation12 + $0xec] sm:$0xf]
    %v2541 = vld [vmem:[#allocation12 + $0xf0] sm:$0xf]
    %v2542 = vld [vmem:[#allocation12 + $0xf4] sm:$0xf]
    %v2543 = vld [vmem:[#allocation12 + $0xf8] sm:$0xf]
    %v2544 = vld [vmem:[#allocation12 + $0xfc] sm:$0xf]
    %v2609 = vunpack.c.l.b16 %v2481
    %v2610 = vunpack.c.l.b16 %v2482
    %v2611 = vunpack.c.l.b16 %v2483
    %v2612 = vunpack.c.l.b16 %v2484
    %v2613 = vunpack.c.l.b16 %v2485
    %v2614 = vunpack.c.l.b16 %v2486
    %v2615 = vunpack.c.l.b16 %v2487
    %v2616 = vunpack.c.l.b16 %v2488
    %v2617 = vunpack.c.l.b16 %v2489
    %v2618 = vunpack.c.l.b16 %v2490
    %v2619 = vunpack.c.l.b16 %v2491
    %v2620 = vunpack.c.l.b16 %v2492
    %v2621 = vunpack.c.l.b16 %v2493
    %v2622 = vunpack.c.l.b16 %v2494
    %v2623 = vunpack.c.l.b16 %v2495
    %v2624 = vunpack.c.l.b16 %v2496
    %v2625 = vunpack.c.l.b16 %v2497
    %v2626 = vunpack.c.l.b16 %v2498
    %v2627 = vunpack.c.l.b16 %v2499
    %v2628 = vunpack.c.l.b16 %v2500
    %v2629 = vunpack.c.l.b16 %v2501
    %v2630 = vunpack.c.l.b16 %v2502
    %v2631 = vunpack.c.l.b16 %v2503
    %v2632 = vunpack.c.l.b16 %v2504
    %v2633 = vunpack.c.l.b16 %v2505
    %v2634 = vunpack.c.l.b16 %v2506
    %v2635 = vunpack.c.l.b16 %v2507
    %v2636 = vunpack.c.l.b16 %v2508
    %v2637 = vunpack.c.l.b16 %v2509
    %v2638 = vunpack.c.l.b16 %v2510
    %v2639 = vunpack.c.l.b16 %v2511
    %v2640 = vunpack.c.l.b16 %v2512
    %v2641 = vunpack.c.l.b16 %v2513
    %v2642 = vunpack.c.l.b16 %v2514
    %v2643 = vunpack.c.l.b16 %v2515
    %v2644 = vunpack.c.l.b16 %v2516
    %v2645 = vunpack.c.l.b16 %v2517
    %v2646 = vunpack.c.l.b16 %v2518
    %v2647 = vunpack.c.l.b16 %v2519
    %v2648 = vunpack.c.l.b16 %v2520
    %v2649 = vunpack.c.l.b16 %v2521
    %v2650 = vunpack.c.l.b16 %v2522
    %v2651 = vunpack.c.l.b16 %v2523
    %v2652 = vunpack.c.l.b16 %v2524
    %v2653 = vunpack.c.l.b16 %v2525
    %v2654 = vunpack.c.l.b16 %v2526
    %v2655 = vunpack.c.l.b16 %v2527
    %v2656 = vunpack.c.l.b16 %v2528
    %v2657 = vunpack.c.l.b16 %v2529
    %v2658 = vunpack.c.l.b16 %v2530
    %v2659 = vunpack.c.l.b16 %v2531
    %v2660 = vunpack.c.l.b16 %v2532
    %v2661 = vunpack.c.l.b16 %v2533
    %v2662 = vunpack.c.l.b16 %v2534
    %v2663 = vunpack.c.l.b16 %v2535
    %v2664 = vunpack.c.l.b16 %v2536
    %v2665 = vunpack.c.l.b16 %v2537
    %v2666 = vunpack.c.l.b16 %v2538
    %v2667 = vunpack.c.l.b16 %v2539
    %v2668 = vunpack.c.l.b16 %v2540
    %v2669 = vunpack.c.l.b16 %v2541
    %v2670 = vunpack.c.l.b16 %v2542
    %v2671 = vunpack.c.l.b16 %v2543
    %v2672 = vunpack.c.l.b16 %v2544
    %v2673 = vpack.c.b16 %v2610, %v2609
    %v2674 = vpack.c.b16 %v2612, %v2611
    %v2675 = vpack.c.b16 %v2614, %v2613
    %v2676 = vpack.c.b16 %v2616, %v2615
    %v2677 = vpack.c.b16 %v2618, %v2617
    %v2678 = vpack.c.b16 %v2620, %v2619
    %v2679 = vpack.c.b16 %v2622, %v2621
    %v2680 = vpack.c.b16 %v2624, %v2623
    %v2681 = vpack.c.b16 %v2626, %v2625
    %v2682 = vpack.c.b16 %v2628, %v2627
    %v2683 = vpack.c.b16 %v2630, %v2629
    %v2684 = vpack.c.b16 %v2632, %v2631
    %v2685 = vpack.c.b16 %v2634, %v2633
    %v2686 = vpack.c.b16 %v2636, %v2635
    %v2687 = vpack.c.b16 %v2638, %v2637
    %v2688 = vpack.c.b16 %v2640, %v2639
    %v2689 = vpack.c.b16 %v2642, %v2641
    %v2690 = vpack.c.b16 %v2644, %v2643
    %v2691 = vpack.c.b16 %v2646, %v2645
    %v2692 = vpack.c.b16 %v2648, %v2647
    %v2693 = vpack.c.b16 %v2650, %v2649
    %v2694 = vpack.c.b16 %v2652, %v2651
    %v2695 = vpack.c.b16 %v2654, %v2653
    %v2696 = vpack.c.b16 %v2656, %v2655
    %v2697 = vpack.c.b16 %v2658, %v2657
    %v2698 = vpack.c.b16 %v2660, %v2659
    %v2699 = vpack.c.b16 %v2662, %v2661
    %v2700 = vpack.c.b16 %v2664, %v2663
    %v2701 = vpack.c.b16 %v2666, %v2665
    %v2702 = vpack.c.b16 %v2668, %v2667
    %v2703 = vpack.c.b16 %v2670, %v2669
    %v2704 = vpack.c.b16 %v2672, %v2671
    %2737 = vmatprep.subr.bf16.mxu0 0
    %2738 = vmatpush1.bf16.msra.mxu0 %v2680
    %2739 = vmatprep.subr.bf16.mxu0 0
    %2740 = vmatpush1.bf16.msra.mxu0 %v2679
    %2741 = vmatprep.subr.bf16.mxu0 0
    %2742 = vmatpush1.bf16.msra.mxu0 %v2678
    %2743 = vmatprep.subr.bf16.mxu0 0
    %2744 = vmatpush1.bf16.msra.mxu0 %v2677
    %2745 = vmatprep.subr.bf16.mxu0 0
    %2746 = vmatpush1.bf16.msra.mxu0 %v2676
    %2747 = vmatprep.subr.bf16.mxu0 0
    %2748 = vmatpush1.bf16.msra.mxu0 %v2675
    %2749 = vmatprep.subr.bf16.mxu0 0
    %2750 = vmatpush1.bf16.msra.mxu0 %v2674
    %2751 = vmatprep.subr.bf16.mxu0 0
    %2752 = vmatpush1.bf16.msra.mxu0 %v2673
    %2753 = vmatprep.subr.bf16.mxu0 0
    %2754 = vmatpush2.bf16.msra.mxu0 %v2688
    %2755 = vmatprep.subr.bf16.mxu0 0
    %2756 = vmatpush2.bf16.msra.mxu0 %v2687
    %2757 = vmatprep.subr.bf16.mxu0 0
    %2758 = vmatpush2.bf16.msra.mxu0 %v2686
    %2759 = vmatprep.subr.bf16.mxu0 0
    %2760 = vmatpush2.bf16.msra.mxu0 %v2685
    %2761 = vmatprep.subr.bf16.mxu0 0
    %2762 = vmatpush2.bf16.msra.mxu0 %v2684
    %2763 = vmatprep.subr.bf16.mxu0 0
    %2764 = vmatpush2.bf16.msra.mxu0 %v2683
    %2765 = vmatprep.subr.bf16.mxu0 0
    %2766 = vmatpush2.bf16.msra.mxu0 %v2682
    %2767 = vmatprep.subr.bf16.mxu0 0
    %2768 = vmatpush2.bf16.msra.mxu0 %v2681
    %2769 = vmatprep.mubr.bf16.mxu0 %v1685
    %2770 = vmatmul.mubr.bf16.gmra.mxu0 %v1684
    %v2771 = vpop.f32.mrf.mxu0
    %v2772 = vadd.f32 0.0, %v2771
    %v2773 = vpop.f32.mrf.mxu0
    %v2774 = vpop.f32.mrf.mxu0
    %v2775 = vadd.f32 0.0, %v2774
    %v2776 = vpop.f32.mrf.mxu0
    %2777 = vdwg.mxu0
    %2778 = vmatprep.subr.bf16.mxu0 0
    %2779 = vmatpush1.bf16.msra.mxu0 %v2696
    %2780 = vmatprep.subr.bf16.mxu0 0
    %2781 = vmatpush1.bf16.msra.mxu0 %v2695
    %2782 = vmatprep.subr.bf16.mxu0 0
    %2783 = vmatpush1.bf16.msra.mxu0 %v2694
    %2784 = vmatprep.subr.bf16.mxu0 0
    %2785 = vmatpush1.bf16.msra.mxu0 %v2693
    %2786 = vmatprep.subr.bf16.mxu0 0
    %2787 = vmatpush1.bf16.msra.mxu0 %v2692
    %2788 = vmatprep.subr.bf16.mxu0 0
    %2789 = vmatpush1.bf16.msra.mxu0 %v2691
    %2790 = vmatprep.subr.bf16.mxu0 0
    %2791 = vmatpush1.bf16.msra.mxu0 %v2690
    %2792 = vmatprep.subr.bf16.mxu0 0
    %2793 = vmatpush1.bf16.msra.mxu0 %v2689
    %2794 = vmatprep.subr.bf16.mxu0 0
    %2795 = vmatpush2.bf16.msra.mxu0 %v2704
    %2796 = vmatprep.subr.bf16.mxu0 0
    %2797 = vmatpush2.bf16.msra.mxu0 %v2703
    %2798 = vmatprep.subr.bf16.mxu0 0
    %2799 = vmatpush2.bf16.msra.mxu0 %v2702
    %2800 = vmatprep.subr.bf16.mxu0 0
    %2801 = vmatpush2.bf16.msra.mxu0 %v2701
    %2802 = vmatprep.subr.bf16.mxu0 0
    %2803 = vmatpush2.bf16.msra.mxu0 %v2700
    %2804 = vmatprep.subr.bf16.mxu0 0
    %2805 = vmatpush2.bf16.msra.mxu0 %v2699
    %2806 = vmatprep.subr.bf16.mxu0 0
    %2807 = vmatpush2.bf16.msra.mxu0 %v2698
    %2808 = vmatprep.subr.bf16.mxu0 0
    %2809 = vmatpush2.bf16.msra.mxu0 %v2697
    %2810 = vmatprep.mubr.bf16.mxu0 %v1687
    %2811 = vmatmul.mubr.bf16.gmra.mxu0 %v1686
    %v2812 = vpop.f32.mrf.mxu0
    %v2813 = vadd.f32 %v2772, %v2812
    %v2814 = vpop.f32.mrf.mxu0
    %v2815 = vpop.f32.mrf.mxu0
    %v2816 = vadd.f32 %v2775, %v2815
    %v2817 = vpop.f32.mrf.mxu0
    %2818 = vdwg.mxu0
    %2820 = vset.pattern.permute.xlu0 0
    %2821 = vperm.xlu0 %2820, %v525
    %v2822 = vpop.permute.xlu0 %2821
    %2825 = vset.pattern.permute.xlu0 0
    %2826 = vperm.xlu0 %2825, %v527
    %v2827 = vpop.permute.xlu0 %2826
    %v2829 = vmul.f32 %v2822, %v2813
    %v2830 = vmul.f32 %v2827, %v2816
    %v2831 = vadd.f32 %v2475, %v2829
    %v2832 = vadd.f32 %v2478, %v2830
    %v2833 = vld [vmem:[#allocation13] sm:$0x1]
    %v2835 = vlaneseq
    %v2836 = vshrl.u32 %v2835, 7
    %v2837 = vsub.s32 0, %v2836
    %v2838 = vrot.slane %v2833, %v2837
    %v2840 = vadd.f32 %v2831, %v2838
    %v2841 = vadd.f32 %v2832, %v2838
    %v2842 = vpack.c.bf16 %v2841, %v2840
    %2843 = vmatprep.subr.bf16.mxu0 0
    %2844 = vmatpush1.bf16.msra.mxu0 0
    %2845 = vmatprep.subr.bf16.mxu0 0
    %2846 = vmatpush1.bf16.msra.mxu0 0
    %2847 = vmatprep.subr.bf16.mxu0 0
    %2848 = vmatpush1.bf16.msra.mxu0 0
    %2849 = vmatprep.subr.bf16.mxu0 0
    %2850 = vmatpush1.bf16.msra.mxu0 0
    %2851 = vmatprep.subr.bf16.mxu0 0
    %2852 = vmatpush1.bf16.msra.mxu0 0
    %2853 = vmatprep.subr.bf16.mxu0 0
    %2854 = vmatpush1.bf16.msra.mxu0 0
    %2855 = vmatprep.subr.bf16.mxu0 0
    %2856 = vmatpush1.bf16.msra.mxu0 0
    %2857 = vmatprep.subr.bf16.mxu0 0
    %2858 = vmatpush1.bf16.msra.mxu0 %v2842
    %2859 = vmatprep.subr.bf16.mxu0 0
    %2860 = vmatpush2.bf16.msra.mxu0 0
    %2861 = vmatprep.subr.bf16.mxu0 0
    %2862 = vmatpush2.bf16.msra.mxu0 0
    %2863 = vmatprep.subr.bf16.mxu0 0
    %2864 = vmatpush2.bf16.msra.mxu0 0
    %2865 = vmatprep.subr.bf16.mxu0 0
    %2866 = vmatpush2.bf16.msra.mxu0 0
    %2867 = vmatprep.subr.bf16.mxu0 0
    %2868 = vmatpush2.bf16.msra.mxu0 0
    %2869 = vmatprep.subr.bf16.mxu0 0
    %2870 = vmatpush2.bf16.msra.mxu0 0
    %2871 = vmatprep.subr.bf16.mxu0 0
    %2872 = vmatpush2.bf16.msra.mxu0 0
    %2873 = vmatprep.subr.bf16.mxu0 0
    %2874 = vmatpush2.bf16.msra.mxu0 0
    %2875 = vmatprep.mubr.bf16.mxu0 0
    %2876 = vmatmul.mubr.bf16.gmra.mxu0 %v532
    %v2877 = vpop.f32.mrf.mxu0
    %v2878 = vadd.f32 0.0, %v2877
    %v2879 = vpop.f32.mrf.mxu0
    %v2880 = vpop.f32.mrf.mxu0
    %v2881 = vadd.f32 0.0, %v2880
    %v2882 = vpop.f32.mrf.mxu0
    %2883 = vmatprep.mubr.bf16.mxu0 0
    %2884 = vmatmul.mubr.bf16.gmra.mxu0 %v535
    %v2885 = vpop.f32.mrf.mxu0
    %v2886 = vadd.f32 0.0, %v2885
    %v2887 = vpop.f32.mrf.mxu0
    %v2888 = vpop.f32.mrf.mxu0
    %v2889 = vadd.f32 0.0, %v2888
    %v2890 = vpop.f32.mrf.mxu0
    %2891 = vmatprep.mubr.bf16.mxu0 0
    %2892 = vmatmul.mubr.bf16.gmra.mxu0 %v538
    %v2893 = vpop.f32.mrf.mxu0
    %v2894 = vadd.f32 0.0, %v2893
    %v2895 = vpop.f32.mrf.mxu0
    %v2896 = vpop.f32.mrf.mxu0
    %v2897 = vadd.f32 0.0, %v2896
    %v2898 = vpop.f32.mrf.mxu0
    %2899 = vdwg.mxu0
    %2900 = vmatprep.subr.bf16.mxu0 0
    %2901 = vmatpush1.bf16.msra.mxu0 0
    %2902 = vmatprep.subr.bf16.mxu0 0
    %2903 = vmatpush1.bf16.msra.mxu0 0
    %2904 = vmatprep.subr.bf16.mxu0 0
    %2905 = vmatpush1.bf16.msra.mxu0 0
    %2906 = vmatprep.subr.bf16.mxu0 0
    %2907 = vmatpush1.bf16.msra.mxu0 0
    %2908 = vmatprep.subr.bf16.mxu0 0
    %2909 = vmatpush1.bf16.msra.mxu0 0
    %2910 = vmatprep.subr.bf16.mxu0 0
    %2911 = vmatpush1.bf16.msra.mxu0 0
    %2912 = vmatprep.subr.bf16.mxu0 0
    %2913 = vmatpush1.bf16.msra.mxu0 0
    %2914 = vmatprep.subr.bf16.mxu0 0
    %2915 = vmatpush1.bf16.msra.mxu0 %v2842
    %2916 = vmatprep.subr.bf16.mxu0 0
    %2917 = vmatpush2.bf16.msra.mxu0 0
    %2918 = vmatprep.subr.bf16.mxu0 0
    %2919 = vmatpush2.bf16.msra.mxu0 0
    %2920 = vmatprep.subr.bf16.mxu0 0
    %2921 = vmatpush2.bf16.msra.mxu0 0
    %2922 = vmatprep.subr.bf16.mxu0 0
    %2923 = vmatpush2.bf16.msra.mxu0 0
    %2924 = vmatprep.subr.bf16.mxu0 0
    %2925 = vmatpush2.bf16.msra.mxu0 0
    %2926 = vmatprep.subr.bf16.mxu0 0
    %2927 = vmatpush2.bf16.msra.mxu0 0
    %2928 = vmatprep.subr.bf16.mxu0 0
    %2929 = vmatpush2.bf16.msra.mxu0 0
    %2930 = vmatprep.subr.bf16.mxu0 0
    %2931 = vmatpush2.bf16.msra.mxu0 0
    %2932 = vmatprep.mubr.bf16.mxu0 0
    %2933 = vmatmul.mubr.bf16.gmra.mxu0 %v598
    %v2934 = vpop.f32.mrf.mxu0
    %v2935 = vadd.f32 0.0, %v2934
    %v2936 = vpop.f32.mrf.mxu0
    %v2937 = vpop.f32.mrf.mxu0
    %v2938 = vadd.f32 0.0, %v2937
    %v2939 = vpop.f32.mrf.mxu0
    %2940 = vmatprep.mubr.bf16.mxu0 0
    %2941 = vmatmul.mubr.bf16.gmra.mxu0 %v601
    %v2942 = vpop.f32.mrf.mxu0
    %v2943 = vadd.f32 0.0, %v2942
    %v2944 = vpop.f32.mrf.mxu0
    %v2945 = vpop.f32.mrf.mxu0
    %v2946 = vadd.f32 0.0, %v2945
    %v2947 = vpop.f32.mrf.mxu0
    %2948 = vmatprep.mubr.bf16.mxu0 0
    %2949 = vmatmul.mubr.bf16.gmra.mxu0 %v604
    %v2950 = vpop.f32.mrf.mxu0
    %v2951 = vadd.f32 0.0, %v2950
    %v2952 = vpop.f32.mrf.mxu0
    %v2953 = vpop.f32.mrf.mxu0
    %v2954 = vadd.f32 0.0, %v2953
    %v2955 = vpop.f32.mrf.mxu0
    %2956 = vdwg.mxu0
    %v2957 = vpack.c.bf16 %v2881, %v2878
    %v2958 = vpack.c.bf16 %v2938, %v2935
    %v2959 = vpack.c.bf16 %v2889, %v2886
    %v2960 = vpack.c.bf16 %v2946, %v2943
    %v2961 = vpack.c.bf16 %v2897, %v2894
    %v2962 = vpack.c.bf16 %v2954, %v2951
    %v2963 = vld [vmem:[#allocation15] sm:$0xf]
    %v2964 = vld [vmem:[#allocation15 + $0x4] sm:$0xf]
    %v2965 = vld [vmem:[#allocation15 + $0x8] sm:$0xf]
    %v2966 = vld [vmem:[#allocation15 + $0xc] sm:$0xf]
    %v2967 = vld [vmem:[#allocation15 + $0x10] sm:$0xf]
    %v2968 = vld [vmem:[#allocation15 + $0x14] sm:$0xf]
    %v2969 = vld [vmem:[#allocation15 + $0x18] sm:$0xf]
    %v2970 = vld [vmem:[#allocation15 + $0x1c] sm:$0xf]
    %v2971 = vld [vmem:[#allocation15 + $0x20] sm:$0xf]
    %v2972 = vld [vmem:[#allocation15 + $0x24] sm:$0xf]
    %v2973 = vld [vmem:[#allocation15 + $0x28] sm:$0xf]
    %v2974 = vld [vmem:[#allocation15 + $0x2c] sm:$0xf]
    %v2975 = vld [vmem:[#allocation15 + $0x30] sm:$0xf]
    %v2976 = vld [vmem:[#allocation15 + $0x34] sm:$0xf]
    %v2977 = vld [vmem:[#allocation15 + $0x38] sm:$0xf]
    %v2978 = vld [vmem:[#allocation15 + $0x3c] sm:$0xf]
    %v2979 = vld [vmem:[#allocation15 + $0x40] sm:$0xf]
    %v2980 = vld [vmem:[#allocation15 + $0x44] sm:$0xf]
    %v2981 = vld [vmem:[#allocation15 + $0x48] sm:$0xf]
    %v2982 = vld [vmem:[#allocation15 + $0x4c] sm:$0xf]
    %v2983 = vld [vmem:[#allocation15 + $0x50] sm:$0xf]
    %v2984 = vld [vmem:[#allocation15 + $0x54] sm:$0xf]
    %v2985 = vld [vmem:[#allocation15 + $0x58] sm:$0xf]
    %v2986 = vld [vmem:[#allocation15 + $0x5c] sm:$0xf]
    %v2987 = vld [vmem:[#allocation15 + $0x60] sm:$0xf]
    %v2988 = vld [vmem:[#allocation15 + $0x64] sm:$0xf]
    %v2989 = vld [vmem:[#allocation15 + $0x68] sm:$0xf]
    %v2990 = vld [vmem:[#allocation15 + $0x6c] sm:$0xf]
    %v2991 = vld [vmem:[#allocation15 + $0x70] sm:$0xf]
    %v2992 = vld [vmem:[#allocation15 + $0x74] sm:$0xf]
    %v2993 = vld [vmem:[#allocation15 + $0x78] sm:$0xf]
    %v2994 = vld [vmem:[#allocation15 + $0x7c] sm:$0xf]
    %v2995 = vld [vmem:[%s35] sm:$0x3]
    %v2997 = vsel %vm712, %v2995, 0
    %2999 = vmatprep.subr.bf16.mxu0 0
    %3000 = vmatpush1.bf16.msra.mxu0 0
    %3001 = vmatprep.subr.bf16.mxu0 0
    %3002 = vmatpush1.bf16.msra.mxu0 0
    %3003 = vmatprep.subr.bf16.mxu0 0
    %3004 = vmatpush1.bf16.msra.mxu0 0
    %3005 = vmatprep.subr.bf16.mxu0 0
    %3006 = vmatpush1.bf16.msra.mxu0 0
    %3007 = vmatprep.subr.bf16.mxu0 0
    %3008 = vmatpush1.bf16.msra.mxu0 0
    %3009 = vmatprep.subr.bf16.mxu0 0
    %3010 = vmatpush1.bf16.msra.mxu0 0
    %3011 = vmatprep.subr.bf16.mxu0 0
    %3012 = vmatpush1.bf16.msra.mxu0 0
    %3013 = vmatprep.subr.bf16.mxu0 0
    %3014 = vmatpush1.bf16.msra.mxu0 %v2997
    %3015 = vmatprep.subr.bf16.mxu0 0
    %3016 = vmatpush2.bf16.msra.mxu0 0
    %3017 = vmatprep.subr.bf16.mxu0 0
    %3018 = vmatpush2.bf16.msra.mxu0 0
    %3019 = vmatprep.subr.bf16.mxu0 0
    %3020 = vmatpush2.bf16.msra.mxu0 0
    %3021 = vmatprep.subr.bf16.mxu0 0
    %3022 = vmatpush2.bf16.msra.mxu0 0
    %3023 = vmatprep.subr.bf16.mxu0 0
    %3024 = vmatpush2.bf16.msra.mxu0 0
    %3025 = vmatprep.subr.bf16.mxu0 0
    %3026 = vmatpush2.bf16.msra.mxu0 0
    %3027 = vmatprep.subr.bf16.mxu0 0
    %3028 = vmatpush2.bf16.msra.mxu0 0
    %3029 = vmatprep.subr.bf16.mxu0 0
    %3030 = vmatpush2.bf16.msra.mxu0 0
    %3031 = vmatprep.mubr.bf16.mxu0 0
    %3032 = vmatmul.mubr.bf16.gmra.mxu0 %v704
    %v3033 = vpop.f32.mrf.mxu0
    %v3034 = vadd.f32 0.0, %v3033
    %v3035 = vpop.f32.mrf.mxu0
    %v3036 = vpop.f32.mrf.mxu0
    %v3037 = vadd.f32 0.0, %v3036
    %v3038 = vpop.f32.mrf.mxu0
    %3039 = vmatprep.mubr.bf16.mxu0 0
    %3040 = vmatmul.mubr.bf16.gmra.mxu0 %v707
    %v3041 = vpop.f32.mrf.mxu0
    %v3042 = vadd.f32 0.0, %v3041
    %v3043 = vpop.f32.mrf.mxu0
    %v3044 = vpop.f32.mrf.mxu0
    %v3045 = vadd.f32 0.0, %v3044
    %v3046 = vpop.f32.mrf.mxu0
    %3047 = vmatprep.mubr.bf16.mxu0 0
    %3048 = vmatmul.mubr.bf16.gmra.mxu0 %v710
    %v3049 = vpop.f32.mrf.mxu0
    %v3050 = vadd.f32 0.0, %v3049
    %v3051 = vpop.f32.mrf.mxu0
    %v3052 = vpop.f32.mrf.mxu0
    %v3053 = vadd.f32 0.0, %v3052
    %v3054 = vpop.f32.mrf.mxu0
    %3055 = vdwg.mxu0
    %v3088 = vunpack.c.l.b16 %v2963
    %v3089 = vunpack.c.l.b16 %v2964
    %v3090 = vunpack.c.l.b16 %v2965
    %v3091 = vunpack.c.l.b16 %v2966
    %v3092 = vunpack.c.l.b16 %v2967
    %v3093 = vunpack.c.l.b16 %v2968
    %v3094 = vunpack.c.l.b16 %v2969
    %v3095 = vunpack.c.l.b16 %v2970
    %v3096 = vunpack.c.l.b16 %v2971
    %v3097 = vunpack.c.l.b16 %v2972
    %v3098 = vunpack.c.l.b16 %v2973
    %v3099 = vunpack.c.l.b16 %v2974
    %v3100 = vunpack.c.l.b16 %v2975
    %v3101 = vunpack.c.l.b16 %v2976
    %v3102 = vunpack.c.l.b16 %v2977
    %v3103 = vunpack.c.l.b16 %v2978
    %v3104 = vunpack.c.l.b16 %v2979
    %v3105 = vunpack.c.l.b16 %v2980
    %v3106 = vunpack.c.l.b16 %v2981
    %v3107 = vunpack.c.l.b16 %v2982
    %v3108 = vunpack.c.l.b16 %v2983
    %v3109 = vunpack.c.l.b16 %v2984
    %v3110 = vunpack.c.l.b16 %v2985
    %v3111 = vunpack.c.l.b16 %v2986
    %v3112 = vunpack.c.l.b16 %v2987
    %v3113 = vunpack.c.l.b16 %v2988
    %v3114 = vunpack.c.l.b16 %v2989
    %v3115 = vunpack.c.l.b16 %v2990
    %v3116 = vunpack.c.l.b16 %v2991
    %v3117 = vunpack.c.l.b16 %v2992
    %v3118 = vunpack.c.l.b16 %v2993
    %v3119 = vunpack.c.l.b16 %v2994
    %v3120 = vpack.c.b16 %v3089, %v3088
    %v3121 = vpack.c.b16 %v3091, %v3090
    %v3122 = vpack.c.b16 %v3093, %v3092
    %v3123 = vpack.c.b16 %v3095, %v3094
    %v3124 = vpack.c.b16 %v3097, %v3096
    %v3125 = vpack.c.b16 %v3099, %v3098
    %v3126 = vpack.c.b16 %v3101, %v3100
    %v3127 = vpack.c.b16 %v3103, %v3102
    %v3128 = vpack.c.b16 %v3105, %v3104
    %v3129 = vpack.c.b16 %v3107, %v3106
    %v3130 = vpack.c.b16 %v3109, %v3108
    %v3131 = vpack.c.b16 %v3111, %v3110
    %v3132 = vpack.c.b16 %v3113, %v3112
    %v3133 = vpack.c.b16 %v3115, %v3114
    %v3134 = vpack.c.b16 %v3117, %v3116
    %v3135 = vpack.c.b16 %v3119, %v3118
    %3152 = vmatprep.subr.bf16.mxu0 0
    %3153 = vmatpush1.bf16.msra.mxu0 %v3127
    %3154 = vmatprep.subr.bf16.mxu0 0
    %3155 = vmatpush1.bf16.msra.mxu0 %v3126
    %3156 = vmatprep.subr.bf16.mxu0 0
    %3157 = vmatpush1.bf16.msra.mxu0 %v3125
    %3158 = vmatprep.subr.bf16.mxu0 0
    %3159 = vmatpush1.bf16.msra.mxu0 %v3124
    %3160 = vmatprep.subr.bf16.mxu0 0
    %3161 = vmatpush1.bf16.msra.mxu0 %v3123
    %3162 = vmatprep.subr.bf16.mxu0 0
    %3163 = vmatpush1.bf16.msra.mxu0 %v3122
    %3164 = vmatprep.subr.bf16.mxu0 0
    %3165 = vmatpush1.bf16.msra.mxu0 %v3121
    %3166 = vmatprep.subr.bf16.mxu0 0
    %3167 = vmatpush1.bf16.msra.mxu0 %v3120
    %3168 = vmatprep.subr.bf16.mxu0 0
    %3169 = vmatpush2.bf16.msra.mxu0 %v3135
    %3170 = vmatprep.subr.bf16.mxu0 0
    %3171 = vmatpush2.bf16.msra.mxu0 %v3134
    %3172 = vmatprep.subr.bf16.mxu0 0
    %3173 = vmatpush2.bf16.msra.mxu0 %v3133
    %3174 = vmatprep.subr.bf16.mxu0 0
    %3175 = vmatpush2.bf16.msra.mxu0 %v3132
    %3176 = vmatprep.subr.bf16.mxu0 0
    %3177 = vmatpush2.bf16.msra.mxu0 %v3131
    %3178 = vmatprep.subr.bf16.mxu0 0
    %3179 = vmatpush2.bf16.msra.mxu0 %v3130
    %3180 = vmatprep.subr.bf16.mxu0 0
    %3181 = vmatpush2.bf16.msra.mxu0 %v3129
    %3182 = vmatprep.subr.bf16.mxu0 0
    %3183 = vmatpush2.bf16.msra.mxu0 %v3128
    %3184 = vmatprep.mubr.bf16.mxu0 %v2958
    %3185 = vmatmul.mubr.bf16.gmra.mxu0 %v2957
    %v3186 = vpop.f32.mrf.mxu0
    %v3187 = vadd.f32 %v3034, %v3186
    %v3188 = vpop.f32.mrf.mxu0
    %v3189 = vpop.f32.mrf.mxu0
    %v3190 = vadd.f32 %v3037, %v3189
    %v3191 = vpop.f32.mrf.mxu0
    %3192 = vmatprep.mubr.bf16.mxu0 %v2960
    %3193 = vmatmul.mubr.bf16.gmra.mxu0 %v2959
    %v3194 = vpop.f32.mrf.mxu0
    %v3195 = vadd.f32 %v3042, %v3194
    %v3196 = vpop.f32.mrf.mxu0
    %v3197 = vpop.f32.mrf.mxu0
    %v3198 = vadd.f32 %v3045, %v3197
    %v3199 = vpop.f32.mrf.mxu0
    %3200 = vmatprep.mubr.bf16.mxu0 %v2962
    %3201 = vmatmul.mubr.bf16.gmra.mxu0 %v2961
    %v3202 = vpop.f32.mrf.mxu0
    %v3203 = vadd.f32 %v3050, %v3202
    %v3204 = vpop.f32.mrf.mxu0
    %v3205 = vpop.f32.mrf.mxu0
    %v3206 = vadd.f32 %v3053, %v3205
    %v3207 = vpop.f32.mrf.mxu0
    %3208 = vdwg.mxu0
    %v3209 = vld [vmem:[#allocation16] sm:$0x1]
    %v3211 = vlaneseq
    %v3212 = vshrl.u32 %v3211, 7
    %v3213 = vsub.s32 0, %v3212
    %v3214 = vrot.slane %v3209, %v3213
    %v3216 = vadd.f32 %v3187, %v3214
    %v3217 = vadd.f32 %v3190, %v3214
    %v3218 = vadd.f32 %v3195, %v3214
    %v3219 = vadd.f32 %v3198, %v3214
    %v3220 = vadd.f32 %v3203, %v3214
    %v3221 = vadd.f32 %v3206, %v3214
    %3222 = vst [vmem:[#allocation2] sm:$0xff] %v3216
    %3223 = vst [vmem:[#allocation2 + $0x8] sm:$0xff] %v3217
    %3224 = vst [vmem:[#allocation2 + $0x10] sm:$0xff] %v3218
    %3225 = vst [vmem:[#allocation2 + $0x18] sm:$0xff] %v3219
    %3226 = vst [vmem:[#allocation2 + $0x20] sm:$0xff] %v3220
    %3227 = vst [vmem:[#allocation2 + $0x28] sm:$0xff] %v3221
    %v3228 = vmul.f32 %v3216, %v3216
    %v3229 = vmul.f32 %v3217, %v3217
    %v3230 = vmul.f32 %v3218, %v3218
    %v3231 = vmul.f32 %v3219, %v3219
    %v3232 = vmul.f32 %v3220, %v3220
    %v3233 = vmul.f32 %v3221, %v3221
    %v3234 = vpack.c.bf16 %v3217, %v3216
    %v3235 = vpack.c.bf16 %v3229, %v3228
    %v3236 = vpack.c.bf16 %v3219, %v3218
    %v3237 = vpack.c.bf16 %v3231, %v3230
    %v3238 = vpack.c.bf16 %v3221, %v3220
    %v3239 = vpack.c.bf16 %v3233, %v3232
    %3240 = vmatprep.subr.bf16.mxu0 0
    %3241 = vmatpush1.bf16.msra.mxu0 0
    %3242 = vmatprep.subr.bf16.mxu0 0
    %3243 = vmatpush1.bf16.msra.mxu0 0
    %3244 = vmatprep.subr.bf16.mxu0 0
    %3245 = vmatpush1.bf16.msra.mxu0 0
    %3246 = vmatprep.subr.bf16.mxu0 0
    %3247 = vmatpush1.bf16.msra.mxu0 0
    %3248 = vmatprep.subr.bf16.mxu0 0
    %3249 = vmatpush1.bf16.msra.mxu0 0
    %3250 = vmatprep.subr.bf16.mxu0 %v3239
    %3251 = vmatpush1.bf16.msra.mxu0 %v3238
    %3252 = vmatprep.subr.bf16.mxu0 %v3237
    %3253 = vmatpush1.bf16.msra.mxu0 %v3236
    %3254 = vmatprep.subr.bf16.mxu0 %v3235
    %3255 = vmatpush1.bf16.msra.mxu0 %v3234
    %3256 = vmatprep.subr.bf16.mxu0 0
    %3257 = vmatpush2.bf16.msra.mxu0 0
    %3258 = vmatprep.subr.bf16.mxu0 0
    %3259 = vmatpush2.bf16.msra.mxu0 0
    %3260 = vmatprep.subr.bf16.mxu0 0
    %3261 = vmatpush2.bf16.msra.mxu0 0
    %3262 = vmatprep.subr.bf16.mxu0 0
    %3263 = vmatpush2.bf16.msra.mxu0 0
    %3264 = vmatprep.subr.bf16.mxu0 0
    %3265 = vmatpush2.bf16.msra.mxu0 0
    %3266 = vmatprep.subr.bf16.mxu0 0
    %3267 = vmatpush2.bf16.msra.mxu0 0
    %3268 = vmatprep.subr.bf16.mxu0 0
    %3269 = vmatpush2.bf16.msra.mxu0 0
    %3270 = vmatprep.subr.bf16.mxu0 0
    %3271 = vmatpush2.bf16.msra.mxu0 0
    %3272 = vmatprep.mubr.bf16.mxu0 0
    %3273 = vmatmul.mubr.bf16.gmra.mxu0 %v959
    %v3274 = vpop.f32.mrf.mxu0
    %v3275 = vadd.f32 0.0, %v3274
    %v3276 = vpop.f32.mrf.mxu0
    %v3277 = vadd.f32 0.0, %v3276
    %v3278 = vpop.f32.mrf.mxu0
    %v3279 = vadd.f32 0.0, %v3278
    %v3280 = vpop.f32.mrf.mxu0
    %v3281 = vadd.f32 0.0, %v3280
    %3282 = vdwg.mxu0
    %v3283 = vmul.f32 %v3275, %v1014
    %v3284 = vmul.f32 %v3279, %v1016
    %v3285 = vmul.f32 %v3277, %v1014
    %v3286 = vmul.f32 %v3281, %v1016
    %v3287 = vmul.f32 %v3283, %v3283
    %v3288 = vmul.f32 %v3284, %v3284
    %v3289 = vsub.f32 %v3285, %v3287
    %v3290 = vsub.f32 %v3286, %v3288
    %v3291 = vmax.f32 %v3289, 0.0
    %v3292 = vmax.f32 %v3290, 0.0
    %v3293 = vadd.f32 %v3291, 1e-05
    %v3294 = vadd.f32 %v3292, 1e-05
    %v3295 = vrsqrt.pop %v3293
    %v3296 = vmul.f32 %v3293, %v3295
    %vm3297 = vcmp.eq.f32.partialorder %v3293, inf
    %v3298 = vsel %vm3297, %v3293, %v3296
    %vm3299 = vcmp.eq.f32.partialorder %v3293, 0.0
    %v3300 = vand.u32 %v3293, 2147483648
    %v3301 = vsel %vm3299, %v3300, %v3298
    %v3302 = vrsqrt.pop %v3294
    %v3303 = vmul.f32 %v3294, %v3302
    %vm3304 = vcmp.eq.f32.partialorder %v3294, inf
    %v3305 = vsel %vm3304, %v3294, %v3303
    %vm3306 = vcmp.eq.f32.partialorder %v3294, 0.0
    %v3307 = vand.u32 %v3294, 2147483648
    %v3308 = vsel %vm3306, %v3307, %v3305
    loop: start=0, step=1, limit=3
    $region217: #{tpu_custom_call.1} parent=1 // loop_pre_header
      _
    $region218: #{tpu_custom_call.1} parent=1 // loop_header
      %s3310 = sphi 0, %s3314
      %p3311 = scmp.ge.s32.totalorder %s3310, 3
      %v3315 = vphi -1e+30, %v3690
      %v3316 = vphi -1e+30, %v3691
      %v3317 = vphi -1e+30, %v3692
      %v3318 = vphi -1e+30, %v3693
      %v3319 = vphi -1e+30, %v3694
      %v3320 = vphi -1e+30, %v3695
      %v3321 = vphi -1e+30, %v3696
      %v3322 = vphi -1e+30, %v3697
      %v3323 = vphi -1e+30, %v3698
      %v3324 = vphi -1e+30, %v3699
      %v3325 = vphi -1e+30, %v3700
      %v3326 = vphi -1e+30, %v3701
      %v3327 = vphi -1e+30, %v3702
      %v3328 = vphi -1e+30, %v3703
      %v3329 = vphi -1e+30, %v3704
      %v3330 = vphi -1e+30, %v3705
      %v3331 = vphi 1e+30, %v3850
      %v3332 = vphi 1e+30, %v3851
      %v3333 = vphi 1e+30, %v3852
      %v3334 = vphi 1e+30, %v3853
      %v3335 = vphi 1e+30, %v3854
      %v3336 = vphi 1e+30, %v3855
      %v3337 = vphi 1e+30, %v3856
      %v3338 = vphi 1e+30, %v3857
      %v3339 = vphi 1e+30, %v3858
      %v3340 = vphi 1e+30, %v3859
      %v3341 = vphi 1e+30, %v3860
      %v3342 = vphi 1e+30, %v3861
      %v3343 = vphi 1e+30, %v3862
      %v3344 = vphi 1e+30, %v3863
      %v3345 = vphi 1e+30, %v3864
      %v3346 = vphi 1e+30, %v3865
    $region219: #{tpu_custom_call.1} parent=1 // loop_header_branch
      %3313 = sbr.rel (%p3311) target = $region223
    $region220: #{tpu_custom_call.1} parent=1 // loop_body
      %s3347 = smul.u32 %s3310, 16
      %s3348 = scalar_lea.vmem [#allocation2], %s3347
      %v3349 = vld [vmem:[%s3348] sm:$0xff]
      %v3350 = vld [vmem:[%s3348 + $0x8] sm:$0xff]
      %s3351 = scalar_lea.vmem %s13, %s3347
      %v3352 = vld [vmem:[%s3351] sm:$0xff]
      %v3353 = vld [vmem:[%s3351 + $0x8] sm:$0xff]
      %vm3354 = vcmp.eq.s32.totalorder %v3352, 0
      %vm3355 = vcmp.eq.s32.totalorder %v3353, 0
      %vm3356 = vcmp.eq.s32.totalorder %v3352, 1
      %vm3357 = vcmp.eq.s32.totalorder %v3353, 1
      %vm3358 = vcmp.eq.s32.totalorder %v3352, 2
      %vm3359 = vcmp.eq.s32.totalorder %v3353, 2
      %vm3360 = vcmp.eq.s32.totalorder %v3352, 3
      %vm3361 = vcmp.eq.s32.totalorder %v3353, 3
      %vm3362 = vcmp.eq.s32.totalorder %v3352, 4
      %vm3363 = vcmp.eq.s32.totalorder %v3353, 4
      %vm3364 = vcmp.eq.s32.totalorder %v3352, 5
      %vm3365 = vcmp.eq.s32.totalorder %v3353, 5
      %vm3366 = vcmp.eq.s32.totalorder %v3352, 6
      %vm3367 = vcmp.eq.s32.totalorder %v3353, 6
      %vm3368 = vcmp.eq.s32.totalorder %v3352, 7
      %vm3369 = vcmp.eq.s32.totalorder %v3353, 7
      %vm3370 = vcmp.eq.s32.totalorder %v3352, 8
      %vm3371 = vcmp.eq.s32.totalorder %v3353, 8
      %vm3372 = vcmp.eq.s32.totalorder %v3352, 9
      %vm3373 = vcmp.eq.s32.totalorder %v3353, 9
      %vm3374 = vcmp.eq.s32.totalorder %v3352, 10
      %vm3375 = vcmp.eq.s32.totalorder %v3353, 10
      %vm3376 = vcmp.eq.s32.totalorder %v3352, 11
      %vm3377 = vcmp.eq.s32.totalorder %v3353, 11
      %vm3378 = vcmp.eq.s32.totalorder %v3352, 12
      %vm3379 = vcmp.eq.s32.totalorder %v3353, 12
      %vm3380 = vcmp.eq.s32.totalorder %v3352, 13
      %vm3381 = vcmp.eq.s32.totalorder %v3353, 13
      %vm3382 = vcmp.eq.s32.totalorder %v3352, 14
      %vm3383 = vcmp.eq.s32.totalorder %v3353, 14
      %vm3384 = vcmp.eq.s32.totalorder %v3352, 15
      %vm3385 = vcmp.eq.s32.totalorder %v3353, 15
      %v3386 = vsel %vm3354, 1, 0
      %v3387 = vsel %vm3355, 1, 0
      %v3388 = vsel %vm3356, 1, 0
      %v3389 = vsel %vm3357, 1, 0
      %v3390 = vsel %vm3358, 1, 0
      %v3391 = vsel %vm3359, 1, 0
      %v3392 = vsel %vm3360, 1, 0
      %v3393 = vsel %vm3361, 1, 0
      %v3394 = vsel %vm3362, 1, 0
      %v3395 = vsel %vm3363, 1, 0
      %v3396 = vsel %vm3364, 1, 0
      %v3397 = vsel %vm3365, 1, 0
      %v3398 = vsel %vm3366, 1, 0
      %v3399 = vsel %vm3367, 1, 0
      %v3400 = vsel %vm3368, 1, 0
      %v3401 = vsel %vm3369, 1, 0
      %v3402 = vsel %vm3370, 1, 0
      %v3403 = vsel %vm3371, 1, 0
      %v3404 = vsel %vm3372, 1, 0
      %v3405 = vsel %vm3373, 1, 0
      %v3406 = vsel %vm3374, 1, 0
      %v3407 = vsel %vm3375, 1, 0
      %v3408 = vsel %vm3376, 1, 0
      %v3409 = vsel %vm3377, 1, 0
      %v3410 = vsel %vm3378, 1, 0
      %v3411 = vsel %vm3379, 1, 0
      %v3412 = vsel %vm3380, 1, 0
      %v3413 = vsel %vm3381, 1, 0
      %v3414 = vsel %vm3382, 1, 0
      %v3415 = vsel %vm3383, 1, 0
      %v3416 = vsel %vm3384, 1, 0
      %v3417 = vsel %vm3385, 1, 0
      %3418 = vset.pattern.permute.xlu0 0
      %3419 = vperm.xlu0 %3418, %v3386
      %v3420 = vpop.permute.xlu0 %3419
      %3421 = vset.pattern.permute.xlu0 0
      %3422 = vperm.xlu0 %3421, %v3387
      %v3423 = vpop.permute.xlu0 %3422
      %3424 = vset.pattern.permute.xlu0 0
      %3425 = vperm.xlu0 %3424, %v3388
      %v3426 = vpop.permute.xlu0 %3425
      %3427 = vset.pattern.permute.xlu0 0
      %3428 = vperm.xlu0 %3427, %v3389
      %v3429 = vpop.permute.xlu0 %3428
      %3430 = vset.pattern.permute.xlu0 0
      %3431 = vperm.xlu0 %3430, %v3390
      %v3432 = vpop.permute.xlu0 %3431
      %3433 = vset.pattern.permute.xlu0 0
      %3434 = vperm.xlu0 %3433, %v3391
      %v3435 = vpop.permute.xlu0 %3434
      %3436 = vset.pattern.permute.xlu0 0
      %3437 = vperm.xlu0 %3436, %v3392
      %v3438 = vpop.permute.xlu0 %3437
      %3439 = vset.pattern.permute.xlu0 0
      %3440 = vperm.xlu0 %3439, %v3393
      %v3441 = vpop.permute.xlu0 %3440
      %3442 = vset.pattern.permute.xlu0 0
      %3443 = vperm.xlu0 %3442, %v3394
      %v3444 = vpop.permute.xlu0 %3443
      %3445 = vset.pattern.permute.xlu0 0
      %3446 = vperm.xlu0 %3445, %v3395
      %v3447 = vpop.permute.xlu0 %3446
      %3448 = vset.pattern.permute.xlu0 0
      %3449 = vperm.xlu0 %3448, %v3396
      %v3450 = vpop.permute.xlu0 %3449
      %3451 = vset.pattern.permute.xlu0 0
      %3452 = vperm.xlu0 %3451, %v3397
      %v3453 = vpop.permute.xlu0 %3452
      %3454 = vset.pattern.permute.xlu0 0
      %3455 = vperm.xlu0 %3454, %v3398
      %v3456 = vpop.permute.xlu0 %3455
      %3457 = vset.pattern.permute.xlu0 0
      %3458 = vperm.xlu0 %3457, %v3399
      %v3459 = vpop.permute.xlu0 %3458
      %3460 = vset.pattern.permute.xlu0 0
      %3461 = vperm.xlu0 %3460, %v3400
      %v3462 = vpop.permute.xlu0 %3461
      %3463 = vset.pattern.permute.xlu0 0
      %3464 = vperm.xlu0 %3463, %v3401
      %v3465 = vpop.permute.xlu0 %3464
      %3466 = vset.pattern.permute.xlu0 0
      %3467 = vperm.xlu0 %3466, %v3402
      %v3468 = vpop.permute.xlu0 %3467
      %3469 = vset.pattern.permute.xlu0 0
      %3470 = vperm.xlu0 %3469, %v3403
      %v3471 = vpop.permute.xlu0 %3470
      %3472 = vset.pattern.permute.xlu0 0
      %3473 = vperm.xlu0 %3472, %v3404
      %v3474 = vpop.permute.xlu0 %3473
      %3475 = vset.pattern.permute.xlu0 0
      %3476 = vperm.xlu0 %3475, %v3405
      %v3477 = vpop.permute.xlu0 %3476
      %3478 = vset.pattern.permute.xlu0 0
      %3479 = vperm.xlu0 %3478, %v3406
      %v3480 = vpop.permute.xlu0 %3479
      %3481 = vset.pattern.permute.xlu0 0
      %3482 = vperm.xlu0 %3481, %v3407
      %v3483 = vpop.permute.xlu0 %3482
      %3484 = vset.pattern.permute.xlu0 0
      %3485 = vperm.xlu0 %3484, %v3408
      %v3486 = vpop.permute.xlu0 %3485
      %3487 = vset.pattern.permute.xlu0 0
      %3488 = vperm.xlu0 %3487, %v3409
      %v3489 = vpop.permute.xlu0 %3488
      %3490 = vset.pattern.permute.xlu0 0
      %3491 = vperm.xlu0 %3490, %v3410
      %v3492 = vpop.permute.xlu0 %3491
      %3493 = vset.pattern.permute.xlu0 0
      %3494 = vperm.xlu0 %3493, %v3411
      %v3495 = vpop.permute.xlu0 %3494
      %3496 = vset.pattern.permute.xlu0 0
      %3497 = vperm.xlu0 %3496, %v3412
      %v3498 = vpop.permute.xlu0 %3497
      %3499 = vset.pattern.permute.xlu0 0
      %3500 = vperm.xlu0 %3499, %v3413
      %v3501 = vpop.permute.xlu0 %3500
      %3502 = vset.pattern.permute.xlu0 0
      %3503 = vperm.xlu0 %3502, %v3414
      %v3504 = vpop.permute.xlu0 %3503
      %3505 = vset.pattern.permute.xlu0 0
      %3506 = vperm.xlu0 %3505, %v3415
      %v3507 = vpop.permute.xlu0 %3506
      %3508 = vset.pattern.permute.xlu0 0
      %3509 = vperm.xlu0 %3508, %v3416
      %v3510 = vpop.permute.xlu0 %3509
      %3511 = vset.pattern.permute.xlu0 0
      %3512 = vperm.xlu0 %3511, %v3417
      %v3513 = vpop.permute.xlu0 %3512
      %vm3514 = vcmp.eq.s32.totalorder %v3420, 1
      %vm3515 = vcmp.eq.s32.totalorder %v3423, 1
      %vm3516 = vcmp.eq.s32.totalorder %v3426, 1
      %vm3517 = vcmp.eq.s32.totalorder %v3429, 1
      %vm3518 = vcmp.eq.s32.totalorder %v3432, 1
      %vm3519 = vcmp.eq.s32.totalorder %v3435, 1
      %vm3520 = vcmp.eq.s32.totalorder %v3438, 1
      %vm3521 = vcmp.eq.s32.totalorder %v3441, 1
      %vm3522 = vcmp.eq.s32.totalorder %v3444, 1
      %vm3523 = vcmp.eq.s32.totalorder %v3447, 1
      %vm3524 = vcmp.eq.s32.totalorder %v3450, 1
      %vm3525 = vcmp.eq.s32.totalorder %v3453, 1
      %vm3526 = vcmp.eq.s32.totalorder %v3456, 1
      %vm3527 = vcmp.eq.s32.totalorder %v3459, 1
      %vm3528 = vcmp.eq.s32.totalorder %v3462, 1
      %vm3529 = vcmp.eq.s32.totalorder %v3465, 1
      %vm3530 = vcmp.eq.s32.totalorder %v3468, 1
      %vm3531 = vcmp.eq.s32.totalorder %v3471, 1
      %vm3532 = vcmp.eq.s32.totalorder %v3474, 1
      %vm3533 = vcmp.eq.s32.totalorder %v3477, 1
      %vm3534 = vcmp.eq.s32.totalorder %v3480, 1
      %vm3535 = vcmp.eq.s32.totalorder %v3483, 1
      %vm3536 = vcmp.eq.s32.totalorder %v3486, 1
      %vm3537 = vcmp.eq.s32.totalorder %v3489, 1
      %vm3538 = vcmp.eq.s32.totalorder %v3492, 1
      %vm3539 = vcmp.eq.s32.totalorder %v3495, 1
      %vm3540 = vcmp.eq.s32.totalorder %v3498, 1
      %vm3541 = vcmp.eq.s32.totalorder %v3501, 1
      %vm3542 = vcmp.eq.s32.totalorder %v3504, 1
      %vm3543 = vcmp.eq.s32.totalorder %v3507, 1
      %vm3544 = vcmp.eq.s32.totalorder %v3510, 1
      %vm3545 = vcmp.eq.s32.totalorder %v3513, 1
      %v3546 = vsel %vm3514, %v3349, -1e+30
      %v3547 = vsel %vm3515, %v3350, -1e+30
      %v3548 = vsel %vm3516, %v3349, -1e+30
      %v3549 = vsel %vm3517, %v3350, -1e+30
      %v3550 = vsel %vm3518, %v3349, -1e+30
      %v3551 = vsel %vm3519, %v3350, -1e+30
      %v3552 = vsel %vm3520, %v3349, -1e+30
      %v3553 = vsel %vm3521, %v3350, -1e+30
      %v3554 = vsel %vm3522, %v3349, -1e+30
      %v3555 = vsel %vm3523, %v3350, -1e+30
      %v3556 = vsel %vm3524, %v3349, -1e+30
      %v3557 = vsel %vm3525, %v3350, -1e+30
      %v3558 = vsel %vm3526, %v3349, -1e+30
      %v3559 = vsel %vm3527, %v3350, -1e+30
      %v3560 = vsel %vm3528, %v3349, -1e+30
      %v3561 = vsel %vm3529, %v3350, -1e+30
      %v3562 = vsel %vm3530, %v3349, -1e+30
      %v3563 = vsel %vm3531, %v3350, -1e+30
      %v3564 = vsel %vm3532, %v3349, -1e+30
      %v3565 = vsel %vm3533, %v3350, -1e+30
      %v3566 = vsel %vm3534, %v3349, -1e+30
      %v3567 = vsel %vm3535, %v3350, -1e+30
      %v3568 = vsel %vm3536, %v3349, -1e+30
      %v3569 = vsel %vm3537, %v3350, -1e+30
      %v3570 = vsel %vm3538, %v3349, -1e+30
      %v3571 = vsel %vm3539, %v3350, -1e+30
      %v3572 = vsel %vm3540, %v3349, -1e+30
      %v3573 = vsel %vm3541, %v3350, -1e+30
      %v3574 = vsel %vm3542, %v3349, -1e+30
      %v3575 = vsel %vm3543, %v3350, -1e+30
      %v3576 = vsel %vm3544, %v3349, -1e+30
      %v3577 = vsel %vm3545, %v3350, -1e+30
      %v3578 = vmax.f32 %v3546, %v3547
      %v3579 = vrot.slane %v3578, 4
      %v3580 = vmax.f32 %v3578, %v3579
      %v3581 = vrot.slane %v3580, 2
      %v3582 = vmax.f32 %v3580, %v3581
      %v3583 = vrot.slane %v3582, 1
      %v3584 = vmax.f32 %v3582, %v3583
      %v3585 = vmax.f32 %v3548, %v3549
      %v3586 = vrot.slane %v3585, 4
      %v3587 = vmax.f32 %v3585, %v3586
      %v3588 = vrot.slane %v3587, 2
      %v3589 = vmax.f32 %v3587, %v3588
      %v3590 = vrot.slane %v3589, 1
      %v3591 = vmax.f32 %v3589, %v3590
      %v3592 = vmax.f32 %v3550, %v3551
      %v3593 = vrot.slane %v3592, 4
      %v3594 = vmax.f32 %v3592, %v3593
      %v3595 = vrot.slane %v3594, 2
      %v3596 = vmax.f32 %v3594, %v3595
      %v3597 = vrot.slane %v3596, 1
      %v3598 = vmax.f32 %v3596, %v3597
      %v3599 = vmax.f32 %v3552, %v3553
      %v3600 = vrot.slane %v3599, 4
      %v3601 = vmax.f32 %v3599, %v3600
      %v3602 = vrot.slane %v3601, 2
      %v3603 = vmax.f32 %v3601, %v3602
      %v3604 = vrot.slane %v3603, 1
      %v3605 = vmax.f32 %v3603, %v3604
      %v3606 = vmax.f32 %v3554, %v3555
      %v3607 = vrot.slane %v3606, 4
      %v3608 = vmax.f32 %v3606, %v3607
      %v3609 = vrot.slane %v3608, 2
      %v3610 = vmax.f32 %v3608, %v3609
      %v3611 = vrot.slane %v3610, 1
      %v3612 = vmax.f32 %v3610, %v3611
      %v3613 = vmax.f32 %v3556, %v3557
      %v3614 = vrot.slane %v3613, 4
      %v3615 = vmax.f32 %v3613, %v3614
      %v3616 = vrot.slane %v3615, 2
      %v3617 = vmax.f32 %v3615, %v3616
      %v3618 = vrot.slane %v3617, 1
      %v3619 = vmax.f32 %v3617, %v3618
      %v3620 = vmax.f32 %v3558, %v3559
      %v3621 = vrot.slane %v3620, 4
      %v3622 = vmax.f32 %v3620, %v3621
      %v3623 = vrot.slane %v3622, 2
      %v3624 = vmax.f32 %v3622, %v3623
      %v3625 = vrot.slane %v3624, 1
      %v3626 = vmax.f32 %v3624, %v3625
      %v3627 = vmax.f32 %v3560, %v3561
      %v3628 = vrot.slane %v3627, 4
      %v3629 = vmax.f32 %v3627, %v3628
      %v3630 = vrot.slane %v3629, 2
      %v3631 = vmax.f32 %v3629, %v3630
      %v3632 = vrot.slane %v3631, 1
      %v3633 = vmax.f32 %v3631, %v3632
      %v3634 = vmax.f32 %v3562, %v3563
      %v3635 = vrot.slane %v3634, 4
      %v3636 = vmax.f32 %v3634, %v3635
      %v3637 = vrot.slane %v3636, 2
      %v3638 = vmax.f32 %v3636, %v3637
      %v3639 = vrot.slane %v3638, 1
      %v3640 = vmax.f32 %v3638, %v3639
      %v3641 = vmax.f32 %v3564, %v3565
      %v3642 = vrot.slane %v3641, 4
      %v3643 = vmax.f32 %v3641, %v3642
      %v3644 = vrot.slane %v3643, 2
      %v3645 = vmax.f32 %v3643, %v3644
      %v3646 = vrot.slane %v3645, 1
      %v3647 = vmax.f32 %v3645, %v3646
      %v3648 = vmax.f32 %v3566, %v3567
      %v3649 = vrot.slane %v3648, 4
      %v3650 = vmax.f32 %v3648, %v3649
      %v3651 = vrot.slane %v3650, 2
      %v3652 = vmax.f32 %v3650, %v3651
      %v3653 = vrot.slane %v3652, 1
      %v3654 = vmax.f32 %v3652, %v3653
      %v3655 = vmax.f32 %v3568, %v3569
      %v3656 = vrot.slane %v3655, 4
      %v3657 = vmax.f32 %v3655, %v3656
      %v3658 = vrot.slane %v3657, 2
      %v3659 = vmax.f32 %v3657, %v3658
      %v3660 = vrot.slane %v3659, 1
      %v3661 = vmax.f32 %v3659, %v3660
      %v3662 = vmax.f32 %v3570, %v3571
      %v3663 = vrot.slane %v3662, 4
      %v3664 = vmax.f32 %v3662, %v3663
      %v3665 = vrot.slane %v3664, 2
      %v3666 = vmax.f32 %v3664, %v3665
      %v3667 = vrot.slane %v3666, 1
      %v3668 = vmax.f32 %v3666, %v3667
      %v3669 = vmax.f32 %v3572, %v3573
      %v3670 = vrot.slane %v3669, 4
      %v3671 = vmax.f32 %v3669, %v3670
      %v3672 = vrot.slane %v3671, 2
      %v3673 = vmax.f32 %v3671, %v3672
      %v3674 = vrot.slane %v3673, 1
      %v3675 = vmax.f32 %v3673, %v3674
      %v3676 = vmax.f32 %v3574, %v3575
      %v3677 = vrot.slane %v3676, 4
      %v3678 = vmax.f32 %v3676, %v3677
      %v3679 = vrot.slane %v3678, 2
      %v3680 = vmax.f32 %v3678, %v3679
      %v3681 = vrot.slane %v3680, 1
      %v3682 = vmax.f32 %v3680, %v3681
      %v3683 = vmax.f32 %v3576, %v3577
      %v3684 = vrot.slane %v3683, 4
      %v3685 = vmax.f32 %v3683, %v3684
      %v3686 = vrot.slane %v3685, 2
      %v3687 = vmax.f32 %v3685, %v3686
      %v3688 = vrot.slane %v3687, 1
      %v3689 = vmax.f32 %v3687, %v3688
      %v3690 = vmax.f32 %v3315, %v3584
      %v3691 = vmax.f32 %v3316, %v3591
      %v3692 = vmax.f32 %v3317, %v3598
      %v3693 = vmax.f32 %v3318, %v3605
      %v3694 = vmax.f32 %v3319, %v3612
      %v3695 = vmax.f32 %v3320, %v3619
      %v3696 = vmax.f32 %v3321, %v3626
      %v3697 = vmax.f32 %v3322, %v3633
      %v3698 = vmax.f32 %v3323, %v3640
      %v3699 = vmax.f32 %v3324, %v3647
      %v3700 = vmax.f32 %v3325, %v3654
      %v3701 = vmax.f32 %v3326, %v3661
      %v3702 = vmax.f32 %v3327, %v3668
      %v3703 = vmax.f32 %v3328, %v3675
      %v3704 = vmax.f32 %v3329, %v3682
      %v3705 = vmax.f32 %v3330, %v3689
      %v3706 = vsel %vm3514, %v3349, 1e+30
      %v3707 = vsel %vm3515, %v3350, 1e+30
      %v3708 = vsel %vm3516, %v3349, 1e+30
      %v3709 = vsel %vm3517, %v3350, 1e+30
      %v3710 = vsel %vm3518, %v3349, 1e+30
      %v3711 = vsel %vm3519, %v3350, 1e+30
      %v3712 = vsel %vm3520, %v3349, 1e+30
      %v3713 = vsel %vm3521, %v3350, 1e+30
      %v3714 = vsel %vm3522, %v3349, 1e+30
      %v3715 = vsel %vm3523, %v3350, 1e+30
      %v3716 = vsel %vm3524, %v3349, 1e+30
      %v3717 = vsel %vm3525, %v3350, 1e+30
      %v3718 = vsel %vm3526, %v3349, 1e+30
      %v3719 = vsel %vm3527, %v3350, 1e+30
      %v3720 = vsel %vm3528, %v3349, 1e+30
      %v3721 = vsel %vm3529, %v3350, 1e+30
      %v3722 = vsel %vm3530, %v3349, 1e+30
      %v3723 = vsel %vm3531, %v3350, 1e+30
      %v3724 = vsel %vm3532, %v3349, 1e+30
      %v3725 = vsel %vm3533, %v3350, 1e+30
      %v3726 = vsel %vm3534, %v3349, 1e+30
      %v3727 = vsel %vm3535, %v3350, 1e+30
      %v3728 = vsel %vm3536, %v3349, 1e+30
      %v3729 = vsel %vm3537, %v3350, 1e+30
      %v3730 = vsel %vm3538, %v3349, 1e+30
      %v3731 = vsel %vm3539, %v3350, 1e+30
      %v3732 = vsel %vm3540, %v3349, 1e+30
      %v3733 = vsel %vm3541, %v3350, 1e+30
      %v3734 = vsel %vm3542, %v3349, 1e+30
      %v3735 = vsel %vm3543, %v3350, 1e+30
      %v3736 = vsel %vm3544, %v3349, 1e+30
      %v3737 = vsel %vm3545, %v3350, 1e+30
      %v3738 = vmin.f32 %v3706, %v3707
      %v3739 = vrot.slane %v3738, 4
      %v3740 = vmin.f32 %v3738, %v3739
      %v3741 = vrot.slane %v3740, 2
      %v3742 = vmin.f32 %v3740, %v3741
      %v3743 = vrot.slane %v3742, 1
      %v3744 = vmin.f32 %v3742, %v3743
      %v3745 = vmin.f32 %v3708, %v3709
      %v3746 = vrot.slane %v3745, 4
      %v3747 = vmin.f32 %v3745, %v3746
      %v3748 = vrot.slane %v3747, 2
      %v3749 = vmin.f32 %v3747, %v3748
      %v3750 = vrot.slane %v3749, 1
      %v3751 = vmin.f32 %v3749, %v3750
      %v3752 = vmin.f32 %v3710, %v3711
      %v3753 = vrot.slane %v3752, 4
      %v3754 = vmin.f32 %v3752, %v3753
      %v3755 = vrot.slane %v3754, 2
      %v3756 = vmin.f32 %v3754, %v3755
      %v3757 = vrot.slane %v3756, 1
      %v3758 = vmin.f32 %v3756, %v3757
      %v3759 = vmin.f32 %v3712, %v3713
      %v3760 = vrot.slane %v3759, 4
      %v3761 = vmin.f32 %v3759, %v3760
      %v3762 = vrot.slane %v3761, 2
      %v3763 = vmin.f32 %v3761, %v3762
      %v3764 = vrot.slane %v3763, 1
      %v3765 = vmin.f32 %v3763, %v3764
      %v3766 = vmin.f32 %v3714, %v3715
      %v3767 = vrot.slane %v3766, 4
      %v3768 = vmin.f32 %v3766, %v3767
      %v3769 = vrot.slane %v3768, 2
      %v3770 = vmin.f32 %v3768, %v3769
      %v3771 = vrot.slane %v3770, 1
      %v3772 = vmin.f32 %v3770, %v3771
      %v3773 = vmin.f32 %v3716, %v3717
      %v3774 = vrot.slane %v3773, 4
      %v3775 = vmin.f32 %v3773, %v3774
      %v3776 = vrot.slane %v3775, 2
      %v3777 = vmin.f32 %v3775, %v3776
      %v3778 = vrot.slane %v3777, 1
      %v3779 = vmin.f32 %v3777, %v3778
      %v3780 = vmin.f32 %v3718, %v3719
      %v3781 = vrot.slane %v3780, 4
      %v3782 = vmin.f32 %v3780, %v3781
      %v3783 = vrot.slane %v3782, 2
      %v3784 = vmin.f32 %v3782, %v3783
      %v3785 = vrot.slane %v3784, 1
      %v3786 = vmin.f32 %v3784, %v3785
      %v3787 = vmin.f32 %v3720, %v3721
      %v3788 = vrot.slane %v3787, 4
      %v3789 = vmin.f32 %v3787, %v3788
      %v3790 = vrot.slane %v3789, 2
      %v3791 = vmin.f32 %v3789, %v3790
      %v3792 = vrot.slane %v3791, 1
      %v3793 = vmin.f32 %v3791, %v3792
      %v3794 = vmin.f32 %v3722, %v3723
      %v3795 = vrot.slane %v3794, 4
      %v3796 = vmin.f32 %v3794, %v3795
      %v3797 = vrot.slane %v3796, 2
      %v3798 = vmin.f32 %v3796, %v3797
      %v3799 = vrot.slane %v3798, 1
      %v3800 = vmin.f32 %v3798, %v3799
      %v3801 = vmin.f32 %v3724, %v3725
      %v3802 = vrot.slane %v3801, 4
      %v3803 = vmin.f32 %v3801, %v3802
      %v3804 = vrot.slane %v3803, 2
      %v3805 = vmin.f32 %v3803, %v3804
      %v3806 = vrot.slane %v3805, 1
      %v3807 = vmin.f32 %v3805, %v3806
      %v3808 = vmin.f32 %v3726, %v3727
      %v3809 = vrot.slane %v3808, 4
      %v3810 = vmin.f32 %v3808, %v3809
      %v3811 = vrot.slane %v3810, 2
      %v3812 = vmin.f32 %v3810, %v3811
      %v3813 = vrot.slane %v3812, 1
      %v3814 = vmin.f32 %v3812, %v3813
      %v3815 = vmin.f32 %v3728, %v3729
      %v3816 = vrot.slane %v3815, 4
      %v3817 = vmin.f32 %v3815, %v3816
      %v3818 = vrot.slane %v3817, 2
      %v3819 = vmin.f32 %v3817, %v3818
      %v3820 = vrot.slane %v3819, 1
      %v3821 = vmin.f32 %v3819, %v3820
      %v3822 = vmin.f32 %v3730, %v3731
      %v3823 = vrot.slane %v3822, 4
      %v3824 = vmin.f32 %v3822, %v3823
      %v3825 = vrot.slane %v3824, 2
      %v3826 = vmin.f32 %v3824, %v3825
      %v3827 = vrot.slane %v3826, 1
      %v3828 = vmin.f32 %v3826, %v3827
      %v3829 = vmin.f32 %v3732, %v3733
      %v3830 = vrot.slane %v3829, 4
      %v3831 = vmin.f32 %v3829, %v3830
      %v3832 = vrot.slane %v3831, 2
      %v3833 = vmin.f32 %v3831, %v3832
      %v3834 = vrot.slane %v3833, 1
      %v3835 = vmin.f32 %v3833, %v3834
      %v3836 = vmin.f32 %v3734, %v3735
      %v3837 = vrot.slane %v3836, 4
      %v3838 = vmin.f32 %v3836, %v3837
      %v3839 = vrot.slane %v3838, 2
      %v3840 = vmin.f32 %v3838, %v3839
      %v3841 = vrot.slane %v3840, 1
      %v3842 = vmin.f32 %v3840, %v3841
      %v3843 = vmin.f32 %v3736, %v3737
      %v3844 = vrot.slane %v3843, 4
      %v3845 = vmin.f32 %v3843, %v3844
      %v3846 = vrot.slane %v3845, 2
      %v3847 = vmin.f32 %v3845, %v3846
      %v3848 = vrot.slane %v3847, 1
      %v3849 = vmin.f32 %v3847, %v3848
      %v3850 = vmin.f32 %v3331, %v3744
      %v3851 = vmin.f32 %v3332, %v3751
      %v3852 = vmin.f32 %v3333, %v3758
      %v3853 = vmin.f32 %v3334, %v3765
      %v3854 = vmin.f32 %v3335, %v3772
      %v3855 = vmin.f32 %v3336, %v3779
      %v3856 = vmin.f32 %v3337, %v3786
      %v3857 = vmin.f32 %v3338, %v3793
      %v3858 = vmin.f32 %v3339, %v3800
      %v3859 = vmin.f32 %v3340, %v3807
      %v3860 = vmin.f32 %v3341, %v3814
      %v3861 = vmin.f32 %v3342, %v3821
      %v3862 = vmin.f32 %v3343, %v3828
      %v3863 = vmin.f32 %v3344, %v3835
      %v3864 = vmin.f32 %v3345, %v3842
      %v3865 = vmin.f32 %v3346, %v3849
    $region221: #{tpu_custom_call.1} parent=1 // loop_footer
      %s3314 = sadd.s32 1, %s3310
    $region222: #{tpu_custom_call.1} parent=1 // loop_footer_branch
      %3309 = sbr.rel target = $region218
    $region223: #{tpu_custom_call.1} parent=1 // loop_exit
      _
    %v3882 = vsel %vm1625, %v3316, %v3315
    %v3883 = vsel %vm1627, %v3317, %v3882
    %v3884 = vsel %vm1629, %v3318, %v3883
    %v3885 = vsel %vm1631, %v3319, %v3884
    %v3886 = vsel %vm1633, %v3320, %v3885
    %v3887 = vsel %vm1635, %v3321, %v3886
    %v3888 = vsel %vm1637, %v3322, %v3887
    %v3889 = vsel %vm1625, %v3324, %v3323
    %v3890 = vsel %vm1627, %v3325, %v3889
    %v3891 = vsel %vm1629, %v3326, %v3890
    %v3892 = vsel %vm1631, %v3327, %v3891
    %v3893 = vsel %vm1633, %v3328, %v3892
    %v3894 = vsel %vm1635, %v3329, %v3893
    %v3895 = vsel %vm1637, %v3330, %v3894
    %v3898 = vsel %vm1607, %v3888, 0.0
    %v3899 = vsel %vm1608, %v3895, 0.0
    %v3916 = vsel %vm1625, %v3332, %v3331
    %v3917 = vsel %vm1627, %v3333, %v3916
    %v3918 = vsel %vm1629, %v3334, %v3917
    %v3919 = vsel %vm1631, %v3335, %v3918
    %v3920 = vsel %vm1633, %v3336, %v3919
    %v3921 = vsel %vm1635, %v3337, %v3920
    %v3922 = vsel %vm1637, %v3338, %v3921
    %v3923 = vsel %vm1625, %v3340, %v3339
    %v3924 = vsel %vm1627, %v3341, %v3923
    %v3925 = vsel %vm1629, %v3342, %v3924
    %v3926 = vsel %vm1631, %v3343, %v3925
    %v3927 = vsel %vm1633, %v3344, %v3926
    %v3928 = vsel %vm1635, %v3345, %v3927
    %v3929 = vsel %vm1637, %v3346, %v3928
    %v3932 = vsel %vm1607, %v3922, 0.0
    %v3933 = vsel %vm1608, %v3929, 0.0
    %v3934 = vpack.c.bf16 %v3284, %v3283
    %v3935 = vpack.c.bf16 %v3933, %v3932
    %v3936 = vpack.c.bf16 %v3899, %v3898
    %v3937 = vpack.c.bf16 %v3308, %v3301
    %v3938 = vld [vmem:[#allocation18] sm:$0xf]
    %v3939 = vld [vmem:[#allocation18 + $0x4] sm:$0xf]
    %v3940 = vld [vmem:[#allocation18 + $0x8] sm:$0xf]
    %v3941 = vld [vmem:[#allocation18 + $0xc] sm:$0xf]
    %v3942 = vld [vmem:[#allocation18 + $0x10] sm:$0xf]
    %v3943 = vld [vmem:[#allocation18 + $0x14] sm:$0xf]
    %v3944 = vld [vmem:[#allocation18 + $0x18] sm:$0xf]
    %v3945 = vld [vmem:[#allocation18 + $0x1c] sm:$0xf]
    %v3946 = vld [vmem:[#allocation18 + $0x20] sm:$0xf]
    %v3947 = vld [vmem:[#allocation18 + $0x24] sm:$0xf]
    %v3948 = vld [vmem:[#allocation18 + $0x28] sm:$0xf]
    %v3949 = vld [vmem:[#allocation18 + $0x2c] sm:$0xf]
    %v3950 = vld [vmem:[#allocation18 + $0x30] sm:$0xf]
    %v3951 = vld [vmem:[#allocation18 + $0x34] sm:$0xf]
    %v3952 = vld [vmem:[#allocation18 + $0x38] sm:$0xf]
    %v3953 = vld [vmem:[#allocation18 + $0x3c] sm:$0xf]
    %v3954 = vld [vmem:[#allocation18 + $0x40] sm:$0xf]
    %v3955 = vld [vmem:[#allocation18 + $0x44] sm:$0xf]
    %v3956 = vld [vmem:[#allocation18 + $0x48] sm:$0xf]
    %v3957 = vld [vmem:[#allocation18 + $0x4c] sm:$0xf]
    %v3958 = vld [vmem:[#allocation18 + $0x50] sm:$0xf]
    %v3959 = vld [vmem:[#allocation18 + $0x54] sm:$0xf]
    %v3960 = vld [vmem:[#allocation18 + $0x58] sm:$0xf]
    %v3961 = vld [vmem:[#allocation18 + $0x5c] sm:$0xf]
    %v3962 = vld [vmem:[#allocation18 + $0x60] sm:$0xf]
    %v3963 = vld [vmem:[#allocation18 + $0x64] sm:$0xf]
    %v3964 = vld [vmem:[#allocation18 + $0x68] sm:$0xf]
    %v3965 = vld [vmem:[#allocation18 + $0x6c] sm:$0xf]
    %v3966 = vld [vmem:[#allocation18 + $0x70] sm:$0xf]
    %v3967 = vld [vmem:[#allocation18 + $0x74] sm:$0xf]
    %v3968 = vld [vmem:[#allocation18 + $0x78] sm:$0xf]
    %v3969 = vld [vmem:[#allocation18 + $0x7c] sm:$0xf]
    %v3970 = vld [vmem:[#allocation18 + $0x80] sm:$0xf]
    %v3971 = vld [vmem:[#allocation18 + $0x84] sm:$0xf]
    %v3972 = vld [vmem:[#allocation18 + $0x88] sm:$0xf]
    %v3973 = vld [vmem:[#allocation18 + $0x8c] sm:$0xf]
    %v3974 = vld [vmem:[#allocation18 + $0x90] sm:$0xf]
    %v3975 = vld [vmem:[#allocation18 + $0x94] sm:$0xf]
    %v3976 = vld [vmem:[#allocation18 + $0x98] sm:$0xf]
    %v3977 = vld [vmem:[#allocation18 + $0x9c] sm:$0xf]
    %v3978 = vld [vmem:[#allocation18 + $0xa0] sm:$0xf]
    %v3979 = vld [vmem:[#allocation18 + $0xa4] sm:$0xf]
    %v3980 = vld [vmem:[#allocation18 + $0xa8] sm:$0xf]
    %v3981 = vld [vmem:[#allocation18 + $0xac] sm:$0xf]
    %v3982 = vld [vmem:[#allocation18 + $0xb0] sm:$0xf]
    %v3983 = vld [vmem:[#allocation18 + $0xb4] sm:$0xf]
    %v3984 = vld [vmem:[#allocation18 + $0xb8] sm:$0xf]
    %v3985 = vld [vmem:[#allocation18 + $0xbc] sm:$0xf]
    %v3986 = vld [vmem:[#allocation18 + $0xc0] sm:$0xf]
    %v3987 = vld [vmem:[#allocation18 + $0xc4] sm:$0xf]
    %v3988 = vld [vmem:[#allocation18 + $0xc8] sm:$0xf]
    %v3989 = vld [vmem:[#allocation18 + $0xcc] sm:$0xf]
    %v3990 = vld [vmem:[#allocation18 + $0xd0] sm:$0xf]
    %v3991 = vld [vmem:[#allocation18 + $0xd4] sm:$0xf]
    %v3992 = vld [vmem:[#allocation18 + $0xd8] sm:$0xf]
    %v3993 = vld [vmem:[#allocation18 + $0xdc] sm:$0xf]
    %v3994 = vld [vmem:[#allocation18 + $0xe0] sm:$0xf]
    %v3995 = vld [vmem:[#allocation18 + $0xe4] sm:$0xf]
    %v3996 = vld [vmem:[#allocation18 + $0xe8] sm:$0xf]
    %v3997 = vld [vmem:[#allocation18 + $0xec] sm:$0xf]
    %v3998 = vld [vmem:[#allocation18 + $0xf0] sm:$0xf]
    %v3999 = vld [vmem:[#allocation18 + $0xf4] sm:$0xf]
    %v4000 = vld [vmem:[#allocation18 + $0xf8] sm:$0xf]
    %v4001 = vld [vmem:[#allocation18 + $0xfc] sm:$0xf]
    %v4002 = vld [vmem:[#allocation18 + $0x100] sm:$0xf]
    %v4003 = vld [vmem:[#allocation18 + $0x104] sm:$0xf]
    %v4004 = vld [vmem:[#allocation18 + $0x108] sm:$0xf]
    %v4005 = vld [vmem:[#allocation18 + $0x10c] sm:$0xf]
    %v4006 = vld [vmem:[#allocation18 + $0x110] sm:$0xf]
    %v4007 = vld [vmem:[#allocation18 + $0x114] sm:$0xf]
    %v4008 = vld [vmem:[#allocation18 + $0x118] sm:$0xf]
    %v4009 = vld [vmem:[#allocation18 + $0x11c] sm:$0xf]
    %v4010 = vld [vmem:[#allocation18 + $0x120] sm:$0xf]
    %v4011 = vld [vmem:[#allocation18 + $0x124] sm:$0xf]
    %v4012 = vld [vmem:[#allocation18 + $0x128] sm:$0xf]
    %v4013 = vld [vmem:[#allocation18 + $0x12c] sm:$0xf]
    %v4014 = vld [vmem:[#allocation18 + $0x130] sm:$0xf]
    %v4015 = vld [vmem:[#allocation18 + $0x134] sm:$0xf]
    %v4016 = vld [vmem:[#allocation18 + $0x138] sm:$0xf]
    %v4017 = vld [vmem:[#allocation18 + $0x13c] sm:$0xf]
    %v4018 = vld [vmem:[#allocation19] sm:$0xf]
    %v4019 = vld [vmem:[#allocation19 + $0x4] sm:$0xf]
    %v4020 = vld [vmem:[#allocation19 + $0x8] sm:$0xf]
    %v4021 = vld [vmem:[#allocation19 + $0xc] sm:$0xf]
    %v4022 = vld [vmem:[#allocation19 + $0x10] sm:$0xf]
    %v4023 = vld [vmem:[#allocation19 + $0x14] sm:$0xf]
    %v4024 = vld [vmem:[#allocation19 + $0x18] sm:$0xf]
    %v4025 = vld [vmem:[#allocation19 + $0x1c] sm:$0xf]
    %v4026 = vld [vmem:[#allocation19 + $0x20] sm:$0xf]
    %v4027 = vld [vmem:[#allocation19 + $0x24] sm:$0xf]
    %v4028 = vld [vmem:[#allocation19 + $0x28] sm:$0xf]
    %v4029 = vld [vmem:[#allocation19 + $0x2c] sm:$0xf]
    %v4030 = vld [vmem:[#allocation19 + $0x30] sm:$0xf]
    %v4031 = vld [vmem:[#allocation19 + $0x34] sm:$0xf]
    %v4032 = vld [vmem:[#allocation19 + $0x38] sm:$0xf]
    %v4033 = vld [vmem:[#allocation19 + $0x3c] sm:$0xf]
    %v4034 = vld [vmem:[#allocation19 + $0x40] sm:$0xf]
    %v4035 = vld [vmem:[#allocation19 + $0x44] sm:$0xf]
    %v4036 = vld [vmem:[#allocation19 + $0x48] sm:$0xf]
    %v4037 = vld [vmem:[#allocation19 + $0x4c] sm:$0xf]
    %v4038 = vld [vmem:[#allocation19 + $0x50] sm:$0xf]
    %v4039 = vld [vmem:[#allocation19 + $0x54] sm:$0xf]
    %v4040 = vld [vmem:[#allocation19 + $0x58] sm:$0xf]
    %v4041 = vld [vmem:[#allocation19 + $0x5c] sm:$0xf]
    %v4042 = vld [vmem:[#allocation19 + $0x60] sm:$0xf]
    %v4043 = vld [vmem:[#allocation19 + $0x64] sm:$0xf]
    %v4044 = vld [vmem:[#allocation19 + $0x68] sm:$0xf]
    %v4045 = vld [vmem:[#allocation19 + $0x6c] sm:$0xf]
    %v4046 = vld [vmem:[#allocation19 + $0x70] sm:$0xf]
    %v4047 = vld [vmem:[#allocation19 + $0x74] sm:$0xf]
    %v4048 = vld [vmem:[#allocation19 + $0x78] sm:$0xf]
    %v4049 = vld [vmem:[#allocation19 + $0x7c] sm:$0xf]
    %v4050 = vld [vmem:[#allocation19 + $0x80] sm:$0xf]
    %v4051 = vld [vmem:[#allocation19 + $0x84] sm:$0xf]
    %v4052 = vld [vmem:[#allocation19 + $0x88] sm:$0xf]
    %v4053 = vld [vmem:[#allocation19 + $0x8c] sm:$0xf]
    %v4054 = vld [vmem:[#allocation19 + $0x90] sm:$0xf]
    %v4055 = vld [vmem:[#allocation19 + $0x94] sm:$0xf]
    %v4056 = vld [vmem:[#allocation19 + $0x98] sm:$0xf]
    %v4057 = vld [vmem:[#allocation19 + $0x9c] sm:$0xf]
    %v4058 = vld [vmem:[#allocation19 + $0xa0] sm:$0xf]
    %v4059 = vld [vmem:[#allocation19 + $0xa4] sm:$0xf]
    %v4060 = vld [vmem:[#allocation19 + $0xa8] sm:$0xf]
    %v4061 = vld [vmem:[#allocation19 + $0xac] sm:$0xf]
    %v4062 = vld [vmem:[#allocation19 + $0xb0] sm:$0xf]
    %v4063 = vld [vmem:[#allocation19 + $0xb4] sm:$0xf]
    %v4064 = vld [vmem:[#allocation19 + $0xb8] sm:$0xf]
    %v4065 = vld [vmem:[#allocation19 + $0xbc] sm:$0xf]
    %v4066 = vld [vmem:[#allocation19 + $0xc0] sm:$0xf]
    %v4067 = vld [vmem:[#allocation19 + $0xc4] sm:$0xf]
    %v4068 = vld [vmem:[#allocation19 + $0xc8] sm:$0xf]
    %v4069 = vld [vmem:[#allocation19 + $0xcc] sm:$0xf]
    %v4070 = vld [vmem:[#allocation19 + $0xd0] sm:$0xf]
    %v4071 = vld [vmem:[#allocation19 + $0xd4] sm:$0xf]
    %v4072 = vld [vmem:[#allocation19 + $0xd8] sm:$0xf]
    %v4073 = vld [vmem:[#allocation19 + $0xdc] sm:$0xf]
    %v4074 = vld [vmem:[#allocation19 + $0xe0] sm:$0xf]
    %v4075 = vld [vmem:[#allocation19 + $0xe4] sm:$0xf]
    %v4076 = vld [vmem:[#allocation19 + $0xe8] sm:$0xf]
    %v4077 = vld [vmem:[#allocation19 + $0xec] sm:$0xf]
    %v4078 = vld [vmem:[#allocation19 + $0xf0] sm:$0xf]
    %v4079 = vld [vmem:[#allocation19 + $0xf4] sm:$0xf]
    %v4080 = vld [vmem:[#allocation19 + $0xf8] sm:$0xf]
    %v4081 = vld [vmem:[#allocation19 + $0xfc] sm:$0xf]
    %v4146 = vunpack.c.l.b16 %v4018
    %v4147 = vunpack.c.l.b16 %v4019
    %v4148 = vunpack.c.l.b16 %v4020
    %v4149 = vunpack.c.l.b16 %v4021
    %v4150 = vunpack.c.l.b16 %v4022
    %v4151 = vunpack.c.l.b16 %v4023
    %v4152 = vunpack.c.l.b16 %v4024
    %v4153 = vunpack.c.l.b16 %v4025
    %v4154 = vunpack.c.l.b16 %v4026
    %v4155 = vunpack.c.l.b16 %v4027
    %v4156 = vunpack.c.l.b16 %v4028
    %v4157 = vunpack.c.l.b16 %v4029
    %v4158 = vunpack.c.l.b16 %v4030
    %v4159 = vunpack.c.l.b16 %v4031
    %v4160 = vunpack.c.l.b16 %v4032
    %v4161 = vunpack.c.l.b16 %v4033
    %v4162 = vunpack.c.l.b16 %v4034
    %v4163 = vunpack.c.l.b16 %v4035
    %v4164 = vunpack.c.l.b16 %v4036
    %v4165 = vunpack.c.l.b16 %v4037
    %v4166 = vunpack.c.l.b16 %v4038
    %v4167 = vunpack.c.l.b16 %v4039
    %v4168 = vunpack.c.l.b16 %v4040
    %v4169 = vunpack.c.l.b16 %v4041
    %v4170 = vunpack.c.l.b16 %v4042
    %v4171 = vunpack.c.l.b16 %v4043
    %v4172 = vunpack.c.l.b16 %v4044
    %v4173 = vunpack.c.l.b16 %v4045
    %v4174 = vunpack.c.l.b16 %v4046
    %v4175 = vunpack.c.l.b16 %v4047
    %v4176 = vunpack.c.l.b16 %v4048
    %v4177 = vunpack.c.l.b16 %v4049
    %v4178 = vunpack.c.l.b16 %v4050
    %v4179 = vunpack.c.l.b16 %v4051
    %v4180 = vunpack.c.l.b16 %v4052
    %v4181 = vunpack.c.l.b16 %v4053
    %v4182 = vunpack.c.l.b16 %v4054
    %v4183 = vunpack.c.l.b16 %v4055
    %v4184 = vunpack.c.l.b16 %v4056
    %v4185 = vunpack.c.l.b16 %v4057
    %v4186 = vunpack.c.l.b16 %v4058
    %v4187 = vunpack.c.l.b16 %v4059
    %v4188 = vunpack.c.l.b16 %v4060
    %v4189 = vunpack.c.l.b16 %v4061
    %v4190 = vunpack.c.l.b16 %v4062
    %v4191 = vunpack.c.l.b16 %v4063
    %v4192 = vunpack.c.l.b16 %v4064
    %v4193 = vunpack.c.l.b16 %v4065
    %v4194 = vunpack.c.l.b16 %v4066
    %v4195 = vunpack.c.l.b16 %v4067
    %v4196 = vunpack.c.l.b16 %v4068
    %v4197 = vunpack.c.l.b16 %v4069
    %v4198 = vunpack.c.l.b16 %v4070
    %v4199 = vunpack.c.l.b16 %v4071
    %v4200 = vunpack.c.l.b16 %v4072
    %v4201 = vunpack.c.l.b16 %v4073
    %v4202 = vunpack.c.l.b16 %v4074
    %v4203 = vunpack.c.l.b16 %v4075
    %v4204 = vunpack.c.l.b16 %v4076
    %v4205 = vunpack.c.l.b16 %v4077
    %v4206 = vunpack.c.l.b16 %v4078
    %v4207 = vunpack.c.l.b16 %v4079
    %v4208 = vunpack.c.l.b16 %v4080
    %v4209 = vunpack.c.l.b16 %v4081
    %v4210 = vpack.c.b16 %v4147, %v4146
    %v4211 = vpack.c.b16 %v4149, %v4148
    %v4212 = vpack.c.b16 %v4151, %v4150
    %v4213 = vpack.c.b16 %v4153, %v4152
    %v4214 = vpack.c.b16 %v4155, %v4154
    %v4215 = vpack.c.b16 %v4157, %v4156
    %v4216 = vpack.c.b16 %v4159, %v4158
    %v4217 = vpack.c.b16 %v4161, %v4160
    %v4218 = vpack.c.b16 %v4163, %v4162
    %v4219 = vpack.c.b16 %v4165, %v4164
    %v4220 = vpack.c.b16 %v4167, %v4166
    %v4221 = vpack.c.b16 %v4169, %v4168
    %v4222 = vpack.c.b16 %v4171, %v4170
    %v4223 = vpack.c.b16 %v4173, %v4172
    %v4224 = vpack.c.b16 %v4175, %v4174
    %v4225 = vpack.c.b16 %v4177, %v4176
    %v4226 = vpack.c.b16 %v4179, %v4178
    %v4227 = vpack.c.b16 %v4181, %v4180
    %v4228 = vpack.c.b16 %v4183, %v4182
    %v4229 = vpack.c.b16 %v4185, %v4184
    %v4230 = vpack.c.b16 %v4187, %v4186
    %v4231 = vpack.c.b16 %v4189, %v4188
    %v4232 = vpack.c.b16 %v4191, %v4190
    %v4233 = vpack.c.b16 %v4193, %v4192
    %v4234 = vpack.c.b16 %v4195, %v4194
    %v4235 = vpack.c.b16 %v4197, %v4196
    %v4236 = vpack.c.b16 %v4199, %v4198
    %v4237 = vpack.c.b16 %v4201, %v4200
    %v4238 = vpack.c.b16 %v4203, %v4202
    %v4239 = vpack.c.b16 %v4205, %v4204
    %v4240 = vpack.c.b16 %v4207, %v4206
    %v4241 = vpack.c.b16 %v4209, %v4208
    %4274 = vmatprep.subr.bf16.mxu0 0
    %4275 = vmatpush1.bf16.msra.mxu0 %v4217
    %4276 = vmatprep.subr.bf16.mxu0 0
    %4277 = vmatpush1.bf16.msra.mxu0 %v4216
    %4278 = vmatprep.subr.bf16.mxu0 0
    %4279 = vmatpush1.bf16.msra.mxu0 %v4215
    %4280 = vmatprep.subr.bf16.mxu0 0
    %4281 = vmatpush1.bf16.msra.mxu0 %v4214
    %4282 = vmatprep.subr.bf16.mxu0 0
    %4283 = vmatpush1.bf16.msra.mxu0 %v4213
    %4284 = vmatprep.subr.bf16.mxu0 0
    %4285 = vmatpush1.bf16.msra.mxu0 %v4212
    %4286 = vmatprep.subr.bf16.mxu0 0
    %4287 = vmatpush1.bf16.msra.mxu0 %v4211
    %4288 = vmatprep.subr.bf16.mxu0 0
    %4289 = vmatpush1.bf16.msra.mxu0 %v4210
    %4290 = vmatprep.subr.bf16.mxu0 0
    %4291 = vmatpush2.bf16.msra.mxu0 %v4225
    %4292 = vmatprep.subr.bf16.mxu0 0
    %4293 = vmatpush2.bf16.msra.mxu0 %v4224
    %4294 = vmatprep.subr.bf16.mxu0 0
    %4295 = vmatpush2.bf16.msra.mxu0 %v4223
    %4296 = vmatprep.subr.bf16.mxu0 0
    %4297 = vmatpush2.bf16.msra.mxu0 %v4222
    %4298 = vmatprep.subr.bf16.mxu0 0
    %4299 = vmatpush2.bf16.msra.mxu0 %v4221
    %4300 = vmatprep.subr.bf16.mxu0 0
    %4301 = vmatpush2.bf16.msra.mxu0 %v4220
    %4302 = vmatprep.subr.bf16.mxu0 0
    %4303 = vmatpush2.bf16.msra.mxu0 %v4219
    %4304 = vmatprep.subr.bf16.mxu0 0
    %4305 = vmatpush2.bf16.msra.mxu0 %v4218
    %4306 = vmatprep.mubr.bf16.mxu0 %v3935
    %4307 = vmatmul.mubr.bf16.gmra.mxu0 %v3934
    %v4308 = vpop.f32.mrf.mxu0
    %v4309 = vadd.f32 0.0, %v4308
    %v4310 = vpop.f32.mrf.mxu0
    %v4311 = vpop.f32.mrf.mxu0
    %v4312 = vadd.f32 0.0, %v4311
    %v4313 = vpop.f32.mrf.mxu0
    %4314 = vdwg.mxu0
    %4315 = vmatprep.subr.bf16.mxu0 0
    %4316 = vmatpush1.bf16.msra.mxu0 %v4233
    %4317 = vmatprep.subr.bf16.mxu0 0
    %4318 = vmatpush1.bf16.msra.mxu0 %v4232
    %4319 = vmatprep.subr.bf16.mxu0 0
    %4320 = vmatpush1.bf16.msra.mxu0 %v4231
    %4321 = vmatprep.subr.bf16.mxu0 0
    %4322 = vmatpush1.bf16.msra.mxu0 %v4230
    %4323 = vmatprep.subr.bf16.mxu0 0
    %4324 = vmatpush1.bf16.msra.mxu0 %v4229
    %4325 = vmatprep.subr.bf16.mxu0 0
    %4326 = vmatpush1.bf16.msra.mxu0 %v4228
    %4327 = vmatprep.subr.bf16.mxu0 0
    %4328 = vmatpush1.bf16.msra.mxu0 %v4227
    %4329 = vmatprep.subr.bf16.mxu0 0
    %4330 = vmatpush1.bf16.msra.mxu0 %v4226
    %4331 = vmatprep.subr.bf16.mxu0 0
    %4332 = vmatpush2.bf16.msra.mxu0 %v4241
    %4333 = vmatprep.subr.bf16.mxu0 0
    %4334 = vmatpush2.bf16.msra.mxu0 %v4240
    %4335 = vmatprep.subr.bf16.mxu0 0
    %4336 = vmatpush2.bf16.msra.mxu0 %v4239
    %4337 = vmatprep.subr.bf16.mxu0 0
    %4338 = vmatpush2.bf16.msra.mxu0 %v4238
    %4339 = vmatprep.subr.bf16.mxu0 0
    %4340 = vmatpush2.bf16.msra.mxu0 %v4237
    %4341 = vmatprep.subr.bf16.mxu0 0
    %4342 = vmatpush2.bf16.msra.mxu0 %v4236
    %4343 = vmatprep.subr.bf16.mxu0 0
    %4344 = vmatpush2.bf16.msra.mxu0 %v4235
    %4345 = vmatprep.subr.bf16.mxu0 0
    %4346 = vmatpush2.bf16.msra.mxu0 %v4234
    %4347 = vmatprep.mubr.bf16.mxu0 %v3937
    %4348 = vmatmul.mubr.bf16.gmra.mxu0 %v3936
    %v4349 = vpop.f32.mrf.mxu0
    %v4350 = vadd.f32 %v4309, %v4349
    %v4351 = vpop.f32.mrf.mxu0
    %v4352 = vpop.f32.mrf.mxu0
    %v4353 = vadd.f32 %v4312, %v4352
    %v4354 = vpop.f32.mrf.mxu0
    %4355 = vdwg.mxu0
    %v4356 = vmul.f32 %v2109, %v4350
    %v4357 = vmul.f32 %v2114, %v4353
    %v4438 = vunpack.c.l.b16 %v3938
    %v4439 = vunpack.c.l.b16 %v3939
    %v4440 = vunpack.c.l.b16 %v3940
    %v4441 = vunpack.c.l.b16 %v3941
    %v4442 = vunpack.c.l.b16 %v3942
    %v4443 = vunpack.c.l.b16 %v3943
    %v4444 = vunpack.c.l.b16 %v3944
    %v4445 = vunpack.c.l.b16 %v3945
    %v4446 = vunpack.c.l.b16 %v3946
    %v4447 = vunpack.c.l.b16 %v3947
    %v4448 = vunpack.c.l.b16 %v3948
    %v4449 = vunpack.c.l.b16 %v3949
    %v4450 = vunpack.c.l.b16 %v3950
    %v4451 = vunpack.c.l.b16 %v3951
    %v4452 = vunpack.c.l.b16 %v3952
    %v4453 = vunpack.c.l.b16 %v3953
    %v4454 = vunpack.c.l.b16 %v3954
    %v4455 = vunpack.c.l.b16 %v3955
    %v4456 = vunpack.c.l.b16 %v3956
    %v4457 = vunpack.c.l.b16 %v3957
    %v4458 = vunpack.c.l.b16 %v3958
    %v4459 = vunpack.c.l.b16 %v3959
    %v4460 = vunpack.c.l.b16 %v3960
    %v4461 = vunpack.c.l.b16 %v3961
    %v4462 = vunpack.c.l.b16 %v3962
    %v4463 = vunpack.c.l.b16 %v3963
    %v4464 = vunpack.c.l.b16 %v3964
    %v4465 = vunpack.c.l.b16 %v3965
    %v4466 = vunpack.c.l.b16 %v3966
    %v4467 = vunpack.c.l.b16 %v3967
    %v4468 = vunpack.c.l.b16 %v3968
    %v4469 = vunpack.c.l.b16 %v3969
    %v4470 = vunpack.c.l.b16 %v3970
    %v4471 = vunpack.c.l.b16 %v3971
    %v4472 = vunpack.c.l.b16 %v3972
    %v4473 = vunpack.c.l.b16 %v3973
    %v4474 = vunpack.c.l.b16 %v3974
    %v4475 = vunpack.c.l.b16 %v3975
    %v4476 = vunpack.c.l.b16 %v3976
    %v4477 = vunpack.c.l.b16 %v3977
    %v4478 = vunpack.c.l.b16 %v3978
    %v4479 = vunpack.c.l.b16 %v3979
    %v4480 = vunpack.c.l.b16 %v3980
    %v4481 = vunpack.c.l.b16 %v3981
    %v4482 = vunpack.c.l.b16 %v3982
    %v4483 = vunpack.c.l.b16 %v3983
    %v4484 = vunpack.c.l.b16 %v3984
    %v4485 = vunpack.c.l.b16 %v3985
    %v4486 = vunpack.c.l.b16 %v3986
    %v4487 = vunpack.c.l.b16 %v3987
    %v4488 = vunpack.c.l.b16 %v3988
    %v4489 = vunpack.c.l.b16 %v3989
    %v4490 = vunpack.c.l.b16 %v3990
    %v4491 = vunpack.c.l.b16 %v3991
    %v4492 = vunpack.c.l.b16 %v3992
    %v4493 = vunpack.c.l.b16 %v3993
    %v4494 = vunpack.c.l.b16 %v3994
    %v4495 = vunpack.c.l.b16 %v3995
    %v4496 = vunpack.c.l.b16 %v3996
    %v4497 = vunpack.c.l.b16 %v3997
    %v4498 = vunpack.c.l.b16 %v3998
    %v4499 = vunpack.c.l.b16 %v3999
    %v4500 = vunpack.c.l.b16 %v4000
    %v4501 = vunpack.c.l.b16 %v4001
    %v4502 = vunpack.c.l.b16 %v4002
    %v4503 = vunpack.c.l.b16 %v4003
    %v4504 = vunpack.c.l.b16 %v4004
    %v4505 = vunpack.c.l.b16 %v4005
    %v4506 = vunpack.c.l.b16 %v4006
    %v4507 = vunpack.c.l.b16 %v4007
    %v4508 = vunpack.c.l.b16 %v4008
    %v4509 = vunpack.c.l.b16 %v4009
    %v4510 = vunpack.c.l.b16 %v4010
    %v4511 = vunpack.c.l.b16 %v4011
    %v4512 = vunpack.c.l.b16 %v4012
    %v4513 = vunpack.c.l.b16 %v4013
    %v4514 = vunpack.c.l.b16 %v4014
    %v4515 = vunpack.c.l.b16 %v4015
    %v4516 = vunpack.c.l.b16 %v4016
    %v4517 = vunpack.c.l.b16 %v4017
    %v4518 = vpack.c.b16 %v4439, %v4438
    %v4519 = vpack.c.b16 %v4441, %v4440
    %v4520 = vpack.c.b16 %v4443, %v4442
    %v4521 = vpack.c.b16 %v4445, %v4444
    %v4522 = vpack.c.b16 %v4447, %v4446
    %v4523 = vpack.c.b16 %v4449, %v4448
    %v4524 = vpack.c.b16 %v4451, %v4450
    %v4525 = vpack.c.b16 %v4453, %v4452
    %v4526 = vpack.c.b16 %v4455, %v4454
    %v4527 = vpack.c.b16 %v4457, %v4456
    %v4528 = vpack.c.b16 %v4459, %v4458
    %v4529 = vpack.c.b16 %v4461, %v4460
    %v4530 = vpack.c.b16 %v4463, %v4462
    %v4531 = vpack.c.b16 %v4465, %v4464
    %v4532 = vpack.c.b16 %v4467, %v4466
    %v4533 = vpack.c.b16 %v4469, %v4468
    %v4534 = vpack.c.b16 %v4471, %v4470
    %v4535 = vpack.c.b16 %v4473, %v4472
    %v4536 = vpack.c.b16 %v4475, %v4474
    %v4537 = vpack.c.b16 %v4477, %v4476
    %v4538 = vpack.c.b16 %v4479, %v4478
    %v4539 = vpack.c.b16 %v4481, %v4480
    %v4540 = vpack.c.b16 %v4483, %v4482
    %v4541 = vpack.c.b16 %v4485, %v4484
    %v4542 = vpack.c.b16 %v4487, %v4486
    %v4543 = vpack.c.b16 %v4489, %v4488
    %v4544 = vpack.c.b16 %v4491, %v4490
    %v4545 = vpack.c.b16 %v4493, %v4492
    %v4546 = vpack.c.b16 %v4495, %v4494
    %v4547 = vpack.c.b16 %v4497, %v4496
    %v4548 = vpack.c.b16 %v4499, %v4498
    %v4549 = vpack.c.b16 %v4501, %v4500
    %v4550 = vpack.c.b16 %v4503, %v4502
    %v4551 = vpack.c.b16 %v4505, %v4504
    %v4552 = vpack.c.b16 %v4507, %v4506
    %v4553 = vpack.c.b16 %v4509, %v4508
    %v4554 = vpack.c.b16 %v4511, %v4510
    %v4555 = vpack.c.b16 %v4513, %v4512
    %v4556 = vpack.c.b16 %v4515, %v4514
    %v4557 = vpack.c.b16 %v4517, %v4516
    %4598 = vmatprep.subr.bf16.mxu0 0
    %4599 = vmatpush1.bf16.msra.mxu0 %v4525
    %4600 = vmatprep.subr.bf16.mxu0 0
    %4601 = vmatpush1.bf16.msra.mxu0 %v4524
    %4602 = vmatprep.subr.bf16.mxu0 0
    %4603 = vmatpush1.bf16.msra.mxu0 %v4523
    %4604 = vmatprep.subr.bf16.mxu0 0
    %4605 = vmatpush1.bf16.msra.mxu0 %v4522
    %4606 = vmatprep.subr.bf16.mxu0 0
    %4607 = vmatpush1.bf16.msra.mxu0 %v4521
    %4608 = vmatprep.subr.bf16.mxu0 0
    %4609 = vmatpush1.bf16.msra.mxu0 %v4520
    %4610 = vmatprep.subr.bf16.mxu0 0
    %4611 = vmatpush1.bf16.msra.mxu0 %v4519
    %4612 = vmatprep.subr.bf16.mxu0 0
    %4613 = vmatpush1.bf16.msra.mxu0 %v4518
    %4614 = vmatprep.subr.bf16.mxu0 0
    %4615 = vmatpush2.bf16.msra.mxu0 %v4533
    %4616 = vmatprep.subr.bf16.mxu0 0
    %4617 = vmatpush2.bf16.msra.mxu0 %v4532
    %4618 = vmatprep.subr.bf16.mxu0 0
    %4619 = vmatpush2.bf16.msra.mxu0 %v4531
    %4620 = vmatprep.subr.bf16.mxu0 0
    %4621 = vmatpush2.bf16.msra.mxu0 %v4530
    %4622 = vmatprep.subr.bf16.mxu0 0
    %4623 = vmatpush2.bf16.msra.mxu0 %v4529
    %4624 = vmatprep.subr.bf16.mxu0 0
    %4625 = vmatpush2.bf16.msra.mxu0 %v4528
    %4626 = vmatprep.subr.bf16.mxu0 0
    %4627 = vmatpush2.bf16.msra.mxu0 %v4527
    %4628 = vmatprep.subr.bf16.mxu0 0
    %4629 = vmatpush2.bf16.msra.mxu0 %v4526
    %4630 = vmatprep.mubr.bf16.mxu0 %v3934
    %4631 = vmatmul.mubr.bf16.gmra.mxu0 %v2842
    %v4632 = vpop.f32.mrf.mxu0
    %v4633 = vadd.f32 %v4356, %v4632
    %v4634 = vpop.f32.mrf.mxu0
    %v4635 = vpop.f32.mrf.mxu0
    %v4636 = vadd.f32 %v4357, %v4635
    %v4637 = vpop.f32.mrf.mxu0
    %4638 = vdwg.mxu0
    %4639 = vmatprep.subr.bf16.mxu0 0
    %4640 = vmatpush1.bf16.msra.mxu0 %v4541
    %4641 = vmatprep.subr.bf16.mxu0 0
    %4642 = vmatpush1.bf16.msra.mxu0 %v4540
    %4643 = vmatprep.subr.bf16.mxu0 0
    %4644 = vmatpush1.bf16.msra.mxu0 %v4539
    %4645 = vmatprep.subr.bf16.mxu0 0
    %4646 = vmatpush1.bf16.msra.mxu0 %v4538
    %4647 = vmatprep.subr.bf16.mxu0 0
    %4648 = vmatpush1.bf16.msra.mxu0 %v4537
    %4649 = vmatprep.subr.bf16.mxu0 0
    %4650 = vmatpush1.bf16.msra.mxu0 %v4536
    %4651 = vmatprep.subr.bf16.mxu0 0
    %4652 = vmatpush1.bf16.msra.mxu0 %v4535
    %4653 = vmatprep.subr.bf16.mxu0 0
    %4654 = vmatpush1.bf16.msra.mxu0 %v4534
    %4655 = vmatprep.subr.bf16.mxu0 0
    %4656 = vmatpush2.bf16.msra.mxu0 %v4549
    %4657 = vmatprep.subr.bf16.mxu0 0
    %4658 = vmatpush2.bf16.msra.mxu0 %v4548
    %4659 = vmatprep.subr.bf16.mxu0 0
    %4660 = vmatpush2.bf16.msra.mxu0 %v4547
    %4661 = vmatprep.subr.bf16.mxu0 0
    %4662 = vmatpush2.bf16.msra.mxu0 %v4546
    %4663 = vmatprep.subr.bf16.mxu0 0
    %4664 = vmatpush2.bf16.msra.mxu0 %v4545
    %4665 = vmatprep.subr.bf16.mxu0 0
    %4666 = vmatpush2.bf16.msra.mxu0 %v4544
    %4667 = vmatprep.subr.bf16.mxu0 0
    %4668 = vmatpush2.bf16.msra.mxu0 %v4543
    %4669 = vmatprep.subr.bf16.mxu0 0
    %4670 = vmatpush2.bf16.msra.mxu0 %v4542
    %4671 = vmatprep.mubr.bf16.mxu0 %v3936
    %4672 = vmatmul.mubr.bf16.gmra.mxu0 %v3935
    %v4673 = vpop.f32.mrf.mxu0
    %v4674 = vadd.f32 %v4633, %v4673
    %v4675 = vpop.f32.mrf.mxu0
    %v4676 = vpop.f32.mrf.mxu0
    %v4677 = vadd.f32 %v4636, %v4676
    %v4678 = vpop.f32.mrf.mxu0
    %4679 = vdwg.mxu0
    %4680 = vmatprep.subr.bf16.mxu0 0
    %4681 = vmatpush1.bf16.msra.mxu0 %v4557
    %4682 = vmatprep.subr.bf16.mxu0 0
    %4683 = vmatpush1.bf16.msra.mxu0 %v4556
    %4684 = vmatprep.subr.bf16.mxu0 0
    %4685 = vmatpush1.bf16.msra.mxu0 %v4555
    %4686 = vmatprep.subr.bf16.mxu0 0
    %4687 = vmatpush1.bf16.msra.mxu0 %v4554
    %4688 = vmatprep.subr.bf16.mxu0 0
    %4689 = vmatpush1.bf16.msra.mxu0 %v4553
    %4690 = vmatprep.subr.bf16.mxu0 0
    %4691 = vmatpush1.bf16.msra.mxu0 %v4552
    %4692 = vmatprep.subr.bf16.mxu0 0
    %4693 = vmatpush1.bf16.msra.mxu0 %v4551
    %4694 = vmatprep.subr.bf16.mxu0 0
    %4695 = vmatpush1.bf16.msra.mxu0 %v4550
    %4696 = vmatprep.subr.bf16.mxu0 0
    %4697 = vmatpush2.bf16.msra.mxu0 0
    %4698 = vmatprep.subr.bf16.mxu0 0
    %4699 = vmatpush2.bf16.msra.mxu0 0
    %4700 = vmatprep.subr.bf16.mxu0 0
    %4701 = vmatpush2.bf16.msra.mxu0 0
    %4702 = vmatprep.subr.bf16.mxu0 0
    %4703 = vmatpush2.bf16.msra.mxu0 0
    %4704 = vmatprep.subr.bf16.mxu0 0
    %4705 = vmatpush2.bf16.msra.mxu0 0
    %4706 = vmatprep.subr.bf16.mxu0 0
    %4707 = vmatpush2.bf16.msra.mxu0 0
    %4708 = vmatprep.subr.bf16.mxu0 0
    %4709 = vmatpush2.bf16.msra.mxu0 0
    %4710 = vmatprep.subr.bf16.mxu0 0
    %4711 = vmatpush2.bf16.msra.mxu0 0
    %4712 = vmatprep.mubr.bf16.mxu0 0
    %4713 = vmatmul.mubr.bf16.gmra.mxu0 %v3937
    %v4714 = vpop.f32.mrf.mxu0
    %v4715 = vadd.f32 %v4674, %v4714
    %v4716 = vpop.f32.mrf.mxu0
    %v4717 = vpop.f32.mrf.mxu0
    %v4718 = vadd.f32 %v4677, %v4717
    %v4719 = vpop.f32.mrf.mxu0
    %4720 = vdwg.mxu0
    %v4721 = vld [vmem:[#allocation21] sm:$0xf]
    %v4722 = vld [vmem:[#allocation21 + $0x4] sm:$0xf]
    %v4723 = vld [vmem:[#allocation21 + $0x8] sm:$0xf]
    %v4724 = vld [vmem:[#allocation21 + $0xc] sm:$0xf]
    %v4725 = vld [vmem:[#allocation21 + $0x10] sm:$0xf]
    %v4726 = vld [vmem:[#allocation21 + $0x14] sm:$0xf]
    %v4727 = vld [vmem:[#allocation21 + $0x18] sm:$0xf]
    %v4728 = vld [vmem:[#allocation21 + $0x1c] sm:$0xf]
    %v4729 = vld [vmem:[#allocation21 + $0x20] sm:$0xf]
    %v4730 = vld [vmem:[#allocation21 + $0x24] sm:$0xf]
    %v4731 = vld [vmem:[#allocation21 + $0x28] sm:$0xf]
    %v4732 = vld [vmem:[#allocation21 + $0x2c] sm:$0xf]
    %v4733 = vld [vmem:[#allocation21 + $0x30] sm:$0xf]
    %v4734 = vld [vmem:[#allocation21 + $0x34] sm:$0xf]
    %v4735 = vld [vmem:[#allocation21 + $0x38] sm:$0xf]
    %v4736 = vld [vmem:[#allocation21 + $0x3c] sm:$0xf]
    %v4737 = vld [vmem:[#allocation21 + $0x40] sm:$0xf]
    %v4738 = vld [vmem:[#allocation21 + $0x44] sm:$0xf]
    %v4739 = vld [vmem:[#allocation21 + $0x48] sm:$0xf]
    %v4740 = vld [vmem:[#allocation21 + $0x4c] sm:$0xf]
    %v4741 = vld [vmem:[#allocation21 + $0x50] sm:$0xf]
    %v4742 = vld [vmem:[#allocation21 + $0x54] sm:$0xf]
    %v4743 = vld [vmem:[#allocation21 + $0x58] sm:$0xf]
    %v4744 = vld [vmem:[#allocation21 + $0x5c] sm:$0xf]
    %v4745 = vld [vmem:[#allocation21 + $0x60] sm:$0xf]
    %v4746 = vld [vmem:[#allocation21 + $0x64] sm:$0xf]
    %v4747 = vld [vmem:[#allocation21 + $0x68] sm:$0xf]
    %v4748 = vld [vmem:[#allocation21 + $0x6c] sm:$0xf]
    %v4749 = vld [vmem:[#allocation21 + $0x70] sm:$0xf]
    %v4750 = vld [vmem:[#allocation21 + $0x74] sm:$0xf]
    %v4751 = vld [vmem:[#allocation21 + $0x78] sm:$0xf]
    %v4752 = vld [vmem:[#allocation21 + $0x7c] sm:$0xf]
    %v4753 = vld [vmem:[#allocation21 + $0x80] sm:$0xf]
    %v4754 = vld [vmem:[#allocation21 + $0x84] sm:$0xf]
    %v4755 = vld [vmem:[#allocation21 + $0x88] sm:$0xf]
    %v4756 = vld [vmem:[#allocation21 + $0x8c] sm:$0xf]
    %v4757 = vld [vmem:[#allocation21 + $0x90] sm:$0xf]
    %v4758 = vld [vmem:[#allocation21 + $0x94] sm:$0xf]
    %v4759 = vld [vmem:[#allocation21 + $0x98] sm:$0xf]
    %v4760 = vld [vmem:[#allocation21 + $0x9c] sm:$0xf]
    %v4761 = vld [vmem:[#allocation21 + $0xa0] sm:$0xf]
    %v4762 = vld [vmem:[#allocation21 + $0xa4] sm:$0xf]
    %v4763 = vld [vmem:[#allocation21 + $0xa8] sm:$0xf]
    %v4764 = vld [vmem:[#allocation21 + $0xac] sm:$0xf]
    %v4765 = vld [vmem:[#allocation21 + $0xb0] sm:$0xf]
    %v4766 = vld [vmem:[#allocation21 + $0xb4] sm:$0xf]
    %v4767 = vld [vmem:[#allocation21 + $0xb8] sm:$0xf]
    %v4768 = vld [vmem:[#allocation21 + $0xbc] sm:$0xf]
    %v4769 = vld [vmem:[#allocation21 + $0xc0] sm:$0xf]
    %v4770 = vld [vmem:[#allocation21 + $0xc4] sm:$0xf]
    %v4771 = vld [vmem:[#allocation21 + $0xc8] sm:$0xf]
    %v4772 = vld [vmem:[#allocation21 + $0xcc] sm:$0xf]
    %v4773 = vld [vmem:[#allocation21 + $0xd0] sm:$0xf]
    %v4774 = vld [vmem:[#allocation21 + $0xd4] sm:$0xf]
    %v4775 = vld [vmem:[#allocation21 + $0xd8] sm:$0xf]
    %v4776 = vld [vmem:[#allocation21 + $0xdc] sm:$0xf]
    %v4777 = vld [vmem:[#allocation21 + $0xe0] sm:$0xf]
    %v4778 = vld [vmem:[#allocation21 + $0xe4] sm:$0xf]
    %v4779 = vld [vmem:[#allocation21 + $0xe8] sm:$0xf]
    %v4780 = vld [vmem:[#allocation21 + $0xec] sm:$0xf]
    %v4781 = vld [vmem:[#allocation21 + $0xf0] sm:$0xf]
    %v4782 = vld [vmem:[#allocation21 + $0xf4] sm:$0xf]
    %v4783 = vld [vmem:[#allocation21 + $0xf8] sm:$0xf]
    %v4784 = vld [vmem:[#allocation21 + $0xfc] sm:$0xf]
    %v4849 = vunpack.c.l.b16 %v4721
    %v4850 = vunpack.c.l.b16 %v4722
    %v4851 = vunpack.c.l.b16 %v4723
    %v4852 = vunpack.c.l.b16 %v4724
    %v4853 = vunpack.c.l.b16 %v4725
    %v4854 = vunpack.c.l.b16 %v4726
    %v4855 = vunpack.c.l.b16 %v4727
    %v4856 = vunpack.c.l.b16 %v4728
    %v4857 = vunpack.c.l.b16 %v4729
    %v4858 = vunpack.c.l.b16 %v4730
    %v4859 = vunpack.c.l.b16 %v4731
    %v4860 = vunpack.c.l.b16 %v4732
    %v4861 = vunpack.c.l.b16 %v4733
    %v4862 = vunpack.c.l.b16 %v4734
    %v4863 = vunpack.c.l.b16 %v4735
    %v4864 = vunpack.c.l.b16 %v4736
    %v4865 = vunpack.c.l.b16 %v4737
    %v4866 = vunpack.c.l.b16 %v4738
    %v4867 = vunpack.c.l.b16 %v4739
    %v4868 = vunpack.c.l.b16 %v4740
    %v4869 = vunpack.c.l.b16 %v4741
    %v4870 = vunpack.c.l.b16 %v4742
    %v4871 = vunpack.c.l.b16 %v4743
    %v4872 = vunpack.c.l.b16 %v4744
    %v4873 = vunpack.c.l.b16 %v4745
    %v4874 = vunpack.c.l.b16 %v4746
    %v4875 = vunpack.c.l.b16 %v4747
    %v4876 = vunpack.c.l.b16 %v4748
    %v4877 = vunpack.c.l.b16 %v4749
    %v4878 = vunpack.c.l.b16 %v4750
    %v4879 = vunpack.c.l.b16 %v4751
    %v4880 = vunpack.c.l.b16 %v4752
    %v4881 = vunpack.c.l.b16 %v4753
    %v4882 = vunpack.c.l.b16 %v4754
    %v4883 = vunpack.c.l.b16 %v4755
    %v4884 = vunpack.c.l.b16 %v4756
    %v4885 = vunpack.c.l.b16 %v4757
    %v4886 = vunpack.c.l.b16 %v4758
    %v4887 = vunpack.c.l.b16 %v4759
    %v4888 = vunpack.c.l.b16 %v4760
    %v4889 = vunpack.c.l.b16 %v4761
    %v4890 = vunpack.c.l.b16 %v4762
    %v4891 = vunpack.c.l.b16 %v4763
    %v4892 = vunpack.c.l.b16 %v4764
    %v4893 = vunpack.c.l.b16 %v4765
    %v4894 = vunpack.c.l.b16 %v4766
    %v4895 = vunpack.c.l.b16 %v4767
    %v4896 = vunpack.c.l.b16 %v4768
    %v4897 = vunpack.c.l.b16 %v4769
    %v4898 = vunpack.c.l.b16 %v4770
    %v4899 = vunpack.c.l.b16 %v4771
    %v4900 = vunpack.c.l.b16 %v4772
    %v4901 = vunpack.c.l.b16 %v4773
    %v4902 = vunpack.c.l.b16 %v4774
    %v4903 = vunpack.c.l.b16 %v4775
    %v4904 = vunpack.c.l.b16 %v4776
    %v4905 = vunpack.c.l.b16 %v4777
    %v4906 = vunpack.c.l.b16 %v4778
    %v4907 = vunpack.c.l.b16 %v4779
    %v4908 = vunpack.c.l.b16 %v4780
    %v4909 = vunpack.c.l.b16 %v4781
    %v4910 = vunpack.c.l.b16 %v4782
    %v4911 = vunpack.c.l.b16 %v4783
    %v4912 = vunpack.c.l.b16 %v4784
    %v4913 = vpack.c.b16 %v4850, %v4849
    %v4914 = vpack.c.b16 %v4852, %v4851
    %v4915 = vpack.c.b16 %v4854, %v4853
    %v4916 = vpack.c.b16 %v4856, %v4855
    %v4917 = vpack.c.b16 %v4858, %v4857
    %v4918 = vpack.c.b16 %v4860, %v4859
    %v4919 = vpack.c.b16 %v4862, %v4861
    %v4920 = vpack.c.b16 %v4864, %v4863
    %v4921 = vpack.c.b16 %v4866, %v4865
    %v4922 = vpack.c.b16 %v4868, %v4867
    %v4923 = vpack.c.b16 %v4870, %v4869
    %v4924 = vpack.c.b16 %v4872, %v4871
    %v4925 = vpack.c.b16 %v4874, %v4873
    %v4926 = vpack.c.b16 %v4876, %v4875
    %v4927 = vpack.c.b16 %v4878, %v4877
    %v4928 = vpack.c.b16 %v4880, %v4879
    %v4929 = vpack.c.b16 %v4882, %v4881
    %v4930 = vpack.c.b16 %v4884, %v4883
    %v4931 = vpack.c.b16 %v4886, %v4885
    %v4932 = vpack.c.b16 %v4888, %v4887
    %v4933 = vpack.c.b16 %v4890, %v4889
    %v4934 = vpack.c.b16 %v4892, %v4891
    %v4935 = vpack.c.b16 %v4894, %v4893
    %v4936 = vpack.c.b16 %v4896, %v4895
    %v4937 = vpack.c.b16 %v4898, %v4897
    %v4938 = vpack.c.b16 %v4900, %v4899
    %v4939 = vpack.c.b16 %v4902, %v4901
    %v4940 = vpack.c.b16 %v4904, %v4903
    %v4941 = vpack.c.b16 %v4906, %v4905
    %v4942 = vpack.c.b16 %v4908, %v4907
    %v4943 = vpack.c.b16 %v4910, %v4909
    %v4944 = vpack.c.b16 %v4912, %v4911
    %4977 = vmatprep.subr.bf16.mxu0 0
    %4978 = vmatpush1.bf16.msra.mxu0 %v4920
    %4979 = vmatprep.subr.bf16.mxu0 0
    %4980 = vmatpush1.bf16.msra.mxu0 %v4919
    %4981 = vmatprep.subr.bf16.mxu0 0
    %4982 = vmatpush1.bf16.msra.mxu0 %v4918
    %4983 = vmatprep.subr.bf16.mxu0 0
    %4984 = vmatpush1.bf16.msra.mxu0 %v4917
    %4985 = vmatprep.subr.bf16.mxu0 0
    %4986 = vmatpush1.bf16.msra.mxu0 %v4916
    %4987 = vmatprep.subr.bf16.mxu0 0
    %4988 = vmatpush1.bf16.msra.mxu0 %v4915
    %4989 = vmatprep.subr.bf16.mxu0 0
    %4990 = vmatpush1.bf16.msra.mxu0 %v4914
    %4991 = vmatprep.subr.bf16.mxu0 0
    %4992 = vmatpush1.bf16.msra.mxu0 %v4913
    %4993 = vmatprep.subr.bf16.mxu0 0
    %4994 = vmatpush2.bf16.msra.mxu0 %v4928
    %4995 = vmatprep.subr.bf16.mxu0 0
    %4996 = vmatpush2.bf16.msra.mxu0 %v4927
    %4997 = vmatprep.subr.bf16.mxu0 0
    %4998 = vmatpush2.bf16.msra.mxu0 %v4926
    %4999 = vmatprep.subr.bf16.mxu0 0
    %5000 = vmatpush2.bf16.msra.mxu0 %v4925
    %5001 = vmatprep.subr.bf16.mxu0 0
    %5002 = vmatpush2.bf16.msra.mxu0 %v4924
    %5003 = vmatprep.subr.bf16.mxu0 0
    %5004 = vmatpush2.bf16.msra.mxu0 %v4923
    %5005 = vmatprep.subr.bf16.mxu0 0
    %5006 = vmatpush2.bf16.msra.mxu0 %v4922
    %5007 = vmatprep.subr.bf16.mxu0 0
    %5008 = vmatpush2.bf16.msra.mxu0 %v4921
    %5009 = vmatprep.mubr.bf16.mxu0 %v3935
    %5010 = vmatmul.mubr.bf16.gmra.mxu0 %v3934
    %v5011 = vpop.f32.mrf.mxu0
    %v5012 = vadd.f32 0.0, %v5011
    %v5013 = vpop.f32.mrf.mxu0
    %v5014 = vpop.f32.mrf.mxu0
    %v5015 = vadd.f32 0.0, %v5014
    %v5016 = vpop.f32.mrf.mxu0
    %5017 = vdwg.mxu0
    %5018 = vmatprep.subr.bf16.mxu0 0
    %5019 = vmatpush1.bf16.msra.mxu0 %v4936
    %5020 = vmatprep.subr.bf16.mxu0 0
    %5021 = vmatpush1.bf16.msra.mxu0 %v4935
    %5022 = vmatprep.subr.bf16.mxu0 0
    %5023 = vmatpush1.bf16.msra.mxu0 %v4934
    %5024 = vmatprep.subr.bf16.mxu0 0
    %5025 = vmatpush1.bf16.msra.mxu0 %v4933
    %5026 = vmatprep.subr.bf16.mxu0 0
    %5027 = vmatpush1.bf16.msra.mxu0 %v4932
    %5028 = vmatprep.subr.bf16.mxu0 0
    %5029 = vmatpush1.bf16.msra.mxu0 %v4931
    %5030 = vmatprep.subr.bf16.mxu0 0
    %5031 = vmatpush1.bf16.msra.mxu0 %v4930
    %5032 = vmatprep.subr.bf16.mxu0 0
    %5033 = vmatpush1.bf16.msra.mxu0 %v4929
    %5034 = vmatprep.subr.bf16.mxu0 0
    %5035 = vmatpush2.bf16.msra.mxu0 %v4944
    %5036 = vmatprep.subr.bf16.mxu0 0
    %5037 = vmatpush2.bf16.msra.mxu0 %v4943
    %5038 = vmatprep.subr.bf16.mxu0 0
    %5039 = vmatpush2.bf16.msra.mxu0 %v4942
    %5040 = vmatprep.subr.bf16.mxu0 0
    %5041 = vmatpush2.bf16.msra.mxu0 %v4941
    %5042 = vmatprep.subr.bf16.mxu0 0
    %5043 = vmatpush2.bf16.msra.mxu0 %v4940
    %5044 = vmatprep.subr.bf16.mxu0 0
    %5045 = vmatpush2.bf16.msra.mxu0 %v4939
    %5046 = vmatprep.subr.bf16.mxu0 0
    %5047 = vmatpush2.bf16.msra.mxu0 %v4938
    %5048 = vmatprep.subr.bf16.mxu0 0
    %5049 = vmatpush2.bf16.msra.mxu0 %v4937
    %5050 = vmatprep.mubr.bf16.mxu0 %v3937
    %5051 = vmatmul.mubr.bf16.gmra.mxu0 %v3936
    %v5052 = vpop.f32.mrf.mxu0
    %v5053 = vadd.f32 %v5012, %v5052
    %v5054 = vpop.f32.mrf.mxu0
    %v5055 = vpop.f32.mrf.mxu0
    %v5056 = vadd.f32 %v5015, %v5055
    %v5057 = vpop.f32.mrf.mxu0
    %5058 = vdwg.mxu0
    %v5059 = vmul.f32 %v2822, %v5053
    %v5060 = vmul.f32 %v2827, %v5056
    %v5061 = vadd.f32 %v4715, %v5059
    %v5062 = vadd.f32 %v4718, %v5060
    %v5063 = vld [vmem:[#allocation22] sm:$0x1]
    %v5065 = vlaneseq
    %v5066 = vshrl.u32 %v5065, 7
    %v5067 = vsub.s32 0, %v5066
    %v5068 = vrot.slane %v5063, %v5067
    %v5070 = vadd.f32 %v5061, %v5068
    %v5071 = vadd.f32 %v5062, %v5068
    %v5072 = vpack.c.bf16 %v5071, %v5070
    %5073 = vmatprep.subr.bf16.mxu0 0
    %5074 = vmatpush1.bf16.msra.mxu0 0
    %5075 = vmatprep.subr.bf16.mxu0 0
    %5076 = vmatpush1.bf16.msra.mxu0 0
    %5077 = vmatprep.subr.bf16.mxu0 0
    %5078 = vmatpush1.bf16.msra.mxu0 0
    %5079 = vmatprep.subr.bf16.mxu0 0
    %5080 = vmatpush1.bf16.msra.mxu0 0
    %5081 = vmatprep.subr.bf16.mxu0 0
    %5082 = vmatpush1.bf16.msra.mxu0 0
    %5083 = vmatprep.subr.bf16.mxu0 0
    %5084 = vmatpush1.bf16.msra.mxu0 0
    %5085 = vmatprep.subr.bf16.mxu0 0
    %5086 = vmatpush1.bf16.msra.mxu0 0
    %5087 = vmatprep.subr.bf16.mxu0 0
    %5088 = vmatpush1.bf16.msra.mxu0 %v5072
    %5089 = vmatprep.subr.bf16.mxu0 0
    %5090 = vmatpush2.bf16.msra.mxu0 0
    %5091 = vmatprep.subr.bf16.mxu0 0
    %5092 = vmatpush2.bf16.msra.mxu0 0
    %5093 = vmatprep.subr.bf16.mxu0 0
    %5094 = vmatpush2.bf16.msra.mxu0 0
    %5095 = vmatprep.subr.bf16.mxu0 0
    %5096 = vmatpush2.bf16.msra.mxu0 0
    %5097 = vmatprep.subr.bf16.mxu0 0
    %5098 = vmatpush2.bf16.msra.mxu0 0
    %5099 = vmatprep.subr.bf16.mxu0 0
    %5100 = vmatpush2.bf16.msra.mxu0 0
    %5101 = vmatprep.subr.bf16.mxu0 0
    %5102 = vmatpush2.bf16.msra.mxu0 0
    %5103 = vmatprep.subr.bf16.mxu0 0
    %5104 = vmatpush2.bf16.msra.mxu0 0
    %5105 = vmatprep.mubr.bf16.mxu0 0
    %5106 = vmatmul.mubr.bf16.gmra.mxu0 %v532
    %v5107 = vpop.f32.mrf.mxu0
    %v5108 = vadd.f32 0.0, %v5107
    %v5109 = vpop.f32.mrf.mxu0
    %v5110 = vpop.f32.mrf.mxu0
    %v5111 = vadd.f32 0.0, %v5110
    %v5112 = vpop.f32.mrf.mxu0
    %5113 = vmatprep.mubr.bf16.mxu0 0
    %5114 = vmatmul.mubr.bf16.gmra.mxu0 %v535
    %v5115 = vpop.f32.mrf.mxu0
    %v5116 = vadd.f32 0.0, %v5115
    %v5117 = vpop.f32.mrf.mxu0
    %v5118 = vpop.f32.mrf.mxu0
    %v5119 = vadd.f32 0.0, %v5118
    %v5120 = vpop.f32.mrf.mxu0
    %5121 = vmatprep.mubr.bf16.mxu0 0
    %5122 = vmatmul.mubr.bf16.gmra.mxu0 %v538
    %v5123 = vpop.f32.mrf.mxu0
    %v5124 = vadd.f32 0.0, %v5123
    %v5125 = vpop.f32.mrf.mxu0
    %v5126 = vpop.f32.mrf.mxu0
    %v5127 = vadd.f32 0.0, %v5126
    %v5128 = vpop.f32.mrf.mxu0
    %5129 = vdwg.mxu0
    %5130 = vmatprep.subr.bf16.mxu0 0
    %5131 = vmatpush1.bf16.msra.mxu0 0
    %5132 = vmatprep.subr.bf16.mxu0 0
    %5133 = vmatpush1.bf16.msra.mxu0 0
    %5134 = vmatprep.subr.bf16.mxu0 0
    %5135 = vmatpush1.bf16.msra.mxu0 0
    %5136 = vmatprep.subr.bf16.mxu0 0
    %5137 = vmatpush1.bf16.msra.mxu0 0
    %5138 = vmatprep.subr.bf16.mxu0 0
    %5139 = vmatpush1.bf16.msra.mxu0 0
    %5140 = vmatprep.subr.bf16.mxu0 0
    %5141 = vmatpush1.bf16.msra.mxu0 0
    %5142 = vmatprep.subr.bf16.mxu0 0
    %5143 = vmatpush1.bf16.msra.mxu0 0
    %5144 = vmatprep.subr.bf16.mxu0 0
    %5145 = vmatpush1.bf16.msra.mxu0 %v5072
    %5146 = vmatprep.subr.bf16.mxu0 0
    %5147 = vmatpush2.bf16.msra.mxu0 0
    %5148 = vmatprep.subr.bf16.mxu0 0
    %5149 = vmatpush2.bf16.msra.mxu0 0
    %5150 = vmatprep.subr.bf16.mxu0 0
    %5151 = vmatpush2.bf16.msra.mxu0 0
    %5152 = vmatprep.subr.bf16.mxu0 0
    %5153 = vmatpush2.bf16.msra.mxu0 0
    %5154 = vmatprep.subr.bf16.mxu0 0
    %5155 = vmatpush2.bf16.msra.mxu0 0
    %5156 = vmatprep.subr.bf16.mxu0 0
    %5157 = vmatpush2.bf16.msra.mxu0 0
    %5158 = vmatprep.subr.bf16.mxu0 0
    %5159 = vmatpush2.bf16.msra.mxu0 0
    %5160 = vmatprep.subr.bf16.mxu0 0
    %5161 = vmatpush2.bf16.msra.mxu0 0
    %5162 = vmatprep.mubr.bf16.mxu0 0
    %5163 = vmatmul.mubr.bf16.gmra.mxu0 %v598
    %v5164 = vpop.f32.mrf.mxu0
    %v5165 = vadd.f32 0.0, %v5164
    %v5166 = vpop.f32.mrf.mxu0
    %v5167 = vpop.f32.mrf.mxu0
    %v5168 = vadd.f32 0.0, %v5167
    %v5169 = vpop.f32.mrf.mxu0
    %5170 = vmatprep.mubr.bf16.mxu0 0
    %5171 = vmatmul.mubr.bf16.gmra.mxu0 %v601
    %v5172 = vpop.f32.mrf.mxu0
    %v5173 = vadd.f32 0.0, %v5172
    %v5174 = vpop.f32.mrf.mxu0
    %v5175 = vpop.f32.mrf.mxu0
    %v5176 = vadd.f32 0.0, %v5175
    %v5177 = vpop.f32.mrf.mxu0
    %5178 = vmatprep.mubr.bf16.mxu0 0
    %5179 = vmatmul.mubr.bf16.gmra.mxu0 %v604
    %v5180 = vpop.f32.mrf.mxu0
    %v5181 = vadd.f32 0.0, %v5180
    %v5182 = vpop.f32.mrf.mxu0
    %v5183 = vpop.f32.mrf.mxu0
    %v5184 = vadd.f32 0.0, %v5183
    %v5185 = vpop.f32.mrf.mxu0
    %5186 = vdwg.mxu0
    %v5187 = vpack.c.bf16 %v5111, %v5108
    %v5188 = vpack.c.bf16 %v5168, %v5165
    %v5189 = vpack.c.bf16 %v5119, %v5116
    %v5190 = vpack.c.bf16 %v5176, %v5173
    %v5191 = vpack.c.bf16 %v5127, %v5124
    %v5192 = vpack.c.bf16 %v5184, %v5181
    %v5193 = vld [vmem:[#allocation24] sm:$0xf]
    %v5194 = vld [vmem:[#allocation24 + $0x4] sm:$0xf]
    %v5195 = vld [vmem:[#allocation24 + $0x8] sm:$0xf]
    %v5196 = vld [vmem:[#allocation24 + $0xc] sm:$0xf]
    %v5197 = vld [vmem:[#allocation24 + $0x10] sm:$0xf]
    %v5198 = vld [vmem:[#allocation24 + $0x14] sm:$0xf]
    %v5199 = vld [vmem:[#allocation24 + $0x18] sm:$0xf]
    %v5200 = vld [vmem:[#allocation24 + $0x1c] sm:$0xf]
    %v5201 = vld [vmem:[#allocation24 + $0x20] sm:$0xf]
    %v5202 = vld [vmem:[#allocation24 + $0x24] sm:$0xf]
    %v5203 = vld [vmem:[#allocation24 + $0x28] sm:$0xf]
    %v5204 = vld [vmem:[#allocation24 + $0x2c] sm:$0xf]
    %v5205 = vld [vmem:[#allocation24 + $0x30] sm:$0xf]
    %v5206 = vld [vmem:[#allocation24 + $0x34] sm:$0xf]
    %v5207 = vld [vmem:[#allocation24 + $0x38] sm:$0xf]
    %v5208 = vld [vmem:[#allocation24 + $0x3c] sm:$0xf]
    %v5209 = vld [vmem:[#allocation24 + $0x40] sm:$0xf]
    %v5210 = vld [vmem:[#allocation24 + $0x44] sm:$0xf]
    %v5211 = vld [vmem:[#allocation24 + $0x48] sm:$0xf]
    %v5212 = vld [vmem:[#allocation24 + $0x4c] sm:$0xf]
    %v5213 = vld [vmem:[#allocation24 + $0x50] sm:$0xf]
    %v5214 = vld [vmem:[#allocation24 + $0x54] sm:$0xf]
    %v5215 = vld [vmem:[#allocation24 + $0x58] sm:$0xf]
    %v5216 = vld [vmem:[#allocation24 + $0x5c] sm:$0xf]
    %v5217 = vld [vmem:[#allocation24 + $0x60] sm:$0xf]
    %v5218 = vld [vmem:[#allocation24 + $0x64] sm:$0xf]
    %v5219 = vld [vmem:[#allocation24 + $0x68] sm:$0xf]
    %v5220 = vld [vmem:[#allocation24 + $0x6c] sm:$0xf]
    %v5221 = vld [vmem:[#allocation24 + $0x70] sm:$0xf]
    %v5222 = vld [vmem:[#allocation24 + $0x74] sm:$0xf]
    %v5223 = vld [vmem:[#allocation24 + $0x78] sm:$0xf]
    %v5224 = vld [vmem:[#allocation24 + $0x7c] sm:$0xf]
    %v5225 = vld [vmem:[%s49] sm:$0x3]
    %v5227 = vsel %vm712, %v5225, 0
    %5229 = vmatprep.subr.bf16.mxu0 0
    %5230 = vmatpush1.bf16.msra.mxu0 0
    %5231 = vmatprep.subr.bf16.mxu0 0
    %5232 = vmatpush1.bf16.msra.mxu0 0
    %5233 = vmatprep.subr.bf16.mxu0 0
    %5234 = vmatpush1.bf16.msra.mxu0 0
    %5235 = vmatprep.subr.bf16.mxu0 0
    %5236 = vmatpush1.bf16.msra.mxu0 0
    %5237 = vmatprep.subr.bf16.mxu0 0
    %5238 = vmatpush1.bf16.msra.mxu0 0
    %5239 = vmatprep.subr.bf16.mxu0 0
    %5240 = vmatpush1.bf16.msra.mxu0 0
    %5241 = vmatprep.subr.bf16.mxu0 0
    %5242 = vmatpush1.bf16.msra.mxu0 0
    %5243 = vmatprep.subr.bf16.mxu0 0
    %5244 = vmatpush1.bf16.msra.mxu0 %v5227
    %5245 = vmatprep.subr.bf16.mxu0 0
    %5246 = vmatpush2.bf16.msra.mxu0 0
    %5247 = vmatprep.subr.bf16.mxu0 0
    %5248 = vmatpush2.bf16.msra.mxu0 0
    %5249 = vmatprep.subr.bf16.mxu0 0
    %5250 = vmatpush2.bf16.msra.mxu0 0
    %5251 = vmatprep.subr.bf16.mxu0 0
    %5252 = vmatpush2.bf16.msra.mxu0 0
    %5253 = vmatprep.subr.bf16.mxu0 0
    %5254 = vmatpush2.bf16.msra.mxu0 0
    %5255 = vmatprep.subr.bf16.mxu0 0
    %5256 = vmatpush2.bf16.msra.mxu0 0
    %5257 = vmatprep.subr.bf16.mxu0 0
    %5258 = vmatpush2.bf16.msra.mxu0 0
    %5259 = vmatprep.subr.bf16.mxu0 0
    %5260 = vmatpush2.bf16.msra.mxu0 0
    %5261 = vmatprep.mubr.bf16.mxu0 0
    %5262 = vmatmul.mubr.bf16.gmra.mxu0 %v704
    %v5263 = vpop.f32.mrf.mxu0
    %v5264 = vadd.f32 0.0, %v5263
    %v5265 = vpop.f32.mrf.mxu0
    %v5266 = vpop.f32.mrf.mxu0
    %v5267 = vadd.f32 0.0, %v5266
    %v5268 = vpop.f32.mrf.mxu0
    %5269 = vmatprep.mubr.bf16.mxu0 0
    %5270 = vmatmul.mubr.bf16.gmra.mxu0 %v707
    %v5271 = vpop.f32.mrf.mxu0
    %v5272 = vadd.f32 0.0, %v5271
    %v5273 = vpop.f32.mrf.mxu0
    %v5274 = vpop.f32.mrf.mxu0
    %v5275 = vadd.f32 0.0, %v5274
    %v5276 = vpop.f32.mrf.mxu0
    %5277 = vmatprep.mubr.bf16.mxu0 0
    %5278 = vmatmul.mubr.bf16.gmra.mxu0 %v710
    %v5279 = vpop.f32.mrf.mxu0
    %v5280 = vadd.f32 0.0, %v5279
    %v5281 = vpop.f32.mrf.mxu0
    %v5282 = vpop.f32.mrf.mxu0
    %v5283 = vadd.f32 0.0, %v5282
    %v5284 = vpop.f32.mrf.mxu0
    %5285 = vdwg.mxu0
    %v5318 = vunpack.c.l.b16 %v5193
    %v5319 = vunpack.c.l.b16 %v5194
    %v5320 = vunpack.c.l.b16 %v5195
    %v5321 = vunpack.c.l.b16 %v5196
    %v5322 = vunpack.c.l.b16 %v5197
    %v5323 = vunpack.c.l.b16 %v5198
    %v5324 = vunpack.c.l.b16 %v5199
    %v5325 = vunpack.c.l.b16 %v5200
    %v5326 = vunpack.c.l.b16 %v5201
    %v5327 = vunpack.c.l.b16 %v5202
    %v5328 = vunpack.c.l.b16 %v5203
    %v5329 = vunpack.c.l.b16 %v5204
    %v5330 = vunpack.c.l.b16 %v5205
    %v5331 = vunpack.c.l.b16 %v5206
    %v5332 = vunpack.c.l.b16 %v5207
    %v5333 = vunpack.c.l.b16 %v5208
    %v5334 = vunpack.c.l.b16 %v5209
    %v5335 = vunpack.c.l.b16 %v5210
    %v5336 = vunpack.c.l.b16 %v5211
    %v5337 = vunpack.c.l.b16 %v5212
    %v5338 = vunpack.c.l.b16 %v5213
    %v5339 = vunpack.c.l.b16 %v5214
    %v5340 = vunpack.c.l.b16 %v5215
    %v5341 = vunpack.c.l.b16 %v5216
    %v5342 = vunpack.c.l.b16 %v5217
    %v5343 = vunpack.c.l.b16 %v5218
    %v5344 = vunpack.c.l.b16 %v5219
    %v5345 = vunpack.c.l.b16 %v5220
    %v5346 = vunpack.c.l.b16 %v5221
    %v5347 = vunpack.c.l.b16 %v5222
    %v5348 = vunpack.c.l.b16 %v5223
    %v5349 = vunpack.c.l.b16 %v5224
    %v5350 = vpack.c.b16 %v5319, %v5318
    %v5351 = vpack.c.b16 %v5321, %v5320
    %v5352 = vpack.c.b16 %v5323, %v5322
    %v5353 = vpack.c.b16 %v5325, %v5324
    %v5354 = vpack.c.b16 %v5327, %v5326
    %v5355 = vpack.c.b16 %v5329, %v5328
    %v5356 = vpack.c.b16 %v5331, %v5330
    %v5357 = vpack.c.b16 %v5333, %v5332
    %v5358 = vpack.c.b16 %v5335, %v5334
    %v5359 = vpack.c.b16 %v5337, %v5336
    %v5360 = vpack.c.b16 %v5339, %v5338
    %v5361 = vpack.c.b16 %v5341, %v5340
    %v5362 = vpack.c.b16 %v5343, %v5342
    %v5363 = vpack.c.b16 %v5345, %v5344
    %v5364 = vpack.c.b16 %v5347, %v5346
    %v5365 = vpack.c.b16 %v5349, %v5348
    %5382 = vmatprep.subr.bf16.mxu0 0
    %5383 = vmatpush1.bf16.msra.mxu0 %v5357
    %5384 = vmatprep.subr.bf16.mxu0 0
    %5385 = vmatpush1.bf16.msra.mxu0 %v5356
    %5386 = vmatprep.subr.bf16.mxu0 0
    %5387 = vmatpush1.bf16.msra.mxu0 %v5355
    %5388 = vmatprep.subr.bf16.mxu0 0
    %5389 = vmatpush1.bf16.msra.mxu0 %v5354
    %5390 = vmatprep.subr.bf16.mxu0 0
    %5391 = vmatpush1.bf16.msra.mxu0 %v5353
    %5392 = vmatprep.subr.bf16.mxu0 0
    %5393 = vmatpush1.bf16.msra.mxu0 %v5352
    %5394 = vmatprep.subr.bf16.mxu0 0
    %5395 = vmatpush1.bf16.msra.mxu0 %v5351
    %5396 = vmatprep.subr.bf16.mxu0 0
    %5397 = vmatpush1.bf16.msra.mxu0 %v5350
    %5398 = vmatprep.subr.bf16.mxu0 0
    %5399 = vmatpush2.bf16.msra.mxu0 %v5365
    %5400 = vmatprep.subr.bf16.mxu0 0
    %5401 = vmatpush2.bf16.msra.mxu0 %v5364
    %5402 = vmatprep.subr.bf16.mxu0 0
    %5403 = vmatpush2.bf16.msra.mxu0 %v5363
    %5404 = vmatprep.subr.bf16.mxu0 0
    %5405 = vmatpush2.bf16.msra.mxu0 %v5362
    %5406 = vmatprep.subr.bf16.mxu0 0
    %5407 = vmatpush2.bf16.msra.mxu0 %v5361
    %5408 = vmatprep.subr.bf16.mxu0 0
    %5409 = vmatpush2.bf16.msra.mxu0 %v5360
    %5410 = vmatprep.subr.bf16.mxu0 0
    %5411 = vmatpush2.bf16.msra.mxu0 %v5359
    %5412 = vmatprep.subr.bf16.mxu0 0
    %5413 = vmatpush2.bf16.msra.mxu0 %v5358
    %5414 = vmatprep.mubr.bf16.mxu0 %v5188
    %5415 = vmatmul.mubr.bf16.gmra.mxu0 %v5187
    %v5416 = vpop.f32.mrf.mxu0
    %v5417 = vadd.f32 %v5264, %v5416
    %v5418 = vpop.f32.mrf.mxu0
    %v5419 = vpop.f32.mrf.mxu0
    %v5420 = vadd.f32 %v5267, %v5419
    %v5421 = vpop.f32.mrf.mxu0
    %5422 = vmatprep.mubr.bf16.mxu0 %v5190
    %5423 = vmatmul.mubr.bf16.gmra.mxu0 %v5189
    %v5424 = vpop.f32.mrf.mxu0
    %v5425 = vadd.f32 %v5272, %v5424
    %v5426 = vpop.f32.mrf.mxu0
    %v5427 = vpop.f32.mrf.mxu0
    %v5428 = vadd.f32 %v5275, %v5427
    %v5429 = vpop.f32.mrf.mxu0
    %5430 = vmatprep.mubr.bf16.mxu0 %v5192
    %5431 = vmatmul.mubr.bf16.gmra.mxu0 %v5191
    %v5432 = vpop.f32.mrf.mxu0
    %v5433 = vadd.f32 %v5280, %v5432
    %v5434 = vpop.f32.mrf.mxu0
    %v5435 = vpop.f32.mrf.mxu0
    %v5436 = vadd.f32 %v5283, %v5435
    %v5437 = vpop.f32.mrf.mxu0
    %5438 = vdwg.mxu0
    %v5439 = vld [vmem:[#allocation25] sm:$0x1]
    %v5441 = vlaneseq
    %v5442 = vshrl.u32 %v5441, 7
    %v5443 = vsub.s32 0, %v5442
    %v5444 = vrot.slane %v5439, %v5443
    %v5446 = vadd.f32 %v5417, %v5444
    %v5447 = vadd.f32 %v5420, %v5444
    %v5448 = vadd.f32 %v5425, %v5444
    %v5449 = vadd.f32 %v5428, %v5444
    %v5450 = vadd.f32 %v5433, %v5444
    %v5451 = vadd.f32 %v5436, %v5444
    %5452 = vst [vmem:[#allocation2] sm:$0xff] %v5446
    %5453 = vst [vmem:[#allocation2 + $0x8] sm:$0xff] %v5447
    %5454 = vst [vmem:[#allocation2 + $0x10] sm:$0xff] %v5448
    %5455 = vst [vmem:[#allocation2 + $0x18] sm:$0xff] %v5449
    %5456 = vst [vmem:[#allocation2 + $0x20] sm:$0xff] %v5450
    %5457 = vst [vmem:[#allocation2 + $0x28] sm:$0xff] %v5451
    %v5458 = vmul.f32 %v5446, %v5446
    %v5459 = vmul.f32 %v5447, %v5447
    %v5460 = vmul.f32 %v5448, %v5448
    %v5461 = vmul.f32 %v5449, %v5449
    %v5462 = vmul.f32 %v5450, %v5450
    %v5463 = vmul.f32 %v5451, %v5451
    %v5464 = vpack.c.bf16 %v5447, %v5446
    %v5465 = vpack.c.bf16 %v5459, %v5458
    %v5466 = vpack.c.bf16 %v5449, %v5448
    %v5467 = vpack.c.bf16 %v5461, %v5460
    %v5468 = vpack.c.bf16 %v5451, %v5450
    %v5469 = vpack.c.bf16 %v5463, %v5462
    %5470 = vmatprep.subr.bf16.mxu0 0
    %5471 = vmatpush1.bf16.msra.mxu0 0
    %5472 = vmatprep.subr.bf16.mxu0 0
    %5473 = vmatpush1.bf16.msra.mxu0 0
    %5474 = vmatprep.subr.bf16.mxu0 0
    %5475 = vmatpush1.bf16.msra.mxu0 0
    %5476 = vmatprep.subr.bf16.mxu0 0
    %5477 = vmatpush1.bf16.msra.mxu0 0
    %5478 = vmatprep.subr.bf16.mxu0 0
    %5479 = vmatpush1.bf16.msra.mxu0 0
    %5480 = vmatprep.subr.bf16.mxu0 %v5469
    %5481 = vmatpush1.bf16.msra.mxu0 %v5468
    %5482 = vmatprep.subr.bf16.mxu0 %v5467
    %5483 = vmatpush1.bf16.msra.mxu0 %v5466
    %5484 = vmatprep.subr.bf16.mxu0 %v5465
    %5485 = vmatpush1.bf16.msra.mxu0 %v5464
    %5486 = vmatprep.subr.bf16.mxu0 0
    %5487 = vmatpush2.bf16.msra.mxu0 0
    %5488 = vmatprep.subr.bf16.mxu0 0
    %5489 = vmatpush2.bf16.msra.mxu0 0
    %5490 = vmatprep.subr.bf16.mxu0 0
    %5491 = vmatpush2.bf16.msra.mxu0 0
    %5492 = vmatprep.subr.bf16.mxu0 0
    %5493 = vmatpush2.bf16.msra.mxu0 0
    %5494 = vmatprep.subr.bf16.mxu0 0
    %5495 = vmatpush2.bf16.msra.mxu0 0
    %5496 = vmatprep.subr.bf16.mxu0 0
    %5497 = vmatpush2.bf16.msra.mxu0 0
    %5498 = vmatprep.subr.bf16.mxu0 0
    %5499 = vmatpush2.bf16.msra.mxu0 0
    %5500 = vmatprep.subr.bf16.mxu0 0
    %5501 = vmatpush2.bf16.msra.mxu0 0
    %5502 = vmatprep.mubr.bf16.mxu0 0
    %5503 = vmatmul.mubr.bf16.gmra.mxu0 %v959
    %v5504 = vpop.f32.mrf.mxu0
    %v5505 = vadd.f32 0.0, %v5504
    %v5506 = vpop.f32.mrf.mxu0
    %v5507 = vadd.f32 0.0, %v5506
    %v5508 = vpop.f32.mrf.mxu0
    %v5509 = vadd.f32 0.0, %v5508
    %v5510 = vpop.f32.mrf.mxu0
    %v5511 = vadd.f32 0.0, %v5510
    %5512 = vdwg.mxu0
    %v5513 = vmul.f32 %v5505, %v1014
    %v5514 = vmul.f32 %v5509, %v1016
    %v5515 = vmul.f32 %v5507, %v1014
    %v5516 = vmul.f32 %v5511, %v1016
    %v5517 = vmul.f32 %v5513, %v5513
    %v5518 = vmul.f32 %v5514, %v5514
    %v5519 = vsub.f32 %v5515, %v5517
    %v5520 = vsub.f32 %v5516, %v5518
    %v5521 = vmax.f32 %v5519, 0.0
    %v5522 = vmax.f32 %v5520, 0.0
    %v5523 = vadd.f32 %v5521, 1e-05
    %v5524 = vadd.f32 %v5522, 1e-05
    %v5525 = vrsqrt.pop %v5523
    %v5526 = vmul.f32 %v5523, %v5525
    %vm5527 = vcmp.eq.f32.partialorder %v5523, inf
    %v5528 = vsel %vm5527, %v5523, %v5526
    %vm5529 = vcmp.eq.f32.partialorder %v5523, 0.0
    %v5530 = vand.u32 %v5523, 2147483648
    %v5531 = vsel %vm5529, %v5530, %v5528
    %v5532 = vrsqrt.pop %v5524
    %v5533 = vmul.f32 %v5524, %v5532
    %vm5534 = vcmp.eq.f32.partialorder %v5524, inf
    %v5535 = vsel %vm5534, %v5524, %v5533
    %vm5536 = vcmp.eq.f32.partialorder %v5524, 0.0
    %v5537 = vand.u32 %v5524, 2147483648
    %v5538 = vsel %vm5536, %v5537, %v5535
    loop: start=0, step=1, limit=3
    $region224: #{tpu_custom_call.1} parent=1 // loop_pre_header
      _
    $region225: #{tpu_custom_call.1} parent=1 // loop_header
      %s5540 = sphi 0, %s5544
      %p5541 = scmp.ge.s32.totalorder %s5540, 3
      %v5545 = vphi -1e+30, %v5920
      %v5546 = vphi -1e+30, %v5921
      %v5547 = vphi -1e+30, %v5922
      %v5548 = vphi -1e+30, %v5923
      %v5549 = vphi -1e+30, %v5924
      %v5550 = vphi -1e+30, %v5925
      %v5551 = vphi -1e+30, %v5926
      %v5552 = vphi -1e+30, %v5927
      %v5553 = vphi -1e+30, %v5928
      %v5554 = vphi -1e+30, %v5929
      %v5555 = vphi -1e+30, %v5930
      %v5556 = vphi -1e+30, %v5931
      %v5557 = vphi -1e+30, %v5932
      %v5558 = vphi -1e+30, %v5933
      %v5559 = vphi -1e+30, %v5934
      %v5560 = vphi -1e+30, %v5935
      %v5561 = vphi 1e+30, %v6080
      %v5562 = vphi 1e+30, %v6081
      %v5563 = vphi 1e+30, %v6082
      %v5564 = vphi 1e+30, %v6083
      %v5565 = vphi 1e+30, %v6084
      %v5566 = vphi 1e+30, %v6085
      %v5567 = vphi 1e+30, %v6086
      %v5568 = vphi 1e+30, %v6087
      %v5569 = vphi 1e+30, %v6088
      %v5570 = vphi 1e+30, %v6089
      %v5571 = vphi 1e+30, %v6090
      %v5572 = vphi 1e+30, %v6091
      %v5573 = vphi 1e+30, %v6092
      %v5574 = vphi 1e+30, %v6093
      %v5575 = vphi 1e+30, %v6094
      %v5576 = vphi 1e+30, %v6095
    $region226: #{tpu_custom_call.1} parent=1 // loop_header_branch
      %5543 = sbr.rel (%p5541) target = $region230
    $region227: #{tpu_custom_call.1} parent=1 // loop_body
      %s5577 = smul.u32 %s5540, 16
      %s5578 = scalar_lea.vmem [#allocation2], %s5577
      %v5579 = vld [vmem:[%s5578] sm:$0xff]
      %v5580 = vld [vmem:[%s5578 + $0x8] sm:$0xff]
      %s5581 = scalar_lea.vmem %s13, %s5577
      %v5582 = vld [vmem:[%s5581] sm:$0xff]
      %v5583 = vld [vmem:[%s5581 + $0x8] sm:$0xff]
      %vm5584 = vcmp.eq.s32.totalorder %v5582, 0
      %vm5585 = vcmp.eq.s32.totalorder %v5583, 0
      %vm5586 = vcmp.eq.s32.totalorder %v5582, 1
      %vm5587 = vcmp.eq.s32.totalorder %v5583, 1
      %vm5588 = vcmp.eq.s32.totalorder %v5582, 2
      %vm5589 = vcmp.eq.s32.totalorder %v5583, 2
      %vm5590 = vcmp.eq.s32.totalorder %v5582, 3
      %vm5591 = vcmp.eq.s32.totalorder %v5583, 3
      %vm5592 = vcmp.eq.s32.totalorder %v5582, 4
      %vm5593 = vcmp.eq.s32.totalorder %v5583, 4
      %vm5594 = vcmp.eq.s32.totalorder %v5582, 5
      %vm5595 = vcmp.eq.s32.totalorder %v5583, 5
      %vm5596 = vcmp.eq.s32.totalorder %v5582, 6
      %vm5597 = vcmp.eq.s32.totalorder %v5583, 6
      %vm5598 = vcmp.eq.s32.totalorder %v5582, 7
      %vm5599 = vcmp.eq.s32.totalorder %v5583, 7
      %vm5600 = vcmp.eq.s32.totalorder %v5582, 8
      %vm5601 = vcmp.eq.s32.totalorder %v5583, 8
      %vm5602 = vcmp.eq.s32.totalorder %v5582, 9
      %vm5603 = vcmp.eq.s32.totalorder %v5583, 9
      %vm5604 = vcmp.eq.s32.totalorder %v5582, 10
      %vm5605 = vcmp.eq.s32.totalorder %v5583, 10
      %vm5606 = vcmp.eq.s32.totalorder %v5582, 11
      %vm5607 = vcmp.eq.s32.totalorder %v5583, 11
      %vm5608 = vcmp.eq.s32.totalorder %v5582, 12
      %vm5609 = vcmp.eq.s32.totalorder %v5583, 12
      %vm5610 = vcmp.eq.s32.totalorder %v5582, 13
      %vm5611 = vcmp.eq.s32.totalorder %v5583, 13
      %vm5612 = vcmp.eq.s32.totalorder %v5582, 14
      %vm5613 = vcmp.eq.s32.totalorder %v5583, 14
      %vm5614 = vcmp.eq.s32.totalorder %v5582, 15
      %vm5615 = vcmp.eq.s32.totalorder %v5583, 15
      %v5616 = vsel %vm5584, 1, 0
      %v5617 = vsel %vm5585, 1, 0
      %v5618 = vsel %vm5586, 1, 0
      %v5619 = vsel %vm5587, 1, 0
      %v5620 = vsel %vm5588, 1, 0
      %v5621 = vsel %vm5589, 1, 0
      %v5622 = vsel %vm5590, 1, 0
      %v5623 = vsel %vm5591, 1, 0
      %v5624 = vsel %vm5592, 1, 0
      %v5625 = vsel %vm5593, 1, 0
      %v5626 = vsel %vm5594, 1, 0
      %v5627 = vsel %vm5595, 1, 0
      %v5628 = vsel %vm5596, 1, 0
      %v5629 = vsel %vm5597, 1, 0
      %v5630 = vsel %vm5598, 1, 0
      %v5631 = vsel %vm5599, 1, 0
      %v5632 = vsel %vm5600, 1, 0
      %v5633 = vsel %vm5601, 1, 0
      %v5634 = vsel %vm5602, 1, 0
      %v5635 = vsel %vm5603, 1, 0
      %v5636 = vsel %vm5604, 1, 0
      %v5637 = vsel %vm5605, 1, 0
      %v5638 = vsel %vm5606, 1, 0
      %v5639 = vsel %vm5607, 1, 0
      %v5640 = vsel %vm5608, 1, 0
      %v5641 = vsel %vm5609, 1, 0
      %v5642 = vsel %vm5610, 1, 0
      %v5643 = vsel %vm5611, 1, 0
      %v5644 = vsel %vm5612, 1, 0
      %v5645 = vsel %vm5613, 1, 0
      %v5646 = vsel %vm5614, 1, 0
      %v5647 = vsel %vm5615, 1, 0
      %5648 = vset.pattern.permute.xlu0 0
      %5649 = vperm.xlu0 %5648, %v5616
      %v5650 = vpop.permute.xlu0 %5649
      %5651 = vset.pattern.permute.xlu0 0
      %5652 = vperm.xlu0 %5651, %v5617
      %v5653 = vpop.permute.xlu0 %5652
      %5654 = vset.pattern.permute.xlu0 0
      %5655 = vperm.xlu0 %5654, %v5618
      %v5656 = vpop.permute.xlu0 %5655
      %5657 = vset.pattern.permute.xlu0 0
      %5658 = vperm.xlu0 %5657, %v5619
      %v5659 = vpop.permute.xlu0 %5658
      %5660 = vset.pattern.permute.xlu0 0
      %5661 = vperm.xlu0 %5660, %v5620
      %v5662 = vpop.permute.xlu0 %5661
      %5663 = vset.pattern.permute.xlu0 0
      %5664 = vperm.xlu0 %5663, %v5621
      %v5665 = vpop.permute.xlu0 %5664
      %5666 = vset.pattern.permute.xlu0 0
      %5667 = vperm.xlu0 %5666, %v5622
      %v5668 = vpop.permute.xlu0 %5667
      %5669 = vset.pattern.permute.xlu0 0
      %5670 = vperm.xlu0 %5669, %v5623
      %v5671 = vpop.permute.xlu0 %5670
      %5672 = vset.pattern.permute.xlu0 0
      %5673 = vperm.xlu0 %5672, %v5624
      %v5674 = vpop.permute.xlu0 %5673
      %5675 = vset.pattern.permute.xlu0 0
      %5676 = vperm.xlu0 %5675, %v5625
      %v5677 = vpop.permute.xlu0 %5676
      %5678 = vset.pattern.permute.xlu0 0
      %5679 = vperm.xlu0 %5678, %v5626
      %v5680 = vpop.permute.xlu0 %5679
      %5681 = vset.pattern.permute.xlu0 0
      %5682 = vperm.xlu0 %5681, %v5627
      %v5683 = vpop.permute.xlu0 %5682
      %5684 = vset.pattern.permute.xlu0 0
      %5685 = vperm.xlu0 %5684, %v5628
      %v5686 = vpop.permute.xlu0 %5685
      %5687 = vset.pattern.permute.xlu0 0
      %5688 = vperm.xlu0 %5687, %v5629
      %v5689 = vpop.permute.xlu0 %5688
      %5690 = vset.pattern.permute.xlu0 0
      %5691 = vperm.xlu0 %5690, %v5630
      %v5692 = vpop.permute.xlu0 %5691
      %5693 = vset.pattern.permute.xlu0 0
      %5694 = vperm.xlu0 %5693, %v5631
      %v5695 = vpop.permute.xlu0 %5694
      %5696 = vset.pattern.permute.xlu0 0
      %5697 = vperm.xlu0 %5696, %v5632
      %v5698 = vpop.permute.xlu0 %5697
      %5699 = vset.pattern.permute.xlu0 0
      %5700 = vperm.xlu0 %5699, %v5633
      %v5701 = vpop.permute.xlu0 %5700
      %5702 = vset.pattern.permute.xlu0 0
      %5703 = vperm.xlu0 %5702, %v5634
      %v5704 = vpop.permute.xlu0 %5703
      %5705 = vset.pattern.permute.xlu0 0
      %5706 = vperm.xlu0 %5705, %v5635
      %v5707 = vpop.permute.xlu0 %5706
      %5708 = vset.pattern.permute.xlu0 0
      %5709 = vperm.xlu0 %5708, %v5636
      %v5710 = vpop.permute.xlu0 %5709
      %5711 = vset.pattern.permute.xlu0 0
      %5712 = vperm.xlu0 %5711, %v5637
      %v5713 = vpop.permute.xlu0 %5712
      %5714 = vset.pattern.permute.xlu0 0
      %5715 = vperm.xlu0 %5714, %v5638
      %v5716 = vpop.permute.xlu0 %5715
      %5717 = vset.pattern.permute.xlu0 0
      %5718 = vperm.xlu0 %5717, %v5639
      %v5719 = vpop.permute.xlu0 %5718
      %5720 = vset.pattern.permute.xlu0 0
      %5721 = vperm.xlu0 %5720, %v5640
      %v5722 = vpop.permute.xlu0 %5721
      %5723 = vset.pattern.permute.xlu0 0
      %5724 = vperm.xlu0 %5723, %v5641
      %v5725 = vpop.permute.xlu0 %5724
      %5726 = vset.pattern.permute.xlu0 0
      %5727 = vperm.xlu0 %5726, %v5642
      %v5728 = vpop.permute.xlu0 %5727
      %5729 = vset.pattern.permute.xlu0 0
      %5730 = vperm.xlu0 %5729, %v5643
      %v5731 = vpop.permute.xlu0 %5730
      %5732 = vset.pattern.permute.xlu0 0
      %5733 = vperm.xlu0 %5732, %v5644
      %v5734 = vpop.permute.xlu0 %5733
      %5735 = vset.pattern.permute.xlu0 0
      %5736 = vperm.xlu0 %5735, %v5645
      %v5737 = vpop.permute.xlu0 %5736
      %5738 = vset.pattern.permute.xlu0 0
      %5739 = vperm.xlu0 %5738, %v5646
      %v5740 = vpop.permute.xlu0 %5739
      %5741 = vset.pattern.permute.xlu0 0
      %5742 = vperm.xlu0 %5741, %v5647
      %v5743 = vpop.permute.xlu0 %5742
      %vm5744 = vcmp.eq.s32.totalorder %v5650, 1
      %vm5745 = vcmp.eq.s32.totalorder %v5653, 1
      %vm5746 = vcmp.eq.s32.totalorder %v5656, 1
      %vm5747 = vcmp.eq.s32.totalorder %v5659, 1
      %vm5748 = vcmp.eq.s32.totalorder %v5662, 1
      %vm5749 = vcmp.eq.s32.totalorder %v5665, 1
      %vm5750 = vcmp.eq.s32.totalorder %v5668, 1
      %vm5751 = vcmp.eq.s32.totalorder %v5671, 1
      %vm5752 = vcmp.eq.s32.totalorder %v5674, 1
      %vm5753 = vcmp.eq.s32.totalorder %v5677, 1
      %vm5754 = vcmp.eq.s32.totalorder %v5680, 1
      %vm5755 = vcmp.eq.s32.totalorder %v5683, 1
      %vm5756 = vcmp.eq.s32.totalorder %v5686, 1
      %vm5757 = vcmp.eq.s32.totalorder %v5689, 1
      %vm5758 = vcmp.eq.s32.totalorder %v5692, 1
      %vm5759 = vcmp.eq.s32.totalorder %v5695, 1
      %vm5760 = vcmp.eq.s32.totalorder %v5698, 1
      %vm5761 = vcmp.eq.s32.totalorder %v5701, 1
      %vm5762 = vcmp.eq.s32.totalorder %v5704, 1
      %vm5763 = vcmp.eq.s32.totalorder %v5707, 1
      %vm5764 = vcmp.eq.s32.totalorder %v5710, 1
      %vm5765 = vcmp.eq.s32.totalorder %v5713, 1
      %vm5766 = vcmp.eq.s32.totalorder %v5716, 1
      %vm5767 = vcmp.eq.s32.totalorder %v5719, 1
      %vm5768 = vcmp.eq.s32.totalorder %v5722, 1
      %vm5769 = vcmp.eq.s32.totalorder %v5725, 1
      %vm5770 = vcmp.eq.s32.totalorder %v5728, 1
      %vm5771 = vcmp.eq.s32.totalorder %v5731, 1
      %vm5772 = vcmp.eq.s32.totalorder %v5734, 1
      %vm5773 = vcmp.eq.s32.totalorder %v5737, 1
      %vm5774 = vcmp.eq.s32.totalorder %v5740, 1
      %vm5775 = vcmp.eq.s32.totalorder %v5743, 1
      %v5776 = vsel %vm5744, %v5579, -1e+30
      %v5777 = vsel %vm5745, %v5580, -1e+30
      %v5778 = vsel %vm5746, %v5579, -1e+30
      %v5779 = vsel %vm5747, %v5580, -1e+30
      %v5780 = vsel %vm5748, %v5579, -1e+30
      %v5781 = vsel %vm5749, %v5580, -1e+30
      %v5782 = vsel %vm5750, %v5579, -1e+30
      %v5783 = vsel %vm5751, %v5580, -1e+30
      %v5784 = vsel %vm5752, %v5579, -1e+30
      %v5785 = vsel %vm5753, %v5580, -1e+30
      %v5786 = vsel %vm5754, %v5579, -1e+30
      %v5787 = vsel %vm5755, %v5580, -1e+30
      %v5788 = vsel %vm5756, %v5579, -1e+30
      %v5789 = vsel %vm5757, %v5580, -1e+30
      %v5790 = vsel %vm5758, %v5579, -1e+30
      %v5791 = vsel %vm5759, %v5580, -1e+30
      %v5792 = vsel %vm5760, %v5579, -1e+30
      %v5793 = vsel %vm5761, %v5580, -1e+30
      %v5794 = vsel %vm5762, %v5579, -1e+30
      %v5795 = vsel %vm5763, %v5580, -1e+30
      %v5796 = vsel %vm5764, %v5579, -1e+30
      %v5797 = vsel %vm5765, %v5580, -1e+30
      %v5798 = vsel %vm5766, %v5579, -1e+30
      %v5799 = vsel %vm5767, %v5580, -1e+30
      %v5800 = vsel %vm5768, %v5579, -1e+30
      %v5801 = vsel %vm5769, %v5580, -1e+30
      %v5802 = vsel %vm5770, %v5579, -1e+30
      %v5803 = vsel %vm5771, %v5580, -1e+30
      %v5804 = vsel %vm5772, %v5579, -1e+30
      %v5805 = vsel %vm5773, %v5580, -1e+30
      %v5806 = vsel %vm5774, %v5579, -1e+30
      %v5807 = vsel %vm5775, %v5580, -1e+30
      %v5808 = vmax.f32 %v5776, %v5777
      %v5809 = vrot.slane %v5808, 4
      %v5810 = vmax.f32 %v5808, %v5809
      %v5811 = vrot.slane %v5810, 2
      %v5812 = vmax.f32 %v5810, %v5811
      %v5813 = vrot.slane %v5812, 1
      %v5814 = vmax.f32 %v5812, %v5813
      %v5815 = vmax.f32 %v5778, %v5779
      %v5816 = vrot.slane %v5815, 4
      %v5817 = vmax.f32 %v5815, %v5816
      %v5818 = vrot.slane %v5817, 2
      %v5819 = vmax.f32 %v5817, %v5818
      %v5820 = vrot.slane %v5819, 1
      %v5821 = vmax.f32 %v5819, %v5820
      %v5822 = vmax.f32 %v5780, %v5781
      %v5823 = vrot.slane %v5822, 4
      %v5824 = vmax.f32 %v5822, %v5823
      %v5825 = vrot.slane %v5824, 2
      %v5826 = vmax.f32 %v5824, %v5825
      %v5827 = vrot.slane %v5826, 1
      %v5828 = vmax.f32 %v5826, %v5827
      %v5829 = vmax.f32 %v5782, %v5783
      %v5830 = vrot.slane %v5829, 4
      %v5831 = vmax.f32 %v5829, %v5830
      %v5832 = vrot.slane %v5831, 2
      %v5833 = vmax.f32 %v5831, %v5832
      %v5834 = vrot.slane %v5833, 1
      %v5835 = vmax.f32 %v5833, %v5834
      %v5836 = vmax.f32 %v5784, %v5785
      %v5837 = vrot.slane %v5836, 4
      %v5838 = vmax.f32 %v5836, %v5837
      %v5839 = vrot.slane %v5838, 2
      %v5840 = vmax.f32 %v5838, %v5839
      %v5841 = vrot.slane %v5840, 1
      %v5842 = vmax.f32 %v5840, %v5841
      %v5843 = vmax.f32 %v5786, %v5787
      %v5844 = vrot.slane %v5843, 4
      %v5845 = vmax.f32 %v5843, %v5844
      %v5846 = vrot.slane %v5845, 2
      %v5847 = vmax.f32 %v5845, %v5846
      %v5848 = vrot.slane %v5847, 1
      %v5849 = vmax.f32 %v5847, %v5848
      %v5850 = vmax.f32 %v5788, %v5789
      %v5851 = vrot.slane %v5850, 4
      %v5852 = vmax.f32 %v5850, %v5851
      %v5853 = vrot.slane %v5852, 2
      %v5854 = vmax.f32 %v5852, %v5853
      %v5855 = vrot.slane %v5854, 1
      %v5856 = vmax.f32 %v5854, %v5855
      %v5857 = vmax.f32 %v5790, %v5791
      %v5858 = vrot.slane %v5857, 4
      %v5859 = vmax.f32 %v5857, %v5858
      %v5860 = vrot.slane %v5859, 2
      %v5861 = vmax.f32 %v5859, %v5860
      %v5862 = vrot.slane %v5861, 1
      %v5863 = vmax.f32 %v5861, %v5862
      %v5864 = vmax.f32 %v5792, %v5793
      %v5865 = vrot.slane %v5864, 4
      %v5866 = vmax.f32 %v5864, %v5865
      %v5867 = vrot.slane %v5866, 2
      %v5868 = vmax.f32 %v5866, %v5867
      %v5869 = vrot.slane %v5868, 1
      %v5870 = vmax.f32 %v5868, %v5869
      %v5871 = vmax.f32 %v5794, %v5795
      %v5872 = vrot.slane %v5871, 4
      %v5873 = vmax.f32 %v5871, %v5872
      %v5874 = vrot.slane %v5873, 2
      %v5875 = vmax.f32 %v5873, %v5874
      %v5876 = vrot.slane %v5875, 1
      %v5877 = vmax.f32 %v5875, %v5876
      %v5878 = vmax.f32 %v5796, %v5797
      %v5879 = vrot.slane %v5878, 4
      %v5880 = vmax.f32 %v5878, %v5879
      %v5881 = vrot.slane %v5880, 2
      %v5882 = vmax.f32 %v5880, %v5881
      %v5883 = vrot.slane %v5882, 1
      %v5884 = vmax.f32 %v5882, %v5883
      %v5885 = vmax.f32 %v5798, %v5799
      %v5886 = vrot.slane %v5885, 4
      %v5887 = vmax.f32 %v5885, %v5886
      %v5888 = vrot.slane %v5887, 2
      %v5889 = vmax.f32 %v5887, %v5888
      %v5890 = vrot.slane %v5889, 1
      %v5891 = vmax.f32 %v5889, %v5890
      %v5892 = vmax.f32 %v5800, %v5801
      %v5893 = vrot.slane %v5892, 4
      %v5894 = vmax.f32 %v5892, %v5893
      %v5895 = vrot.slane %v5894, 2
      %v5896 = vmax.f32 %v5894, %v5895
      %v5897 = vrot.slane %v5896, 1
      %v5898 = vmax.f32 %v5896, %v5897
      %v5899 = vmax.f32 %v5802, %v5803
      %v5900 = vrot.slane %v5899, 4
      %v5901 = vmax.f32 %v5899, %v5900
      %v5902 = vrot.slane %v5901, 2
      %v5903 = vmax.f32 %v5901, %v5902
      %v5904 = vrot.slane %v5903, 1
      %v5905 = vmax.f32 %v5903, %v5904
      %v5906 = vmax.f32 %v5804, %v5805
      %v5907 = vrot.slane %v5906, 4
      %v5908 = vmax.f32 %v5906, %v5907
      %v5909 = vrot.slane %v5908, 2
      %v5910 = vmax.f32 %v5908, %v5909
      %v5911 = vrot.slane %v5910, 1
      %v5912 = vmax.f32 %v5910, %v5911
      %v5913 = vmax.f32 %v5806, %v5807
      %v5914 = vrot.slane %v5913, 4
      %v5915 = vmax.f32 %v5913, %v5914
      %v5916 = vrot.slane %v5915, 2
      %v5917 = vmax.f32 %v5915, %v5916
      %v5918 = vrot.slane %v5917, 1
      %v5919 = vmax.f32 %v5917, %v5918
      %v5920 = vmax.f32 %v5545, %v5814
      %v5921 = vmax.f32 %v5546, %v5821
      %v5922 = vmax.f32 %v5547, %v5828
      %v5923 = vmax.f32 %v5548, %v5835
      %v5924 = vmax.f32 %v5549, %v5842
      %v5925 = vmax.f32 %v5550, %v5849
      %v5926 = vmax.f32 %v5551, %v5856
      %v5927 = vmax.f32 %v5552, %v5863
      %v5928 = vmax.f32 %v5553, %v5870
      %v5929 = vmax.f32 %v5554, %v5877
      %v5930 = vmax.f32 %v5555, %v5884
      %v5931 = vmax.f32 %v5556, %v5891
      %v5932 = vmax.f32 %v5557, %v5898
      %v5933 = vmax.f32 %v5558, %v5905
      %v5934 = vmax.f32 %v5559, %v5912
      %v5935 = vmax.f32 %v5560, %v5919
      %v5936 = vsel %vm5744, %v5579, 1e+30
      %v5937 = vsel %vm5745, %v5580, 1e+30
      %v5938 = vsel %vm5746, %v5579, 1e+30
      %v5939 = vsel %vm5747, %v5580, 1e+30
      %v5940 = vsel %vm5748, %v5579, 1e+30
      %v5941 = vsel %vm5749, %v5580, 1e+30
      %v5942 = vsel %vm5750, %v5579, 1e+30
      %v5943 = vsel %vm5751, %v5580, 1e+30
      %v5944 = vsel %vm5752, %v5579, 1e+30
      %v5945 = vsel %vm5753, %v5580, 1e+30
      %v5946 = vsel %vm5754, %v5579, 1e+30
      %v5947 = vsel %vm5755, %v5580, 1e+30
      %v5948 = vsel %vm5756, %v5579, 1e+30
      %v5949 = vsel %vm5757, %v5580, 1e+30
      %v5950 = vsel %vm5758, %v5579, 1e+30
      %v5951 = vsel %vm5759, %v5580, 1e+30
      %v5952 = vsel %vm5760, %v5579, 1e+30
      %v5953 = vsel %vm5761, %v5580, 1e+30
      %v5954 = vsel %vm5762, %v5579, 1e+30
      %v5955 = vsel %vm5763, %v5580, 1e+30
      %v5956 = vsel %vm5764, %v5579, 1e+30
      %v5957 = vsel %vm5765, %v5580, 1e+30
      %v5958 = vsel %vm5766, %v5579, 1e+30
      %v5959 = vsel %vm5767, %v5580, 1e+30
      %v5960 = vsel %vm5768, %v5579, 1e+30
      %v5961 = vsel %vm5769, %v5580, 1e+30
      %v5962 = vsel %vm5770, %v5579, 1e+30
      %v5963 = vsel %vm5771, %v5580, 1e+30
      %v5964 = vsel %vm5772, %v5579, 1e+30
      %v5965 = vsel %vm5773, %v5580, 1e+30
      %v5966 = vsel %vm5774, %v5579, 1e+30
      %v5967 = vsel %vm5775, %v5580, 1e+30
      %v5968 = vmin.f32 %v5936, %v5937
      %v5969 = vrot.slane %v5968, 4
      %v5970 = vmin.f32 %v5968, %v5969
      %v5971 = vrot.slane %v5970, 2
      %v5972 = vmin.f32 %v5970, %v5971
      %v5973 = vrot.slane %v5972, 1
      %v5974 = vmin.f32 %v5972, %v5973
      %v5975 = vmin.f32 %v5938, %v5939
      %v5976 = vrot.slane %v5975, 4
      %v5977 = vmin.f32 %v5975, %v5976
      %v5978 = vrot.slane %v5977, 2
      %v5979 = vmin.f32 %v5977, %v5978
      %v5980 = vrot.slane %v5979, 1
      %v5981 = vmin.f32 %v5979, %v5980
      %v5982 = vmin.f32 %v5940, %v5941
      %v5983 = vrot.slane %v5982, 4
      %v5984 = vmin.f32 %v5982, %v5983
      %v5985 = vrot.slane %v5984, 2
      %v5986 = vmin.f32 %v5984, %v5985
      %v5987 = vrot.slane %v5986, 1
      %v5988 = vmin.f32 %v5986, %v5987
      %v5989 = vmin.f32 %v5942, %v5943
      %v5990 = vrot.slane %v5989, 4
      %v5991 = vmin.f32 %v5989, %v5990
      %v5992 = vrot.slane %v5991, 2
      %v5993 = vmin.f32 %v5991, %v5992
      %v5994 = vrot.slane %v5993, 1
      %v5995 = vmin.f32 %v5993, %v5994
      %v5996 = vmin.f32 %v5944, %v5945
      %v5997 = vrot.slane %v5996, 4
      %v5998 = vmin.f32 %v5996, %v5997
      %v5999 = vrot.slane %v5998, 2
      %v6000 = vmin.f32 %v5998, %v5999
      %v6001 = vrot.slane %v6000, 1
      %v6002 = vmin.f32 %v6000, %v6001
      %v6003 = vmin.f32 %v5946, %v5947
      %v6004 = vrot.slane %v6003, 4
      %v6005 = vmin.f32 %v6003, %v6004
      %v6006 = vrot.slane %v6005, 2
      %v6007 = vmin.f32 %v6005, %v6006
      %v6008 = vrot.slane %v6007, 1
      %v6009 = vmin.f32 %v6007, %v6008
      %v6010 = vmin.f32 %v5948, %v5949
      %v6011 = vrot.slane %v6010, 4
      %v6012 = vmin.f32 %v6010, %v6011
      %v6013 = vrot.slane %v6012, 2
      %v6014 = vmin.f32 %v6012, %v6013
      %v6015 = vrot.slane %v6014, 1
      %v6016 = vmin.f32 %v6014, %v6015
      %v6017 = vmin.f32 %v5950, %v5951
      %v6018 = vrot.slane %v6017, 4
      %v6019 = vmin.f32 %v6017, %v6018
      %v6020 = vrot.slane %v6019, 2
      %v6021 = vmin.f32 %v6019, %v6020
      %v6022 = vrot.slane %v6021, 1
      %v6023 = vmin.f32 %v6021, %v6022
      %v6024 = vmin.f32 %v5952, %v5953
      %v6025 = vrot.slane %v6024, 4
      %v6026 = vmin.f32 %v6024, %v6025
      %v6027 = vrot.slane %v6026, 2
      %v6028 = vmin.f32 %v6026, %v6027
      %v6029 = vrot.slane %v6028, 1
      %v6030 = vmin.f32 %v6028, %v6029
      %v6031 = vmin.f32 %v5954, %v5955
      %v6032 = vrot.slane %v6031, 4
      %v6033 = vmin.f32 %v6031, %v6032
      %v6034 = vrot.slane %v6033, 2
      %v6035 = vmin.f32 %v6033, %v6034
      %v6036 = vrot.slane %v6035, 1
      %v6037 = vmin.f32 %v6035, %v6036
      %v6038 = vmin.f32 %v5956, %v5957
      %v6039 = vrot.slane %v6038, 4
      %v6040 = vmin.f32 %v6038, %v6039
      %v6041 = vrot.slane %v6040, 2
      %v6042 = vmin.f32 %v6040, %v6041
      %v6043 = vrot.slane %v6042, 1
      %v6044 = vmin.f32 %v6042, %v6043
      %v6045 = vmin.f32 %v5958, %v5959
      %v6046 = vrot.slane %v6045, 4
      %v6047 = vmin.f32 %v6045, %v6046
      %v6048 = vrot.slane %v6047, 2
      %v6049 = vmin.f32 %v6047, %v6048
      %v6050 = vrot.slane %v6049, 1
      %v6051 = vmin.f32 %v6049, %v6050
      %v6052 = vmin.f32 %v5960, %v5961
      %v6053 = vrot.slane %v6052, 4
      %v6054 = vmin.f32 %v6052, %v6053
      %v6055 = vrot.slane %v6054, 2
      %v6056 = vmin.f32 %v6054, %v6055
      %v6057 = vrot.slane %v6056, 1
      %v6058 = vmin.f32 %v6056, %v6057
      %v6059 = vmin.f32 %v5962, %v5963
      %v6060 = vrot.slane %v6059, 4
      %v6061 = vmin.f32 %v6059, %v6060
      %v6062 = vrot.slane %v6061, 2
      %v6063 = vmin.f32 %v6061, %v6062
      %v6064 = vrot.slane %v6063, 1
      %v6065 = vmin.f32 %v6063, %v6064
      %v6066 = vmin.f32 %v5964, %v5965
      %v6067 = vrot.slane %v6066, 4
      %v6068 = vmin.f32 %v6066, %v6067
      %v6069 = vrot.slane %v6068, 2
      %v6070 = vmin.f32 %v6068, %v6069
      %v6071 = vrot.slane %v6070, 1
      %v6072 = vmin.f32 %v6070, %v6071
      %v6073 = vmin.f32 %v5966, %v5967
      %v6074 = vrot.slane %v6073, 4
      %v6075 = vmin.f32 %v6073, %v6074
      %v6076 = vrot.slane %v6075, 2
      %v6077 = vmin.f32 %v6075, %v6076
      %v6078 = vrot.slane %v6077, 1
      %v6079 = vmin.f32 %v6077, %v6078
      %v6080 = vmin.f32 %v5561, %v5974
      %v6081 = vmin.f32 %v5562, %v5981
      %v6082 = vmin.f32 %v5563, %v5988
      %v6083 = vmin.f32 %v5564, %v5995
      %v6084 = vmin.f32 %v5565, %v6002
      %v6085 = vmin.f32 %v5566, %v6009
      %v6086 = vmin.f32 %v5567, %v6016
      %v6087 = vmin.f32 %v5568, %v6023
      %v6088 = vmin.f32 %v5569, %v6030
      %v6089 = vmin.f32 %v5570, %v6037
      %v6090 = vmin.f32 %v5571, %v6044
      %v6091 = vmin.f32 %v5572, %v6051
      %v6092 = vmin.f32 %v5573, %v6058
      %v6093 = vmin.f32 %v5574, %v6065
      %v6094 = vmin.f32 %v5575, %v6072
      %v6095 = vmin.f32 %v5576, %v6079
    $region228: #{tpu_custom_call.1} parent=1 // loop_footer
      %s5544 = sadd.s32 1, %s5540
    $region229: #{tpu_custom_call.1} parent=1 // loop_footer_branch
      %5539 = sbr.rel target = $region225
    $region230: #{tpu_custom_call.1} parent=1 // loop_exit
      _
    %v6112 = vsel %vm1625, %v5546, %v5545
    %v6113 = vsel %vm1627, %v5547, %v6112
    %v6114 = vsel %vm1629, %v5548, %v6113
    %v6115 = vsel %vm1631, %v5549, %v6114
    %v6116 = vsel %vm1633, %v5550, %v6115
    %v6117 = vsel %vm1635, %v5551, %v6116
    %v6118 = vsel %vm1637, %v5552, %v6117
    %v6119 = vsel %vm1625, %v5554, %v5553
    %v6120 = vsel %vm1627, %v5555, %v6119
    %v6121 = vsel %vm1629, %v5556, %v6120
    %v6122 = vsel %vm1631, %v5557, %v6121
    %v6123 = vsel %vm1633, %v5558, %v6122
    %v6124 = vsel %vm1635, %v5559, %v6123
    %v6125 = vsel %vm1637, %v5560, %v6124
    %v6128 = vsel %vm1607, %v6118, 0.0
    %v6129 = vsel %vm1608, %v6125, 0.0
    %v6146 = vsel %vm1625, %v5562, %v5561
    %v6147 = vsel %vm1627, %v5563, %v6146
    %v6148 = vsel %vm1629, %v5564, %v6147
    %v6149 = vsel %vm1631, %v5565, %v6148
    %v6150 = vsel %vm1633, %v5566, %v6149
    %v6151 = vsel %vm1635, %v5567, %v6150
    %v6152 = vsel %vm1637, %v5568, %v6151
    %v6153 = vsel %vm1625, %v5570, %v5569
    %v6154 = vsel %vm1627, %v5571, %v6153
    %v6155 = vsel %vm1629, %v5572, %v6154
    %v6156 = vsel %vm1631, %v5573, %v6155
    %v6157 = vsel %vm1633, %v5574, %v6156
    %v6158 = vsel %vm1635, %v5575, %v6157
    %v6159 = vsel %vm1637, %v5576, %v6158
    %v6162 = vsel %vm1607, %v6152, 0.0
    %v6163 = vsel %vm1608, %v6159, 0.0
    %v6164 = vpack.c.bf16 %v5514, %v5513
    %v6165 = vpack.c.bf16 %v6163, %v6162
    %v6166 = vpack.c.bf16 %v6129, %v6128
    %v6167 = vpack.c.bf16 %v5538, %v5531
    %v6168 = vld [vmem:[#allocation27] sm:$0xf]
    %v6169 = vld [vmem:[#allocation27 + $0x4] sm:$0xf]
    %v6170 = vld [vmem:[#allocation27 + $0x8] sm:$0xf]
    %v6171 = vld [vmem:[#allocation27 + $0xc] sm:$0xf]
    %v6172 = vld [vmem:[#allocation27 + $0x10] sm:$0xf]
    %v6173 = vld [vmem:[#allocation27 + $0x14] sm:$0xf]
    %v6174 = vld [vmem:[#allocation27 + $0x18] sm:$0xf]
    %v6175 = vld [vmem:[#allocation27 + $0x1c] sm:$0xf]
    %v6176 = vld [vmem:[#allocation27 + $0x20] sm:$0xf]
    %v6177 = vld [vmem:[#allocation27 + $0x24] sm:$0xf]
    %v6178 = vld [vmem:[#allocation27 + $0x28] sm:$0xf]
    %v6179 = vld [vmem:[#allocation27 + $0x2c] sm:$0xf]
    %v6180 = vld [vmem:[#allocation27 + $0x30] sm:$0xf]
    %v6181 = vld [vmem:[#allocation27 + $0x34] sm:$0xf]
    %v6182 = vld [vmem:[#allocation27 + $0x38] sm:$0xf]
    %v6183 = vld [vmem:[#allocation27 + $0x3c] sm:$0xf]
    %v6184 = vld [vmem:[#allocation27 + $0x40] sm:$0xf]
    %v6185 = vld [vmem:[#allocation27 + $0x44] sm:$0xf]
    %v6186 = vld [vmem:[#allocation27 + $0x48] sm:$0xf]
    %v6187 = vld [vmem:[#allocation27 + $0x4c] sm:$0xf]
    %v6188 = vld [vmem:[#allocation27 + $0x50] sm:$0xf]
    %v6189 = vld [vmem:[#allocation27 + $0x54] sm:$0xf]
    %v6190 = vld [vmem:[#allocation27 + $0x58] sm:$0xf]
    %v6191 = vld [vmem:[#allocation27 + $0x5c] sm:$0xf]
    %v6192 = vld [vmem:[#allocation27 + $0x60] sm:$0xf]
    %v6193 = vld [vmem:[#allocation27 + $0x64] sm:$0xf]
    %v6194 = vld [vmem:[#allocation27 + $0x68] sm:$0xf]
    %v6195 = vld [vmem:[#allocation27 + $0x6c] sm:$0xf]
    %v6196 = vld [vmem:[#allocation27 + $0x70] sm:$0xf]
    %v6197 = vld [vmem:[#allocation27 + $0x74] sm:$0xf]
    %v6198 = vld [vmem:[#allocation27 + $0x78] sm:$0xf]
    %v6199 = vld [vmem:[#allocation27 + $0x7c] sm:$0xf]
    %v6200 = vld [vmem:[#allocation27 + $0x80] sm:$0xf]
    %v6201 = vld [vmem:[#allocation27 + $0x84] sm:$0xf]
    %v6202 = vld [vmem:[#allocation27 + $0x88] sm:$0xf]
    %v6203 = vld [vmem:[#allocation27 + $0x8c] sm:$0xf]
    %v6204 = vld [vmem:[#allocation27 + $0x90] sm:$0xf]
    %v6205 = vld [vmem:[#allocation27 + $0x94] sm:$0xf]
    %v6206 = vld [vmem:[#allocation27 + $0x98] sm:$0xf]
    %v6207 = vld [vmem:[#allocation27 + $0x9c] sm:$0xf]
    %v6208 = vld [vmem:[#allocation27 + $0xa0] sm:$0xf]
    %v6209 = vld [vmem:[#allocation27 + $0xa4] sm:$0xf]
    %v6210 = vld [vmem:[#allocation27 + $0xa8] sm:$0xf]
    %v6211 = vld [vmem:[#allocation27 + $0xac] sm:$0xf]
    %v6212 = vld [vmem:[#allocation27 + $0xb0] sm:$0xf]
    %v6213 = vld [vmem:[#allocation27 + $0xb4] sm:$0xf]
    %v6214 = vld [vmem:[#allocation27 + $0xb8] sm:$0xf]
    %v6215 = vld [vmem:[#allocation27 + $0xbc] sm:$0xf]
    %v6216 = vld [vmem:[#allocation27 + $0xc0] sm:$0xf]
    %v6217 = vld [vmem:[#allocation27 + $0xc4] sm:$0xf]
    %v6218 = vld [vmem:[#allocation27 + $0xc8] sm:$0xf]
    %v6219 = vld [vmem:[#allocation27 + $0xcc] sm:$0xf]
    %v6220 = vld [vmem:[#allocation27 + $0xd0] sm:$0xf]
    %v6221 = vld [vmem:[#allocation27 + $0xd4] sm:$0xf]
    %v6222 = vld [vmem:[#allocation27 + $0xd8] sm:$0xf]
    %v6223 = vld [vmem:[#allocation27 + $0xdc] sm:$0xf]
    %v6224 = vld [vmem:[#allocation27 + $0xe0] sm:$0xf]
    %v6225 = vld [vmem:[#allocation27 + $0xe4] sm:$0xf]
    %v6226 = vld [vmem:[#allocation27 + $0xe8] sm:$0xf]
    %v6227 = vld [vmem:[#allocation27 + $0xec] sm:$0xf]
    %v6228 = vld [vmem:[#allocation27 + $0xf0] sm:$0xf]
    %v6229 = vld [vmem:[#allocation27 + $0xf4] sm:$0xf]
    %v6230 = vld [vmem:[#allocation27 + $0xf8] sm:$0xf]
    %v6231 = vld [vmem:[#allocation27 + $0xfc] sm:$0xf]
    %v6232 = vld [vmem:[#allocation27 + $0x100] sm:$0xf]
    %v6233 = vld [vmem:[#allocation27 + $0x104] sm:$0xf]
    %v6234 = vld [vmem:[#allocation27 + $0x108] sm:$0xf]
    %v6235 = vld [vmem:[#allocation27 + $0x10c] sm:$0xf]
    %v6236 = vld [vmem:[#allocation27 + $0x110] sm:$0xf]
    %v6237 = vld [vmem:[#allocation27 + $0x114] sm:$0xf]
    %v6238 = vld [vmem:[#allocation27 + $0x118] sm:$0xf]
    %v6239 = vld [vmem:[#allocation27 + $0x11c] sm:$0xf]
    %v6240 = vld [vmem:[#allocation27 + $0x120] sm:$0xf]
    %v6241 = vld [vmem:[#allocation27 + $0x124] sm:$0xf]
    %v6242 = vld [vmem:[#allocation27 + $0x128] sm:$0xf]
    %v6243 = vld [vmem:[#allocation27 + $0x12c] sm:$0xf]
    %v6244 = vld [vmem:[#allocation27 + $0x130] sm:$0xf]
    %v6245 = vld [vmem:[#allocation27 + $0x134] sm:$0xf]
    %v6246 = vld [vmem:[#allocation27 + $0x138] sm:$0xf]
    %v6247 = vld [vmem:[#allocation27 + $0x13c] sm:$0xf]
    %v6248 = vld [vmem:[%s55] sm:$0xf]
    %v6249 = vld [vmem:[%s55 + $0x4] sm:$0xf]
    %v6250 = vld [vmem:[%s55 + $0x8] sm:$0xf]
    %v6251 = vld [vmem:[%s55 + $0xc] sm:$0xf]
    %v6252 = vld [vmem:[%s55 + $0x10] sm:$0xf]
    %v6253 = vld [vmem:[%s55 + $0x14] sm:$0xf]
    %v6254 = vld [vmem:[%s55 + $0x18] sm:$0xf]
    %v6255 = vld [vmem:[%s55 + $0x1c] sm:$0xf]
    %v6256 = vld [vmem:[%s55 + $0x20] sm:$0xf]
    %v6257 = vld [vmem:[%s55 + $0x24] sm:$0xf]
    %v6258 = vld [vmem:[%s55 + $0x28] sm:$0xf]
    %v6259 = vld [vmem:[%s55 + $0x2c] sm:$0xf]
    %v6260 = vld [vmem:[%s55 + $0x30] sm:$0xf]
    %v6261 = vld [vmem:[%s55 + $0x34] sm:$0xf]
    %v6262 = vld [vmem:[%s55 + $0x38] sm:$0xf]
    %v6263 = vld [vmem:[%s55 + $0x3c] sm:$0xf]
    %v6264 = vld [vmem:[%s55 + $0x40] sm:$0xf]
    %v6265 = vld [vmem:[%s55 + $0x44] sm:$0xf]
    %v6266 = vld [vmem:[%s55 + $0x48] sm:$0xf]
    %v6267 = vld [vmem:[%s55 + $0x4c] sm:$0xf]
    %v6268 = vld [vmem:[%s55 + $0x50] sm:$0xf]
    %v6269 = vld [vmem:[%s55 + $0x54] sm:$0xf]
    %v6270 = vld [vmem:[%s55 + $0x58] sm:$0xf]
    %v6271 = vld [vmem:[%s55 + $0x5c] sm:$0xf]
    %v6272 = vld [vmem:[%s55 + $0x60] sm:$0xf]
    %v6273 = vld [vmem:[%s55 + $0x64] sm:$0xf]
    %v6274 = vld [vmem:[%s55 + $0x68] sm:$0xf]
    %v6275 = vld [vmem:[%s55 + $0x6c] sm:$0xf]
    %v6276 = vld [vmem:[%s55 + $0x70] sm:$0xf]
    %v6277 = vld [vmem:[%s55 + $0x74] sm:$0xf]
    %v6278 = vld [vmem:[%s55 + $0x78] sm:$0xf]
    %v6279 = vld [vmem:[%s55 + $0x7c] sm:$0xf]
    %v6280 = vld [vmem:[%s55 + $0x80] sm:$0xf]
    %v6281 = vld [vmem:[%s55 + $0x84] sm:$0xf]
    %v6282 = vld [vmem:[%s55 + $0x88] sm:$0xf]
    %v6283 = vld [vmem:[%s55 + $0x8c] sm:$0xf]
    %v6284 = vld [vmem:[%s55 + $0x90] sm:$0xf]
    %v6285 = vld [vmem:[%s55 + $0x94] sm:$0xf]
    %v6286 = vld [vmem:[%s55 + $0x98] sm:$0xf]
    %v6287 = vld [vmem:[%s55 + $0x9c] sm:$0xf]
    %v6288 = vld [vmem:[%s55 + $0xa0] sm:$0xf]
    %v6289 = vld [vmem:[%s55 + $0xa4] sm:$0xf]
    %v6290 = vld [vmem:[%s55 + $0xa8] sm:$0xf]
    %v6291 = vld [vmem:[%s55 + $0xac] sm:$0xf]
    %v6292 = vld [vmem:[%s55 + $0xb0] sm:$0xf]
    %v6293 = vld [vmem:[%s55 + $0xb4] sm:$0xf]
    %v6294 = vld [vmem:[%s55 + $0xb8] sm:$0xf]
    %v6295 = vld [vmem:[%s55 + $0xbc] sm:$0xf]
    %v6296 = vld [vmem:[%s55 + $0xc0] sm:$0xf]
    %v6297 = vld [vmem:[%s55 + $0xc4] sm:$0xf]
    %v6298 = vld [vmem:[%s55 + $0xc8] sm:$0xf]
    %v6299 = vld [vmem:[%s55 + $0xcc] sm:$0xf]
    %v6300 = vld [vmem:[%s55 + $0xd0] sm:$0xf]
    %v6301 = vld [vmem:[%s55 + $0xd4] sm:$0xf]
    %v6302 = vld [vmem:[%s55 + $0xd8] sm:$0xf]
    %v6303 = vld [vmem:[%s55 + $0xdc] sm:$0xf]
    %v6304 = vld [vmem:[%s55 + $0xe0] sm:$0xf]
    %v6305 = vld [vmem:[%s55 + $0xe4] sm:$0xf]
    %v6306 = vld [vmem:[%s55 + $0xe8] sm:$0xf]
    %v6307 = vld [vmem:[%s55 + $0xec] sm:$0xf]
    %v6308 = vld [vmem:[%s55 + $0xf0] sm:$0xf]
    %v6309 = vld [vmem:[%s55 + $0xf4] sm:$0xf]
    %v6310 = vld [vmem:[%s55 + $0xf8] sm:$0xf]
    %v6311 = vld [vmem:[%s55 + $0xfc] sm:$0xf]
    %v6376 = vunpack.c.l.b16 %v6248
    %v6377 = vunpack.c.l.b16 %v6249
    %v6378 = vunpack.c.l.b16 %v6250
    %v6379 = vunpack.c.l.b16 %v6251
    %v6380 = vunpack.c.l.b16 %v6252
    %v6381 = vunpack.c.l.b16 %v6253
    %v6382 = vunpack.c.l.b16 %v6254
    %v6383 = vunpack.c.l.b16 %v6255
    %v6384 = vunpack.c.l.b16 %v6256
    %v6385 = vunpack.c.l.b16 %v6257
    %v6386 = vunpack.c.l.b16 %v6258
    %v6387 = vunpack.c.l.b16 %v6259
    %v6388 = vunpack.c.l.b16 %v6260
    %v6389 = vunpack.c.l.b16 %v6261
    %v6390 = vunpack.c.l.b16 %v6262
    %v6391 = vunpack.c.l.b16 %v6263
    %v6392 = vunpack.c.l.b16 %v6264
    %v6393 = vunpack.c.l.b16 %v6265
    %v6394 = vunpack.c.l.b16 %v6266
    %v6395 = vunpack.c.l.b16 %v6267
    %v6396 = vunpack.c.l.b16 %v6268
    %v6397 = vunpack.c.l.b16 %v6269
    %v6398 = vunpack.c.l.b16 %v6270
    %v6399 = vunpack.c.l.b16 %v6271
    %v6400 = vunpack.c.l.b16 %v6272
    %v6401 = vunpack.c.l.b16 %v6273
    %v6402 = vunpack.c.l.b16 %v6274
    %v6403 = vunpack.c.l.b16 %v6275
    %v6404 = vunpack.c.l.b16 %v6276
    %v6405 = vunpack.c.l.b16 %v6277
    %v6406 = vunpack.c.l.b16 %v6278
    %v6407 = vunpack.c.l.b16 %v6279
    %v6408 = vunpack.c.l.b16 %v6280
    %v6409 = vunpack.c.l.b16 %v6281
    %v6410 = vunpack.c.l.b16 %v6282
    %v6411 = vunpack.c.l.b16 %v6283
    %v6412 = vunpack.c.l.b16 %v6284
    %v6413 = vunpack.c.l.b16 %v6285
    %v6414 = vunpack.c.l.b16 %v6286
    %v6415 = vunpack.c.l.b16 %v6287
    %v6416 = vunpack.c.l.b16 %v6288
    %v6417 = vunpack.c.l.b16 %v6289
    %v6418 = vunpack.c.l.b16 %v6290
    %v6419 = vunpack.c.l.b16 %v6291
    %v6420 = vunpack.c.l.b16 %v6292
    %v6421 = vunpack.c.l.b16 %v6293
    %v6422 = vunpack.c.l.b16 %v6294
    %v6423 = vunpack.c.l.b16 %v6295
    %v6424 = vunpack.c.l.b16 %v6296
    %v6425 = vunpack.c.l.b16 %v6297
    %v6426 = vunpack.c.l.b16 %v6298
    %v6427 = vunpack.c.l.b16 %v6299
    %v6428 = vunpack.c.l.b16 %v6300
    %v6429 = vunpack.c.l.b16 %v6301
    %v6430 = vunpack.c.l.b16 %v6302
    %v6431 = vunpack.c.l.b16 %v6303
    %v6432 = vunpack.c.l.b16 %v6304
    %v6433 = vunpack.c.l.b16 %v6305
    %v6434 = vunpack.c.l.b16 %v6306
    %v6435 = vunpack.c.l.b16 %v6307
    %v6436 = vunpack.c.l.b16 %v6308
    %v6437 = vunpack.c.l.b16 %v6309
    %v6438 = vunpack.c.l.b16 %v6310
    %v6439 = vunpack.c.l.b16 %v6311
    %v6440 = vpack.c.b16 %v6377, %v6376
    %v6441 = vpack.c.b16 %v6379, %v6378
    %v6442 = vpack.c.b16 %v6381, %v6380
    %v6443 = vpack.c.b16 %v6383, %v6382
    %v6444 = vpack.c.b16 %v6385, %v6384
    %v6445 = vpack.c.b16 %v6387, %v6386
    %v6446 = vpack.c.b16 %v6389, %v6388
    %v6447 = vpack.c.b16 %v6391, %v6390
    %v6448 = vpack.c.b16 %v6393, %v6392
    %v6449 = vpack.c.b16 %v6395, %v6394
    %v6450 = vpack.c.b16 %v6397, %v6396
    %v6451 = vpack.c.b16 %v6399, %v6398
    %v6452 = vpack.c.b16 %v6401, %v6400
    %v6453 = vpack.c.b16 %v6403, %v6402
    %v6454 = vpack.c.b16 %v6405, %v6404
    %v6455 = vpack.c.b16 %v6407, %v6406
    %v6456 = vpack.c.b16 %v6409, %v6408
    %v6457 = vpack.c.b16 %v6411, %v6410
    %v6458 = vpack.c.b16 %v6413, %v6412
    %v6459 = vpack.c.b16 %v6415, %v6414
    %v6460 = vpack.c.b16 %v6417, %v6416
    %v6461 = vpack.c.b16 %v6419, %v6418
    %v6462 = vpack.c.b16 %v6421, %v6420
    %v6463 = vpack.c.b16 %v6423, %v6422
    %v6464 = vpack.c.b16 %v6425, %v6424
    %v6465 = vpack.c.b16 %v6427, %v6426
    %v6466 = vpack.c.b16 %v6429, %v6428
    %v6467 = vpack.c.b16 %v6431, %v6430
    %v6468 = vpack.c.b16 %v6433, %v6432
    %v6469 = vpack.c.b16 %v6435, %v6434
    %v6470 = vpack.c.b16 %v6437, %v6436
    %v6471 = vpack.c.b16 %v6439, %v6438
    %6504 = vmatprep.subr.bf16.mxu0 0
    %6505 = vmatpush1.bf16.msra.mxu0 %v6447
    %6506 = vmatprep.subr.bf16.mxu0 0
    %6507 = vmatpush1.bf16.msra.mxu0 %v6446
    %6508 = vmatprep.subr.bf16.mxu0 0
    %6509 = vmatpush1.bf16.msra.mxu0 %v6445
    %6510 = vmatprep.subr.bf16.mxu0 0
    %6511 = vmatpush1.bf16.msra.mxu0 %v6444
    %6512 = vmatprep.subr.bf16.mxu0 0
    %6513 = vmatpush1.bf16.msra.mxu0 %v6443
    %6514 = vmatprep.subr.bf16.mxu0 0
    %6515 = vmatpush1.bf16.msra.mxu0 %v6442
    %6516 = vmatprep.subr.bf16.mxu0 0
    %6517 = vmatpush1.bf16.msra.mxu0 %v6441
    %6518 = vmatprep.subr.bf16.mxu0 0
    %6519 = vmatpush1.bf16.msra.mxu0 %v6440
    %6520 = vmatprep.subr.bf16.mxu0 0
    %6521 = vmatpush2.bf16.msra.mxu0 %v6455
    %6522 = vmatprep.subr.bf16.mxu0 0
    %6523 = vmatpush2.bf16.msra.mxu0 %v6454
    %6524 = vmatprep.subr.bf16.mxu0 0
    %6525 = vmatpush2.bf16.msra.mxu0 %v6453
    %6526 = vmatprep.subr.bf16.mxu0 0
    %6527 = vmatpush2.bf16.msra.mxu0 %v6452
    %6528 = vmatprep.subr.bf16.mxu0 0
    %6529 = vmatpush2.bf16.msra.mxu0 %v6451
    %6530 = vmatprep.subr.bf16.mxu0 0
    %6531 = vmatpush2.bf16.msra.mxu0 %v6450
    %6532 = vmatprep.subr.bf16.mxu0 0
    %6533 = vmatpush2.bf16.msra.mxu0 %v6449
    %6534 = vmatprep.subr.bf16.mxu0 0
    %6535 = vmatpush2.bf16.msra.mxu0 %v6448
    %6536 = vmatprep.mubr.bf16.mxu0 %v6165
    %6537 = vmatmul.mubr.bf16.gmra.mxu0 %v6164
    %v6538 = vpop.f32.mrf.mxu0
    %v6539 = vadd.f32 0.0, %v6538
    %v6540 = vpop.f32.mrf.mxu0
    %v6541 = vpop.f32.mrf.mxu0
    %v6542 = vadd.f32 0.0, %v6541
    %v6543 = vpop.f32.mrf.mxu0
    %6544 = vdwg.mxu0
    %6545 = vmatprep.subr.bf16.mxu0 0
    %6546 = vmatpush1.bf16.msra.mxu0 %v6463
    %6547 = vmatprep.subr.bf16.mxu0 0
    %6548 = vmatpush1.bf16.msra.mxu0 %v6462
    %6549 = vmatprep.subr.bf16.mxu0 0
    %6550 = vmatpush1.bf16.msra.mxu0 %v6461
    %6551 = vmatprep.subr.bf16.mxu0 0
    %6552 = vmatpush1.bf16.msra.mxu0 %v6460
    %6553 = vmatprep.subr.bf16.mxu0 0
    %6554 = vmatpush1.bf16.msra.mxu0 %v6459
    %6555 = vmatprep.subr.bf16.mxu0 0
    %6556 = vmatpush1.bf16.msra.mxu0 %v6458
    %6557 = vmatprep.subr.bf16.mxu0 0
    %6558 = vmatpush1.bf16.msra.mxu0 %v6457
    %6559 = vmatprep.subr.bf16.mxu0 0
    %6560 = vmatpush1.bf16.msra.mxu0 %v6456
    %6561 = vmatprep.subr.bf16.mxu0 0
    %6562 = vmatpush2.bf16.msra.mxu0 %v6471
    %6563 = vmatprep.subr.bf16.mxu0 0
    %6564 = vmatpush2.bf16.msra.mxu0 %v6470
    %6565 = vmatprep.subr.bf16.mxu0 0
    %6566 = vmatpush2.bf16.msra.mxu0 %v6469
    %6567 = vmatprep.subr.bf16.mxu0 0
    %6568 = vmatpush2.bf16.msra.mxu0 %v6468
    %6569 = vmatprep.subr.bf16.mxu0 0
    %6570 = vmatpush2.bf16.msra.mxu0 %v6467
    %6571 = vmatprep.subr.bf16.mxu0 0
    %6572 = vmatpush2.bf16.msra.mxu0 %v6466
    %6573 = vmatprep.subr.bf16.mxu0 0
    %6574 = vmatpush2.bf16.msra.mxu0 %v6465
    %6575 = vmatprep.subr.bf16.mxu0 0
    %6576 = vmatpush2.bf16.msra.mxu0 %v6464
    %6577 = vmatprep.mubr.bf16.mxu0 %v6167
    %6578 = vmatmul.mubr.bf16.gmra.mxu0 %v6166
    %v6579 = vpop.f32.mrf.mxu0
    %v6580 = vadd.f32 %v6539, %v6579
    %v6581 = vpop.f32.mrf.mxu0
    %v6582 = vpop.f32.mrf.mxu0
    %v6583 = vadd.f32 %v6542, %v6582
    %v6584 = vpop.f32.mrf.mxu0
    %6585 = vdwg.mxu0
    %v6586 = vmul.f32 %v2109, %v6580
    %v6587 = vmul.f32 %v2114, %v6583
    %v6668 = vunpack.c.l.b16 %v6168
    %v6669 = vunpack.c.l.b16 %v6169
    %v6670 = vunpack.c.l.b16 %v6170
    %v6671 = vunpack.c.l.b16 %v6171
    %v6672 = vunpack.c.l.b16 %v6172
    %v6673 = vunpack.c.l.b16 %v6173
    %v6674 = vunpack.c.l.b16 %v6174
    %v6675 = vunpack.c.l.b16 %v6175
    %v6676 = vunpack.c.l.b16 %v6176
    %v6677 = vunpack.c.l.b16 %v6177
    %v6678 = vunpack.c.l.b16 %v6178
    %v6679 = vunpack.c.l.b16 %v6179
    %v6680 = vunpack.c.l.b16 %v6180
    %v6681 = vunpack.c.l.b16 %v6181
    %v6682 = vunpack.c.l.b16 %v6182
    %v6683 = vunpack.c.l.b16 %v6183
    %v6684 = vunpack.c.l.b16 %v6184
    %v6685 = vunpack.c.l.b16 %v6185
    %v6686 = vunpack.c.l.b16 %v6186
    %v6687 = vunpack.c.l.b16 %v6187
    %v6688 = vunpack.c.l.b16 %v6188
    %v6689 = vunpack.c.l.b16 %v6189
    %v6690 = vunpack.c.l.b16 %v6190
    %v6691 = vunpack.c.l.b16 %v6191
    %v6692 = vunpack.c.l.b16 %v6192
    %v6693 = vunpack.c.l.b16 %v6193
    %v6694 = vunpack.c.l.b16 %v6194
    %v6695 = vunpack.c.l.b16 %v6195
    %v6696 = vunpack.c.l.b16 %v6196
    %v6697 = vunpack.c.l.b16 %v6197
    %v6698 = vunpack.c.l.b16 %v6198
    %v6699 = vunpack.c.l.b16 %v6199
    %v6700 = vunpack.c.l.b16 %v6200
    %v6701 = vunpack.c.l.b16 %v6201
    %v6702 = vunpack.c.l.b16 %v6202
    %v6703 = vunpack.c.l.b16 %v6203
    %v6704 = vunpack.c.l.b16 %v6204
    %v6705 = vunpack.c.l.b16 %v6205
    %v6706 = vunpack.c.l.b16 %v6206
    %v6707 = vunpack.c.l.b16 %v6207
    %v6708 = vunpack.c.l.b16 %v6208
    %v6709 = vunpack.c.l.b16 %v6209
    %v6710 = vunpack.c.l.b16 %v6210
    %v6711 = vunpack.c.l.b16 %v6211
    %v6712 = vunpack.c.l.b16 %v6212
    %v6713 = vunpack.c.l.b16 %v6213
    %v6714 = vunpack.c.l.b16 %v6214
    %v6715 = vunpack.c.l.b16 %v6215
    %v6716 = vunpack.c.l.b16 %v6216
    %v6717 = vunpack.c.l.b16 %v6217
    %v6718 = vunpack.c.l.b16 %v6218
    %v6719 = vunpack.c.l.b16 %v6219
    %v6720 = vunpack.c.l.b16 %v6220
    %v6721 = vunpack.c.l.b16 %v6221
    %v6722 = vunpack.c.l.b16 %v6222
    %v6723 = vunpack.c.l.b16 %v6223
    %v6724 = vunpack.c.l.b16 %v6224
    %v6725 = vunpack.c.l.b16 %v6225
    %v6726 = vunpack.c.l.b16 %v6226
    %v6727 = vunpack.c.l.b16 %v6227
    %v6728 = vunpack.c.l.b16 %v6228
    %v6729 = vunpack.c.l.b16 %v6229
    %v6730 = vunpack.c.l.b16 %v6230
    %v6731 = vunpack.c.l.b16 %v6231
    %v6732 = vunpack.c.l.b16 %v6232
    %v6733 = vunpack.c.l.b16 %v6233
    %v6734 = vunpack.c.l.b16 %v6234
    %v6735 = vunpack.c.l.b16 %v6235
    %v6736 = vunpack.c.l.b16 %v6236
    %v6737 = vunpack.c.l.b16 %v6237
    %v6738 = vunpack.c.l.b16 %v6238
    %v6739 = vunpack.c.l.b16 %v6239
    %v6740 = vunpack.c.l.b16 %v6240
    %v6741 = vunpack.c.l.b16 %v6241
    %v6742 = vunpack.c.l.b16 %v6242
    %v6743 = vunpack.c.l.b16 %v6243
    %v6744 = vunpack.c.l.b16 %v6244
    %v6745 = vunpack.c.l.b16 %v6245
    %v6746 = vunpack.c.l.b16 %v6246
    %v6747 = vunpack.c.l.b16 %v6247
    %v6748 = vpack.c.b16 %v6669, %v6668
    %v6749 = vpack.c.b16 %v6671, %v6670
    %v6750 = vpack.c.b16 %v6673, %v6672
    %v6751 = vpack.c.b16 %v6675, %v6674
    %v6752 = vpack.c.b16 %v6677, %v6676
    %v6753 = vpack.c.b16 %v6679, %v6678
    %v6754 = vpack.c.b16 %v6681, %v6680
    %v6755 = vpack.c.b16 %v6683, %v6682
    %v6756 = vpack.c.b16 %v6685, %v6684
    %v6757 = vpack.c.b16 %v6687, %v6686
    %v6758 = vpack.c.b16 %v6689, %v6688
    %v6759 = vpack.c.b16 %v6691, %v6690
    %v6760 = vpack.c.b16 %v6693, %v6692
    %v6761 = vpack.c.b16 %v6695, %v6694
    %v6762 = vpack.c.b16 %v6697, %v6696
    %v6763 = vpack.c.b16 %v6699, %v6698
    %v6764 = vpack.c.b16 %v6701, %v6700
    %v6765 = vpack.c.b16 %v6703, %v6702
    %v6766 = vpack.c.b16 %v6705, %v6704
    %v6767 = vpack.c.b16 %v6707, %v6706
    %v6768 = vpack.c.b16 %v6709, %v6708
    %v6769 = vpack.c.b16 %v6711, %v6710
    %v6770 = vpack.c.b16 %v6713, %v6712
    %v6771 = vpack.c.b16 %v6715, %v6714
    %v6772 = vpack.c.b16 %v6717, %v6716
    %v6773 = vpack.c.b16 %v6719, %v6718
    %v6774 = vpack.c.b16 %v6721, %v6720
    %v6775 = vpack.c.b16 %v6723, %v6722
    %v6776 = vpack.c.b16 %v6725, %v6724
    %v6777 = vpack.c.b16 %v6727, %v6726
    %v6778 = vpack.c.b16 %v6729, %v6728
    %v6779 = vpack.c.b16 %v6731, %v6730
    %v6780 = vpack.c.b16 %v6733, %v6732
    %v6781 = vpack.c.b16 %v6735, %v6734
    %v6782 = vpack.c.b16 %v6737, %v6736
    %v6783 = vpack.c.b16 %v6739, %v6738
    %v6784 = vpack.c.b16 %v6741, %v6740
    %v6785 = vpack.c.b16 %v6743, %v6742
    %v6786 = vpack.c.b16 %v6745, %v6744
    %v6787 = vpack.c.b16 %v6747, %v6746
    %6828 = vmatprep.subr.bf16.mxu0 0
    %6829 = vmatpush1.bf16.msra.mxu0 %v6755
    %6830 = vmatprep.subr.bf16.mxu0 0
    %6831 = vmatpush1.bf16.msra.mxu0 %v6754
    %6832 = vmatprep.subr.bf16.mxu0 0
    %6833 = vmatpush1.bf16.msra.mxu0 %v6753
    %6834 = vmatprep.subr.bf16.mxu0 0
    %6835 = vmatpush1.bf16.msra.mxu0 %v6752
    %6836 = vmatprep.subr.bf16.mxu0 0
    %6837 = vmatpush1.bf16.msra.mxu0 %v6751
    %6838 = vmatprep.subr.bf16.mxu0 0
    %6839 = vmatpush1.bf16.msra.mxu0 %v6750
    %6840 = vmatprep.subr.bf16.mxu0 0
    %6841 = vmatpush1.bf16.msra.mxu0 %v6749
    %6842 = vmatprep.subr.bf16.mxu0 0
    %6843 = vmatpush1.bf16.msra.mxu0 %v6748
    %6844 = vmatprep.subr.bf16.mxu0 0
    %6845 = vmatpush2.bf16.msra.mxu0 %v6763
    %6846 = vmatprep.subr.bf16.mxu0 0
    %6847 = vmatpush2.bf16.msra.mxu0 %v6762
    %6848 = vmatprep.subr.bf16.mxu0 0
    %6849 = vmatpush2.bf16.msra.mxu0 %v6761
    %6850 = vmatprep.subr.bf16.mxu0 0
    %6851 = vmatpush2.bf16.msra.mxu0 %v6760
    %6852 = vmatprep.subr.bf16.mxu0 0
    %6853 = vmatpush2.bf16.msra.mxu0 %v6759
    %6854 = vmatprep.subr.bf16.mxu0 0
    %6855 = vmatpush2.bf16.msra.mxu0 %v6758
    %6856 = vmatprep.subr.bf16.mxu0 0
    %6857 = vmatpush2.bf16.msra.mxu0 %v6757
    %6858 = vmatprep.subr.bf16.mxu0 0
    %6859 = vmatpush2.bf16.msra.mxu0 %v6756
    %6860 = vmatprep.mubr.bf16.mxu0 %v6164
    %6861 = vmatmul.mubr.bf16.gmra.mxu0 %v5072
    %v6862 = vpop.f32.mrf.mxu0
    %v6863 = vadd.f32 %v6586, %v6862
    %v6864 = vpop.f32.mrf.mxu0
    %v6865 = vpop.f32.mrf.mxu0
    %v6866 = vadd.f32 %v6587, %v6865
    %v6867 = vpop.f32.mrf.mxu0
    %6868 = vdwg.mxu0
    %6869 = vmatprep.subr.bf16.mxu0 0
    %6870 = vmatpush1.bf16.msra.mxu0 %v6771
    %6871 = vmatprep.subr.bf16.mxu0 0
    %6872 = vmatpush1.bf16.msra.mxu0 %v6770
    %6873 = vmatprep.subr.bf16.mxu0 0
    %6874 = vmatpush1.bf16.msra.mxu0 %v6769
    %6875 = vmatprep.subr.bf16.mxu0 0
    %6876 = vmatpush1.bf16.msra.mxu0 %v6768
    %6877 = vmatprep.subr.bf16.mxu0 0
    %6878 = vmatpush1.bf16.msra.mxu0 %v6767
    %6879 = vmatprep.subr.bf16.mxu0 0
    %6880 = vmatpush1.bf16.msra.mxu0 %v6766
    %6881 = vmatprep.subr.bf16.mxu0 0
    %6882 = vmatpush1.bf16.msra.mxu0 %v6765
    %6883 = vmatprep.subr.bf16.mxu0 0
    %6884 = vmatpush1.bf16.msra.mxu0 %v6764
    %6885 = vmatprep.subr.bf16.mxu0 0
    %6886 = vmatpush2.bf16.msra.mxu0 %v6779
    %6887 = vmatprep.subr.bf16.mxu0 0
    %6888 = vmatpush2.bf16.msra.mxu0 %v6778
    %6889 = vmatprep.subr.bf16.mxu0 0
    %6890 = vmatpush2.bf16.msra.mxu0 %v6777
    %6891 = vmatprep.subr.bf16.mxu0 0
    %6892 = vmatpush2.bf16.msra.mxu0 %v6776
    %6893 = vmatprep.subr.bf16.mxu0 0
    %6894 = vmatpush2.bf16.msra.mxu0 %v6775
    %6895 = vmatprep.subr.bf16.mxu0 0
    %6896 = vmatpush2.bf16.msra.mxu0 %v6774
    %6897 = vmatprep.subr.bf16.mxu0 0
    %6898 = vmatpush2.bf16.msra.mxu0 %v6773
    %6899 = vmatprep.subr.bf16.mxu0 0
    %6900 = vmatpush2.bf16.msra.mxu0 %v6772
    %6901 = vmatprep.mubr.bf16.mxu0 %v6166
    %6902 = vmatmul.mubr.bf16.gmra.mxu0 %v6165
    %v6903 = vpop.f32.mrf.mxu0
    %v6904 = vadd.f32 %v6863, %v6903
    %v6905 = vpop.f32.mrf.mxu0
    %v6906 = vpop.f32.mrf.mxu0
    %v6907 = vadd.f32 %v6866, %v6906
    %v6908 = vpop.f32.mrf.mxu0
    %6909 = vdwg.mxu0
    %6910 = vmatprep.subr.bf16.mxu0 0
    %6911 = vmatpush1.bf16.msra.mxu0 %v6787
    %6912 = vmatprep.subr.bf16.mxu0 0
    %6913 = vmatpush1.bf16.msra.mxu0 %v6786
    %6914 = vmatprep.subr.bf16.mxu0 0
    %6915 = vmatpush1.bf16.msra.mxu0 %v6785
    %6916 = vmatprep.subr.bf16.mxu0 0
    %6917 = vmatpush1.bf16.msra.mxu0 %v6784
    %6918 = vmatprep.subr.bf16.mxu0 0
    %6919 = vmatpush1.bf16.msra.mxu0 %v6783
    %6920 = vmatprep.subr.bf16.mxu0 0
    %6921 = vmatpush1.bf16.msra.mxu0 %v6782
    %6922 = vmatprep.subr.bf16.mxu0 0
    %6923 = vmatpush1.bf16.msra.mxu0 %v6781
    %6924 = vmatprep.subr.bf16.mxu0 0
    %6925 = vmatpush1.bf16.msra.mxu0 %v6780
    %6926 = vmatprep.subr.bf16.mxu0 0
    %6927 = vmatpush2.bf16.msra.mxu0 0
    %6928 = vmatprep.subr.bf16.mxu0 0
    %6929 = vmatpush2.bf16.msra.mxu0 0
    %6930 = vmatprep.subr.bf16.mxu0 0
    %6931 = vmatpush2.bf16.msra.mxu0 0
    %6932 = vmatprep.subr.bf16.mxu0 0
    %6933 = vmatpush2.bf16.msra.mxu0 0
    %6934 = vmatprep.subr.bf16.mxu0 0
    %6935 = vmatpush2.bf16.msra.mxu0 0
    %6936 = vmatprep.subr.bf16.mxu0 0
    %6937 = vmatpush2.bf16.msra.mxu0 0
    %6938 = vmatprep.subr.bf16.mxu0 0
    %6939 = vmatpush2.bf16.msra.mxu0 0
    %6940 = vmatprep.subr.bf16.mxu0 0
    %6941 = vmatpush2.bf16.msra.mxu0 0
    %6942 = vmatprep.mubr.bf16.mxu0 0
    %6943 = vmatmul.mubr.bf16.gmra.mxu0 %v6167
    %v6944 = vpop.f32.mrf.mxu0
    %v6945 = vadd.f32 %v6904, %v6944
    %v6946 = vpop.f32.mrf.mxu0
    %v6947 = vpop.f32.mrf.mxu0
    %v6948 = vadd.f32 %v6907, %v6947
    %v6949 = vpop.f32.mrf.mxu0
    %6950 = vdwg.mxu0
    %v6951 = vld [vmem:[#allocation28] sm:$0xf]
    %v6952 = vld [vmem:[#allocation28 + $0x4] sm:$0xf]
    %v6953 = vld [vmem:[#allocation28 + $0x8] sm:$0xf]
    %v6954 = vld [vmem:[#allocation28 + $0xc] sm:$0xf]
    %v6955 = vld [vmem:[#allocation28 + $0x10] sm:$0xf]
    %v6956 = vld [vmem:[#allocation28 + $0x14] sm:$0xf]
    %v6957 = vld [vmem:[#allocation28 + $0x18] sm:$0xf]
    %v6958 = vld [vmem:[#allocation28 + $0x1c] sm:$0xf]
    %v6959 = vld [vmem:[#allocation28 + $0x20] sm:$0xf]
    %v6960 = vld [vmem:[#allocation28 + $0x24] sm:$0xf]
    %v6961 = vld [vmem:[#allocation28 + $0x28] sm:$0xf]
    %v6962 = vld [vmem:[#allocation28 + $0x2c] sm:$0xf]
    %v6963 = vld [vmem:[#allocation28 + $0x30] sm:$0xf]
    %v6964 = vld [vmem:[#allocation28 + $0x34] sm:$0xf]
    %v6965 = vld [vmem:[#allocation28 + $0x38] sm:$0xf]
    %v6966 = vld [vmem:[#allocation28 + $0x3c] sm:$0xf]
    %v6967 = vld [vmem:[#allocation28 + $0x40] sm:$0xf]
    %v6968 = vld [vmem:[#allocation28 + $0x44] sm:$0xf]
    %v6969 = vld [vmem:[#allocation28 + $0x48] sm:$0xf]
    %v6970 = vld [vmem:[#allocation28 + $0x4c] sm:$0xf]
    %v6971 = vld [vmem:[#allocation28 + $0x50] sm:$0xf]
    %v6972 = vld [vmem:[#allocation28 + $0x54] sm:$0xf]
    %v6973 = vld [vmem:[#allocation28 + $0x58] sm:$0xf]
    %v6974 = vld [vmem:[#allocation28 + $0x5c] sm:$0xf]
    %v6975 = vld [vmem:[#allocation28 + $0x60] sm:$0xf]
    %v6976 = vld [vmem:[#allocation28 + $0x64] sm:$0xf]
    %v6977 = vld [vmem:[#allocation28 + $0x68] sm:$0xf]
    %v6978 = vld [vmem:[#allocation28 + $0x6c] sm:$0xf]
    %v6979 = vld [vmem:[#allocation28 + $0x70] sm:$0xf]
    %v6980 = vld [vmem:[#allocation28 + $0x74] sm:$0xf]
    %v6981 = vld [vmem:[#allocation28 + $0x78] sm:$0xf]
    %v6982 = vld [vmem:[#allocation28 + $0x7c] sm:$0xf]
    %v6983 = vld [vmem:[#allocation28 + $0x80] sm:$0xf]
    %v6984 = vld [vmem:[#allocation28 + $0x84] sm:$0xf]
    %v6985 = vld [vmem:[#allocation28 + $0x88] sm:$0xf]
    %v6986 = vld [vmem:[#allocation28 + $0x8c] sm:$0xf]
    %v6987 = vld [vmem:[#allocation28 + $0x90] sm:$0xf]
    %v6988 = vld [vmem:[#allocation28 + $0x94] sm:$0xf]
    %v6989 = vld [vmem:[#allocation28 + $0x98] sm:$0xf]
    %v6990 = vld [vmem:[#allocation28 + $0x9c] sm:$0xf]
    %v6991 = vld [vmem:[#allocation28 + $0xa0] sm:$0xf]
    %v6992 = vld [vmem:[#allocation28 + $0xa4] sm:$0xf]
    %v6993 = vld [vmem:[#allocation28 + $0xa8] sm:$0xf]
    %v6994 = vld [vmem:[#allocation28 + $0xac] sm:$0xf]
    %v6995 = vld [vmem:[#allocation28 + $0xb0] sm:$0xf]
    %v6996 = vld [vmem:[#allocation28 + $0xb4] sm:$0xf]
    %v6997 = vld [vmem:[#allocation28 + $0xb8] sm:$0xf]
    %v6998 = vld [vmem:[#allocation28 + $0xbc] sm:$0xf]
    %v6999 = vld [vmem:[#allocation28 + $0xc0] sm:$0xf]
    %v7000 = vld [vmem:[#allocation28 + $0xc4] sm:$0xf]
    %v7001 = vld [vmem:[#allocation28 + $0xc8] sm:$0xf]
    %v7002 = vld [vmem:[#allocation28 + $0xcc] sm:$0xf]
    %v7003 = vld [vmem:[#allocation28 + $0xd0] sm:$0xf]
    %v7004 = vld [vmem:[#allocation28 + $0xd4] sm:$0xf]
    %v7005 = vld [vmem:[#allocation28 + $0xd8] sm:$0xf]
    %v7006 = vld [vmem:[#allocation28 + $0xdc] sm:$0xf]
    %v7007 = vld [vmem:[#allocation28 + $0xe0] sm:$0xf]
    %v7008 = vld [vmem:[#allocation28 + $0xe4] sm:$0xf]
    %v7009 = vld [vmem:[#allocation28 + $0xe8] sm:$0xf]
    %v7010 = vld [vmem:[#allocation28 + $0xec] sm:$0xf]
    %v7011 = vld [vmem:[#allocation28 + $0xf0] sm:$0xf]
    %v7012 = vld [vmem:[#allocation28 + $0xf4] sm:$0xf]
    %v7013 = vld [vmem:[#allocation28 + $0xf8] sm:$0xf]
    %v7014 = vld [vmem:[#allocation28 + $0xfc] sm:$0xf]
    %v7079 = vunpack.c.l.b16 %v6951
    %v7080 = vunpack.c.l.b16 %v6952
    %v7081 = vunpack.c.l.b16 %v6953
    %v7082 = vunpack.c.l.b16 %v6954
    %v7083 = vunpack.c.l.b16 %v6955
    %v7084 = vunpack.c.l.b16 %v6956
    %v7085 = vunpack.c.l.b16 %v6957
    %v7086 = vunpack.c.l.b16 %v6958
    %v7087 = vunpack.c.l.b16 %v6959
    %v7088 = vunpack.c.l.b16 %v6960
    %v7089 = vunpack.c.l.b16 %v6961
    %v7090 = vunpack.c.l.b16 %v6962
    %v7091 = vunpack.c.l.b16 %v6963
    %v7092 = vunpack.c.l.b16 %v6964
    %v7093 = vunpack.c.l.b16 %v6965
    %v7094 = vunpack.c.l.b16 %v6966
    %v7095 = vunpack.c.l.b16 %v6967
    %v7096 = vunpack.c.l.b16 %v6968
    %v7097 = vunpack.c.l.b16 %v6969
    %v7098 = vunpack.c.l.b16 %v6970
    %v7099 = vunpack.c.l.b16 %v6971
    %v7100 = vunpack.c.l.b16 %v6972
    %v7101 = vunpack.c.l.b16 %v6973
    %v7102 = vunpack.c.l.b16 %v6974
    %v7103 = vunpack.c.l.b16 %v6975
    %v7104 = vunpack.c.l.b16 %v6976
    %v7105 = vunpack.c.l.b16 %v6977
    %v7106 = vunpack.c.l.b16 %v6978
    %v7107 = vunpack.c.l.b16 %v6979
    %v7108 = vunpack.c.l.b16 %v6980
    %v7109 = vunpack.c.l.b16 %v6981
    %v7110 = vunpack.c.l.b16 %v6982
    %v7111 = vunpack.c.l.b16 %v6983
    %v7112 = vunpack.c.l.b16 %v6984
    %v7113 = vunpack.c.l.b16 %v6985
    %v7114 = vunpack.c.l.b16 %v6986
    %v7115 = vunpack.c.l.b16 %v6987
    %v7116 = vunpack.c.l.b16 %v6988
    %v7117 = vunpack.c.l.b16 %v6989
    %v7118 = vunpack.c.l.b16 %v6990
    %v7119 = vunpack.c.l.b16 %v6991
    %v7120 = vunpack.c.l.b16 %v6992
    %v7121 = vunpack.c.l.b16 %v6993
    %v7122 = vunpack.c.l.b16 %v6994
    %v7123 = vunpack.c.l.b16 %v6995
    %v7124 = vunpack.c.l.b16 %v6996
    %v7125 = vunpack.c.l.b16 %v6997
    %v7126 = vunpack.c.l.b16 %v6998
    %v7127 = vunpack.c.l.b16 %v6999
    %v7128 = vunpack.c.l.b16 %v7000
    %v7129 = vunpack.c.l.b16 %v7001
    %v7130 = vunpack.c.l.b16 %v7002
    %v7131 = vunpack.c.l.b16 %v7003
    %v7132 = vunpack.c.l.b16 %v7004
    %v7133 = vunpack.c.l.b16 %v7005
    %v7134 = vunpack.c.l.b16 %v7006
    %v7135 = vunpack.c.l.b16 %v7007
    %v7136 = vunpack.c.l.b16 %v7008
    %v7137 = vunpack.c.l.b16 %v7009
    %v7138 = vunpack.c.l.b16 %v7010
    %v7139 = vunpack.c.l.b16 %v7011
    %v7140 = vunpack.c.l.b16 %v7012
    %v7141 = vunpack.c.l.b16 %v7013
    %v7142 = vunpack.c.l.b16 %v7014
    %v7143 = vpack.c.b16 %v7080, %v7079
    %v7144 = vpack.c.b16 %v7082, %v7081
    %v7145 = vpack.c.b16 %v7084, %v7083
    %v7146 = vpack.c.b16 %v7086, %v7085
    %v7147 = vpack.c.b16 %v7088, %v7087
    %v7148 = vpack.c.b16 %v7090, %v7089
    %v7149 = vpack.c.b16 %v7092, %v7091
    %v7150 = vpack.c.b16 %v7094, %v7093
    %v7151 = vpack.c.b16 %v7096, %v7095
    %v7152 = vpack.c.b16 %v7098, %v7097
    %v7153 = vpack.c.b16 %v7100, %v7099
    %v7154 = vpack.c.b16 %v7102, %v7101
    %v7155 = vpack.c.b16 %v7104, %v7103
    %v7156 = vpack.c.b16 %v7106, %v7105
    %v7157 = vpack.c.b16 %v7108, %v7107
    %v7158 = vpack.c.b16 %v7110, %v7109
    %v7159 = vpack.c.b16 %v7112, %v7111
    %v7160 = vpack.c.b16 %v7114, %v7113
    %v7161 = vpack.c.b16 %v7116, %v7115
    %v7162 = vpack.c.b16 %v7118, %v7117
    %v7163 = vpack.c.b16 %v7120, %v7119
    %v7164 = vpack.c.b16 %v7122, %v7121
    %v7165 = vpack.c.b16 %v7124, %v7123
    %v7166 = vpack.c.b16 %v7126, %v7125
    %v7167 = vpack.c.b16 %v7128, %v7127
    %v7168 = vpack.c.b16 %v7130, %v7129
    %v7169 = vpack.c.b16 %v7132, %v7131
    %v7170 = vpack.c.b16 %v7134, %v7133
    %v7171 = vpack.c.b16 %v7136, %v7135
    %v7172 = vpack.c.b16 %v7138, %v7137
    %v7173 = vpack.c.b16 %v7140, %v7139
    %v7174 = vpack.c.b16 %v7142, %v7141
    %7207 = vmatprep.subr.bf16.mxu0 0
    %7208 = vmatpush1.bf16.msra.mxu0 %v7150
    %7209 = vmatprep.subr.bf16.mxu0 0
    %7210 = vmatpush1.bf16.msra.mxu0 %v7149
    %7211 = vmatprep.subr.bf16.mxu0 0
    %7212 = vmatpush1.bf16.msra.mxu0 %v7148
    %7213 = vmatprep.subr.bf16.mxu0 0
    %7214 = vmatpush1.bf16.msra.mxu0 %v7147
    %7215 = vmatprep.subr.bf16.mxu0 0
    %7216 = vmatpush1.bf16.msra.mxu0 %v7146
    %7217 = vmatprep.subr.bf16.mxu0 0
    %7218 = vmatpush1.bf16.msra.mxu0 %v7145
    %7219 = vmatprep.subr.bf16.mxu0 0
    %7220 = vmatpush1.bf16.msra.mxu0 %v7144
    %7221 = vmatprep.subr.bf16.mxu0 0
    %7222 = vmatpush1.bf16.msra.mxu0 %v7143
    %7223 = vmatprep.subr.bf16.mxu0 0
    %7224 = vmatpush2.bf16.msra.mxu0 %v7158
    %7225 = vmatprep.subr.bf16.mxu0 0
    %7226 = vmatpush2.bf16.msra.mxu0 %v7157
    %7227 = vmatprep.subr.bf16.mxu0 0
    %7228 = vmatpush2.bf16.msra.mxu0 %v7156
    %7229 = vmatprep.subr.bf16.mxu0 0
    %7230 = vmatpush2.bf16.msra.mxu0 %v7155
    %7231 = vmatprep.subr.bf16.mxu0 0
    %7232 = vmatpush2.bf16.msra.mxu0 %v7154
    %7233 = vmatprep.subr.bf16.mxu0 0
    %7234 = vmatpush2.bf16.msra.mxu0 %v7153
    %7235 = vmatprep.subr.bf16.mxu0 0
    %7236 = vmatpush2.bf16.msra.mxu0 %v7152
    %7237 = vmatprep.subr.bf16.mxu0 0
    %7238 = vmatpush2.bf16.msra.mxu0 %v7151
    %7239 = vmatprep.mubr.bf16.mxu0 %v6165
    %7240 = vmatmul.mubr.bf16.gmra.mxu0 %v6164
    %v7241 = vpop.f32.mrf.mxu0
    %v7242 = vadd.f32 0.0, %v7241
    %v7243 = vpop.f32.mrf.mxu0
    %v7244 = vpop.f32.mrf.mxu0
    %v7245 = vadd.f32 0.0, %v7244
    %v7246 = vpop.f32.mrf.mxu0
    %7247 = vdwg.mxu0
    %7248 = vmatprep.subr.bf16.mxu0 0
    %7249 = vmatpush1.bf16.msra.mxu0 %v7166
    %7250 = vmatprep.subr.bf16.mxu0 0
    %7251 = vmatpush1.bf16.msra.mxu0 %v7165
    %7252 = vmatprep.subr.bf16.mxu0 0
    %7253 = vmatpush1.bf16.msra.mxu0 %v7164
    %7254 = vmatprep.subr.bf16.mxu0 0
    %7255 = vmatpush1.bf16.msra.mxu0 %v7163
    %7256 = vmatprep.subr.bf16.mxu0 0
    %7257 = vmatpush1.bf16.msra.mxu0 %v7162
    %7258 = vmatprep.subr.bf16.mxu0 0
    %7259 = vmatpush1.bf16.msra.mxu0 %v7161
    %7260 = vmatprep.subr.bf16.mxu0 0
    %7261 = vmatpush1.bf16.msra.mxu0 %v7160
    %7262 = vmatprep.subr.bf16.mxu0 0
    %7263 = vmatpush1.bf16.msra.mxu0 %v7159
    %7264 = vmatprep.subr.bf16.mxu0 0
    %7265 = vmatpush2.bf16.msra.mxu0 %v7174
    %7266 = vmatprep.subr.bf16.mxu0 0
    %7267 = vmatpush2.bf16.msra.mxu0 %v7173
    %7268 = vmatprep.subr.bf16.mxu0 0
    %7269 = vmatpush2.bf16.msra.mxu0 %v7172
    %7270 = vmatprep.subr.bf16.mxu0 0
    %7271 = vmatpush2.bf16.msra.mxu0 %v7171
    %7272 = vmatprep.subr.bf16.mxu0 0
    %7273 = vmatpush2.bf16.msra.mxu0 %v7170
    %7274 = vmatprep.subr.bf16.mxu0 0
    %7275 = vmatpush2.bf16.msra.mxu0 %v7169
    %7276 = vmatprep.subr.bf16.mxu0 0
    %7277 = vmatpush2.bf16.msra.mxu0 %v7168
    %7278 = vmatprep.subr.bf16.mxu0 0
    %7279 = vmatpush2.bf16.msra.mxu0 %v7167
    %7280 = vmatprep.mubr.bf16.mxu0 %v6167
    %7281 = vmatmul.mubr.bf16.gmra.mxu0 %v6166
    %v7282 = vpop.f32.mrf.mxu0
    %v7283 = vadd.f32 %v7242, %v7282
    %v7284 = vpop.f32.mrf.mxu0
    %v7285 = vpop.f32.mrf.mxu0
    %v7286 = vadd.f32 %v7245, %v7285
    %v7287 = vpop.f32.mrf.mxu0
    %7288 = vdwg.mxu0
    %v7289 = vmul.f32 %v2822, %v7283
    %v7290 = vmul.f32 %v2827, %v7286
    %v7291 = vadd.f32 %v6945, %v7289
    %v7292 = vadd.f32 %v6948, %v7290
    %v7293 = vld [vmem:[%s59] sm:$0x1]
    %v7295 = vlaneseq
    %v7296 = vshrl.u32 %v7295, 7
    %v7297 = vsub.s32 0, %v7296
    %v7298 = vrot.slane %v7293, %v7297
    %v7300 = vadd.f32 %v7291, %v7298
    %v7301 = vadd.f32 %v7292, %v7298
    %v7302 = vpack.c.bf16 %v7301, %v7300
    %v7304 = vsel %vm530, %v511, 0
    %7306 = vmatprep.subr.bf16.mxu0 0
    %7307 = vmatpush1.bf16.msra.mxu0 0
    %7308 = vmatprep.subr.bf16.mxu0 0
    %7309 = vmatpush1.bf16.msra.mxu0 0
    %7310 = vmatprep.subr.bf16.mxu0 0
    %7311 = vmatpush1.bf16.msra.mxu0 0
    %7312 = vmatprep.subr.bf16.mxu0 0
    %7313 = vmatpush1.bf16.msra.mxu0 0
    %7314 = vmatprep.subr.bf16.mxu0 0
    %7315 = vmatpush1.bf16.msra.mxu0 0
    %7316 = vmatprep.subr.bf16.mxu0 0
    %7317 = vmatpush1.bf16.msra.mxu0 0
    %7318 = vmatprep.subr.bf16.mxu0 0
    %7319 = vmatpush1.bf16.msra.mxu0 0
    %7320 = vmatprep.subr.bf16.mxu0 %v5072
    %7321 = vmatpush1.bf16.msra.mxu0 %v2842
    %7322 = vmatprep.subr.bf16.mxu0 0
    %7323 = vmatpush2.bf16.msra.mxu0 0
    %7324 = vmatprep.subr.bf16.mxu0 0
    %7325 = vmatpush2.bf16.msra.mxu0 0
    %7326 = vmatprep.subr.bf16.mxu0 0
    %7327 = vmatpush2.bf16.msra.mxu0 0
    %7328 = vmatprep.subr.bf16.mxu0 0
    %7329 = vmatpush2.bf16.msra.mxu0 0
    %7330 = vmatprep.subr.bf16.mxu0 0
    %7331 = vmatpush2.bf16.msra.mxu0 0
    %7332 = vmatprep.subr.bf16.mxu0 0
    %7333 = vmatpush2.bf16.msra.mxu0 0
    %7334 = vmatprep.subr.bf16.mxu0 0
    %7335 = vmatpush2.bf16.msra.mxu0 0
    %7336 = vmatprep.subr.bf16.mxu0 0
    %7337 = vmatpush2.bf16.msra.mxu0 0
    %7338 = vmatprep.mubr.bf16.mxu0 0
    %7339 = vmatmul.mubr.bf16.gmra.mxu0 %v7304
    %v7340 = vpop.f32.mrf.mxu0
    %v7341 = vadd.f32 0.0, %v7340
    %v7342 = vpop.f32.mrf.mxu0
    %v7343 = vadd.f32 0.0, %v7342
    %v7344 = vpop.f32.mrf.mxu0
    %v7345 = vpop.f32.mrf.mxu0
    %7346 = vdwg.mxu0
    %7347 = vmatprep.subr.bf16.mxu0 0
    %7348 = vmatpush1.bf16.msra.mxu0 0
    %7349 = vmatprep.subr.bf16.mxu0 0
    %7350 = vmatpush1.bf16.msra.mxu0 0
    %7351 = vmatprep.subr.bf16.mxu0 0
    %7352 = vmatpush1.bf16.msra.mxu0 0
    %7353 = vmatprep.subr.bf16.mxu0 0
    %7354 = vmatpush1.bf16.msra.mxu0 0
    %7355 = vmatprep.subr.bf16.mxu0 0
    %7356 = vmatpush1.bf16.msra.mxu0 0
    %7357 = vmatprep.subr.bf16.mxu0 0
    %7358 = vmatpush1.bf16.msra.mxu0 0
    %7359 = vmatprep.subr.bf16.mxu0 0
    %7360 = vmatpush1.bf16.msra.mxu0 0
    %7361 = vmatprep.subr.bf16.mxu0 0
    %7362 = vmatpush1.bf16.msra.mxu0 %v7302
    %7363 = vmatprep.subr.bf16.mxu0 0
    %7364 = vmatpush2.bf16.msra.mxu0 0
    %7365 = vmatprep.subr.bf16.mxu0 0
    %7366 = vmatpush2.bf16.msra.mxu0 0
    %7367 = vmatprep.subr.bf16.mxu0 0
    %7368 = vmatpush2.bf16.msra.mxu0 0
    %7369 = vmatprep.subr.bf16.mxu0 0
    %7370 = vmatpush2.bf16.msra.mxu0 0
    %7371 = vmatprep.subr.bf16.mxu0 0
    %7372 = vmatpush2.bf16.msra.mxu0 0
    %7373 = vmatprep.subr.bf16.mxu0 0
    %7374 = vmatpush2.bf16.msra.mxu0 0
    %7375 = vmatprep.subr.bf16.mxu0 0
    %7376 = vmatpush2.bf16.msra.mxu0 0
    %7377 = vmatprep.subr.bf16.mxu0 0
    %7378 = vmatpush2.bf16.msra.mxu0 0
    %7379 = vmatprep.mubr.bf16.mxu0 0
    %7380 = vmatmul.mubr.bf16.gmra.mxu0 %v7304
    %v7381 = vpop.f32.mrf.mxu0
    %v7382 = vadd.f32 0.0, %v7381
    %v7383 = vpop.f32.mrf.mxu0
    %v7384 = vpop.f32.mrf.mxu0
    %v7385 = vpop.f32.mrf.mxu0
    %7386 = vdwg.mxu0
    %v7387 = vpack.c.bf16 %v7341, %v7341
    %v7388 = vpack.c.bf16 %v7343, %v7343
    %v7389 = vpack.c.bf16 %v7382, %v7382
    %v7390 = vld [vmem:[#allocation30] sm:$0xf]
    %v7391 = vld [vmem:[#allocation30 + $0x4] sm:$0xf]
    %v7392 = vld [vmem:[#allocation30 + $0x8] sm:$0xf]
    %v7393 = vld [vmem:[#allocation30 + $0xc] sm:$0xf]
    %v7394 = vld [vmem:[#allocation30 + $0x10] sm:$0xf]
    %v7395 = vld [vmem:[#allocation30 + $0x14] sm:$0xf]
    %v7396 = vld [vmem:[#allocation30 + $0x18] sm:$0xf]
    %v7397 = vld [vmem:[#allocation30 + $0x1c] sm:$0xf]
    %v7398 = vld [vmem:[#allocation30 + $0x20] sm:$0xf]
    %v7399 = vld [vmem:[#allocation30 + $0x24] sm:$0xf]
    %v7400 = vld [vmem:[#allocation30 + $0x28] sm:$0xf]
    %v7401 = vld [vmem:[#allocation30 + $0x2c] sm:$0xf]
    %v7402 = vld [vmem:[#allocation30 + $0x30] sm:$0xf]
    %v7403 = vld [vmem:[#allocation30 + $0x34] sm:$0xf]
    %v7404 = vld [vmem:[#allocation30 + $0x38] sm:$0xf]
    %v7405 = vld [vmem:[#allocation30 + $0x3c] sm:$0xf]
    %v7406 = vld [vmem:[#allocation30 + $0x40] sm:$0xf]
    %v7407 = vld [vmem:[#allocation30 + $0x44] sm:$0xf]
    %v7408 = vld [vmem:[#allocation30 + $0x48] sm:$0xf]
    %v7409 = vld [vmem:[#allocation30 + $0x4c] sm:$0xf]
    %v7410 = vld [vmem:[#allocation30 + $0x50] sm:$0xf]
    %v7411 = vld [vmem:[#allocation30 + $0x54] sm:$0xf]
    %v7412 = vld [vmem:[#allocation30 + $0x58] sm:$0xf]
    %v7413 = vld [vmem:[#allocation30 + $0x5c] sm:$0xf]
    %v7414 = vld [vmem:[#allocation30 + $0x60] sm:$0xf]
    %v7415 = vld [vmem:[#allocation30 + $0x64] sm:$0xf]
    %v7416 = vld [vmem:[#allocation30 + $0x68] sm:$0xf]
    %v7417 = vld [vmem:[#allocation30 + $0x6c] sm:$0xf]
    %v7418 = vld [vmem:[#allocation30 + $0x70] sm:$0xf]
    %v7419 = vld [vmem:[#allocation30 + $0x74] sm:$0xf]
    %v7420 = vld [vmem:[#allocation30 + $0x78] sm:$0xf]
    %v7421 = vld [vmem:[#allocation30 + $0x7c] sm:$0xf]
    %v7422 = vld [vmem:[#allocation30 + $0x80] sm:$0xf]
    %v7423 = vld [vmem:[#allocation30 + $0x84] sm:$0xf]
    %v7424 = vld [vmem:[#allocation30 + $0x88] sm:$0xf]
    %v7425 = vld [vmem:[#allocation30 + $0x8c] sm:$0xf]
    %v7426 = vld [vmem:[#allocation30 + $0x90] sm:$0xf]
    %v7427 = vld [vmem:[#allocation30 + $0x94] sm:$0xf]
    %v7428 = vld [vmem:[#allocation30 + $0x98] sm:$0xf]
    %v7429 = vld [vmem:[#allocation30 + $0x9c] sm:$0xf]
    %v7430 = vld [vmem:[#allocation30 + $0xa0] sm:$0xf]
    %v7431 = vld [vmem:[#allocation30 + $0xa4] sm:$0xf]
    %v7432 = vld [vmem:[#allocation30 + $0xa8] sm:$0xf]
    %v7433 = vld [vmem:[#allocation30 + $0xac] sm:$0xf]
    %v7434 = vld [vmem:[#allocation30 + $0xb0] sm:$0xf]
    %v7435 = vld [vmem:[#allocation30 + $0xb4] sm:$0xf]
    %v7436 = vld [vmem:[#allocation30 + $0xb8] sm:$0xf]
    %v7437 = vld [vmem:[#allocation30 + $0xbc] sm:$0xf]
    %v7438 = vld [vmem:[%s63] sm:$0x1]
    %v7440 = vlaneseq
    %v7441 = vshrl.u32 %v7440, 7
    %v7442 = vsub.s32 0, %v7441
    %v7443 = vrot.slane %v7438, %v7442
    %v7493 = vunpack.c.l.b16 %v7390
    %v7494 = vunpack.c.l.b16 %v7391
    %v7495 = vunpack.c.l.b16 %v7392
    %v7496 = vunpack.c.l.b16 %v7393
    %v7497 = vunpack.c.l.b16 %v7394
    %v7498 = vunpack.c.l.b16 %v7395
    %v7499 = vunpack.c.l.b16 %v7396
    %v7500 = vunpack.c.l.b16 %v7397
    %v7501 = vunpack.c.l.b16 %v7398
    %v7502 = vunpack.c.l.b16 %v7399
    %v7503 = vunpack.c.l.b16 %v7400
    %v7504 = vunpack.c.l.b16 %v7401
    %v7505 = vunpack.c.l.b16 %v7402
    %v7506 = vunpack.c.l.b16 %v7403
    %v7507 = vunpack.c.l.b16 %v7404
    %v7508 = vunpack.c.l.b16 %v7405
    %v7509 = vunpack.c.l.b16 %v7406
    %v7510 = vunpack.c.l.b16 %v7407
    %v7511 = vunpack.c.l.b16 %v7408
    %v7512 = vunpack.c.l.b16 %v7409
    %v7513 = vunpack.c.l.b16 %v7410
    %v7514 = vunpack.c.l.b16 %v7411
    %v7515 = vunpack.c.l.b16 %v7412
    %v7516 = vunpack.c.l.b16 %v7413
    %v7517 = vunpack.c.l.b16 %v7414
    %v7518 = vunpack.c.l.b16 %v7415
    %v7519 = vunpack.c.l.b16 %v7416
    %v7520 = vunpack.c.l.b16 %v7417
    %v7521 = vunpack.c.l.b16 %v7418
    %v7522 = vunpack.c.l.b16 %v7419
    %v7523 = vunpack.c.l.b16 %v7420
    %v7524 = vunpack.c.l.b16 %v7421
    %v7525 = vunpack.c.l.b16 %v7422
    %v7526 = vunpack.c.l.b16 %v7423
    %v7527 = vunpack.c.l.b16 %v7424
    %v7528 = vunpack.c.l.b16 %v7425
    %v7529 = vunpack.c.l.b16 %v7426
    %v7530 = vunpack.c.l.b16 %v7427
    %v7531 = vunpack.c.l.b16 %v7428
    %v7532 = vunpack.c.l.b16 %v7429
    %v7533 = vunpack.c.l.b16 %v7430
    %v7534 = vunpack.c.l.b16 %v7431
    %v7535 = vunpack.c.l.b16 %v7432
    %v7536 = vunpack.c.l.b16 %v7433
    %v7537 = vunpack.c.l.b16 %v7434
    %v7538 = vunpack.c.l.b16 %v7435
    %v7539 = vunpack.c.l.b16 %v7436
    %v7540 = vunpack.c.l.b16 %v7437
    %v7541 = vpack.c.b16 %v7494, %v7493
    %v7542 = vpack.c.b16 %v7496, %v7495
    %v7543 = vpack.c.b16 %v7498, %v7497
    %v7544 = vpack.c.b16 %v7500, %v7499
    %v7545 = vpack.c.b16 %v7502, %v7501
    %v7546 = vpack.c.b16 %v7504, %v7503
    %v7547 = vpack.c.b16 %v7506, %v7505
    %v7548 = vpack.c.b16 %v7508, %v7507
    %v7549 = vpack.c.b16 %v7510, %v7509
    %v7550 = vpack.c.b16 %v7512, %v7511
    %v7551 = vpack.c.b16 %v7514, %v7513
    %v7552 = vpack.c.b16 %v7516, %v7515
    %v7553 = vpack.c.b16 %v7518, %v7517
    %v7554 = vpack.c.b16 %v7520, %v7519
    %v7555 = vpack.c.b16 %v7522, %v7521
    %v7556 = vpack.c.b16 %v7524, %v7523
    %v7557 = vpack.c.b16 %v7526, %v7525
    %v7558 = vpack.c.b16 %v7528, %v7527
    %v7559 = vpack.c.b16 %v7530, %v7529
    %v7560 = vpack.c.b16 %v7532, %v7531
    %v7561 = vpack.c.b16 %v7534, %v7533
    %v7562 = vpack.c.b16 %v7536, %v7535
    %v7563 = vpack.c.b16 %v7538, %v7537
    %v7564 = vpack.c.b16 %v7540, %v7539
    %7589 = vmatprep.subr.bf16.mxu0 0
    %7590 = vmatpush1.bf16.msra.mxu0 %v7548
    %7591 = vmatprep.subr.bf16.mxu0 0
    %7592 = vmatpush1.bf16.msra.mxu0 %v7547
    %7593 = vmatprep.subr.bf16.mxu0 0
    %7594 = vmatpush1.bf16.msra.mxu0 %v7546
    %7595 = vmatprep.subr.bf16.mxu0 0
    %7596 = vmatpush1.bf16.msra.mxu0 %v7545
    %7597 = vmatprep.subr.bf16.mxu0 0
    %7598 = vmatpush1.bf16.msra.mxu0 %v7544
    %7599 = vmatprep.subr.bf16.mxu0 0
    %7600 = vmatpush1.bf16.msra.mxu0 %v7543
    %7601 = vmatprep.subr.bf16.mxu0 0
    %7602 = vmatpush1.bf16.msra.mxu0 %v7542
    %7603 = vmatprep.subr.bf16.mxu0 0
    %7604 = vmatpush1.bf16.msra.mxu0 %v7541
    %7605 = vmatprep.subr.bf16.mxu0 0
    %7606 = vmatpush2.bf16.msra.mxu0 %v7556
    %7607 = vmatprep.subr.bf16.mxu0 0
    %7608 = vmatpush2.bf16.msra.mxu0 %v7555
    %7609 = vmatprep.subr.bf16.mxu0 0
    %7610 = vmatpush2.bf16.msra.mxu0 %v7554
    %7611 = vmatprep.subr.bf16.mxu0 0
    %7612 = vmatpush2.bf16.msra.mxu0 %v7553
    %7613 = vmatprep.subr.bf16.mxu0 0
    %7614 = vmatpush2.bf16.msra.mxu0 %v7552
    %7615 = vmatprep.subr.bf16.mxu0 0
    %7616 = vmatpush2.bf16.msra.mxu0 %v7551
    %7617 = vmatprep.subr.bf16.mxu0 0
    %7618 = vmatpush2.bf16.msra.mxu0 %v7550
    %7619 = vmatprep.subr.bf16.mxu0 0
    %7620 = vmatpush2.bf16.msra.mxu0 %v7549
    %7621 = vmatprep.mubr.bf16.mxu0 %v7388
    %7622 = vmatmul.mubr.bf16.gmra.mxu0 %v7387
    %v7623 = vpop.f32.mrf.mxu0
    %v7624 = vadd.f32 %v7443, %v7623
    %v7625 = vpop.f32.mrf.mxu0
    %v7626 = vpop.f32.mrf.mxu0
    %v7627 = vpop.f32.mrf.mxu0
    %7628 = vdwg.mxu0
    %7629 = vmatprep.subr.bf16.mxu0 0
    %7630 = vmatpush1.bf16.msra.mxu0 %v7564
    %7631 = vmatprep.subr.bf16.mxu0 0
    %7632 = vmatpush1.bf16.msra.mxu0 %v7563
    %7633 = vmatprep.subr.bf16.mxu0 0
    %7634 = vmatpush1.bf16.msra.mxu0 %v7562
    %7635 = vmatprep.subr.bf16.mxu0 0
    %7636 = vmatpush1.bf16.msra.mxu0 %v7561
    %7637 = vmatprep.subr.bf16.mxu0 0
    %7638 = vmatpush1.bf16.msra.mxu0 %v7560
    %7639 = vmatprep.subr.bf16.mxu0 0
    %7640 = vmatpush1.bf16.msra.mxu0 %v7559
    %7641 = vmatprep.subr.bf16.mxu0 0
    %7642 = vmatpush1.bf16.msra.mxu0 %v7558
    %7643 = vmatprep.subr.bf16.mxu0 0
    %7644 = vmatpush1.bf16.msra.mxu0 %v7557
    %7645 = vmatprep.subr.bf16.mxu0 0
    %7646 = vmatpush2.bf16.msra.mxu0 0
    %7647 = vmatprep.subr.bf16.mxu0 0
    %7648 = vmatpush2.bf16.msra.mxu0 0
    %7649 = vmatprep.subr.bf16.mxu0 0
    %7650 = vmatpush2.bf16.msra.mxu0 0
    %7651 = vmatprep.subr.bf16.mxu0 0
    %7652 = vmatpush2.bf16.msra.mxu0 0
    %7653 = vmatprep.subr.bf16.mxu0 0
    %7654 = vmatpush2.bf16.msra.mxu0 0
    %7655 = vmatprep.subr.bf16.mxu0 0
    %7656 = vmatpush2.bf16.msra.mxu0 0
    %7657 = vmatprep.subr.bf16.mxu0 0
    %7658 = vmatpush2.bf16.msra.mxu0 0
    %7659 = vmatprep.subr.bf16.mxu0 0
    %7660 = vmatpush2.bf16.msra.mxu0 0
    %7661 = vmatprep.mubr.bf16.mxu0 0
    %7662 = vmatmul.mubr.bf16.gmra.mxu0 %v7389
    %v7663 = vpop.f32.mrf.mxu0
    %v7664 = vadd.f32 %v7624, %v7663
    %v7665 = vpop.f32.mrf.mxu0
    %v7666 = vpop.f32.mrf.mxu0
    %v7667 = vpop.f32.mrf.mxu0
    %7668 = vdwg.mxu0
    %v7669 = vmax.f32 %v7664, 0.0
    %v7670 = vpack.c.bf16 %v7669, %v7669
    %v7671 = vld [vmem:[#allocation31] sm:$0xf]
    %v7672 = vld [vmem:[#allocation31 + $0x4] sm:$0xf]
    %v7673 = vld [vmem:[#allocation31 + $0x8] sm:$0xf]
    %v7674 = vld [vmem:[#allocation31 + $0xc] sm:$0xf]
    %v7675 = vld [vmem:[#allocation31 + $0x10] sm:$0xf]
    %v7676 = vld [vmem:[#allocation31 + $0x14] sm:$0xf]
    %v7677 = vld [vmem:[#allocation31 + $0x18] sm:$0xf]
    %v7678 = vld [vmem:[#allocation31 + $0x1c] sm:$0xf]
    %v7679 = vld [vmem:[#allocation31 + $0x20] sm:$0xf]
    %v7680 = vld [vmem:[#allocation31 + $0x24] sm:$0xf]
    %v7681 = vld [vmem:[#allocation31 + $0x28] sm:$0xf]
    %v7682 = vld [vmem:[#allocation31 + $0x2c] sm:$0xf]
    %v7683 = vld [vmem:[#allocation31 + $0x30] sm:$0xf]
    %v7684 = vld [vmem:[#allocation31 + $0x34] sm:$0xf]
    %v7685 = vld [vmem:[#allocation31 + $0x38] sm:$0xf]
    %v7686 = vld [vmem:[#allocation31 + $0x3c] sm:$0xf]
    %v7687 = vld [vmem:[%s67] sm:$0x1]
    %v7689 = vlaneseq
    %v7690 = vshrl.u32 %v7689, 7
    %v7691 = vsub.s32 0, %v7690
    %v7692 = vrot.slane %v7687, %v7691
    %v7710 = vunpack.c.l.b16 %v7671
    %v7711 = vunpack.c.l.b16 %v7672
    %v7712 = vunpack.c.l.b16 %v7673
    %v7713 = vunpack.c.l.b16 %v7674
    %v7714 = vunpack.c.l.b16 %v7675
    %v7715 = vunpack.c.l.b16 %v7676
    %v7716 = vunpack.c.l.b16 %v7677
    %v7717 = vunpack.c.l.b16 %v7678
    %v7718 = vunpack.c.l.b16 %v7679
    %v7719 = vunpack.c.l.b16 %v7680
    %v7720 = vunpack.c.l.b16 %v7681
    %v7721 = vunpack.c.l.b16 %v7682
    %v7722 = vunpack.c.l.b16 %v7683
    %v7723 = vunpack.c.l.b16 %v7684
    %v7724 = vunpack.c.l.b16 %v7685
    %v7725 = vunpack.c.l.b16 %v7686
    %v7726 = vpack.c.b16 %v7711, %v7710
    %v7727 = vpack.c.b16 %v7713, %v7712
    %v7728 = vpack.c.b16 %v7715, %v7714
    %v7729 = vpack.c.b16 %v7717, %v7716
    %v7730 = vpack.c.b16 %v7719, %v7718
    %v7731 = vpack.c.b16 %v7721, %v7720
    %v7732 = vpack.c.b16 %v7723, %v7722
    %v7733 = vpack.c.b16 %v7725, %v7724
    %7742 = vmatprep.subr.bf16.mxu0 0
    %7743 = vmatpush1.bf16.msra.mxu0 %v7733
    %7744 = vmatprep.subr.bf16.mxu0 0
    %7745 = vmatpush1.bf16.msra.mxu0 %v7732
    %7746 = vmatprep.subr.bf16.mxu0 0
    %7747 = vmatpush1.bf16.msra.mxu0 %v7731
    %7748 = vmatprep.subr.bf16.mxu0 0
    %7749 = vmatpush1.bf16.msra.mxu0 %v7730
    %7750 = vmatprep.subr.bf16.mxu0 0
    %7751 = vmatpush1.bf16.msra.mxu0 %v7729
    %7752 = vmatprep.subr.bf16.mxu0 0
    %7753 = vmatpush1.bf16.msra.mxu0 %v7728
    %7754 = vmatprep.subr.bf16.mxu0 0
    %7755 = vmatpush1.bf16.msra.mxu0 %v7727
    %7756 = vmatprep.subr.bf16.mxu0 0
    %7757 = vmatpush1.bf16.msra.mxu0 %v7726
    %7758 = vmatprep.subr.bf16.mxu0 0
    %7759 = vmatpush2.bf16.msra.mxu0 0
    %7760 = vmatprep.subr.bf16.mxu0 0
    %7761 = vmatpush2.bf16.msra.mxu0 0
    %7762 = vmatprep.subr.bf16.mxu0 0
    %7763 = vmatpush2.bf16.msra.mxu0 0
    %7764 = vmatprep.subr.bf16.mxu0 0
    %7765 = vmatpush2.bf16.msra.mxu0 0
    %7766 = vmatprep.subr.bf16.mxu0 0
    %7767 = vmatpush2.bf16.msra.mxu0 0
    %7768 = vmatprep.subr.bf16.mxu0 0
    %7769 = vmatpush2.bf16.msra.mxu0 0
    %7770 = vmatprep.subr.bf16.mxu0 0
    %7771 = vmatpush2.bf16.msra.mxu0 0
    %7772 = vmatprep.subr.bf16.mxu0 0
    %7773 = vmatpush2.bf16.msra.mxu0 0
    %7774 = vmatprep.mubr.bf16.mxu0 0
    %7775 = vmatmul.mubr.bf16.gmra.mxu0 %v7670
    %v7776 = vpop.f32.mrf.mxu0
    %v7777 = vadd.f32 %v7692, %v7776
    %v7778 = vpop.f32.mrf.mxu0
    %v7779 = vpop.f32.mrf.mxu0
    %v7780 = vpop.f32.mrf.mxu0
    %7781 = vdwg.mxu0
    %7782 = vst [vmem:[#allocation33] sm:$0x3] %v7777
    // Predicated region
    $region231: #{tpu_custom_call.1} parent=1 // pred_check
      _
    $region232: #{tpu_custom_call.1} parent=1 // pred_check_branch
      %7784 = sbr.rel (0) target = $region234
    $region233: #{tpu_custom_call.1} parent=1 // pred_region
      %s7786 = ssub.s32 32, 32
      %7787 = vsyncadd [#allocation6], %s7786
      %s7789 = sshll.u32 [#allocation33], 4
      %s7790 = int_to_ptr.vmem [resolvable:$true] %s7789
      %7792 = dma.vmem_to_hbm [thread:$0]  %s7790, 32, %s69, [#allocation6]
    $region234: #{tpu_custom_call.1} parent=1 // pred_fallthru
      _
    // Predicated region
    $region235: #{tpu_custom_call.1} parent=1 // pred_check
      _
    $region236: #{tpu_custom_call.1} parent=1 // pred_check_branch
      %7794 = sbr.rel (0) target = $region238
    $region237: #{tpu_custom_call.1} parent=1 // pred_region
      %7795 = dma.done [#allocation6], 32
    $region238: #{tpu_custom_call.1} parent=1 // pred_fallthru
      _
    %7796 = vsyncpa [#allocation5], 1
    %7797 = vsyncpa [#allocation8], 1
    %7798 = vsyncpa [#allocation11], 1
    %7799 = vsyncpa [#allocation14], 1
    %7800 = vsyncpa [#allocation17], 1
    %7801 = vsyncpa [#allocation20], 1
    %7802 = vsyncpa [#allocation23], 1
    %7803 = vsyncpa [#allocation26], 1
    %7804 = vsyncpa [#allocation29], 1
    %7805 = vsyncpa [#allocation32], 1
    %7806 = vsyncpa [#allocation6], 1

</llo_original>
